<compile_context>
chip_gen: v7x
topology: tpu7x:2x2x1
jax: 0.10.0
libtpu: 0.0.40
codegen_flags: <defaults>
</compile_context>

<pallas_src>
import math
import numpy as np
import jax
import jax.numpy as jnp
from jax.experimental import pallas as pl
from jax.experimental.pallas import tpu as pltpu

_VMEM_LIMIT = 48 * 1024 * 1024        # explicit scoped-VMEM budget (safe on v5e/v6e/v7x)


# ------------------------------- small helpers --------------------------------
def _round_up(a, m):
    return ((a + m - 1) // m) * m


def _pick_tile(dim, target, quantum=128):
    """Largest tile <= target that divides dim and respects the (8,128) BlockSpec rule
    (via `quantum`); falls back to the full dim."""
    if dim <= target:
        return dim
    t = target
    while t >= quantum:
        if dim % t == 0:
            return t
        t //= 2
    return dim


def _row_tile(h):
    if h <= 8:
        return h
    for t in (8, 16, 4, 2):
        if h % t == 0:
            return t
    return h


# --------------------- Pallas kernel: tiled matmul + BN + SiLU ----------------
def _matmul_bn_silu_kernel(x_ref, w_ref, s_ref, b_ref, o_ref, acc_ref):
    k = pl.program_id(2)

    @pl.when(k == 0)
    def _():
        acc_ref[...] = jnp.zeros_like(acc_ref)

    acc_ref[...] += jnp.dot(x_ref[...], w_ref[...], preferred_element_type=jnp.float32)

    @pl.when(k == pl.num_programs(2) - 1)
    def _():
        y = acc_ref[...] * s_ref[...] + b_ref[...]
        o_ref[...] = (y * jax.nn.sigmoid(y)).astype(o_ref.dtype)      # SiLU


def matmul_bn_silu(x, w, scale, bias, out_dtype=jnp.bfloat16, tm=512):
    """x: (M,K) bf16, w: (K,N) bf16, scale/bias: (N,) f32. silu((x@w)*scale+bias)."""
    M, K = x.shape
    N = w.shape[1]
    tm = min(tm, _round_up(M, 8))
    Mp = _round_up(M, tm)
    if Mp != M:
        x = jnp.pad(x, ((0, Mp - M), (0, 0)))
    tn = _pick_tile(N, 512)
    tk = _pick_tile(K, 512)
    grid = (Mp // tm, N // tn, K // tk)
    cost = pl.CostEstimate(flops=2 * Mp * K * N, transcendentals=Mp * N,
                           bytes_accessed=Mp * K * 2 + K * N * 2 + Mp * N * 2)
    out = pl.pallas_call(
        _matmul_bn_silu_kernel,
        out_shape=jax.ShapeDtypeStruct((Mp, N), out_dtype),
        grid=grid,
        in_specs=[
            pl.BlockSpec((tm, tk), lambda i, j, k: (i, k)),
            pl.BlockSpec((tk, tn), lambda i, j, k: (k, j)),
            pl.BlockSpec((1, tn), lambda i, j, k: (0, j)),
            pl.BlockSpec((1, tn), lambda i, j, k: (0, j)),
        ],
        out_specs=pl.BlockSpec((tm, tn), lambda i, j, k: (i, j)),
        scratch_shapes=[pltpu.VMEM((tm, tn), jnp.float32)],
        compiler_params=pltpu.CompilerParams(
            dimension_semantics=("parallel", "parallel", "arbitrary"),
            vmem_limit_bytes=_VMEM_LIMIT),
        cost_estimate=cost,
    )(x, w, scale.reshape(1, N), bias.reshape(1, N))
    return out[:M] if Mp != M else out


def conv1x1_bn_silu(x, w_t, scale, bias, out_dtype=jnp.bfloat16):
    B, H, W, C = x.shape
    y = matmul_bn_silu(x.reshape(B * H * W, C), w_t, scale, bias, out_dtype=out_dtype)
    return y.reshape(B, H, W, -1)


# --------- Pallas kernel: fused chunk-concat + matmul + BN + SiLU (cv2) -------
def _make_concat_mm_kernel(n_chunks):
    def kernel(*refs):
        x_refs = refs[:n_chunks]
        w_refs = refs[n_chunks:2 * n_chunks]
        s_ref = refs[2 * n_chunks]
        b_ref = refs[2 * n_chunks + 1]
        o_ref = refs[2 * n_chunks + 2]
        acc = jnp.zeros(o_ref.shape, jnp.float32)
        for xr, wr in zip(x_refs, w_refs):
            acc = acc + jnp.dot(xr[...], wr[...], preferred_element_type=jnp.float32)
        y = acc * s_ref[...] + b_ref[...]
        o_ref[...] = (y * jax.nn.sigmoid(y)).astype(o_ref.dtype)
    return kernel


def concat_matmul_bn_silu(xs, ws, scale, bias, out_dtype=jnp.bfloat16, tm=512):
    """silu(bn(concat(xs, -1) @ concat(ws, 0))) without materializing the concat."""
    M = xs[0].shape[0]
    N = ws[0].shape[1]
    nc = len(xs)
    tm = min(tm, _round_up(M, 8))
    Mp = _round_up(M, tm)
    if Mp != M:
        xs = [jnp.pad(xi, ((0, Mp - M), (0, 0))) for xi in xs]
    tn = _pick_tile(N, 512)
    grid = (Mp // tm, N // tn)
    in_specs = ([pl.BlockSpec((tm, xi.shape[1]), lambda i, j: (i, 0)) for xi in xs]
                + [pl.BlockSpec((wi.shape[0], tn), lambda i, j: (0, j)) for wi in ws]
                + [pl.BlockSpec((1, tn), lambda i, j: (0, j))] * 2)
    ktot = sum(wi.shape[0] for wi in ws)
    cost = pl.CostEstimate(flops=2 * Mp * ktot * N, transcendentals=Mp * N,
                           bytes_accessed=Mp * ktot * 2 + ktot * N * 2 + Mp * N * 2)
    out = pl.pallas_call(
        _make_concat_mm_kernel(nc),
        out_shape=jax.ShapeDtypeStruct((Mp, N), out_dtype),
        grid=grid,
        in_specs=in_specs,
        out_specs=pl.BlockSpec((tm, tn), lambda i, j: (i, j)),
        compiler_params=pltpu.CompilerParams(
            dimension_semantics=("parallel", "parallel"),
            vmem_limit_bytes=_VMEM_LIMIT),
        cost_estimate=cost,
    )(*xs, *ws, scale.reshape(1, N), bias.reshape(1, N))
    return out[:M] if Mp != M else out


# ----- Pallas kernel: row-block 3x3 conv + BN + SiLU (+ fused MLCA pooling) ----
def _conv3x3_tile(xc_ref, xt_ref, xb_ref, w_ref, s_ref, b_ref, xbuf, out_dtype):
    """Assemble a zero-padded, halo'd, row-flattened tile in VMEM scratch and run the
    9-tap conv as 9 contiguous-window matmuls. Returns post-SiLU activation of shape
    (TR*(W+2), Cout) in `out_dtype` (the 2 junk columns per row are never stored)."""
    j = pl.program_id(1)
    n_rb = pl.num_programs(1)
    _, TR, W, C = xc_ref.shape
    Cout = w_ref.shape[2]
    Wp = W + 2
    P = TR * Wp

    # Zero scratch: provides the left/right zero pad columns, top/bottom zero halo rows
    # at the image boundary, and a zeroed tail so the last tap window stays in bounds.
    xbuf[...] = jnp.zeros(xbuf.shape, xbuf.dtype)

    @pl.when(j > 0)
    def _():
        xbuf[1:1 + W, :] = xt_ref[0, 0]                 # top halo row
    for r in range(TR):                                 # center rows
        base = (r + 1) * Wp + 1
        xbuf[base:base + W, :] = xc_ref[0, r]

    @pl.when(j < n_rb - 1)
    def _():
        base = (TR + 1) * Wp + 1
        xbuf[base:base + W, :] = xb_ref[0, 0]           # bottom halo row

    acc = jnp.zeros((P, Cout), jnp.float32)
    for dh in range(3):                                 # 9 taps, contiguous flat windows
        for dw in range(3):
            off = dh * Wp + dw
            acc = acc + jnp.dot(xbuf[off:off + P, :], w_ref[dh * 3 + dw],
                                preferred_element_type=jnp.float32)
    y = acc * s_ref[...] + b_ref[...]
    return (y * jax.nn.sigmoid(y)).astype(out_dtype)    # SiLU, bf16


def _conv3x3_kernel(xc_ref, xt_ref, xb_ref, w_ref, s_ref, b_ref, o_ref, xbuf):
    act = _conv3x3_tile(xc_ref, xt_ref, xb_ref, w_ref, s_ref, b_ref, xbuf, o_ref.dtype)
    TR, W = o_ref.shape[1], o_ref.shape[2]
    Wp = W + 2
    for r in range(TR):
        o_ref[0, r] = act[r * Wp:r * Wp + W, :]


def _conv3x3_pool_kernel(xc_ref, xt_ref, xb_ref, w_ref, s_ref, b_ref, p_ref,
                         o_ref, q_ref, xbuf):
    act = _conv3x3_tile(xc_ref, xt_ref, xb_ref, w_ref, s_ref, b_ref, xbuf, o_ref.dtype)
    TR, W = o_ref.shape[1], o_ref.shape[2]
    Wp = W + 2
    for r in range(TR):
        o_ref[0, r] = act[r * Wp:r * Wp + W, :]
    # Fused MLCA local adaptive-avg-pool, accumulated across row blocks in the
    # resident output block (row axis is "arbitrary").
    contrib = jnp.dot(p_ref[0], act, preferred_element_type=jnp.float32)

    @pl.when(pl.program_id(1) == 0)
    def _():
        q_ref[...] = jnp.zeros(q_ref.shape, q_ref.dtype)
    q_ref[0] = q_ref[0] + contrib


def adaptive_pool_matrix(out_size, in_size):
    """Row-stochastic matrix reproducing torch adaptive_avg_pool bin rule (numpy)."""
    m = np.zeros((out_size, in_size), np.float32)
    for i in range(out_size):
        s = (i * in_size) // out_size
        e = ((i + 1) * in_size + out_size - 1) // out_size
        m[i, s:e] = 1.0 / (e - s)
    return m


def conv3x3_bn_silu(x, w9, scale, bias, pool_size=None):
    """x: (B,H,W,C) bf16; w9: (9,C,Cout) bf16 (tap=kh*3+kw); scale/bias: (Cout,) f32.
    Row-block tiled 3x3 'same' conv + BN + SiLU. If pool_size=L is given, also returns
    the MLCA (L,L) adaptive-avg-pool of the activation, shape (B, L*L, Cout) f32."""
    B, H, W, C = x.shape
    Cout = w9.shape[2]
    TR = _row_tile(H)
    n_rb = H // TR
    Wp = W + 2
    NF = (TR + 2) * Wp + 8                               # flat scratch rows (+ margin)
    s2 = scale.reshape(1, Cout)
    b2 = bias.reshape(1, Cout)

    xc_spec = pl.BlockSpec((1, TR, W, C), lambda b, j: (b, j, 0, 0))
    xt_spec = pl.BlockSpec((1, 1, W, C),
                           lambda b, j: (b, jnp.maximum(j * TR - 1, 0), 0, 0))
    xb_spec = pl.BlockSpec((1, 1, W, C),
                           lambda b, j: (b, jnp.minimum(j * TR + TR, H - 1), 0, 0))
    w_spec = pl.BlockSpec((9, C, Cout), lambda b, j: (0, 0, 0))
    v_spec = pl.BlockSpec((1, Cout), lambda b, j: (0, 0))
    o_spec = pl.BlockSpec((1, TR, W, Cout), lambda b, j: (b, j, 0, 0))
    scratch = [pltpu.VMEM((NF, C), x.dtype)]
    cost = pl.CostEstimate(
        flops=2 * B * H * W * C * 9 * Cout,
        transcendentals=B * H * W * Cout,
        bytes_accessed=(B * (H + 2 * n_rb) * W * C + 9 * C * Cout + B * H * W * Cout) * 2)

    if pool_size is None:
        return pl.pallas_call(
            _conv3x3_kernel,
            out_shape=jax.ShapeDtypeStruct((B, H, W, Cout), x.dtype),
            grid=(B, n_rb),
            in_specs=[xc_spec, xt_spec, xb_spec, w_spec, v_spec, v_spec],
            out_specs=o_spec,
            scratch_shapes=scratch,
            compiler_params=pltpu.CompilerParams(
                dimension_semantics=("parallel", "parallel"),
                vmem_limit_bytes=_VMEM_LIMIT),
            cost_estimate=cost,
        )(x, x, x, w9, s2, b2)

    L = pool_size
    LL = L * L
    # Pool matrix over the *flattened padded-width* layout, split per row block; the two
    # junk columns per row get zero weight so they never contribute.
    pm = np.kron(adaptive_pool_matrix(L, H), adaptive_pool_matrix(L, W))   # (LL, H*W)
    pm = pm.reshape(LL, n_rb, TR, W).transpose(1, 0, 2, 3)
    pm = np.concatenate([pm, np.zeros((n_rb, LL, TR, 2), np.float32)], axis=-1)
    pm = jnp.asarray(pm.reshape(n_rb, LL, TR * Wp), jnp.bfloat16)
    p_spec = pl.BlockSpec((1, LL, TR * Wp), lambda b, j: (j, 0, 0))
    q_spec = pl.BlockSpec((1, LL, Cout), lambda b, j: (b, 0, 0))
    return pl.pallas_call(
        _conv3x3_pool_kernel,
        out_shape=(jax.ShapeDtypeStruct((B, H, W, Cout), x.dtype),
                   jax.ShapeDtypeStruct((B, LL, Cout), jnp.float32)),
        grid=(B, n_rb),
        in_specs=[xc_spec, xt_spec, xb_spec, w_spec, v_spec, v_spec, p_spec],
        out_specs=(o_spec, q_spec),
        scratch_shapes=scratch,
        compiler_params=pltpu.CompilerParams(
            dimension_semantics=("parallel", "arbitrary"),
            vmem_limit_bytes=_VMEM_LIMIT),
        cost_estimate=cost,
    )(x, x, x, w9, s2, b2, pm)


# ------- Pallas kernel: MLCA attention upsample + apply (+ fused residual) ----
def _mlca_apply_kernel(x_ref, a_ref, u_ref, o_ref):
    att = jnp.dot(u_ref[...], a_ref[0], preferred_element_type=jnp.float32)
    o_ref[0] = (x_ref[0].astype(jnp.float32) * att).astype(o_ref.dtype)


def _mlca_apply_res_kernel(x_ref, a_ref, u_ref, r_ref, o_ref):
    att = jnp.dot(u_ref[...], a_ref[0], preferred_element_type=jnp.float32)
    o_ref[0] = (x_ref[0].astype(jnp.float32) * att
                + r_ref[0].astype(jnp.float32)).astype(o_ref.dtype)


def mlca_apply(x2, att5, U, residual=None):
    """x2: (B,HW,C) bf16; att5: (B,LL,C) bf16; U: (HW,LL) bf16. x2 * upsample(att5) [+res]."""
    B, HW, C = x2.shape
    LL = U.shape[1]
    thw = _pick_tile(HW, 4096, quantum=8)                # HW tiling (v7x VMEM)
    tc = _pick_tile(C, 256, quantum=128)                 # channel tiling for big C
    grid = (B, HW // thw, C // tc)
    x_spec = pl.BlockSpec((1, thw, tc), lambda b, h, cb: (b, h, cb))
    a_spec = pl.BlockSpec((1, LL, tc), lambda b, h, cb: (b, 0, cb))
    u_spec = pl.BlockSpec((thw, LL), lambda b, h, cb: (h, 0))
    cparams = pltpu.CompilerParams(
        dimension_semantics=("parallel", "parallel", "parallel"),
        vmem_limit_bytes=_VMEM_LIMIT)
    if residual is None:
        return pl.pallas_call(
            _mlca_apply_kernel,
            out_shape=jax.ShapeDtypeStruct((B, HW, C), x2.dtype),
            grid=grid,
            in_specs=[x_spec, a_spec, u_spec],
            out_specs=x_spec,
            compiler_params=cparams,
        )(x2, att5, U)
    return pl.pallas_call(
        _mlca_apply_res_kernel,
        out_shape=jax.ShapeDtypeStruct((B, HW, C), x2.dtype),
        grid=grid,
        in_specs=[x_spec, a_spec, u_spec, x_spec],
        out_specs=x_spec,
        compiler_params=cparams,
    )(x2, att5, U, residual)


# ----------------------------------- Glue -------------------------------------
def conv1d_same(seq, w):
    """1-channel Conv1d, no bias, 'same' padding (cross-correlation). seq: (B,L); w: (k,)."""
    # TODO(synk): tiny 1-D conv (length 25*C and C) kept in plain JAX; negligible compute.
    k = w.shape[0]
    pad = (k - 1) // 2
    L = seq.shape[1]
    sp = jnp.pad(seq, ((0, 0), (pad, pad)))
    out = jnp.zeros_like(seq)
    for i in range(k):
        out = out + w[i] * sp[:, i:i + L]
    return out


def fold_bn(gamma, beta, mean, var, eps=1e-5):
    scale = gamma / jnp.sqrt(var + eps)
    return scale, beta - mean * scale


def mlca_attention(local, H, W, p):
    """local: (B, L*L, C) f32 pooled values. Returns mixed attention (B,L*L,C) bf16 and
    the (H*W, L*L) adaptive-upsample matrix bf16."""
    B, LL, C = local.shape
    L = p['local_size']
    lw = p['local_weight']
    glob = jnp.mean(local, axis=1)                               # (B, C), pool (L,L)->(1,1)
    # temp_local sequence: spatial-major, channel-minor (matches torch view/transpose chain)
    y_local = conv1d_same(local.reshape(B, LL * C), p['w_conv_local'])
    y_global = conv1d_same(glob, p['w_conv'])
    att_local = jax.nn.sigmoid(y_local).reshape(B, LL, C)
    att_global = jax.nn.sigmoid(y_global)[:, None, :]            # (1,1) -> (L,L) replicate
    att5 = (att_global * (1.0 - lw) + att_local * lw).astype(jnp.bfloat16)
    U = jnp.asarray(np.kron(adaptive_pool_matrix(H, L), adaptive_pool_matrix(W, L)),
                    jnp.bfloat16)                                # (H*W, L*L) constant
    return att5, U


def bottleneck_forward(x, p):
    B, H, W, C = x.shape
    L = p['mlca']['local_size']
    y = conv3x3_bn_silu(x, p['cv1_w'], p['cv1_scale'], p['cv1_bias'])
    # cv2: MLCA local adaptive pool fused into the conv epilogue (one fewer activation read)
    y, local = conv3x3_bn_silu(y, p['cv2_w'], p['cv2_scale'], p['cv2_bias'], pool_size=L)
    att5, U = mlca_attention(local, H, W, p['mlca'])
    res = x.reshape(B, H * W, C) if p['add'] else None           # residual fused into apply
    out = mlca_apply(y.reshape(B, H * W, C), att5, U, residual=res)
    return out.reshape(B, H, W, C)


def c2f_mlca_forward(x, params):
    """x: (B,H,W,C1) bf16 NHWC. Returns (B,H,W,C2) f32."""
    B, H, W, _ = x.shape
    c = params['c']
    y = conv1x1_bn_silu(x, params['cv1_w'], params['cv1_scale'], params['cv1_bias'])
    chunks = [y]                              # first two C2f chunks == y itself
    prev = y[..., c:]                         # TODO(synk): fuse this split into cv1 outputs
    for bp in params['m']:
        prev = bottleneck_forward(prev, bp)
        chunks.append(prev)
    xs = [ch.reshape(B * H * W, ch.shape[-1]) for ch in chunks]
    out = concat_matmul_bn_silu(xs, params['cv2_w_parts'],
                                params['cv2_scale'], params['cv2_bias'],
                                out_dtype=jnp.float32)            # fused concat, f32 out
    return out.reshape(B, H, W, -1)


# ------------------------------ parameter init --------------------------------
def make_bn_params(key, c):
    k1, k2, k3, k4 = jax.random.split(key, 4)
    gamma = 1.0 + 0.1 * jax.random.normal(k1, (c,), jnp.float32)
    beta = 0.1 * jax.random.normal(k2, (c,), jnp.float32)
    mean = 0.1 * jax.random.normal(k3, (c,), jnp.float32)
    var = 1.0 + 0.1 * jnp.abs(jax.random.normal(k4, (c,), jnp.float32))
    return fold_bn(gamma, beta, mean, var)


def _conv3x3_to_taps(w):
    # PyTorch (Cout, Cin, kh, kw) -> kernel layout (9, Cin, Cout), tap = kh*3+kw, bf16
    cout, cin = w.shape[0], w.shape[1]
    return jnp.transpose(w, (2, 3, 1, 0)).reshape(9, cin, cout).astype(jnp.bfloat16)


def make_c2f_mlca_params(key, c1, c2, n=1, shortcut=False, e=0.5,
                         local_size=5, gamma=2, b=1, local_weight=0.5):
    c = int(c2 * e)
    keys = jax.random.split(key, 4 + n)
    cv1_scale, cv1_bias = make_bn_params(keys[1], 2 * c)
    cv2_scale, cv2_bias = make_bn_params(keys[3], c2)
    # PyTorch 1x1 Conv2d weights (Cout, Cin) -> kernel layout (Cin, Cout) bf16
    w_cv1 = 0.1 * jax.random.normal(keys[0], (2 * c, c1), jnp.float32)
    w_cv2 = 0.1 * jax.random.normal(keys[2], (c2, (2 + n) * c), jnp.float32)
    w_cv2_t = jnp.transpose(w_cv2).astype(jnp.bfloat16)           # ((2+n)c, c2)
    cv2_parts = [w_cv2_t[:2 * c]] + [w_cv2_t[2 * c + i * c: 2 * c + (i + 1) * c]
                                     for i in range(n)]
    params = {
        'c': c,
        'cv1_w': jnp.transpose(w_cv1).astype(jnp.bfloat16),
        'cv1_scale': cv1_scale, 'cv1_bias': cv1_bias,
        'cv2_w_parts': cv2_parts,
        'cv2_scale': cv2_scale, 'cv2_bias': cv2_bias,
        'm': [],
    }
    for i in range(n):
        bk = jax.random.split(keys[4 + i], 6)
        # MLCA kernel size rule: t = int(|log2(in_size) + b| / gamma); k = t if odd else t+1
        t = int(abs(math.log(c, 2) + b) / gamma)
        kk = t if t % 2 else t + 1
        s1, b1 = make_bn_params(bk[1], c)
        s2, b2 = make_bn_params(bk[3], c)
        w1 = 0.1 * jax.random.normal(bk[0], (c, c, 3, 3), jnp.float32)
        w2 = 0.1 * jax.random.normal(bk[2], (c, c, 3, 3), jnp.float32)
        params['m'].append({
            'cv1_w': _conv3x3_to_taps(w1), 'cv1_scale': s1, 'cv1_bias': b1,
            'cv2_w': _conv3x3_to_taps(w2), 'cv2_scale': s2, 'cv2_bias': b2,
            'add': bool(shortcut),   # bottleneck has c1 == c2 == c
            'mlca': {
                'local_size': local_size,
                'local_weight': local_weight,
                'w_conv': 0.3 * jax.random.normal(bk[4], (kk,), jnp.float32),
                'w_conv_local': 0.3 * jax.random.normal(bk[5], (kk,), jnp.float32),
            },
        })
    return params


if __name__ == "__main__":
    key = jax.random.PRNGKey(0)
    kx, kp = jax.random.split(key)
    B, C1, C2, H, W = 2, 16, 16, 16, 16
    # PyTorch-style NCHW f32 input, converted once to the kernels' NHWC bf16 layout.
    x_nchw = jax.random.normal(kx, (B, C1, H, W), jnp.float32)
    x = jnp.transpose(x_nchw, (0, 2, 3, 1)).astype(jnp.bfloat16)
    params = make_c2f_mlca_params(kp, C1, C2, n=1, shortcut=False)

    fwd = jax.jit(lambda xx: c2f_mlca_forward(xx, params))
    out = jax.block_until_ready(fwd(x))
    assert out.shape == (B, H, W, C2)
    assert out.dtype == jnp.float32
    assert bool(jnp.all(jnp.isfinite(out)))
    print("KERNEL_OK")
</pallas_src>

<mosaic_0001>
module attributes {stable_mosaic.version = 11 : i64} {
  func.func @_conv3x3_pool_kernel(%arg0: i32, %arg1: i32, %arg2: memref<1x8x16x8xbf16, #tpu.memory_space<vmem>>, %arg3: memref<1x1x16x8xbf16, #tpu.memory_space<vmem>>, %arg4: memref<1x1x16x8xbf16, #tpu.memory_space<vmem>>, %arg5: memref<9x8x8xbf16, #tpu.memory_space<vmem>>, %arg6: memref<1x8xf32, #tpu.memory_space<vmem>>, %arg7: memref<1x8xf32, #tpu.memory_space<vmem>>, %arg8: memref<1x25x144xbf16, #tpu.memory_space<vmem>>, %arg9: memref<1x8x16x8xbf16, #tpu.memory_space<vmem>>, %arg10: memref<1x25x8xf32, #tpu.memory_space<vmem>>, %arg11: memref<188x8xbf16, #tpu.memory_space<vmem>>) attributes {dimension_semantics = [#tpu.dimension_semantics<parallel>, #tpu.dimension_semantics<arbitrary>], iteration_bounds = array<i64: 2, 2>, scalar_prefetch = 0 : i64, scratch_operands = 1 : i64, tpu.core_type = #tpu.core_type<tc>, window_params = [{transform_indices = @transform_0, window_bounds = array<i64: 1, 8, 16, 8>}, {transform_indices = @transform_1, window_bounds = array<i64: 1, 1, 16, 8>}, {transform_indices = @transform_2, window_bounds = array<i64: 1, 1, 16, 8>}, {pipeline_mode = #tpu.pipeline_mode<synchronous>, transform_indices = @transform_3, window_bounds = array<i64: 9, 8, 8>}, {pipeline_mode = #tpu.pipeline_mode<synchronous>, transform_indices = @transform_4, window_bounds = array<i64: 1, 8>}, {pipeline_mode = #tpu.pipeline_mode<synchronous>, transform_indices = @transform_5, window_bounds = array<i64: 1, 8>}, {transform_indices = @transform_6, window_bounds = array<i64: 1, 25, 144>}, {transform_indices = @transform_7, window_bounds = array<i64: 1, 8, 16, 8>}, {transform_indices = @transform_8, window_bounds = array<i64: 1, 25, 8>}]} {
    %cst = arith.constant 0.000000e+00 : bf16
    %0 = vector.broadcast %cst : bf16 to vector<188x8xbf16>
    %c0 = arith.constant 0 : index
    %c0_0 = arith.constant 0 : index
    %1 = vector.load %arg11[%c0, %c0_0] : memref<188x8xbf16, #tpu.memory_space<vmem>>, vector<188x8xbf16>
    tpu.vector_store %arg11[%c0, %c0_0], %0 {strides = array<i32>} : memref<188x8xbf16, #tpu.memory_space<vmem>>, vector<188x8xbf16>,
    %c0_i32 = arith.constant 0 : i32
    %2 = arith.cmpi sgt, %arg1, %c0_i32 : i32
    %3 = arith.extui %2 : i1 to i32
    %c0_i32_1 = arith.constant 0 : i32
    %4 = arith.cmpi ne, %3, %c0_i32_1 : i32
    scf.if %4 {
      %c0_135 = arith.constant 0 : index
      %c0_136 = arith.constant 0 : index
      %c0_137 = arith.constant 0 : index
      %c0_138 = arith.constant 0 : index
      %135 = vector.load %arg3[%c0_135, %c0_136, %c0_137, %c0_138] : memref<1x1x16x8xbf16, #tpu.memory_space<vmem>>, vector<1x1x16x8xbf16>
      %136 = vector.shape_cast %135 : vector<1x1x16x8xbf16> to vector<16x8xbf16>
      %c1_139 = arith.constant 1 : index
      %c0_140 = arith.constant 0 : index
      %137 = vector.load %arg11[%c1_139, %c0_140] : memref<188x8xbf16, #tpu.memory_space<vmem>>, vector<16x8xbf16>
      tpu.vector_store %arg11[%c1_139, %c0_140], %136 {strides = array<i32>} : memref<188x8xbf16, #tpu.memory_space<vmem>>, vector<16x8xbf16>,
    } else {
    }
    %c0_2 = arith.constant 0 : index
    %c0_3 = arith.constant 0 : index
    %c0_4 = arith.constant 0 : index
    %c0_5 = arith.constant 0 : index
    %5 = vector.load %arg2[%c0_2, %c0_3, %c0_4, %c0_5] : memref<1x8x16x8xbf16, #tpu.memory_space<vmem>>, vector<1x1x16x8xbf16>
    %6 = vector.shape_cast %5 : vector<1x1x16x8xbf16> to vector<16x8xbf16>
    %c19 = arith.constant 19 : index
    %c0_6 = arith.constant 0 : index
    %7 = vector.load %arg11[%c19, %c0_6] : memref<188x8xbf16, #tpu.memory_space<vmem>>, vector<16x8xbf16>
    tpu.vector_store %arg11[%c19, %c0_6], %6 {strides = array<i32>} : memref<188x8xbf16, #tpu.memory_space<vmem>>, vector<16x8xbf16>,
    %c0_7 = arith.constant 0 : index
    %c1 = arith.constant 1 : index
    %c0_8 = arith.constant 0 : index
    %c0_9 = arith.constant 0 : index
    %8 = vector.load %arg2[%c0_7, %c1, %c0_8, %c0_9] : memref<1x8x16x8xbf16, #tpu.memory_space<vmem>>, vector<1x1x16x8xbf16>
    %9 = vector.shape_cast %8 : vector<1x1x16x8xbf16> to vector<16x8xbf16>
    %c37 = arith.constant 37 : index
    %c0_10 = arith.constant 0 : index
    %10 = vector.load %arg11[%c37, %c0_10] : memref<188x8xbf16, #tpu.memory_space<vmem>>, vector<16x8xbf16>
    tpu.vector_store %arg11[%c37, %c0_10], %9 {strides = array<i32>} : memref<188x8xbf16, #tpu.memory_space<vmem>>, vector<16x8xbf16>,
    %c0_11 = arith.constant 0 : index
    %c2 = arith.constant 2 : index
    %c0_12 = arith.constant 0 : index
    %c0_13 = arith.constant 0 : index
    %11 = vector.load %arg2[%c0_11, %c2, %c0_12, %c0_13] : memref<1x8x16x8xbf16, #tpu.memory_space<vmem>>, vector<1x1x16x8xbf16>
    %12 = vector.shape_cast %11 : vector<1x1x16x8xbf16> to vector<16x8xbf16>
    %c55 = arith.constant 55 : index
    %c0_14 = arith.constant 0 : index
    %13 = vector.load %arg11[%c55, %c0_14] : memref<188x8xbf16, #tpu.memory_space<vmem>>, vector<16x8xbf16>
    tpu.vector_store %arg11[%c55, %c0_14], %12 {strides = array<i32>} : memref<188x8xbf16, #tpu.memory_space<vmem>>, vector<16x8xbf16>,
    %c0_15 = arith.constant 0 : index
    %c3 = arith.constant 3 : index
    %c0_16 = arith.constant 0 : index
    %c0_17 = arith.constant 0 : index
    %14 = vector.load %arg2[%c0_15, %c3, %c0_16, %c0_17] : memref<1x8x16x8xbf16, #tpu.memory_space<vmem>>, vector<1x1x16x8xbf16>
    %15 = vector.shape_cast %14 : vector<1x1x16x8xbf16> to vector<16x8xbf16>
    %c73 = arith.constant 73 : index
    %c0_18 = arith.constant 0 : index
    %16 = vector.load %arg11[%c73, %c0_18] : memref<188x8xbf16, #tpu.memory_space<vmem>>, vector<16x8xbf16>
    tpu.vector_store %arg11[%c73, %c0_18], %15 {strides = array<i32>} : memref<188x8xbf16, #tpu.memory_space<vmem>>, vector<16x8xbf16>,
    %c0_19 = arith.constant 0 : index
    %c4 = arith.constant 4 : index
    %c0_20 = arith.constant 0 : index
    %c0_21 = arith.constant 0 : index
    %17 = vector.load %arg2[%c0_19, %c4, %c0_20, %c0_21] : memref<1x8x16x8xbf16, #tpu.memory_space<vmem>>, vector<1x1x16x8xbf16>
    %18 = vector.shape_cast %17 : vector<1x1x16x8xbf16> to vector<16x8xbf16>
    %c91 = arith.constant 91 : index
    %c0_22 = arith.constant 0 : index
    %19 = vector.load %arg11[%c91, %c0_22] : memref<188x8xbf16, #tpu.memory_space<vmem>>, vector<16x8xbf16>
    tpu.vector_store %arg11[%c91, %c0_22], %18 {strides = array<i32>} : memref<188x8xbf16, #tpu.memory_space<vmem>>, vector<16x8xbf16>,
    %c0_23 = arith.constant 0 : index
    %c5 = arith.constant 5 : index
    %c0_24 = arith.constant 0 : index
    %c0_25 = arith.constant 0 : index
    %20 = vector.load %arg2[%c0_23, %c5, %c0_24, %c0_25] : memref<1x8x16x8xbf16, #tpu.memory_space<vmem>>, vector<1x1x16x8xbf16>
    %21 = vector.shape_cast %20 : vector<1x1x16x8xbf16> to vector<16x8xbf16>
    %c109 = arith.constant 109 : index
    %c0_26 = arith.constant 0 : index
    %22 = vector.load %arg11[%c109, %c0_26] : memref<188x8xbf16, #tpu.memory_space<vmem>>, vector<16x8xbf16>
    tpu.vector_store %arg11[%c109, %c0_26], %21 {strides = array<i32>} : memref<188x8xbf16, #tpu.memory_space<vmem>>, vector<16x8xbf16>,
    %c0_27 = arith.constant 0 : index
    %c6 = arith.constant 6 : index
    %c0_28 = arith.constant 0 : index
    %c0_29 = arith.constant 0 : index
    %23 = vector.load %arg2[%c0_27, %c6, %c0_28, %c0_29] : memref<1x8x16x8xbf16, #tpu.memory_space<vmem>>, vector<1x1x16x8xbf16>
    %24 = vector.shape_cast %23 : vector<1x1x16x8xbf16> to vector<16x8xbf16>
    %c127 = arith.constant 127 : index
    %c0_30 = arith.constant 0 : index
    %25 = vector.load %arg11[%c127, %c0_30] : memref<188x8xbf16, #tpu.memory_space<vmem>>, vector<16x8xbf16>
    tpu.vector_store %arg11[%c127, %c0_30], %24 {strides = array<i32>} : memref<188x8xbf16, #tpu.memory_space<vmem>>, vector<16x8xbf16>,
    %c0_31 = arith.constant 0 : index
    %c7 = arith.constant 7 : index
    %c0_32 = arith.constant 0 : index
    %c0_33 = arith.constant 0 : index
    %26 = vector.load %arg2[%c0_31, %c7, %c0_32, %c0_33] : memref<1x8x16x8xbf16, #tpu.memory_space<vmem>>, vector<1x1x16x8xbf16>
    %27 = vector.shape_cast %26 : vector<1x1x16x8xbf16> to vector<16x8xbf16>
    %c145 = arith.constant 145 : index
    %c0_34 = arith.constant 0 : index
    %28 = vector.load %arg11[%c145, %c0_34] : memref<188x8xbf16, #tpu.memory_space<vmem>>, vector<16x8xbf16>
    tpu.vector_store %arg11[%c145, %c0_34], %27 {strides = array<i32>} : memref<188x8xbf16, #tpu.memory_space<vmem>>, vector<16x8xbf16>,
    %c1_i32 = arith.constant 1 : i32
    %29 = arith.cmpi slt, %arg1, %c1_i32 : i32
    %30 = arith.extui %29 : i1 to i32
    %c0_i32_35 = arith.constant 0 : i32
    %31 = arith.cmpi ne, %30, %c0_i32_35 : i32
    scf.if %31 {
      %c0_135 = arith.constant 0 : index
      %c0_136 = arith.constant 0 : index
      %c0_137 = arith.constant 0 : index
      %c0_138 = arith.constant 0 : index
      %135 = vector.load %arg4[%c0_135, %c0_136, %c0_137, %c0_138] : memref<1x1x16x8xbf16, #tpu.memory_space<vmem>>, vector<1x1x16x8xbf16>
      %136 = vector.shape_cast %135 : vector<1x1x16x8xbf16> to vector<16x8xbf16>
      %c163 = arith.constant 163 : index
      %c0_139 = arith.constant 0 : index
      %137 = vector.load %arg11[%c163, %c0_139] : memref<188x8xbf16, #tpu.memory_space<vmem>>, vector<16x8xbf16>
      tpu.vector_store %arg11[%c163, %c0_139], %136 {strides = array<i32>} : memref<188x8xbf16, #tpu.memory_space<vmem>>, vector<16x8xbf16>,
    } else {
    }
    %cst_36 = arith.constant 0.000000e+00 : f32
    %32 = vector.broadcast %cst_36 : f32 to vector<144x8xf32>
    %c0_37 = arith.constant 0 : index
    %c0_38 = arith.constant 0 : index
    %33 = vector.load %arg11[%c0_37, %c0_38] : memref<188x8xbf16, #tpu.memory_space<vmem>>, vector<144x8xbf16>
    %c0_39 = arith.constant 0 : index
    %c0_40 = arith.constant 0 : index
    %c0_41 = arith.constant 0 : index
    %34 = vector.load %arg5[%c0_39, %c0_40, %c0_41] : memref<9x8x8xbf16, #tpu.memory_space<vmem>>, vector<1x8x8xbf16>
    %35 = vector.shape_cast %34 : vector<1x8x8xbf16> to vector<8x8xbf16>
    %cst_42 = arith.constant dense<0.000000e+00> : vector<144x8xf32>
    %36 = tpu.matmul %33, %35, %cst_42 {dimension_numbers = #tpu.dot_dimension_numbers<[1], [0], [0], [1], [0, 0, 1, 1], [], []>} : vector<144x8xbf16>, vector<8x8xbf16>, vector<144x8xf32> -> vector<144x8xf32>
    %37 = arith.addf %32, %36 : vector<144x8xf32>
    %c1_43 = arith.constant 1 : index
    %c0_44 = arith.constant 0 : index
    %38 = vector.load %arg11[%c1_43, %c0_44] : memref<188x8xbf16, #tpu.memory_space<vmem>>, vector<144x8xbf16>
    %c1_45 = arith.constant 1 : index
    %c0_46 = arith.constant 0 : index
    %c0_47 = arith.constant 0 : index
    %39 = vector.load %arg5[%c1_45, %c0_46, %c0_47] : memref<9x8x8xbf16, #tpu.memory_space<vmem>>, vector<1x8x8xbf16>
    %40 = vector.shape_cast %39 : vector<1x8x8xbf16> to vector<8x8xbf16>
    %cst_48 = arith.constant dense<0.000000e+00> : vector<144x8xf32>
    %41 = tpu.matmul %38, %40, %cst_48 {dimension_numbers = #tpu.dot_dimension_numbers<[1], [0], [0], [1], [0, 0, 1, 1], [], []>} : vector<144x8xbf16>, vector<8x8xbf16>, vector<144x8xf32> -> vector<144x8xf32>
    %42 = arith.addf %37, %41 : vector<144x8xf32>
    %c2_49 = arith.constant 2 : index
    %c0_50 = arith.constant 0 : index
    %43 = vector.load %arg11[%c2_49, %c0_50] : memref<188x8xbf16, #tpu.memory_space<vmem>>, vector<144x8xbf16>
    %c2_51 = arith.constant 2 : index
    %c0_52 = arith.constant 0 : index
    %c0_53 = arith.constant 0 : index
    %44 = vector.load %arg5[%c2_51, %c0_52, %c0_53] : memref<9x8x8xbf16, #tpu.memory_space<vmem>>, vector<1x8x8xbf16>
    %45 = vector.shape_cast %44 : vector<1x8x8xbf16> to vector<8x8xbf16>
    %cst_54 = arith.constant dense<0.000000e+00> : vector<144x8xf32>
    %46 = tpu.matmul %43, %45, %cst_54 {dimension_numbers = #tpu.dot_dimension_numbers<[1], [0], [0], [1], [0, 0, 1, 1], [], []>} : vector<144x8xbf16>, vector<8x8xbf16>, vector<144x8xf32> -> vector<144x8xf32>
    %47 = arith.addf %42, %46 : vector<144x8xf32>
    %c18 = arith.constant 18 : index
    %c0_55 = arith.constant 0 : index
    %48 = vector.load %arg11[%c18, %c0_55] : memref<188x8xbf16, #tpu.memory_space<vmem>>, vector<144x8xbf16>
    %c3_56 = arith.constant 3 : index
    %c0_57 = arith.constant 0 : index
    %c0_58 = arith.constant 0 : index
    %49 = vector.load %arg5[%c3_56, %c0_57, %c0_58] : memref<9x8x8xbf16, #tpu.memory_space<vmem>>, vector<1x8x8xbf16>
    %50 = vector.shape_cast %49 : vector<1x8x8xbf16> to vector<8x8xbf16>
    %cst_59 = arith.constant dense<0.000000e+00> : vector<144x8xf32>
    %51 = tpu.matmul %48, %50, %cst_59 {dimension_numbers = #tpu.dot_dimension_numbers<[1], [0], [0], [1], [0, 0, 1, 1], [], []>} : vector<144x8xbf16>, vector<8x8xbf16>, vector<144x8xf32> -> vector<144x8xf32>
    %52 = arith.addf %47, %51 : vector<144x8xf32>
    %c19_60 = arith.constant 19 : index
    %c0_61 = arith.constant 0 : index
    %53 = vector.load %arg11[%c19_60, %c0_61] : memref<188x8xbf16, #tpu.memory_space<vmem>>, vector<144x8xbf16>
    %c4_62 = arith.constant 4 : index
    %c0_63 = arith.constant 0 : index
    %c0_64 = arith.constant 0 : index
    %54 = vector.load %arg5[%c4_62, %c0_63, %c0_64] : memref<9x8x8xbf16, #tpu.memory_space<vmem>>, vector<1x8x8xbf16>
    %55 = vector.shape_cast %54 : vector<1x8x8xbf16> to vector<8x8xbf16>
    %cst_65 = arith.constant dense<0.000000e+00> : vector<144x8xf32>
    %56 = tpu.matmul %53, %55, %cst_65 {dimension_numbers = #tpu.dot_dimension_numbers<[1], [0], [0], [1], [0, 0, 1, 1], [], []>} : vector<144x8xbf16>, vector<8x8xbf16>, vector<144x8xf32> -> vector<144x8xf32>
    %57 = arith.addf %52, %56 : vector<144x8xf32>
    %c20 = arith.constant 20 : index
    %c0_66 = arith.constant 0 : index
    %58 = vector.load %arg11[%c20, %c0_66] : memref<188x8xbf16, #tpu.memory_space<vmem>>, vector<144x8xbf16>
    %c5_67 = arith.constant 5 : index
    %c0_68 = arith.constant 0 : index
    %c0_69 = arith.constant 0 : index
    %59 = vector.load %arg5[%c5_67, %c0_68, %c0_69] : memref<9x8x8xbf16, #tpu.memory_space<vmem>>, vector<1x8x8xbf16>
    %60 = vector.shape_cast %59 : vector<1x8x8xbf16> to vector<8x8xbf16>
    %cst_70 = arith.constant dense<0.000000e+00> : vector<144x8xf32>
    %61 = tpu.matmul %58, %60, %cst_70 {dimension_numbers = #tpu.dot_dimension_numbers<[1], [0], [0], [1], [0, 0, 1, 1], [], []>} : vector<144x8xbf16>, vector<8x8xbf16>, vector<144x8xf32> -> vector<144x8xf32>
    %62 = arith.addf %57, %61 : vector<144x8xf32>
    %c36 = arith.constant 36 : index
    %c0_71 = arith.constant 0 : index
    %63 = vector.load %arg11[%c36, %c0_71] : memref<188x8xbf16, #tpu.memory_space<vmem>>, vector<144x8xbf16>
    %c6_72 = arith.constant 6 : index
    %c0_73 = arith.constant 0 : index
    %c0_74 = arith.constant 0 : index
    %64 = vector.load %arg5[%c6_72, %c0_73, %c0_74] : memref<9x8x8xbf16, #tpu.memory_space<vmem>>, vector<1x8x8xbf16>
    %65 = vector.shape_cast %64 : vector<1x8x8xbf16> to vector<8x8xbf16>
    %cst_75 = arith.constant dense<0.000000e+00> : vector<144x8xf32>
    %66 = tpu.matmul %63, %65, %cst_75 {dimension_numbers = #tpu.dot_dimension_numbers<[1], [0], [0], [1], [0, 0, 1, 1], [], []>} : vector<144x8xbf16>, vector<8x8xbf16>, vector<144x8xf32> -> vector<144x8xf32>
    %67 = arith.addf %62, %66 : vector<144x8xf32>
    %c37_76 = arith.constant 37 : index
    %c0_77 = arith.constant 0 : index
    %68 = vector.load %arg11[%c37_76, %c0_77] : memref<188x8xbf16, #tpu.memory_space<vmem>>, vector<144x8xbf16>
    %c7_78 = arith.constant 7 : index
    %c0_79 = arith.constant 0 : index
    %c0_80 = arith.constant 0 : index
    %69 = vector.load %arg5[%c7_78, %c0_79, %c0_80] : memref<9x8x8xbf16, #tpu.memory_space<vmem>>, vector<1x8x8xbf16>
    %70 = vector.shape_cast %69 : vector<1x8x8xbf16> to vector<8x8xbf16>
    %cst_81 = arith.constant dense<0.000000e+00> : vector<144x8xf32>
    %71 = tpu.matmul %68, %70, %cst_81 {dimension_numbers = #tpu.dot_dimension_numbers<[1], [0], [0], [1], [0, 0, 1, 1], [], []>} : vector<144x8xbf16>, vector<8x8xbf16>, vector<144x8xf32> -> vector<144x8xf32>
    %72 = arith.addf %67, %71 : vector<144x8xf32>
    %c38 = arith.constant 38 : index
    %c0_82 = arith.constant 0 : index
    %73 = vector.load %arg11[%c38, %c0_82] : memref<188x8xbf16, #tpu.memory_space<vmem>>, vector<144x8xbf16>
    %c8 = arith.constant 8 : index
    %c0_83 = arith.constant 0 : index
    %c0_84 = arith.constant 0 : index
    %74 = vector.load %arg5[%c8, %c0_83, %c0_84] : memref<9x8x8xbf16, #tpu.memory_space<vmem>>, vector<1x8x8xbf16>
    %75 = vector.shape_cast %74 : vector<1x8x8xbf16> to vector<8x8xbf16>
    %cst_85 = arith.constant dense<0.000000e+00> : vector<144x8xf32>
    %76 = tpu.matmul %73, %75, %cst_85 {dimension_numbers = #tpu.dot_dimension_numbers<[1], [0], [0], [1], [0, 0, 1, 1], [], []>} : vector<144x8xbf16>, vector<8x8xbf16>, vector<144x8xf32> -> vector<144x8xf32>
    %77 = arith.addf %72, %76 : vector<144x8xf32>
    %c0_86 = arith.constant 0 : index
    %c0_87 = arith.constant 0 : index
    %78 = vector.load %arg6[%c0_86, %c0_87] : memref<1x8xf32, #tpu.memory_space<vmem>>, vector<1x8xf32>
    %79 = vector.broadcast %78 : vector<1x8xf32> to vector<144x8xf32>
    %80 = arith.mulf %77, %79 : vector<144x8xf32>
    %c0_88 = arith.constant 0 : index
    %c0_89 = arith.constant 0 : index
    %81 = vector.load %arg7[%c0_88, %c0_89] : memref<1x8xf32, #tpu.memory_space<vmem>>, vector<1x8xf32>
    %82 = vector.broadcast %81 : vector<1x8xf32> to vector<144x8xf32>
    %83 = arith.addf %80, %82 : vector<144x8xf32>
    %84 = arith.negf %83 : vector<144x8xf32>
    %85 = math.exp %84 : vector<144x8xf32>
    %cst_90 = arith.constant 1.000000e+00 : f32
    %86 = vector.broadcast %cst_90 : f32 to vector<144x8xf32>
    %87 = arith.addf %86, %85 : vector<144x8xf32>
    %88 = arith.divf %86, %87 : vector<144x8xf32>
    %89 = arith.mulf %83, %88 : vector<144x8xf32>
    %90 = arith.truncf %89 : vector<144x8xf32> to vector<144x8xbf16>
    %91 = vector.extract_strided_slice %90 {offsets = [0, 0], sizes = [16, 8], strides = [1, 1]} : vector<144x8xbf16> to vector<16x8xbf16>
    %c0_91 = arith.constant 0 : index
    %c0_92 = arith.constant 0 : index
    %c0_93 = arith.constant 0 : index
    %c0_94 = arith.constant 0 : index
    %92 = vector.load %arg9[%c0_91, %c0_92, %c0_93, %c0_94] : memref<1x8x16x8xbf16, #tpu.memory_space<vmem>>, vector<1x1x16x8xbf16>
    %93 = vector.shape_cast %92 : vector<1x1x16x8xbf16> to vector<16x8xbf16>
    %94 = vector.shape_cast %91 : vector<16x8xbf16> to vector<1x1x16x8xbf16>
    tpu.vector_store %arg9[%c0_91, %c0_92, %c0_93, %c0_94], %94 {strides = array<i32>} : memref<1x8x16x8xbf16, #tpu.memory_space<vmem>>, vector<1x1x16x8xbf16>,
    %95 = vector.extract_strided_slice %90 {offsets = [18, 0], sizes = [16, 8], strides = [1, 1]} : vector<144x8xbf16> to vector<16x8xbf16>
    %c0_95 = arith.constant 0 : index
    %c1_96 = arith.constant 1 : index
    %c0_97 = arith.constant 0 : index
    %c0_98 = arith.constant 0 : index
    %96 = vector.load %arg9[%c0_95, %c1_96, %c0_97, %c0_98] : memref<1x8x16x8xbf16, #tpu.memory_space<vmem>>, vector<1x1x16x8xbf16>
    %97 = vector.shape_cast %96 : vector<1x1x16x8xbf16> to vector<16x8xbf16>
    %98 = vector.shape_cast %95 : vector<16x8xbf16> to vector<1x1x16x8xbf16>
    tpu.vector_store %arg9[%c0_95, %c1_96, %c0_97, %c0_98], %98 {strides = array<i32>} : memref<1x8x16x8xbf16, #tpu.memory_space<vmem>>, vector<1x1x16x8xbf16>,
    %99 = vector.extract_strided_slice %90 {offsets = [36, 0], sizes = [16, 8], strides = [1, 1]} : vector<144x8xbf16> to vector<16x8xbf16>
    %c0_99 = arith.constant 0 : index
    %c2_100 = arith.constant 2 : index
    %c0_101 = arith.constant 0 : index
    %c0_102 = arith.constant 0 : index
    %100 = vector.load %arg9[%c0_99, %c2_100, %c0_101, %c0_102] : memref<1x8x16x8xbf16, #tpu.memory_space<vmem>>, vector<1x1x16x8xbf16>
    %101 = vector.shape_cast %100 : vector<1x1x16x8xbf16> to vector<16x8xbf16>
    %102 = vector.shape_cast %99 : vector<16x8xbf16> to vector<1x1x16x8xbf16>
    tpu.vector_store %arg9[%c0_99, %c2_100, %c0_101, %c0_102], %102 {strides = array<i32>} : memref<1x8x16x8xbf16, #tpu.memory_space<vmem>>, vector<1x1x16x8xbf16>,
    %103 = vector.extract_strided_slice %90 {offsets = [54, 0], sizes = [16, 8], strides = [1, 1]} : vector<144x8xbf16> to vector<16x8xbf16>
    %c0_103 = arith.constant 0 : index
    %c3_104 = arith.constant 3 : index
    %c0_105 = arith.constant 0 : index
    %c0_106 = arith.constant 0 : index
    %104 = vector.load %arg9[%c0_103, %c3_104, %c0_105, %c0_106] : memref<1x8x16x8xbf16, #tpu.memory_space<vmem>>, vector<1x1x16x8xbf16>
    %105 = vector.shape_cast %104 : vector<1x1x16x8xbf16> to vector<16x8xbf16>
    %106 = vector.shape_cast %103 : vector<16x8xbf16> to vector<1x1x16x8xbf16>
    tpu.vector_store %arg9[%c0_103, %c3_104, %c0_105, %c0_106], %106 {strides = array<i32>} : memref<1x8x16x8xbf16, #tpu.memory_space<vmem>>, vector<1x1x16x8xbf16>,
    %107 = vector.extract_strided_slice %90 {offsets = [72, 0], sizes = [16, 8], strides = [1, 1]} : vector<144x8xbf16> to vector<16x8xbf16>
    %c0_107 = arith.constant 0 : index
    %c4_108 = arith.constant 4 : index
    %c0_109 = arith.constant 0 : index
    %c0_110 = arith.constant 0 : index
    %108 = vector.load %arg9[%c0_107, %c4_108, %c0_109, %c0_110] : memref<1x8x16x8xbf16, #tpu.memory_space<vmem>>, vector<1x1x16x8xbf16>
    %109 = vector.shape_cast %108 : vector<1x1x16x8xbf16> to vector<16x8xbf16>
    %110 = vector.shape_cast %107 : vector<16x8xbf16> to vector<1x1x16x8xbf16>
    tpu.vector_store %arg9[%c0_107, %c4_108, %c0_109, %c0_110], %110 {strides = array<i32>} : memref<1x8x16x8xbf16, #tpu.memory_space<vmem>>, vector<1x1x16x8xbf16>,
    %111 = vector.extract_strided_slice %90 {offsets = [90, 0], sizes = [16, 8], strides = [1, 1]} : vector<144x8xbf16> to vector<16x8xbf16>
    %c0_111 = arith.constant 0 : index
    %c5_112 = arith.constant 5 : index
    %c0_113 = arith.constant 0 : index
    %c0_114 = arith.constant 0 : index
    %112 = vector.load %arg9[%c0_111, %c5_112, %c0_113, %c0_114] : memref<1x8x16x8xbf16, #tpu.memory_space<vmem>>, vector<1x1x16x8xbf16>
    %113 = vector.shape_cast %112 : vector<1x1x16x8xbf16> to vector<16x8xbf16>
    %114 = vector.shape_cast %111 : vector<16x8xbf16> to vector<1x1x16x8xbf16>
    tpu.vector_store %arg9[%c0_111, %c5_112, %c0_113, %c0_114], %114 {strides = array<i32>} : memref<1x8x16x8xbf16, #tpu.memory_space<vmem>>, vector<1x1x16x8xbf16>,
    %115 = vector.extract_strided_slice %90 {offsets = [108, 0], sizes = [16, 8], strides = [1, 1]} : vector<144x8xbf16> to vector<16x8xbf16>
    %c0_115 = arith.constant 0 : index
    %c6_116 = arith.constant 6 : index
    %c0_117 = arith.constant 0 : index
    %c0_118 = arith.constant 0 : index
    %116 = vector.load %arg9[%c0_115, %c6_116, %c0_117, %c0_118] : memref<1x8x16x8xbf16, #tpu.memory_space<vmem>>, vector<1x1x16x8xbf16>
    %117 = vector.shape_cast %116 : vector<1x1x16x8xbf16> to vector<16x8xbf16>
    %118 = vector.shape_cast %115 : vector<16x8xbf16> to vector<1x1x16x8xbf16>
    tpu.vector_store %arg9[%c0_115, %c6_116, %c0_117, %c0_118], %118 {strides = array<i32>} : memref<1x8x16x8xbf16, #tpu.memory_space<vmem>>, vector<1x1x16x8xbf16>,
    %119 = vector.extract_strided_slice %90 {offsets = [126, 0], sizes = [16, 8], strides = [1, 1]} : vector<144x8xbf16> to vector<16x8xbf16>
    %c0_119 = arith.constant 0 : index
    %c7_120 = arith.constant 7 : index
    %c0_121 = arith.constant 0 : index
    %c0_122 = arith.constant 0 : index
    %120 = vector.load %arg9[%c0_119, %c7_120, %c0_121, %c0_122] : memref<1x8x16x8xbf16, #tpu.memory_space<vmem>>, vector<1x1x16x8xbf16>
    %121 = vector.shape_cast %120 : vector<1x1x16x8xbf16> to vector<16x8xbf16>
    %122 = vector.shape_cast %119 : vector<16x8xbf16> to vector<1x1x16x8xbf16>
    tpu.vector_store %arg9[%c0_119, %c7_120, %c0_121, %c0_122], %122 {strides = array<i32>} : memref<1x8x16x8xbf16, #tpu.memory_space<vmem>>, vector<1x1x16x8xbf16>,
    %c0_123 = arith.constant 0 : index
    %c0_124 = arith.constant 0 : index
    %c0_125 = arith.constant 0 : index
    %123 = vector.load %arg8[%c0_123, %c0_124, %c0_125] : memref<1x25x144xbf16, #tpu.memory_space<vmem>>, vector<1x25x144xbf16>
    %124 = vector.shape_cast %123 : vector<1x25x144xbf16> to vector<25x144xbf16>
    %cst_126 = arith.constant dense<0.000000e+00> : vector<25x8xf32>
    %125 = tpu.matmul %124, %90, %cst_126 {dimension_numbers = #tpu.dot_dimension_numbers<[1], [0], [0], [1], [0, 0, 1, 1], [], []>} : vector<25x144xbf16>, vector<144x8xbf16>, vector<25x8xf32> -> vector<25x8xf32>
    %c0_i32_127 = arith.constant 0 : i32
    %126 = arith.cmpi eq, %arg1, %c0_i32_127 : i32
    %127 = arith.extui %126 : i1 to i32
    %c0_i32_128 = arith.constant 0 : i32
    %128 = arith.cmpi ne, %127, %c0_i32_128 : i32
    scf.if %128 {
      %cst_135 = arith.constant 0.000000e+00 : f32
      %135 = vector.broadcast %cst_135 : f32 to vector<1x25x8xf32>
      %c0_136 = arith.constant 0 : index
      %c0_137 = arith.constant 0 : index
      %c0_138 = arith.constant 0 : index
      %136 = vector.load %arg10[%c0_136, %c0_137, %c0_138] : memref<1x25x8xf32, #tpu.memory_space<vmem>>, vector<1x25x8xf32>
      tpu.vector_store %arg10[%c0_136, %c0_137, %c0_138], %135 {strides = array<i32>} : memref<1x25x8xf32, #tpu.memory_space<vmem>>, vector<1x25x8xf32>,
    } else {
    }
    %c0_129 = arith.constant 0 : index
    %c0_130 = arith.constant 0 : index
    %c0_131 = arith.constant 0 : index
    %129 = vector.load %arg10[%c0_129, %c0_130, %c0_131] : memref<1x25x8xf32, #tpu.memory_space<vmem>>, vector<1x25x8xf32>
    %130 = vector.shape_cast %129 : vector<1x25x8xf32> to vector<25x8xf32>
    %131 = arith.addf %130, %125 : vector<25x8xf32>
    %c0_132 = arith.constant 0 : index
    %c0_133 = arith.constant 0 : index
    %c0_134 = arith.constant 0 : index
    %132 = vector.load %arg10[%c0_132, %c0_133, %c0_134] : memref<1x25x8xf32, #tpu.memory_space<vmem>>, vector<1x25x8xf32>
    %133 = vector.shape_cast %132 : vector<1x25x8xf32> to vector<25x8xf32>
    %134 = vector.shape_cast %131 : vector<25x8xf32> to vector<1x25x8xf32>
    tpu.vector_store %arg10[%c0_132, %c0_133, %c0_134], %134 {strides = array<i32>} : memref<1x25x8xf32, #tpu.memory_space<vmem>>, vector<1x25x8xf32>,
    return
  }
  func.func @transform_0(%arg0: i32, %arg1: i32) -> (i32, i32, i32, i32) {
    %c0_i32 = arith.constant 0 : i32
    %c0_i32_0 = arith.constant 0 : i32
    %c0_i32_1 = arith.constant 0 : i32
    return %arg0, %arg1, %c0_i32, %c0_i32_0 : i32, i32, i32, i32
  }
  func.func @transform_1(%arg0: i32, %arg1: i32) -> (i32, i32, i32, i32) {
    %c8_i32 = arith.constant 8 : i32
    %0 = arith.muli %arg1, %c8_i32 : i32
    %c1_i32 = arith.constant 1 : i32
    %1 = arith.subi %0, %c1_i32 : i32
    %c0_i32 = arith.constant 0 : i32
    %2 = arith.maxsi %1, %c0_i32 : i32
    %c0_i32_0 = arith.constant 0 : i32
    %c0_i32_1 = arith.constant 0 : i32
    %c0_i32_2 = arith.constant 0 : i32
    return %arg0, %2, %c0_i32_0, %c0_i32_1 : i32, i32, i32, i32
  }
  func.func @transform_2(%arg0: i32, %arg1: i32) -> (i32, i32, i32, i32) {
    %c8_i32 = arith.constant 8 : i32
    %0 = arith.muli %arg1, %c8_i32 : i32
    %c8_i32_0 = arith.constant 8 : i32
    %1 = arith.addi %0, %c8_i32_0 : i32
    %c15_i32 = arith.constant 15 : i32
    %2 = arith.minsi %1, %c15_i32 : i32
    %c0_i32 = arith.constant 0 : i32
    %c0_i32_1 = arith.constant 0 : i32
    %c0_i32_2 = arith.constant 0 : i32
    return %arg0, %2, %c0_i32, %c0_i32_1 : i32, i32, i32, i32
  }
  func.func @transform_3(%arg0: i32, %arg1: i32) -> (i32, i32, i32) {
    %c0_i32 = arith.constant 0 : i32
    %c0_i32_0 = arith.constant 0 : i32
    %c0_i32_1 = arith.constant 0 : i32
    %c0_i32_2 = arith.constant 0 : i32
    return %c0_i32, %c0_i32_0, %c0_i32_1 : i32, i32, i32
  }
  func.func @transform_4(%arg0: i32, %arg1: i32) -> (i32, i32) {
    %c0_i32 = arith.constant 0 : i32
    %c0_i32_0 = arith.constant 0 : i32
    %c0_i32_1 = arith.constant 0 : i32
    return %c0_i32, %c0_i32_0 : i32, i32
  }
  func.func @transform_5(%arg0: i32, %arg1: i32) -> (i32, i32) {
    %c0_i32 = arith.constant 0 : i32
    %c0_i32_0 = arith.constant 0 : i32
    %c0_i32_1 = arith.constant 0 : i32
    return %c0_i32, %c0_i32_0 : i32, i32
  }
  func.func @transform_6(%arg0: i32, %arg1: i32) -> (i32, i32, i32) {
    %c0_i32 = arith.constant 0 : i32
    %c0_i32_0 = arith.constant 0 : i32
    %c0_i32_1 = arith.constant 0 : i32
    return %arg1, %c0_i32, %c0_i32_0 : i32, i32, i32
  }
  func.func @transform_7(%arg0: i32, %arg1: i32) -> (i32, i32, i32, i32) {
    %c0_i32 = arith.constant 0 : i32
    %c0_i32_0 = arith.constant 0 : i32
    %c0_i32_1 = arith.constant 0 : i32
    return %arg0, %arg1, %c0_i32, %c0_i32_0 : i32, i32, i32, i32
  }
  func.func @transform_8(%arg0: i32, %arg1: i32) -> (i32, i32, i32) {
    %c0_i32 = arith.constant 0 : i32
    %c0_i32_0 = arith.constant 0 : i32
    %c0_i32_1 = arith.constant 0 : i32
    return %arg0, %c0_i32, %c0_i32_0 : i32, i32, i32
  }
}

module attributes {stable_mosaic.version = 11 : i64} {
  func.func @_matmul_bn_silu_kernel(%arg0: i32, %arg1: i32, %arg2: i32, %arg3: memref<512x16xbf16, #tpu.memory_space<vmem>>, %arg4: memref<16x16xbf16, #tpu.memory_space<vmem>>, %arg5: memref<1x16xf32, #tpu.memory_space<vmem>>, %arg6: memref<1x16xf32, #tpu.memory_space<vmem>>, %arg7: memref<512x16xbf16, #tpu.memory_space<vmem>>, %arg8: memref<512x16xf32, #tpu.memory_space<vmem>>) attributes {dimension_semantics = [#tpu.dimension_semantics<parallel>, #tpu.dimension_semantics<parallel>, #tpu.dimension_semantics<arbitrary>], iteration_bounds = array<i64: 1, 1, 1>, scalar_prefetch = 0 : i64, scratch_operands = 1 : i64, tpu.core_type = #tpu.core_type<tc>, window_params = [{transform_indices = @transform_0, window_bounds = array<i64: 512, 16>}, {transform_indices = @transform_1, window_bounds = array<i64: 16, 16>}, {transform_indices = @transform_2, window_bounds = array<i64: 1, 16>}, {transform_indices = @transform_3, window_bounds = array<i64: 1, 16>}, {transform_indices = @transform_4, window_bounds = array<i64: 512, 16>}]} {
    %c0_i32 = arith.constant 0 : i32
    %0 = arith.cmpi eq, %arg2, %c0_i32 : i32
    %1 = arith.extui %0 : i1 to i32
    %c0_i32_0 = arith.constant 0 : i32
    %2 = arith.cmpi ne, %1, %c0_i32_0 : i32
    scf.if %2 {
      %cst_10 = arith.constant 0.000000e+00 : f32
      %12 = vector.broadcast %cst_10 : f32 to vector<512x16xf32>
      %c0_11 = arith.constant 0 : index
      %c0_12 = arith.constant 0 : index
      %13 = vector.load %arg8[%c0_11, %c0_12] : memref<512x16xf32, #tpu.memory_space<vmem>>, vector<512x16xf32>
      tpu.vector_store %arg8[%c0_11, %c0_12], %12 {strides = array<i32>} : memref<512x16xf32, #tpu.memory_space<vmem>>, vector<512x16xf32>,
    } else {
    }
    %c0 = arith.constant 0 : index
    %c0_1 = arith.constant 0 : index
    %3 = vector.load %arg8[%c0, %c0_1] : memref<512x16xf32, #tpu.memory_space<vmem>>, vector<512x16xf32>
    %c0_2 = arith.constant 0 : index
    %c0_3 = arith.constant 0 : index
    %4 = vector.load %arg3[%c0_2, %c0_3] : memref<512x16xbf16, #tpu.memory_space<vmem>>, vector<512x16xbf16>
    %c0_4 = arith.constant 0 : index
    %c0_5 = arith.constant 0 : index
    %5 = vector.load %arg4[%c0_4, %c0_5] : memref<16x16xbf16, #tpu.memory_space<vmem>>, vector<16x16xbf16>
    %cst = arith.constant dense<0.000000e+00> : vector<512x16xf32>
    %6 = tpu.matmul %4, %5, %cst {dimension_numbers = #tpu.dot_dimension_numbers<[1], [0], [0], [1], [0, 0, 1, 1], [], []>} : vector<512x16xbf16>, vector<16x16xbf16>, vector<512x16xf32> -> vector<512x16xf32>
    %7 = arith.addf %3, %6 : vector<512x16xf32>
    %c0_6 = arith.constant 0 : index
    %c0_7 = arith.constant 0 : index
    %8 = vector.load %arg8[%c0_6, %c0_7] : memref<512x16xf32, #tpu.memory_space<vmem>>, vector<512x16xf32>
    tpu.vector_store %arg8[%c0_6, %c0_7], %7 {strides = array<i32>} : memref<512x16xf32, #tpu.memory_space<vmem>>, vector<512x16xf32>,
    %c0_i32_8 = arith.constant 0 : i32
    %9 = arith.cmpi eq, %arg2, %c0_i32_8 : i32
    %10 = arith.extui %9 : i1 to i32
    %c0_i32_9 = arith.constant 0 : i32
    %11 = arith.cmpi ne, %10, %c0_i32_9 : i32
    scf.if %11 {
      %c0_10 = arith.constant 0 : index
      %c0_11 = arith.constant 0 : index
      %12 = vector.load %arg8[%c0_10, %c0_11] : memref<512x16xf32, #tpu.memory_space<vmem>>, vector<512x16xf32>
      %c0_12 = arith.constant 0 : index
      %c0_13 = arith.constant 0 : index
      %13 = vector.load %arg5[%c0_12, %c0_13] : memref<1x16xf32, #tpu.memory_space<vmem>>, vector<1x16xf32>
      %14 = vector.broadcast %13 : vector<1x16xf32> to vector<512x16xf32>
      %15 = arith.mulf %12, %14 : vector<512x16xf32>
      %c0_14 = arith.constant 0 : index
      %c0_15 = arith.constant 0 : index
      %16 = vector.load %arg6[%c0_14, %c0_15] : memref<1x16xf32, #tpu.memory_space<vmem>>, vector<1x16xf32>
      %17 = vector.broadcast %16 : vector<1x16xf32> to vector<512x16xf32>
      %18 = arith.addf %15, %17 : vector<512x16xf32>
      %19 = arith.negf %18 : vector<512x16xf32>
      %20 = math.exp %19 : vector<512x16xf32>
      %cst_16 = arith.constant 1.000000e+00 : f32
      %21 = vector.broadcast %cst_16 : f32 to vector<512x16xf32>
      %22 = arith.addf %21, %20 : vector<512x16xf32>
      %23 = arith.divf %21, %22 : vector<512x16xf32>
      %24 = arith.mulf %18, %23 : vector<512x16xf32>
      %25 = arith.truncf %24 : vector<512x16xf32> to vector<512x16xbf16>
      %c0_17 = arith.constant 0 : index
      %c0_18 = arith.constant 0 : index
      %26 = vector.load %arg7[%c0_17, %c0_18] : memref<512x16xbf16, #tpu.memory_space<vmem>>, vector<512x16xbf16>
      tpu.vector_store %arg7[%c0_17, %c0_18], %25 {strides = array<i32>} : memref<512x16xbf16, #tpu.memory_space<vmem>>, vector<512x16xbf16>,
    } else {
    }
    return
  }
  func.func @transform_0(%arg0: i32, %arg1: i32, %arg2: i32) -> (i32, i32) {
    %c0_i32 = arith.constant 0 : i32
    return %arg0, %arg2 : i32, i32
  }
  func.func @transform_1(%arg0: i32, %arg1: i32, %arg2: i32) -> (i32, i32) {
    %c0_i32 = arith.constant 0 : i32
    return %arg2, %arg1 : i32, i32
  }
  func.func @transform_2(%arg0: i32, %arg1: i32, %arg2: i32) -> (i32, i32) {
    %c0_i32 = arith.constant 0 : i32
    %c0_i32_0 = arith.constant 0 : i32
    return %c0_i32, %arg1 : i32, i32
  }
  func.func @transform_3(%arg0: i32, %arg1: i32, %arg2: i32) -> (i32, i32) {
    %c0_i32 = arith.constant 0 : i32
    %c0_i32_0 = arith.constant 0 : i32
    return %c0_i32, %arg1 : i32, i32
  }
  func.func @transform_4(%arg0: i32, %arg1: i32, %arg2: i32) -> (i32, i32) {
    %c0_i32 = arith.constant 0 : i32
    return %arg0, %arg1 : i32, i32
  }
}

module attributes {stable_mosaic.version = 11 : i64} {
  func.func @_conv3x3_kernel(%arg0: i32, %arg1: i32, %arg2: memref<1x8x16x8xbf16, #tpu.memory_space<vmem>>, %arg3: memref<1x1x16x8xbf16, #tpu.memory_space<vmem>>, %arg4: memref<1x1x16x8xbf16, #tpu.memory_space<vmem>>, %arg5: memref<9x8x8xbf16, #tpu.memory_space<vmem>>, %arg6: memref<1x8xf32, #tpu.memory_space<vmem>>, %arg7: memref<1x8xf32, #tpu.memory_space<vmem>>, %arg8: memref<1x8x16x8xbf16, #tpu.memory_space<vmem>>, %arg9: memref<188x8xbf16, #tpu.memory_space<vmem>>) attributes {dimension_semantics = [#tpu.dimension_semantics<parallel>, #tpu.dimension_semantics<parallel>], iteration_bounds = array<i64: 2, 2>, scalar_prefetch = 0 : i64, scratch_operands = 1 : i64, tpu.core_type = #tpu.core_type<tc>, window_params = [{transform_indices = @transform_0, window_bounds = array<i64: 1, 8, 16, 8>}, {transform_indices = @transform_1, window_bounds = array<i64: 1, 1, 16, 8>}, {transform_indices = @transform_2, window_bounds = array<i64: 1, 1, 16, 8>}, {pipeline_mode = #tpu.pipeline_mode<synchronous>, transform_indices = @transform_3, window_bounds = array<i64: 9, 8, 8>}, {pipeline_mode = #tpu.pipeline_mode<synchronous>, transform_indices = @transform_4, window_bounds = array<i64: 1, 8>}, {pipeline_mode = #tpu.pipeline_mode<synchronous>, transform_indices = @transform_5, window_bounds = array<i64: 1, 8>}, {transform_indices = @transform_6, window_bounds = array<i64: 1, 8, 16, 8>}]} {
    %cst = arith.constant 0.000000e+00 : bf16
    %0 = vector.broadcast %cst : bf16 to vector<188x8xbf16>
    %c0 = arith.constant 0 : index
    %c0_0 = arith.constant 0 : index
    %1 = vector.load %arg9[%c0, %c0_0] : memref<188x8xbf16, #tpu.memory_space<vmem>>, vector<188x8xbf16>
    tpu.vector_store %arg9[%c0, %c0_0], %0 {strides = array<i32>} : memref<188x8xbf16, #tpu.memory_space<vmem>>, vector<188x8xbf16>,
    %c0_i32 = arith.constant 0 : i32
    %2 = arith.cmpi sgt, %arg1, %c0_i32 : i32
    %3 = arith.extui %2 : i1 to i32
    %c0_i32_1 = arith.constant 0 : i32
    %4 = arith.cmpi ne, %3, %c0_i32_1 : i32
    scf.if %4 {
      %c0_123 = arith.constant 0 : index
      %c0_124 = arith.constant 0 : index
      %c0_125 = arith.constant 0 : index
      %c0_126 = arith.constant 0 : index
      %123 = vector.load %arg3[%c0_123, %c0_124, %c0_125, %c0_126] : memref<1x1x16x8xbf16, #tpu.memory_space<vmem>>, vector<1x1x16x8xbf16>
      %124 = vector.shape_cast %123 : vector<1x1x16x8xbf16> to vector<16x8xbf16>
      %c1_127 = arith.constant 1 : index
      %c0_128 = arith.constant 0 : index
      %125 = vector.load %arg9[%c1_127, %c0_128] : memref<188x8xbf16, #tpu.memory_space<vmem>>, vector<16x8xbf16>
      tpu.vector_store %arg9[%c1_127, %c0_128], %124 {strides = array<i32>} : memref<188x8xbf16, #tpu.memory_space<vmem>>, vector<16x8xbf16>,
    } else {
    }
    %c0_2 = arith.constant 0 : index
    %c0_3 = arith.constant 0 : index
    %c0_4 = arith.constant 0 : index
    %c0_5 = arith.constant 0 : index
    %5 = vector.load %arg2[%c0_2, %c0_3, %c0_4, %c0_5] : memref<1x8x16x8xbf16, #tpu.memory_space<vmem>>, vector<1x1x16x8xbf16>
    %6 = vector.shape_cast %5 : vector<1x1x16x8xbf16> to vector<16x8xbf16>
    %c19 = arith.constant 19 : index
    %c0_6 = arith.constant 0 : index
    %7 = vector.load %arg9[%c19, %c0_6] : memref<188x8xbf16, #tpu.memory_space<vmem>>, vector<16x8xbf16>
    tpu.vector_store %arg9[%c19, %c0_6], %6 {strides = array<i32>} : memref<188x8xbf16, #tpu.memory_space<vmem>>, vector<16x8xbf16>,
    %c0_7 = arith.constant 0 : index
    %c1 = arith.constant 1 : index
    %c0_8 = arith.constant 0 : index
    %c0_9 = arith.constant 0 : index
    %8 = vector.load %arg2[%c0_7, %c1, %c0_8, %c0_9] : memref<1x8x16x8xbf16, #tpu.memory_space<vmem>>, vector<1x1x16x8xbf16>
    %9 = vector.shape_cast %8 : vector<1x1x16x8xbf16> to vector<16x8xbf16>
    %c37 = arith.constant 37 : index
    %c0_10 = arith.constant 0 : index
    %10 = vector.load %arg9[%c37, %c0_10] : memref<188x8xbf16, #tpu.memory_space<vmem>>, vector<16x8xbf16>
    tpu.vector_store %arg9[%c37, %c0_10], %9 {strides = array<i32>} : memref<188x8xbf16, #tpu.memory_space<vmem>>, vector<16x8xbf16>,
    %c0_11 = arith.constant 0 : index
    %c2 = arith.constant 2 : index
    %c0_12 = arith.constant 0 : index
    %c0_13 = arith.constant 0 : index
    %11 = vector.load %arg2[%c0_11, %c2, %c0_12, %c0_13] : memref<1x8x16x8xbf16, #tpu.memory_space<vmem>>, vector<1x1x16x8xbf16>
    %12 = vector.shape_cast %11 : vector<1x1x16x8xbf16> to vector<16x8xbf16>
    %c55 = arith.constant 55 : index
    %c0_14 = arith.constant 0 : index
    %13 = vector.load %arg9[%c55, %c0_14] : memref<188x8xbf16, #tpu.memory_space<vmem>>, vector<16x8xbf16>
    tpu.vector_store %arg9[%c55, %c0_14], %12 {strides = array<i32>} : memref<188x8xbf16, #tpu.memory_space<vmem>>, vector<16x8xbf16>,
    %c0_15 = arith.constant 0 : index
    %c3 = arith.constant 3 : index
    %c0_16 = arith.constant 0 : index
    %c0_17 = arith.constant 0 : index
    %14 = vector.load %arg2[%c0_15, %c3, %c0_16, %c0_17] : memref<1x8x16x8xbf16, #tpu.memory_space<vmem>>, vector<1x1x16x8xbf16>
    %15 = vector.shape_cast %14 : vector<1x1x16x8xbf16> to vector<16x8xbf16>
    %c73 = arith.constant 73 : index
    %c0_18 = arith.constant 0 : index
    %16 = vector.load %arg9[%c73, %c0_18] : memref<188x8xbf16, #tpu.memory_space<vmem>>, vector<16x8xbf16>
    tpu.vector_store %arg9[%c73, %c0_18], %15 {strides = array<i32>} : memref<188x8xbf16, #tpu.memory_space<vmem>>, vector<16x8xbf16>,
    %c0_19 = arith.constant 0 : index
    %c4 = arith.constant 4 : index
    %c0_20 = arith.constant 0 : index
    %c0_21 = arith.constant 0 : index
    %17 = vector.load %arg2[%c0_19, %c4, %c0_20, %c0_21] : memref<1x8x16x8xbf16, #tpu.memory_space<vmem>>, vector<1x1x16x8xbf16>
    %18 = vector.shape_cast %17 : vector<1x1x16x8xbf16> to vector<16x8xbf16>
    %c91 = arith.constant 91 : index
    %c0_22 = arith.constant 0 : index
    %19 = vector.load %arg9[%c91, %c0_22] : memref<188x8xbf16, #tpu.memory_space<vmem>>, vector<16x8xbf16>
    tpu.vector_store %arg9[%c91, %c0_22], %18 {strides = array<i32>} : memref<188x8xbf16, #tpu.memory_space<vmem>>, vector<16x8xbf16>,
    %c0_23 = arith.constant 0 : index
    %c5 = arith.constant 5 : index
    %c0_24 = arith.constant 0 : index
    %c0_25 = arith.constant 0 : index
    %20 = vector.load %arg2[%c0_23, %c5, %c0_24, %c0_25] : memref<1x8x16x8xbf16, #tpu.memory_space<vmem>>, vector<1x1x16x8xbf16>
    %21 = vector.shape_cast %20 : vector<1x1x16x8xbf16> to vector<16x8xbf16>
    %c109 = arith.constant 109 : index
    %c0_26 = arith.constant 0 : index
    %22 = vector.load %arg9[%c109, %c0_26] : memref<188x8xbf16, #tpu.memory_space<vmem>>, vector<16x8xbf16>
    tpu.vector_store %arg9[%c109, %c0_26], %21 {strides = array<i32>} : memref<188x8xbf16, #tpu.memory_space<vmem>>, vector<16x8xbf16>,
    %c0_27 = arith.constant 0 : index
    %c6 = arith.constant 6 : index
    %c0_28 = arith.constant 0 : index
    %c0_29 = arith.constant 0 : index
    %23 = vector.load %arg2[%c0_27, %c6, %c0_28, %c0_29] : memref<1x8x16x8xbf16, #tpu.memory_space<vmem>>, vector<1x1x16x8xbf16>
    %24 = vector.shape_cast %23 : vector<1x1x16x8xbf16> to vector<16x8xbf16>
    %c127 = arith.constant 127 : index
    %c0_30 = arith.constant 0 : index
    %25 = vector.load %arg9[%c127, %c0_30] : memref<188x8xbf16, #tpu.memory_space<vmem>>, vector<16x8xbf16>
    tpu.vector_store %arg9[%c127, %c0_30], %24 {strides = array<i32>} : memref<188x8xbf16, #tpu.memory_space<vmem>>, vector<16x8xbf16>,
    %c0_31 = arith.constant 0 : index
    %c7 = arith.constant 7 : index
    %c0_32 = arith.constant 0 : index
    %c0_33 = arith.constant 0 : index
    %26 = vector.load %arg2[%c0_31, %c7, %c0_32, %c0_33] : memref<1x8x16x8xbf16, #tpu.memory_space<vmem>>, vector<1x1x16x8xbf16>
    %27 = vector.shape_cast %26 : vector<1x1x16x8xbf16> to vector<16x8xbf16>
    %c145 = arith.constant 145 : index
    %c0_34 = arith.constant 0 : index
    %28 = vector.load %arg9[%c145, %c0_34] : memref<188x8xbf16, #tpu.memory_space<vmem>>, vector<16x8xbf16>
    tpu.vector_store %arg9[%c145, %c0_34], %27 {strides = array<i32>} : memref<188x8xbf16, #tpu.memory_space<vmem>>, vector<16x8xbf16>,
    %c1_i32 = arith.constant 1 : i32
    %29 = arith.cmpi slt, %arg1, %c1_i32 : i32
    %30 = arith.extui %29 : i1 to i32
    %c0_i32_35 = arith.constant 0 : i32
    %31 = arith.cmpi ne, %30, %c0_i32_35 : i32
    scf.if %31 {
      %c0_123 = arith.constant 0 : index
      %c0_124 = arith.constant 0 : index
      %c0_125 = arith.constant 0 : index
      %c0_126 = arith.constant 0 : index
      %123 = vector.load %arg4[%c0_123, %c0_124, %c0_125, %c0_126] : memref<1x1x16x8xbf16, #tpu.memory_space<vmem>>, vector<1x1x16x8xbf16>
      %124 = vector.shape_cast %123 : vector<1x1x16x8xbf16> to vector<16x8xbf16>
      %c163 = arith.constant 163 : index
      %c0_127 = arith.constant 0 : index
      %125 = vector.load %arg9[%c163, %c0_127] : memref<188x8xbf16, #tpu.memory_space<vmem>>, vector<16x8xbf16>
      tpu.vector_store %arg9[%c163, %c0_127], %124 {strides = array<i32>} : memref<188x8xbf16, #tpu.memory_space<vmem>>, vector<16x8xbf16>,
    } else {
    }
    %cst_36 = arith.constant 0.000000e+00 : f32
    %32 = vector.broadcast %cst_36 : f32 to vector<144x8xf32>
    %c0_37 = arith.constant 0 : index
    %c0_38 = arith.constant 0 : index
    %33 = vector.load %arg9[%c0_37, %c0_38] : memref<188x8xbf16, #tpu.memory_space<vmem>>, vector<144x8xbf16>
    %c0_39 = arith.constant 0 : index
    %c0_40 = arith.constant 0 : index
    %c0_41 = arith.constant 0 : index
    %34 = vector.load %arg5[%c0_39, %c0_40, %c0_41] : memref<9x8x8xbf16, #tpu.memory_space<vmem>>, vector<1x8x8xbf16>
    %35 = vector.shape_cast %34 : vector<1x8x8xbf16> to vector<8x8xbf16>
    %cst_42 = arith.constant dense<0.000000e+00> : vector<144x8xf32>
    %36 = tpu.matmul %33, %35, %cst_42 {dimension_numbers = #tpu.dot_dimension_numbers<[1], [0], [0], [1], [0, 0, 1, 1], [], []>} : vector<144x8xbf16>, vector<8x8xbf16>, vector<144x8xf32> -> vector<144x8xf32>
    %37 = arith.addf %32, %36 : vector<144x8xf32>
    %c1_43 = arith.constant 1 : index
    %c0_44 = arith.constant 0 : index
    %38 = vector.load %arg9[%c1_43, %c0_44] : memref<188x8xbf16, #tpu.memory_space<vmem>>, vector<144x8xbf16>
    %c1_45 = arith.constant 1 : index
    %c0_46 = arith.constant 0 : index
    %c0_47 = arith.constant 0 : index
    %39 = vector.load %arg5[%c1_45, %c0_46, %c0_47] : memref<9x8x8xbf16, #tpu.memory_space<vmem>>, vector<1x8x8xbf16>
    %40 = vector.shape_cast %39 : vector<1x8x8xbf16> to vector<8x8xbf16>
    %cst_48 = arith.constant dense<0.000000e+00> : vector<144x8xf32>
    %41 = tpu.matmul %38, %40, %cst_48 {dimension_numbers = #tpu.dot_dimension_numbers<[1], [0], [0], [1], [0, 0, 1, 1], [], []>} : vector<144x8xbf16>, vector<8x8xbf16>, vector<144x8xf32> -> vector<144x8xf32>
    %42 = arith.addf %37, %41 : vector<144x8xf32>
    %c2_49 = arith.constant 2 : index
    %c0_50 = arith.constant 0 : index
    %43 = vector.load %arg9[%c2_49, %c0_50] : memref<188x8xbf16, #tpu.memory_space<vmem>>, vector<144x8xbf16>
    %c2_51 = arith.constant 2 : index
    %c0_52 = arith.constant 0 : index
    %c0_53 = arith.constant 0 : index
    %44 = vector.load %arg5[%c2_51, %c0_52, %c0_53] : memref<9x8x8xbf16, #tpu.memory_space<vmem>>, vector<1x8x8xbf16>
    %45 = vector.shape_cast %44 : vector<1x8x8xbf16> to vector<8x8xbf16>
    %cst_54 = arith.constant dense<0.000000e+00> : vector<144x8xf32>
    %46 = tpu.matmul %43, %45, %cst_54 {dimension_numbers = #tpu.dot_dimension_numbers<[1], [0], [0], [1], [0, 0, 1, 1], [], []>} : vector<144x8xbf16>, vector<8x8xbf16>, vector<144x8xf32> -> vector<144x8xf32>
    %47 = arith.addf %42, %46 : vector<144x8xf32>
    %c18 = arith.constant 18 : index
    %c0_55 = arith.constant 0 : index
    %48 = vector.load %arg9[%c18, %c0_55] : memref<188x8xbf16, #tpu.memory_space<vmem>>, vector<144x8xbf16>
    %c3_56 = arith.constant 3 : index
    %c0_57 = arith.constant 0 : index
    %c0_58 = arith.constant 0 : index
    %49 = vector.load %arg5[%c3_56, %c0_57, %c0_58] : memref<9x8x8xbf16, #tpu.memory_space<vmem>>, vector<1x8x8xbf16>
    %50 = vector.shape_cast %49 : vector<1x8x8xbf16> to vector<8x8xbf16>
    %cst_59 = arith.constant dense<0.000000e+00> : vector<144x8xf32>
    %51 = tpu.matmul %48, %50, %cst_59 {dimension_numbers = #tpu.dot_dimension_numbers<[1], [0], [0], [1], [0, 0, 1, 1], [], []>} : vector<144x8xbf16>, vector<8x8xbf16>, vector<144x8xf32> -> vector<144x8xf32>
    %52 = arith.addf %47, %51 : vector<144x8xf32>
    %c19_60 = arith.constant 19 : index
    %c0_61 = arith.constant 0 : index
    %53 = vector.load %arg9[%c19_60, %c0_61] : memref<188x8xbf16, #tpu.memory_space<vmem>>, vector<144x8xbf16>
    %c4_62 = arith.constant 4 : index
    %c0_63 = arith.constant 0 : index
    %c0_64 = arith.constant 0 : index
    %54 = vector.load %arg5[%c4_62, %c0_63, %c0_64] : memref<9x8x8xbf16, #tpu.memory_space<vmem>>, vector<1x8x8xbf16>
    %55 = vector.shape_cast %54 : vector<1x8x8xbf16> to vector<8x8xbf16>
    %cst_65 = arith.constant dense<0.000000e+00> : vector<144x8xf32>
    %56 = tpu.matmul %53, %55, %cst_65 {dimension_numbers = #tpu.dot_dimension_numbers<[1], [0], [0], [1], [0, 0, 1, 1], [], []>} : vector<144x8xbf16>, vector<8x8xbf16>, vector<144x8xf32> -> vector<144x8xf32>
    %57 = arith.addf %52, %56 : vector<144x8xf32>
    %c20 = arith.constant 20 : index
    %c0_66 = arith.constant 0 : index
    %58 = vector.load %arg9[%c20, %c0_66] : memref<188x8xbf16, #tpu.memory_space<vmem>>, vector<144x8xbf16>
    %c5_67 = arith.constant 5 : index
    %c0_68 = arith.constant 0 : index
    %c0_69 = arith.constant 0 : index
    %59 = vector.load %arg5[%c5_67, %c0_68, %c0_69] : memref<9x8x8xbf16, #tpu.memory_space<vmem>>, vector<1x8x8xbf16>
    %60 = vector.shape_cast %59 : vector<1x8x8xbf16> to vector<8x8xbf16>
    %cst_70 = arith.constant dense<0.000000e+00> : vector<144x8xf32>
    %61 = tpu.matmul %58, %60, %cst_70 {dimension_numbers = #tpu.dot_dimension_numbers<[1], [0], [0], [1], [0, 0, 1, 1], [], []>} : vector<144x8xbf16>, vector<8x8xbf16>, vector<144x8xf32> -> vector<144x8xf32>
    %62 = arith.addf %57, %61 : vector<144x8xf32>
    %c36 = arith.constant 36 : index
    %c0_71 = arith.constant 0 : index
    %63 = vector.load %arg9[%c36, %c0_71] : memref<188x8xbf16, #tpu.memory_space<vmem>>, vector<144x8xbf16>
    %c6_72 = arith.constant 6 : index
    %c0_73 = arith.constant 0 : index
    %c0_74 = arith.constant 0 : index
    %64 = vector.load %arg5[%c6_72, %c0_73, %c0_74] : memref<9x8x8xbf16, #tpu.memory_space<vmem>>, vector<1x8x8xbf16>
    %65 = vector.shape_cast %64 : vector<1x8x8xbf16> to vector<8x8xbf16>
    %cst_75 = arith.constant dense<0.000000e+00> : vector<144x8xf32>
    %66 = tpu.matmul %63, %65, %cst_75 {dimension_numbers = #tpu.dot_dimension_numbers<[1], [0], [0], [1], [0, 0, 1, 1], [], []>} : vector<144x8xbf16>, vector<8x8xbf16>, vector<144x8xf32> -> vector<144x8xf32>
    %67 = arith.addf %62, %66 : vector<144x8xf32>
    %c37_76 = arith.constant 37 : index
    %c0_77 = arith.constant 0 : index
    %68 = vector.load %arg9[%c37_76, %c0_77] : memref<188x8xbf16, #tpu.memory_space<vmem>>, vector<144x8xbf16>
    %c7_78 = arith.constant 7 : index
    %c0_79 = arith.constant 0 : index
    %c0_80 = arith.constant 0 : index
    %69 = vector.load %arg5[%c7_78, %c0_79, %c0_80] : memref<9x8x8xbf16, #tpu.memory_space<vmem>>, vector<1x8x8xbf16>
    %70 = vector.shape_cast %69 : vector<1x8x8xbf16> to vector<8x8xbf16>
    %cst_81 = arith.constant dense<0.000000e+00> : vector<144x8xf32>
    %71 = tpu.matmul %68, %70, %cst_81 {dimension_numbers = #tpu.dot_dimension_numbers<[1], [0], [0], [1], [0, 0, 1, 1], [], []>} : vector<144x8xbf16>, vector<8x8xbf16>, vector<144x8xf32> -> vector<144x8xf32>
    %72 = arith.addf %67, %71 : vector<144x8xf32>
    %c38 = arith.constant 38 : index
    %c0_82 = arith.constant 0 : index
    %73 = vector.load %arg9[%c38, %c0_82] : memref<188x8xbf16, #tpu.memory_space<vmem>>, vector<144x8xbf16>
    %c8 = arith.constant 8 : index
    %c0_83 = arith.constant 0 : index
    %c0_84 = arith.constant 0 : index
    %74 = vector.load %arg5[%c8, %c0_83, %c0_84] : memref<9x8x8xbf16, #tpu.memory_space<vmem>>, vector<1x8x8xbf16>
    %75 = vector.shape_cast %74 : vector<1x8x8xbf16> to vector<8x8xbf16>
    %cst_85 = arith.constant dense<0.000000e+00> : vector<144x8xf32>
    %76 = tpu.matmul %73, %75, %cst_85 {dimension_numbers = #tpu.dot_dimension_numbers<[1], [0], [0], [1], [0, 0, 1, 1], [], []>} : vector<144x8xbf16>, vector<8x8xbf16>, vector<144x8xf32> -> vector<144x8xf32>
    %77 = arith.addf %72, %76 : vector<144x8xf32>
    %c0_86 = arith.constant 0 : index
    %c0_87 = arith.constant 0 : index
    %78 = vector.load %arg6[%c0_86, %c0_87] : memref<1x8xf32, #tpu.memory_space<vmem>>, vector<1x8xf32>
    %79 = vector.broadcast %78 : vector<1x8xf32> to vector<144x8xf32>
    %80 = arith.mulf %77, %79 : vector<144x8xf32>
    %c0_88 = arith.constant 0 : index
    %c0_89 = arith.constant 0 : index
    %81 = vector.load %arg7[%c0_88, %c0_89] : memref<1x8xf32, #tpu.memory_space<vmem>>, vector<1x8xf32>
    %82 = vector.broadcast %81 : vector<1x8xf32> to vector<144x8xf32>
    %83 = arith.addf %80, %82 : vector<144x8xf32>
    %84 = arith.negf %83 : vector<144x8xf32>
    %85 = math.exp %84 : vector<144x8xf32>
    %cst_90 = arith.constant 1.000000e+00 : f32
    %86 = vector.broadcast %cst_90 : f32 to vector<144x8xf32>
    %87 = arith.addf %86, %85 : vector<144x8xf32>
    %88 = arith.divf %86, %87 : vector<144x8xf32>
    %89 = arith.mulf %83, %88 : vector<144x8xf32>
    %90 = arith.truncf %89 : vector<144x8xf32> to vector<144x8xbf16>
    %91 = vector.extract_strided_slice %90 {offsets = [0, 0], sizes = [16, 8], strides = [1, 1]} : vector<144x8xbf16> to vector<16x8xbf16>
    %c0_91 = arith.constant 0 : index
    %c0_92 = arith.constant 0 : index
    %c0_93 = arith.constant 0 : index
    %c0_94 = arith.constant 0 : index
    %92 = vector.load %arg8[%c0_91, %c0_92, %c0_93, %c0_94] : memref<1x8x16x8xbf16, #tpu.memory_space<vmem>>, vector<1x1x16x8xbf16>
    %93 = vector.shape_cast %92 : vector<1x1x16x8xbf16> to vector<16x8xbf16>
    %94 = vector.shape_cast %91 : vector<16x8xbf16> to vector<1x1x16x8xbf16>
    tpu.vector_store %arg8[%c0_91, %c0_92, %c0_93, %c0_94], %94 {strides = array<i32>} : memref<1x8x16x8xbf16, #tpu.memory_space<vmem>>, vector<1x1x16x8xbf16>,
    %95 = vector.extract_strided_slice %90 {offsets = [18, 0], sizes = [16, 8], strides = [1, 1]} : vector<144x8xbf16> to vector<16x8xbf16>
    %c0_95 = arith.constant 0 : index
    %c1_96 = arith.constant 1 : index
    %c0_97 = arith.constant 0 : index
    %c0_98 = arith.constant 0 : index
    %96 = vector.load %arg8[%c0_95, %c1_96, %c0_97, %c0_98] : memref<1x8x16x8xbf16, #tpu.memory_space<vmem>>, vector<1x1x16x8xbf16>
    %97 = vector.shape_cast %96 : vector<1x1x16x8xbf16> to vector<16x8xbf16>
    %98 = vector.shape_cast %95 : vector<16x8xbf16> to vector<1x1x16x8xbf16>
    tpu.vector_store %arg8[%c0_95, %c1_96, %c0_97, %c0_98], %98 {strides = array<i32>} : memref<1x8x16x8xbf16, #tpu.memory_space<vmem>>, vector<1x1x16x8xbf16>,
    %99 = vector.extract_strided_slice %90 {offsets = [36, 0], sizes = [16, 8], strides = [1, 1]} : vector<144x8xbf16> to vector<16x8xbf16>
    %c0_99 = arith.constant 0 : index
    %c2_100 = arith.constant 2 : index
    %c0_101 = arith.constant 0 : index
    %c0_102 = arith.constant 0 : index
    %100 = vector.load %arg8[%c0_99, %c2_100, %c0_101, %c0_102] : memref<1x8x16x8xbf16, #tpu.memory_space<vmem>>, vector<1x1x16x8xbf16>
    %101 = vector.shape_cast %100 : vector<1x1x16x8xbf16> to vector<16x8xbf16>
    %102 = vector.shape_cast %99 : vector<16x8xbf16> to vector<1x1x16x8xbf16>
    tpu.vector_store %arg8[%c0_99, %c2_100, %c0_101, %c0_102], %102 {strides = array<i32>} : memref<1x8x16x8xbf16, #tpu.memory_space<vmem>>, vector<1x1x16x8xbf16>,
    %103 = vector.extract_strided_slice %90 {offsets = [54, 0], sizes = [16, 8], strides = [1, 1]} : vector<144x8xbf16> to vector<16x8xbf16>
    %c0_103 = arith.constant 0 : index
    %c3_104 = arith.constant 3 : index
    %c0_105 = arith.constant 0 : index
    %c0_106 = arith.constant 0 : index
    %104 = vector.load %arg8[%c0_103, %c3_104, %c0_105, %c0_106] : memref<1x8x16x8xbf16, #tpu.memory_space<vmem>>, vector<1x1x16x8xbf16>
    %105 = vector.shape_cast %104 : vector<1x1x16x8xbf16> to vector<16x8xbf16>
    %106 = vector.shape_cast %103 : vector<16x8xbf16> to vector<1x1x16x8xbf16>
    tpu.vector_store %arg8[%c0_103, %c3_104, %c0_105, %c0_106], %106 {strides = array<i32>} : memref<1x8x16x8xbf16, #tpu.memory_space<vmem>>, vector<1x1x16x8xbf16>,
    %107 = vector.extract_strided_slice %90 {offsets = [72, 0], sizes = [16, 8], strides = [1, 1]} : vector<144x8xbf16> to vector<16x8xbf16>
    %c0_107 = arith.constant 0 : index
    %c4_108 = arith.constant 4 : index
    %c0_109 = arith.constant 0 : index
    %c0_110 = arith.constant 0 : index
    %108 = vector.load %arg8[%c0_107, %c4_108, %c0_109, %c0_110] : memref<1x8x16x8xbf16, #tpu.memory_space<vmem>>, vector<1x1x16x8xbf16>
    %109 = vector.shape_cast %108 : vector<1x1x16x8xbf16> to vector<16x8xbf16>
    %110 = vector.shape_cast %107 : vector<16x8xbf16> to vector<1x1x16x8xbf16>
    tpu.vector_store %arg8[%c0_107, %c4_108, %c0_109, %c0_110], %110 {strides = array<i32>} : memref<1x8x16x8xbf16, #tpu.memory_space<vmem>>, vector<1x1x16x8xbf16>,
    %111 = vector.extract_strided_slice %90 {offsets = [90, 0], sizes = [16, 8], strides = [1, 1]} : vector<144x8xbf16> to vector<16x8xbf16>
    %c0_111 = arith.constant 0 : index
    %c5_112 = arith.constant 5 : index
    %c0_113 = arith.constant 0 : index
    %c0_114 = arith.constant 0 : index
    %112 = vector.load %arg8[%c0_111, %c5_112, %c0_113, %c0_114] : memref<1x8x16x8xbf16, #tpu.memory_space<vmem>>, vector<1x1x16x8xbf16>
    %113 = vector.shape_cast %112 : vector<1x1x16x8xbf16> to vector<16x8xbf16>
    %114 = vector.shape_cast %111 : vector<16x8xbf16> to vector<1x1x16x8xbf16>
    tpu.vector_store %arg8[%c0_111, %c5_112, %c0_113, %c0_114], %114 {strides = array<i32>} : memref<1x8x16x8xbf16, #tpu.memory_space<vmem>>, vector<1x1x16x8xbf16>,
    %115 = vector.extract_strided_slice %90 {offsets = [108, 0], sizes = [16, 8], strides = [1, 1]} : vector<144x8xbf16> to vector<16x8xbf16>
    %c0_115 = arith.constant 0 : index
    %c6_116 = arith.constant 6 : index
    %c0_117 = arith.constant 0 : index
    %c0_118 = arith.constant 0 : index
    %116 = vector.load %arg8[%c0_115, %c6_116, %c0_117, %c0_118] : memref<1x8x16x8xbf16, #tpu.memory_space<vmem>>, vector<1x1x16x8xbf16>
    %117 = vector.shape_cast %116 : vector<1x1x16x8xbf16> to vector<16x8xbf16>
    %118 = vector.shape_cast %115 : vector<16x8xbf16> to vector<1x1x16x8xbf16>
    tpu.vector_store %arg8[%c0_115, %c6_116, %c0_117, %c0_118], %118 {strides = array<i32>} : memref<1x8x16x8xbf16, #tpu.memory_space<vmem>>, vector<1x1x16x8xbf16>,
    %119 = vector.extract_strided_slice %90 {offsets = [126, 0], sizes = [16, 8], strides = [1, 1]} : vector<144x8xbf16> to vector<16x8xbf16>
    %c0_119 = arith.constant 0 : index
    %c7_120 = arith.constant 7 : index
    %c0_121 = arith.constant 0 : index
    %c0_122 = arith.constant 0 : index
    %120 = vector.load %arg8[%c0_119, %c7_120, %c0_121, %c0_122] : memref<1x8x16x8xbf16, #tpu.memory_space<vmem>>, vector<1x1x16x8xbf16>
    %121 = vector.shape_cast %120 : vector<1x1x16x8xbf16> to vector<16x8xbf16>
    %122 = vector.shape_cast %119 : vector<16x8xbf16> to vector<1x1x16x8xbf16>
    tpu.vector_store %arg8[%c0_119, %c7_120, %c0_121, %c0_122], %122 {strides = array<i32>} : memref<1x8x16x8xbf16, #tpu.memory_space<vmem>>, vector<1x1x16x8xbf16>,
    return
  }
  func.func @transform_0(%arg0: i32, %arg1: i32) -> (i32, i32, i32, i32) {
    %c0_i32 = arith.constant 0 : i32
    %c0_i32_0 = arith.constant 0 : i32
    %c0_i32_1 = arith.constant 0 : i32
    return %arg0, %arg1, %c0_i32, %c0_i32_0 : i32, i32, i32, i32
  }
  func.func @transform_1(%arg0: i32, %arg1: i32) -> (i32, i32, i32, i32) {
    %c8_i32 = arith.constant 8 : i32
    %0 = arith.muli %arg1, %c8_i32 : i32
    %c1_i32 = arith.constant 1 : i32
    %1 = arith.subi %0, %c1_i32 : i32
    %c0_i32 = arith.constant 0 : i32
    %2 = arith.maxsi %1, %c0_i32 : i32
    %c0_i32_0 = arith.constant 0 : i32
    %c0_i32_1 = arith.constant 0 : i32
    %c0_i32_2 = arith.constant 0 : i32
    return %arg0, %2, %c0_i32_0, %c0_i32_1 : i32, i32, i32, i32
  }
  func.func @transform_2(%arg0: i32, %arg1: i32) -> (i32, i32, i32, i32) {
    %c8_i32 = arith.constant 8 : i32
    %0 = arith.muli %arg1, %c8_i32 : i32
    %c8_i32_0 = arith.constant 8 : i32
    %1 = arith.addi %0, %c8_i32_0 : i32
    %c15_i32 = arith.constant 15 : i32
    %2 = arith.minsi %1, %c15_i32 : i32
    %c0_i32 = arith.constant 0 : i32
    %c0_i32_1 = arith.constant 0 : i32
    %c0_i32_2 = arith.constant 0 : i32
    return %arg0, %2, %c0_i32, %c0_i32_1 : i32, i32, i32, i32
  }
  func.func @transform_3(%arg0: i32, %arg1: i32) -> (i32, i32, i32) {
    %c0_i32 = arith.constant 0 : i32
    %c0_i32_0 = arith.constant 0 : i32
    %c0_i32_1 = arith.constant 0 : i32
    %c0_i32_2 = arith.constant 0 : i32
    return %c0_i32, %c0_i32_0, %c0_i32_1 : i32, i32, i32
  }
  func.func @transform_4(%arg0: i32, %arg1: i32) -> (i32, i32) {
    %c0_i32 = arith.constant 0 : i32
    %c0_i32_0 = arith.constant 0 : i32
    %c0_i32_1 = arith.constant 0 : i32
    return %c0_i32, %c0_i32_0 : i32, i32
  }
  func.func @transform_5(%arg0: i32, %arg1: i32) -> (i32, i32) {
    %c0_i32 = arith.constant 0 : i32
    %c0_i32_0 = arith.constant 0 : i32
    %c0_i32_1 = arith.constant 0 : i32
    return %c0_i32, %c0_i32_0 : i32, i32
  }
  func.func @transform_6(%arg0: i32, %arg1: i32) -> (i32, i32, i32, i32) {
    %c0_i32 = arith.constant 0 : i32
    %c0_i32_0 = arith.constant 0 : i32
    %c0_i32_1 = arith.constant 0 : i32
    return %arg0, %arg1, %c0_i32, %c0_i32_0 : i32, i32, i32, i32
  }
}

module attributes {stable_mosaic.version = 11 : i64} {
  func.func @_mlca_apply_kernel(%arg0: i32, %arg1: i32, %arg2: i32, %arg3: memref<1x256x8xbf16, #tpu.memory_space<vmem>>, %arg4: memref<1x25x8xbf16, #tpu.memory_space<vmem>>, %arg5: memref<256x25xbf16, #tpu.memory_space<vmem>>, %arg6: memref<1x256x8xbf16, #tpu.memory_space<vmem>>) attributes {dimension_semantics = [#tpu.dimension_semantics<parallel>, #tpu.dimension_semantics<parallel>, #tpu.dimension_semantics<parallel>], iteration_bounds = array<i64: 2, 1, 1>, scalar_prefetch = 0 : i64, scratch_operands = 0 : i64, tpu.core_type = #tpu.core_type<tc>, window_params = [{transform_indices = @transform_0, window_bounds = array<i64: 1, 256, 8>}, {transform_indices = @transform_1, window_bounds = array<i64: 1, 25, 8>}, {transform_indices = @transform_2, window_bounds = array<i64: 256, 25>}, {transform_indices = @transform_3, window_bounds = array<i64: 1, 256, 8>}]} {
    %c0 = arith.constant 0 : index
    %c0_0 = arith.constant 0 : index
    %0 = vector.load %arg5[%c0, %c0_0] : memref<256x25xbf16, #tpu.memory_space<vmem>>, vector<256x25xbf16>
    %c0_1 = arith.constant 0 : index
    %c0_2 = arith.constant 0 : index
    %c0_3 = arith.constant 0 : index
    %1 = vector.load %arg4[%c0_1, %c0_2, %c0_3] : memref<1x25x8xbf16, #tpu.memory_space<vmem>>, vector<1x25x8xbf16>
    %2 = vector.shape_cast %1 : vector<1x25x8xbf16> to vector<25x8xbf16>
    %cst = arith.constant dense<0.000000e+00> : vector<256x8xf32>
    %3 = tpu.matmul %0, %2, %cst {dimension_numbers = #tpu.dot_dimension_numbers<[1], [0], [0], [1], [0, 0, 1, 1], [], []>} : vector<256x25xbf16>, vector<25x8xbf16>, vector<256x8xf32> -> vector<256x8xf32>
    %c0_4 = arith.constant 0 : index
    %c0_5 = arith.constant 0 : index
    %c0_6 = arith.constant 0 : index
    %4 = vector.load %arg3[%c0_4, %c0_5, %c0_6] : memref<1x256x8xbf16, #tpu.memory_space<vmem>>, vector<1x256x8xbf16>
    %5 = vector.shape_cast %4 : vector<1x256x8xbf16> to vector<256x8xbf16>
    %6 = arith.extf %5 : vector<256x8xbf16> to vector<256x8xf32>
    %7 = arith.mulf %6, %3 : vector<256x8xf32>
    %8 = arith.truncf %7 : vector<256x8xf32> to vector<256x8xbf16>
    %c0_7 = arith.constant 0 : index
    %c0_8 = arith.constant 0 : index
    %c0_9 = arith.constant 0 : index
    %9 = vector.load %arg6[%c0_7, %c0_8, %c0_9] : memref<1x256x8xbf16, #tpu.memory_space<vmem>>, vector<1x256x8xbf16>
    %10 = vector.shape_cast %9 : vector<1x256x8xbf16> to vector<256x8xbf16>
    %11 = vector.shape_cast %8 : vector<256x8xbf16> to vector<1x256x8xbf16>
    tpu.vector_store %arg6[%c0_7, %c0_8, %c0_9], %11 {strides = array<i32>} : memref<1x256x8xbf16, #tpu.memory_space<vmem>>, vector<1x256x8xbf16>,
    return
  }
  func.func @transform_0(%arg0: i32, %arg1: i32, %arg2: i32) -> (i32, i32, i32) {
    %c0_i32 = arith.constant 0 : i32
    return %arg0, %arg1, %arg2 : i32, i32, i32
  }
  func.func @transform_1(%arg0: i32, %arg1: i32, %arg2: i32) -> (i32, i32, i32) {
    %c0_i32 = arith.constant 0 : i32
    %c0_i32_0 = arith.constant 0 : i32
    return %arg0, %c0_i32, %arg2 : i32, i32, i32
  }
  func.func @transform_2(%arg0: i32, %arg1: i32, %arg2: i32) -> (i32, i32) {
    %c0_i32 = arith.constant 0 : i32
    %c0_i32_0 = arith.constant 0 : i32
    return %arg1, %c0_i32 : i32, i32
  }
  func.func @transform_3(%arg0: i32, %arg1: i32, %arg2: i32) -> (i32, i32, i32) {
    %c0_i32 = arith.constant 0 : i32
    return %arg0, %arg1, %arg2 : i32, i32, i32
  }
}

module attributes {stable_mosaic.version = 11 : i64} {
  func.func @kernel(%arg0: i32, %arg1: i32, %arg2: memref<512x16xbf16, #tpu.memory_space<vmem>>, %arg3: memref<512x8xbf16, #tpu.memory_space<vmem>>, %arg4: memref<16x16xbf16, #tpu.memory_space<vmem>>, %arg5: memref<8x16xbf16, #tpu.memory_space<vmem>>, %arg6: memref<1x16xf32, #tpu.memory_space<vmem>>, %arg7: memref<1x16xf32, #tpu.memory_space<vmem>>, %arg8: memref<512x16xf32, #tpu.memory_space<vmem>>) attributes {dimension_semantics = [#tpu.dimension_semantics<parallel>, #tpu.dimension_semantics<parallel>], iteration_bounds = array<i64: 1, 1>, scalar_prefetch = 0 : i64, scratch_operands = 0 : i64, tpu.core_type = #tpu.core_type<tc>, window_params = [{transform_indices = @transform_0, window_bounds = array<i64: 512, 16>}, {transform_indices = @transform_1, window_bounds = array<i64: 512, 8>}, {transform_indices = @transform_2, window_bounds = array<i64: 16, 16>}, {transform_indices = @transform_3, window_bounds = array<i64: 8, 16>}, {transform_indices = @transform_4, window_bounds = array<i64: 1, 16>}, {transform_indices = @transform_5, window_bounds = array<i64: 1, 16>}, {transform_indices = @transform_6, window_bounds = array<i64: 512, 16>}]} {
    %cst = arith.constant 0.000000e+00 : f32
    %0 = vector.broadcast %cst : f32 to vector<512x16xf32>
    %c0 = arith.constant 0 : index
    %c0_0 = arith.constant 0 : index
    %1 = vector.load %arg2[%c0, %c0_0] : memref<512x16xbf16, #tpu.memory_space<vmem>>, vector<512x16xbf16>
    %c0_1 = arith.constant 0 : index
    %c0_2 = arith.constant 0 : index
    %2 = vector.load %arg4[%c0_1, %c0_2] : memref<16x16xbf16, #tpu.memory_space<vmem>>, vector<16x16xbf16>
    %cst_3 = arith.constant dense<0.000000e+00> : vector<512x16xf32>
    %3 = tpu.matmul %1, %2, %cst_3 {dimension_numbers = #tpu.dot_dimension_numbers<[1], [0], [0], [1], [0, 0, 1, 1], [], []>} : vector<512x16xbf16>, vector<16x16xbf16>, vector<512x16xf32> -> vector<512x16xf32>
    %4 = arith.addf %0, %3 : vector<512x16xf32>
    %c0_4 = arith.constant 0 : index
    %c0_5 = arith.constant 0 : index
    %5 = vector.load %arg3[%c0_4, %c0_5] : memref<512x8xbf16, #tpu.memory_space<vmem>>, vector<512x8xbf16>
    %c0_6 = arith.constant 0 : index
    %c0_7 = arith.constant 0 : index
    %6 = vector.load %arg5[%c0_6, %c0_7] : memref<8x16xbf16, #tpu.memory_space<vmem>>, vector<8x16xbf16>
    %cst_8 = arith.constant dense<0.000000e+00> : vector<512x16xf32>
    %7 = tpu.matmul %5, %6, %cst_8 {dimension_numbers = #tpu.dot_dimension_numbers<[1], [0], [0], [1], [0, 0, 1, 1], [], []>} : vector<512x8xbf16>, vector<8x16xbf16>, vector<512x16xf32> -> vector<512x16xf32>
    %8 = arith.addf %4, %7 : vector<512x16xf32>
    %c0_9 = arith.constant 0 : index
    %c0_10 = arith.constant 0 : index
    %9 = vector.load %arg6[%c0_9, %c0_10] : memref<1x16xf32, #tpu.memory_space<vmem>>, vector<1x16xf32>
    %10 = vector.broadcast %9 : vector<1x16xf32> to vector<512x16xf32>
    %11 = arith.mulf %8, %10 : vector<512x16xf32>
    %c0_11 = arith.constant 0 : index
    %c0_12 = arith.constant 0 : index
    %12 = vector.load %arg7[%c0_11, %c0_12] : memref<1x16xf32, #tpu.memory_space<vmem>>, vector<1x16xf32>
    %13 = vector.broadcast %12 : vector<1x16xf32> to vector<512x16xf32>
    %14 = arith.addf %11, %13 : vector<512x16xf32>
    %15 = arith.negf %14 : vector<512x16xf32>
    %16 = math.exp %15 : vector<512x16xf32>
    %cst_13 = arith.constant 1.000000e+00 : f32
    %17 = vector.broadcast %cst_13 : f32 to vector<512x16xf32>
    %18 = arith.addf %17, %16 : vector<512x16xf32>
    %19 = arith.divf %17, %18 : vector<512x16xf32>
    %20 = arith.mulf %14, %19 : vector<512x16xf32>
    %c0_14 = arith.constant 0 : index
    %c0_15 = arith.constant 0 : index
    %21 = vector.load %arg8[%c0_14, %c0_15] : memref<512x16xf32, #tpu.memory_space<vmem>>, vector<512x16xf32>
    tpu.vector_store %arg8[%c0_14, %c0_15], %20 {strides = array<i32>} : memref<512x16xf32, #tpu.memory_space<vmem>>, vector<512x16xf32>,
    return
  }
  func.func @transform_0(%arg0: i32, %arg1: i32) -> (i32, i32) {
    %c0_i32 = arith.constant 0 : i32
    %c0_i32_0 = arith.constant 0 : i32
    return %arg0, %c0_i32 : i32, i32
  }
  func.func @transform_1(%arg0: i32, %arg1: i32) -> (i32, i32) {
    %c0_i32 = arith.constant 0 : i32
    %c0_i32_0 = arith.constant 0 : i32
    return %arg0, %c0_i32 : i32, i32
  }
  func.func @transform_2(%arg0: i32, %arg1: i32) -> (i32, i32) {
    %c0_i32 = arith.constant 0 : i32
    %c0_i32_0 = arith.constant 0 : i32
    return %c0_i32, %arg1 : i32, i32
  }
  func.func @transform_3(%arg0: i32, %arg1: i32) -> (i32, i32) {
    %c0_i32 = arith.constant 0 : i32
    %c0_i32_0 = arith.constant 0 : i32
    return %c0_i32, %arg1 : i32, i32
  }
  func.func @transform_4(%arg0: i32, %arg1: i32) -> (i32, i32) {
    %c0_i32 = arith.constant 0 : i32
    %c0_i32_0 = arith.constant 0 : i32
    return %c0_i32, %arg1 : i32, i32
  }
  func.func @transform_5(%arg0: i32, %arg1: i32) -> (i32, i32) {
    %c0_i32 = arith.constant 0 : i32
    %c0_i32_0 = arith.constant 0 : i32
    return %c0_i32, %arg1 : i32, i32
  }
  func.func @transform_6(%arg0: i32, %arg1: i32) -> (i32, i32) {
    %c0_i32 = arith.constant 0 : i32
    return %arg0, %arg1 : i32, i32
  }
}

</mosaic_0001>

<llo_original>
// kernel: _lambda_.5
$region0: #{_lambda_.5}
  #allocation0 [shape = 'u32[]', space=smem, size = 0x4, offset = 0x4, fixed_abs, tag = 'smem constant byte address 0x4 - core index']
  #allocation1 [shape = 'u32[144,128]{1,0:T(1,128)}', space=vmem, size = 0x12000, scoped, tag = 'internal scratch']
  #allocation2 [shape = 'f32[512,16]{1,0:T(8,128)}', space=vmem, size = 0x40000, scoped, tag = 'scratch operand']
  %s0 = inlined_call_operand.hbm [shape: bf16[512,16], index: 0, kind: input, shape index: {}]
  %s1 = inlined_call_operand.vmem [shape: bf16[16,16], index: 1, kind: input, shape index: {}]
  %s2 = inlined_call_operand.vmem [shape: f32[1,16], index: 2, kind: input, shape index: {}]
  %s3 = inlined_call_operand.vmem [shape: f32[1,16], index: 3, kind: input, shape index: {}]
  %s4 = inlined_call_operand.vmem [shape: bf16[512,16], index: 4, kind: output, shape index: {}]
  %s5 = sld [smem:[#allocation0]]
  $region38: #{_lambda_.5} parent=0
    _
  %s7 = ssub.s32 1, %s5
  %s8 = scalar_select 0, %s7, %s5
  $region1: #{_lambda_.5} parent=0
    #allocation3 [shape = 'u8[131072]{0}', space=vmem, size = 0x20000, scoped, tag = 'input window, operand 0, single buffered']
    #allocation4 [shape = 's32[1]{0}', space=sflag, size = 0x4, scoped, tag = 'scoped memory for _lambda_.5']
    %9 = vsyncpa [#allocation4], 0
    // Predicated region
    $region2: #{_lambda_.5} parent=1 // pred_check
      _
    $region3: #{_lambda_.5} parent=1 // pred_check_branch
      %11 = sbr.rel (0) target = $region5
    $region4: #{_lambda_.5} parent=1 // pred_region
      %s13 = ssub.s32 4096, 4096
      %14 = vsyncadd [#allocation4], %s13
      %s15 = sshll.u32 [#allocation3], 4
      %s16 = int_to_ptr.vmem [resolvable:$true] %s15
      %21 = dma.hbm_to_vmem [thread:$0]  %s0, 4096, %s16, [#allocation4], 64, 64, 4
    $region5: #{_lambda_.5} parent=1 // pred_fallthru
      _
    // Predicated region
    $region6: #{_lambda_.5} parent=1 // pred_check
      _
    $region7: #{_lambda_.5} parent=1 // pred_check_branch
      %23 = sbr.rel (0) target = $region9
    $region8: #{_lambda_.5} parent=1 // pred_region
      _
    $region9: #{_lambda_.5} parent=1 // pred_fallthru
      _
    // Predicated region
    $region10: #{_lambda_.5} parent=1 // pred_check
      _
    $region11: #{_lambda_.5} parent=1 // pred_check_branch
      %25 = sbr.rel (0) target = $region13
    $region12: #{_lambda_.5} parent=1 // pred_region
      _
    $region13: #{_lambda_.5} parent=1 // pred_fallthru
      _
    // Predicated region
    $region14: #{_lambda_.5} parent=1 // pred_check
      _
    $region15: #{_lambda_.5} parent=1 // pred_check_branch
      %27 = sbr.rel (0) target = $region17
    $region16: #{_lambda_.5} parent=1 // pred_region
      _
    $region17: #{_lambda_.5} parent=1 // pred_fallthru
      _
    // Predicated region
    $region18: #{_lambda_.5} parent=1 // pred_check
      _
    $region19: #{_lambda_.5} parent=1 // pred_check_branch
      %29 = sbr.rel (0) target = $region21
    $region20: #{_lambda_.5} parent=1 // pred_region
      %30 = dma.done [#allocation4], 4096
    $region21: #{_lambda_.5} parent=1 // pred_fallthru
      _
    %p32 = scmp.eq.s32.totalorder 0, 0
    // Predicated region
    $region22: #{_lambda_.5} parent=1 // pred_check
      %p33 = pneg %p32
    $region23: #{_lambda_.5} parent=1 // pred_check_branch
      %35 = sbr.rel (%p33) target = $region25
    $region24: #{_lambda_.5} parent=1 // pred_region
      %vm36 = vcmask 130048
      %37 = vst.msk [vmem:[#allocation2] sm:$0xff] %vm36, 0.0
      %38 = vst.msk [vmem:[#allocation2 + $0x8] sm:$0xff] %vm36, 0.0
      %39 = vst.msk [vmem:[#allocation2 + $0x10] sm:$0xff] %vm36, 0.0
      %40 = vst.msk [vmem:[#allocation2 + $0x18] sm:$0xff] %vm36, 0.0
      %41 = vst.msk [vmem:[#allocation2 + $0x20] sm:$0xff] %vm36, 0.0
      %42 = vst.msk [vmem:[#allocation2 + $0x28] sm:$0xff] %vm36, 0.0
      %43 = vst.msk [vmem:[#allocation2 + $0x30] sm:$0xff] %vm36, 0.0
      %44 = vst.msk [vmem:[#allocation2 + $0x38] sm:$0xff] %vm36, 0.0
      %45 = vst.msk [vmem:[#allocation2 + $0x40] sm:$0xff] %vm36, 0.0
      %46 = vst.msk [vmem:[#allocation2 + $0x48] sm:$0xff] %vm36, 0.0
      %47 = vst.msk [vmem:[#allocation2 + $0x50] sm:$0xff] %vm36, 0.0
      %48 = vst.msk [vmem:[#allocation2 + $0x58] sm:$0xff] %vm36, 0.0
      %49 = vst.msk [vmem:[#allocation2 + $0x60] sm:$0xff] %vm36, 0.0
      %50 = vst.msk [vmem:[#allocation2 + $0x68] sm:$0xff] %vm36, 0.0
      %51 = vst.msk [vmem:[#allocation2 + $0x70] sm:$0xff] %vm36, 0.0
      %52 = vst.msk [vmem:[#allocation2 + $0x78] sm:$0xff] %vm36, 0.0
      %53 = vst.msk [vmem:[#allocation2 + $0x80] sm:$0xff] %vm36, 0.0
      %54 = vst.msk [vmem:[#allocation2 + $0x88] sm:$0xff] %vm36, 0.0
      %55 = vst.msk [vmem:[#allocation2 + $0x90] sm:$0xff] %vm36, 0.0
      %56 = vst.msk [vmem:[#allocation2 + $0x98] sm:$0xff] %vm36, 0.0
      %57 = vst.msk [vmem:[#allocation2 + $0xa0] sm:$0xff] %vm36, 0.0
      %58 = vst.msk [vmem:[#allocation2 + $0xa8] sm:$0xff] %vm36, 0.0
      %59 = vst.msk [vmem:[#allocation2 + $0xb0] sm:$0xff] %vm36, 0.0
      %60 = vst.msk [vmem:[#allocation2 + $0xb8] sm:$0xff] %vm36, 0.0
      %61 = vst.msk [vmem:[#allocation2 + $0xc0] sm:$0xff] %vm36, 0.0
      %62 = vst.msk [vmem:[#allocation2 + $0xc8] sm:$0xff] %vm36, 0.0
      %63 = vst.msk [vmem:[#allocation2 + $0xd0] sm:$0xff] %vm36, 0.0
      %64 = vst.msk [vmem:[#allocation2 + $0xd8] sm:$0xff] %vm36, 0.0
      %65 = vst.msk [vmem:[#allocation2 + $0xe0] sm:$0xff] %vm36, 0.0
      %66 = vst.msk [vmem:[#allocation2 + $0xe8] sm:$0xff] %vm36, 0.0
      %67 = vst.msk [vmem:[#allocation2 + $0xf0] sm:$0xff] %vm36, 0.0
      %68 = vst.msk [vmem:[#allocation2 + $0xf8] sm:$0xff] %vm36, 0.0
      %69 = vst.msk [vmem:[#allocation2 + $0x100] sm:$0xff] %vm36, 0.0
      %70 = vst.msk [vmem:[#allocation2 + $0x108] sm:$0xff] %vm36, 0.0
      %71 = vst.msk [vmem:[#allocation2 + $0x110] sm:$0xff] %vm36, 0.0
      %72 = vst.msk [vmem:[#allocation2 + $0x118] sm:$0xff] %vm36, 0.0
      %73 = vst.msk [vmem:[#allocation2 + $0x120] sm:$0xff] %vm36, 0.0
      %74 = vst.msk [vmem:[#allocation2 + $0x128] sm:$0xff] %vm36, 0.0
      %75 = vst.msk [vmem:[#allocation2 + $0x130] sm:$0xff] %vm36, 0.0
      %76 = vst.msk [vmem:[#allocation2 + $0x138] sm:$0xff] %vm36, 0.0
      %77 = vst.msk [vmem:[#allocation2 + $0x140] sm:$0xff] %vm36, 0.0
      %78 = vst.msk [vmem:[#allocation2 + $0x148] sm:$0xff] %vm36, 0.0
      %79 = vst.msk [vmem:[#allocation2 + $0x150] sm:$0xff] %vm36, 0.0
      %80 = vst.msk [vmem:[#allocation2 + $0x158] sm:$0xff] %vm36, 0.0
      %81 = vst.msk [vmem:[#allocation2 + $0x160] sm:$0xff] %vm36, 0.0
      %82 = vst.msk [vmem:[#allocation2 + $0x168] sm:$0xff] %vm36, 0.0
      %83 = vst.msk [vmem:[#allocation2 + $0x170] sm:$0xff] %vm36, 0.0
      %84 = vst.msk [vmem:[#allocation2 + $0x178] sm:$0xff] %vm36, 0.0
      %85 = vst.msk [vmem:[#allocation2 + $0x180] sm:$0xff] %vm36, 0.0
      %86 = vst.msk [vmem:[#allocation2 + $0x188] sm:$0xff] %vm36, 0.0
      %87 = vst.msk [vmem:[#allocation2 + $0x190] sm:$0xff] %vm36, 0.0
      %88 = vst.msk [vmem:[#allocation2 + $0x198] sm:$0xff] %vm36, 0.0
      %89 = vst.msk [vmem:[#allocation2 + $0x1a0] sm:$0xff] %vm36, 0.0
      %90 = vst.msk [vmem:[#allocation2 + $0x1a8] sm:$0xff] %vm36, 0.0
      %91 = vst.msk [vmem:[#allocation2 + $0x1b0] sm:$0xff] %vm36, 0.0
      %92 = vst.msk [vmem:[#allocation2 + $0x1b8] sm:$0xff] %vm36, 0.0
      %93 = vst.msk [vmem:[#allocation2 + $0x1c0] sm:$0xff] %vm36, 0.0
      %94 = vst.msk [vmem:[#allocation2 + $0x1c8] sm:$0xff] %vm36, 0.0
      %95 = vst.msk [vmem:[#allocation2 + $0x1d0] sm:$0xff] %vm36, 0.0
      %96 = vst.msk [vmem:[#allocation2 + $0x1d8] sm:$0xff] %vm36, 0.0
      %97 = vst.msk [vmem:[#allocation2 + $0x1e0] sm:$0xff] %vm36, 0.0
      %98 = vst.msk [vmem:[#allocation2 + $0x1e8] sm:$0xff] %vm36, 0.0
      %99 = vst.msk [vmem:[#allocation2 + $0x1f0] sm:$0xff] %vm36, 0.0
      %100 = vst.msk [vmem:[#allocation2 + $0x1f8] sm:$0xff] %vm36, 0.0
    $region25: #{_lambda_.5} parent=1 // pred_fallthru
      _
    %v101 = vld [vmem:[#allocation2] sm:$0xff]
    %v102 = vld [vmem:[#allocation2 + $0x8] sm:$0xff]
    %v103 = vld [vmem:[#allocation2 + $0x10] sm:$0xff]
    %v104 = vld [vmem:[#allocation2 + $0x18] sm:$0xff]
    %v105 = vld [vmem:[#allocation2 + $0x20] sm:$0xff]
    %v106 = vld [vmem:[#allocation2 + $0x28] sm:$0xff]
    %v107 = vld [vmem:[#allocation2 + $0x30] sm:$0xff]
    %v108 = vld [vmem:[#allocation2 + $0x38] sm:$0xff]
    %v109 = vld [vmem:[#allocation2 + $0x40] sm:$0xff]
    %v110 = vld [vmem:[#allocation2 + $0x48] sm:$0xff]
    %v111 = vld [vmem:[#allocation2 + $0x50] sm:$0xff]
    %v112 = vld [vmem:[#allocation2 + $0x58] sm:$0xff]
    %v113 = vld [vmem:[#allocation2 + $0x60] sm:$0xff]
    %v114 = vld [vmem:[#allocation2 + $0x68] sm:$0xff]
    %v115 = vld [vmem:[#allocation2 + $0x70] sm:$0xff]
    %v116 = vld [vmem:[#allocation2 + $0x78] sm:$0xff]
    %v117 = vld [vmem:[#allocation2 + $0x80] sm:$0xff]
    %v118 = vld [vmem:[#allocation2 + $0x88] sm:$0xff]
    %v119 = vld [vmem:[#allocation2 + $0x90] sm:$0xff]
    %v120 = vld [vmem:[#allocation2 + $0x98] sm:$0xff]
    %v121 = vld [vmem:[#allocation2 + $0xa0] sm:$0xff]
    %v122 = vld [vmem:[#allocation2 + $0xa8] sm:$0xff]
    %v123 = vld [vmem:[#allocation2 + $0xb0] sm:$0xff]
    %v124 = vld [vmem:[#allocation2 + $0xb8] sm:$0xff]
    %v125 = vld [vmem:[#allocation2 + $0xc0] sm:$0xff]
    %v126 = vld [vmem:[#allocation2 + $0xc8] sm:$0xff]
    %v127 = vld [vmem:[#allocation2 + $0xd0] sm:$0xff]
    %v128 = vld [vmem:[#allocation2 + $0xd8] sm:$0xff]
    %v129 = vld [vmem:[#allocation2 + $0xe0] sm:$0xff]
    %v130 = vld [vmem:[#allocation2 + $0xe8] sm:$0xff]
    %v131 = vld [vmem:[#allocation2 + $0xf0] sm:$0xff]
    %v132 = vld [vmem:[#allocation2 + $0xf8] sm:$0xff]
    %v133 = vld [vmem:[#allocation2 + $0x100] sm:$0xff]
    %v134 = vld [vmem:[#allocation2 + $0x108] sm:$0xff]
    %v135 = vld [vmem:[#allocation2 + $0x110] sm:$0xff]
    %v136 = vld [vmem:[#allocation2 + $0x118] sm:$0xff]
    %v137 = vld [vmem:[#allocation2 + $0x120] sm:$0xff]
    %v138 = vld [vmem:[#allocation2 + $0x128] sm:$0xff]
    %v139 = vld [vmem:[#allocation2 + $0x130] sm:$0xff]
    %v140 = vld [vmem:[#allocation2 + $0x138] sm:$0xff]
    %v141 = vld [vmem:[#allocation2 + $0x140] sm:$0xff]
    %v142 = vld [vmem:[#allocation2 + $0x148] sm:$0xff]
    %v143 = vld [vmem:[#allocation2 + $0x150] sm:$0xff]
    %v144 = vld [vmem:[#allocation2 + $0x158] sm:$0xff]
    %v145 = vld [vmem:[#allocation2 + $0x160] sm:$0xff]
    %v146 = vld [vmem:[#allocation2 + $0x168] sm:$0xff]
    %v147 = vld [vmem:[#allocation2 + $0x170] sm:$0xff]
    %v148 = vld [vmem:[#allocation2 + $0x178] sm:$0xff]
    %v149 = vld [vmem:[#allocation2 + $0x180] sm:$0xff]
    %v150 = vld [vmem:[#allocation2 + $0x188] sm:$0xff]
    %v151 = vld [vmem:[#allocation2 + $0x190] sm:$0xff]
    %v152 = vld [vmem:[#allocation2 + $0x198] sm:$0xff]
    %v153 = vld [vmem:[#allocation2 + $0x1a0] sm:$0xff]
    %v154 = vld [vmem:[#allocation2 + $0x1a8] sm:$0xff]
    %v155 = vld [vmem:[#allocation2 + $0x1b0] sm:$0xff]
    %v156 = vld [vmem:[#allocation2 + $0x1b8] sm:$0xff]
    %v157 = vld [vmem:[#allocation2 + $0x1c0] sm:$0xff]
    %v158 = vld [vmem:[#allocation2 + $0x1c8] sm:$0xff]
    %v159 = vld [vmem:[#allocation2 + $0x1d0] sm:$0xff]
    %v160 = vld [vmem:[#allocation2 + $0x1d8] sm:$0xff]
    %v161 = vld [vmem:[#allocation2 + $0x1e0] sm:$0xff]
    %v162 = vld [vmem:[#allocation2 + $0x1e8] sm:$0xff]
    %v163 = vld [vmem:[#allocation2 + $0x1f0] sm:$0xff]
    %v164 = vld [vmem:[#allocation2 + $0x1f8] sm:$0xff]
    %v165 = vld [vmem:[#allocation3] sm:$0xf]
    %v166 = vld [vmem:[#allocation3 + $0x4] sm:$0xf]
    %v167 = vld [vmem:[#allocation3 + $0x8] sm:$0xf]
    %v168 = vld [vmem:[#allocation3 + $0xc] sm:$0xf]
    %v169 = vld [vmem:[#allocation3 + $0x10] sm:$0xf]
    %v170 = vld [vmem:[#allocation3 + $0x14] sm:$0xf]
    %v171 = vld [vmem:[#allocation3 + $0x18] sm:$0xf]
    %v172 = vld [vmem:[#allocation3 + $0x1c] sm:$0xf]
    %v173 = vld [vmem:[#allocation3 + $0x20] sm:$0xf]
    %v174 = vld [vmem:[#allocation3 + $0x24] sm:$0xf]
    %v175 = vld [vmem:[#allocation3 + $0x28] sm:$0xf]
    %v176 = vld [vmem:[#allocation3 + $0x2c] sm:$0xf]
    %v177 = vld [vmem:[#allocation3 + $0x30] sm:$0xf]
    %v178 = vld [vmem:[#allocation3 + $0x34] sm:$0xf]
    %v179 = vld [vmem:[#allocation3 + $0x38] sm:$0xf]
    %v180 = vld [vmem:[#allocation3 + $0x3c] sm:$0xf]
    %v181 = vld [vmem:[#allocation3 + $0x40] sm:$0xf]
    %v182 = vld [vmem:[#allocation3 + $0x44] sm:$0xf]
    %v183 = vld [vmem:[#allocation3 + $0x48] sm:$0xf]
    %v184 = vld [vmem:[#allocation3 + $0x4c] sm:$0xf]
    %v185 = vld [vmem:[#allocation3 + $0x50] sm:$0xf]
    %v186 = vld [vmem:[#allocation3 + $0x54] sm:$0xf]
    %v187 = vld [vmem:[#allocation3 + $0x58] sm:$0xf]
    %v188 = vld [vmem:[#allocation3 + $0x5c] sm:$0xf]
    %v189 = vld [vmem:[#allocation3 + $0x60] sm:$0xf]
    %v190 = vld [vmem:[#allocation3 + $0x64] sm:$0xf]
    %v191 = vld [vmem:[#allocation3 + $0x68] sm:$0xf]
    %v192 = vld [vmem:[#allocation3 + $0x6c] sm:$0xf]
    %v193 = vld [vmem:[#allocation3 + $0x70] sm:$0xf]
    %v194 = vld [vmem:[#allocation3 + $0x74] sm:$0xf]
    %v195 = vld [vmem:[#allocation3 + $0x78] sm:$0xf]
    %v196 = vld [vmem:[#allocation3 + $0x7c] sm:$0xf]
    %v197 = vld [vmem:[#allocation3 + $0x80] sm:$0xf]
    %v198 = vld [vmem:[#allocation3 + $0x84] sm:$0xf]
    %v199 = vld [vmem:[#allocation3 + $0x88] sm:$0xf]
    %v200 = vld [vmem:[#allocation3 + $0x8c] sm:$0xf]
    %v201 = vld [vmem:[#allocation3 + $0x90] sm:$0xf]
    %v202 = vld [vmem:[#allocation3 + $0x94] sm:$0xf]
    %v203 = vld [vmem:[#allocation3 + $0x98] sm:$0xf]
    %v204 = vld [vmem:[#allocation3 + $0x9c] sm:$0xf]
    %v205 = vld [vmem:[#allocation3 + $0xa0] sm:$0xf]
    %v206 = vld [vmem:[#allocation3 + $0xa4] sm:$0xf]
    %v207 = vld [vmem:[#allocation3 + $0xa8] sm:$0xf]
    %v208 = vld [vmem:[#allocation3 + $0xac] sm:$0xf]
    %v209 = vld [vmem:[#allocation3 + $0xb0] sm:$0xf]
    %v210 = vld [vmem:[#allocation3 + $0xb4] sm:$0xf]
    %v211 = vld [vmem:[#allocation3 + $0xb8] sm:$0xf]
    %v212 = vld [vmem:[#allocation3 + $0xbc] sm:$0xf]
    %v213 = vld [vmem:[#allocation3 + $0xc0] sm:$0xf]
    %v214 = vld [vmem:[#allocation3 + $0xc4] sm:$0xf]
    %v215 = vld [vmem:[#allocation3 + $0xc8] sm:$0xf]
    %v216 = vld [vmem:[#allocation3 + $0xcc] sm:$0xf]
    %v217 = vld [vmem:[#allocation3 + $0xd0] sm:$0xf]
    %v218 = vld [vmem:[#allocation3 + $0xd4] sm:$0xf]
    %v219 = vld [vmem:[#allocation3 + $0xd8] sm:$0xf]
    %v220 = vld [vmem:[#allocation3 + $0xdc] sm:$0xf]
    %v221 = vld [vmem:[#allocation3 + $0xe0] sm:$0xf]
    %v222 = vld [vmem:[#allocation3 + $0xe4] sm:$0xf]
    %v223 = vld [vmem:[#allocation3 + $0xe8] sm:$0xf]
    %v224 = vld [vmem:[#allocation3 + $0xec] sm:$0xf]
    %v225 = vld [vmem:[#allocation3 + $0xf0] sm:$0xf]
    %v226 = vld [vmem:[#allocation3 + $0xf4] sm:$0xf]
    %v227 = vld [vmem:[#allocation3 + $0xf8] sm:$0xf]
    %v228 = vld [vmem:[#allocation3 + $0xfc] sm:$0xf]
    %v229 = vld [vmem:[%s1] sm:$0xf]
    %v230 = vld [vmem:[%s1 + $0x4] sm:$0xf]
    %v295 = vunpack.c.l.b16 %v165
    %v296 = vunpack.c.l.b16 %v166
    %v297 = vunpack.c.l.b16 %v167
    %v298 = vunpack.c.l.b16 %v168
    %v299 = vunpack.c.l.b16 %v169
    %v300 = vunpack.c.l.b16 %v170
    %v301 = vunpack.c.l.b16 %v171
    %v302 = vunpack.c.l.b16 %v172
    %v303 = vunpack.c.l.b16 %v173
    %v304 = vunpack.c.l.b16 %v174
    %v305 = vunpack.c.l.b16 %v175
    %v306 = vunpack.c.l.b16 %v176
    %v307 = vunpack.c.l.b16 %v177
    %v308 = vunpack.c.l.b16 %v178
    %v309 = vunpack.c.l.b16 %v179
    %v310 = vunpack.c.l.b16 %v180
    %v311 = vunpack.c.l.b16 %v181
    %v312 = vunpack.c.l.b16 %v182
    %v313 = vunpack.c.l.b16 %v183
    %v314 = vunpack.c.l.b16 %v184
    %v315 = vunpack.c.l.b16 %v185
    %v316 = vunpack.c.l.b16 %v186
    %v317 = vunpack.c.l.b16 %v187
    %v318 = vunpack.c.l.b16 %v188
    %v319 = vunpack.c.l.b16 %v189
    %v320 = vunpack.c.l.b16 %v190
    %v321 = vunpack.c.l.b16 %v191
    %v322 = vunpack.c.l.b16 %v192
    %v323 = vunpack.c.l.b16 %v193
    %v324 = vunpack.c.l.b16 %v194
    %v325 = vunpack.c.l.b16 %v195
    %v326 = vunpack.c.l.b16 %v196
    %v327 = vunpack.c.l.b16 %v197
    %v328 = vunpack.c.l.b16 %v198
    %v329 = vunpack.c.l.b16 %v199
    %v330 = vunpack.c.l.b16 %v200
    %v331 = vunpack.c.l.b16 %v201
    %v332 = vunpack.c.l.b16 %v202
    %v333 = vunpack.c.l.b16 %v203
    %v334 = vunpack.c.l.b16 %v204
    %v335 = vunpack.c.l.b16 %v205
    %v336 = vunpack.c.l.b16 %v206
    %v337 = vunpack.c.l.b16 %v207
    %v338 = vunpack.c.l.b16 %v208
    %v339 = vunpack.c.l.b16 %v209
    %v340 = vunpack.c.l.b16 %v210
    %v341 = vunpack.c.l.b16 %v211
    %v342 = vunpack.c.l.b16 %v212
    %v343 = vunpack.c.l.b16 %v213
    %v344 = vunpack.c.l.b16 %v214
    %v345 = vunpack.c.l.b16 %v215
    %v346 = vunpack.c.l.b16 %v216
    %v347 = vunpack.c.l.b16 %v217
    %v348 = vunpack.c.l.b16 %v218
    %v349 = vunpack.c.l.b16 %v219
    %v350 = vunpack.c.l.b16 %v220
    %v351 = vunpack.c.l.b16 %v221
    %v352 = vunpack.c.l.b16 %v222
    %v353 = vunpack.c.l.b16 %v223
    %v354 = vunpack.c.l.b16 %v224
    %v355 = vunpack.c.l.b16 %v225
    %v356 = vunpack.c.l.b16 %v226
    %v357 = vunpack.c.l.b16 %v227
    %v358 = vunpack.c.l.b16 %v228
    %v359 = vpack.c.b16 %v296, %v295
    %v360 = vpack.c.b16 %v298, %v297
    %v361 = vpack.c.b16 %v300, %v299
    %v362 = vpack.c.b16 %v302, %v301
    %v363 = vpack.c.b16 %v304, %v303
    %v364 = vpack.c.b16 %v306, %v305
    %v365 = vpack.c.b16 %v308, %v307
    %v366 = vpack.c.b16 %v310, %v309
    %v367 = vpack.c.b16 %v312, %v311
    %v368 = vpack.c.b16 %v314, %v313
    %v369 = vpack.c.b16 %v316, %v315
    %v370 = vpack.c.b16 %v318, %v317
    %v371 = vpack.c.b16 %v320, %v319
    %v372 = vpack.c.b16 %v322, %v321
    %v373 = vpack.c.b16 %v324, %v323
    %v374 = vpack.c.b16 %v326, %v325
    %v375 = vpack.c.b16 %v328, %v327
    %v376 = vpack.c.b16 %v330, %v329
    %v377 = vpack.c.b16 %v332, %v331
    %v378 = vpack.c.b16 %v334, %v333
    %v379 = vpack.c.b16 %v336, %v335
    %v380 = vpack.c.b16 %v338, %v337
    %v381 = vpack.c.b16 %v340, %v339
    %v382 = vpack.c.b16 %v342, %v341
    %v383 = vpack.c.b16 %v344, %v343
    %v384 = vpack.c.b16 %v346, %v345
    %v385 = vpack.c.b16 %v348, %v347
    %v386 = vpack.c.b16 %v350, %v349
    %v387 = vpack.c.b16 %v352, %v351
    %v388 = vpack.c.b16 %v354, %v353
    %v389 = vpack.c.b16 %v356, %v355
    %v390 = vpack.c.b16 %v358, %v357
    %v393 = vunpack.c.l.b16 %v229
    %v394 = vunpack.c.l.b16 %v230
    %v395 = vpack.c.b16 %v394, %v393
    %vm397 = vcmask 130048
    %v399 = vsel %vm397, %v359, 0
    %v402 = vsel %vm397, %v360, 0
    %v405 = vsel %vm397, %v361, 0
    %v408 = vsel %vm397, %v362, 0
    %v411 = vsel %vm397, %v363, 0
    %v414 = vsel %vm397, %v364, 0
    %v417 = vsel %vm397, %v365, 0
    %v420 = vsel %vm397, %v366, 0
    %v423 = vsel %vm397, %v367, 0
    %v426 = vsel %vm397, %v368, 0
    %v429 = vsel %vm397, %v369, 0
    %v432 = vsel %vm397, %v370, 0
    %v435 = vsel %vm397, %v371, 0
    %v438 = vsel %vm397, %v372, 0
    %v441 = vsel %vm397, %v373, 0
    %v444 = vsel %vm397, %v374, 0
    %v447 = vsel %vm397, %v375, 0
    %v450 = vsel %vm397, %v376, 0
    %v453 = vsel %vm397, %v377, 0
    %v456 = vsel %vm397, %v378, 0
    %v459 = vsel %vm397, %v379, 0
    %v462 = vsel %vm397, %v380, 0
    %v465 = vsel %vm397, %v381, 0
    %v468 = vsel %vm397, %v382, 0
    %v471 = vsel %vm397, %v383, 0
    %v474 = vsel %vm397, %v384, 0
    %v477 = vsel %vm397, %v385, 0
    %v480 = vsel %vm397, %v386, 0
    %v483 = vsel %vm397, %v387, 0
    %v486 = vsel %vm397, %v388, 0
    %v489 = vsel %vm397, %v389, 0
    %v492 = vsel %vm397, %v390, 0
    %494 = vmatprep.subr.bf16.mxu0 0
    %495 = vmatpush1.bf16.msra.mxu0 %v395
    %496 = vmatprep.subr.bf16.mxu0 0
    %497 = vmatpush1.bf16.msra.mxu0 0
    %498 = vmatprep.subr.bf16.mxu0 0
    %499 = vmatpush1.bf16.msra.mxu0 0
    %500 = vmatprep.subr.bf16.mxu0 0
    %501 = vmatpush1.bf16.msra.mxu0 0
    %502 = vmatprep.subr.bf16.mxu0 0
    %503 = vmatpush1.bf16.msra.mxu0 0
    %504 = vmatprep.subr.bf16.mxu0 0
    %505 = vmatpush1.bf16.msra.mxu0 0
    %506 = vmatprep.subr.bf16.mxu0 0
    %507 = vmatpush1.bf16.msra.mxu0 0
    %508 = vmatprep.subr.bf16.mxu0 0
    %509 = vmatpush1.bf16.msra.mxu0 0
    %510 = vmatprep.subr.bf16.mxu0 0
    %511 = vmatpush1.bf16.msra.mxu0 0
    %512 = vmatprep.subr.bf16.mxu0 0
    %513 = vmatpush1.bf16.msra.mxu0 0
    %514 = vmatprep.subr.bf16.mxu0 0
    %515 = vmatpush1.bf16.msra.mxu0 0
    %516 = vmatprep.subr.bf16.mxu0 0
    %517 = vmatpush1.bf16.msra.mxu0 0
    %518 = vmatprep.subr.bf16.mxu0 0
    %519 = vmatpush1.bf16.msra.mxu0 0
    %520 = vmatprep.subr.bf16.mxu0 0
    %521 = vmatpush1.bf16.msra.mxu0 0
    %522 = vmatprep.subr.bf16.mxu0 0
    %523 = vmatpush1.bf16.msra.mxu0 0
    %524 = vmatprep.subr.bf16.mxu0 0
    %525 = vmatpush1.bf16.msra.mxu0 0
    %526 = vmatprep.mubr.bf16.mxu0 0
    %527 = vmatmul.mubr.bf16.gmra.mrb[0].mxu0 %v399
    %v528 = vpop.f32.mrb[0].mxu0
    %v529 = vadd.f32 0.0, %v528
    %v530 = vpop.f32.mrb[0].mxu0
    %v531 = vpop.f32.mrb[0].mxu0
    %v532 = vadd.f32 0.0, %v531
    %v533 = vpop.f32.mrb[0].mxu0
    %534 = vmatprep.mubr.bf16.mxu0 0
    %535 = vmatmul.mubr.bf16.gmra.mrb[0].mxu0 %v402
    %v536 = vpop.f32.mrb[0].mxu0
    %v537 = vadd.f32 0.0, %v536
    %v538 = vpop.f32.mrb[0].mxu0
    %v539 = vpop.f32.mrb[0].mxu0
    %v540 = vadd.f32 0.0, %v539
    %v541 = vpop.f32.mrb[0].mxu0
    %542 = vmatprep.mubr.bf16.mxu0 0
    %543 = vmatmul.mubr.bf16.gmra.mrb[0].mxu0 %v405
    %v544 = vpop.f32.mrb[0].mxu0
    %v545 = vadd.f32 0.0, %v544
    %v546 = vpop.f32.mrb[0].mxu0
    %v547 = vpop.f32.mrb[0].mxu0
    %v548 = vadd.f32 0.0, %v547
    %v549 = vpop.f32.mrb[0].mxu0
    %550 = vmatprep.mubr.bf16.mxu0 0
    %551 = vmatmul.mubr.bf16.gmra.mrb[0].mxu0 %v408
    %v552 = vpop.f32.mrb[0].mxu0
    %v553 = vadd.f32 0.0, %v552
    %v554 = vpop.f32.mrb[0].mxu0
    %v555 = vpop.f32.mrb[0].mxu0
    %v556 = vadd.f32 0.0, %v555
    %v557 = vpop.f32.mrb[0].mxu0
    %558 = vmatprep.mubr.bf16.mxu0 0
    %559 = vmatmul.mubr.bf16.gmra.mrb[0].mxu0 %v411
    %v560 = vpop.f32.mrb[0].mxu0
    %v561 = vadd.f32 0.0, %v560
    %v562 = vpop.f32.mrb[0].mxu0
    %v563 = vpop.f32.mrb[0].mxu0
    %v564 = vadd.f32 0.0, %v563
    %v565 = vpop.f32.mrb[0].mxu0
    %566 = vmatprep.mubr.bf16.mxu0 0
    %567 = vmatmul.mubr.bf16.gmra.mrb[0].mxu0 %v414
    %v568 = vpop.f32.mrb[0].mxu0
    %v569 = vadd.f32 0.0, %v568
    %v570 = vpop.f32.mrb[0].mxu0
    %v571 = vpop.f32.mrb[0].mxu0
    %v572 = vadd.f32 0.0, %v571
    %v573 = vpop.f32.mrb[0].mxu0
    %574 = vmatprep.mubr.bf16.mxu0 0
    %575 = vmatmul.mubr.bf16.gmra.mrb[0].mxu0 %v417
    %v576 = vpop.f32.mrb[0].mxu0
    %v577 = vadd.f32 0.0, %v576
    %v578 = vpop.f32.mrb[0].mxu0
    %v579 = vpop.f32.mrb[0].mxu0
    %v580 = vadd.f32 0.0, %v579
    %v581 = vpop.f32.mrb[0].mxu0
    %582 = vmatprep.mubr.bf16.mxu0 0
    %583 = vmatmul.mubr.bf16.gmra.mrb[0].mxu0 %v420
    %v584 = vpop.f32.mrb[0].mxu0
    %v585 = vadd.f32 0.0, %v584
    %v586 = vpop.f32.mrb[0].mxu0
    %v587 = vpop.f32.mrb[0].mxu0
    %v588 = vadd.f32 0.0, %v587
    %v589 = vpop.f32.mrb[0].mxu0
    %590 = vmatprep.mubr.bf16.mxu0 0
    %591 = vmatmul.mubr.bf16.gmra.mrb[0].mxu0 %v423
    %v592 = vpop.f32.mrb[0].mxu0
    %v593 = vadd.f32 0.0, %v592
    %v594 = vpop.f32.mrb[0].mxu0
    %v595 = vpop.f32.mrb[0].mxu0
    %v596 = vadd.f32 0.0, %v595
    %v597 = vpop.f32.mrb[0].mxu0
    %598 = vmatprep.mubr.bf16.mxu0 0
    %599 = vmatmul.mubr.bf16.gmra.mrb[0].mxu0 %v426
    %v600 = vpop.f32.mrb[0].mxu0
    %v601 = vadd.f32 0.0, %v600
    %v602 = vpop.f32.mrb[0].mxu0
    %v603 = vpop.f32.mrb[0].mxu0
    %v604 = vadd.f32 0.0, %v603
    %v605 = vpop.f32.mrb[0].mxu0
    %606 = vmatprep.mubr.bf16.mxu0 0
    %607 = vmatmul.mubr.bf16.gmra.mrb[0].mxu0 %v429
    %v608 = vpop.f32.mrb[0].mxu0
    %v609 = vadd.f32 0.0, %v608
    %v610 = vpop.f32.mrb[0].mxu0
    %v611 = vpop.f32.mrb[0].mxu0
    %v612 = vadd.f32 0.0, %v611
    %v613 = vpop.f32.mrb[0].mxu0
    %614 = vmatprep.mubr.bf16.mxu0 0
    %615 = vmatmul.mubr.bf16.gmra.mrb[0].mxu0 %v432
    %v616 = vpop.f32.mrb[0].mxu0
    %v617 = vadd.f32 0.0, %v616
    %v618 = vpop.f32.mrb[0].mxu0
    %v619 = vpop.f32.mrb[0].mxu0
    %v620 = vadd.f32 0.0, %v619
    %v621 = vpop.f32.mrb[0].mxu0
    %622 = vmatprep.mubr.bf16.mxu0 0
    %623 = vmatmul.mubr.bf16.gmra.mrb[0].mxu0 %v435
    %v624 = vpop.f32.mrb[0].mxu0
    %v625 = vadd.f32 0.0, %v624
    %v626 = vpop.f32.mrb[0].mxu0
    %v627 = vpop.f32.mrb[0].mxu0
    %v628 = vadd.f32 0.0, %v627
    %v629 = vpop.f32.mrb[0].mxu0
    %630 = vmatprep.mubr.bf16.mxu0 0
    %631 = vmatmul.mubr.bf16.gmra.mrb[0].mxu0 %v438
    %v632 = vpop.f32.mrb[0].mxu0
    %v633 = vadd.f32 0.0, %v632
    %v634 = vpop.f32.mrb[0].mxu0
    %v635 = vpop.f32.mrb[0].mxu0
    %v636 = vadd.f32 0.0, %v635
    %v637 = vpop.f32.mrb[0].mxu0
    %638 = vmatprep.mubr.bf16.mxu0 0
    %639 = vmatmul.mubr.bf16.gmra.mrb[0].mxu0 %v441
    %v640 = vpop.f32.mrb[0].mxu0
    %v641 = vadd.f32 0.0, %v640
    %v642 = vpop.f32.mrb[0].mxu0
    %v643 = vpop.f32.mrb[0].mxu0
    %v644 = vadd.f32 0.0, %v643
    %v645 = vpop.f32.mrb[0].mxu0
    %646 = vmatprep.mubr.bf16.mxu0 0
    %647 = vmatmul.mubr.bf16.gmra.mrb[0].mxu0 %v444
    %v648 = vpop.f32.mrb[0].mxu0
    %v649 = vadd.f32 0.0, %v648
    %v650 = vpop.f32.mrb[0].mxu0
    %v651 = vpop.f32.mrb[0].mxu0
    %v652 = vadd.f32 0.0, %v651
    %v653 = vpop.f32.mrb[0].mxu0
    %654 = vmatprep.mubr.bf16.mxu0 0
    %655 = vmatmul.mubr.bf16.gmra.mrb[0].mxu0 %v447
    %v656 = vpop.f32.mrb[0].mxu0
    %v657 = vadd.f32 0.0, %v656
    %v658 = vpop.f32.mrb[0].mxu0
    %v659 = vpop.f32.mrb[0].mxu0
    %v660 = vadd.f32 0.0, %v659
    %v661 = vpop.f32.mrb[0].mxu0
    %662 = vmatprep.mubr.bf16.mxu0 0
    %663 = vmatmul.mubr.bf16.gmra.mrb[0].mxu0 %v450
    %v664 = vpop.f32.mrb[0].mxu0
    %v665 = vadd.f32 0.0, %v664
    %v666 = vpop.f32.mrb[0].mxu0
    %v667 = vpop.f32.mrb[0].mxu0
    %v668 = vadd.f32 0.0, %v667
    %v669 = vpop.f32.mrb[0].mxu0
    %670 = vmatprep.mubr.bf16.mxu0 0
    %671 = vmatmul.mubr.bf16.gmra.mrb[0].mxu0 %v453
    %v672 = vpop.f32.mrb[0].mxu0
    %v673 = vadd.f32 0.0, %v672
    %v674 = vpop.f32.mrb[0].mxu0
    %v675 = vpop.f32.mrb[0].mxu0
    %v676 = vadd.f32 0.0, %v675
    %v677 = vpop.f32.mrb[0].mxu0
    %678 = vmatprep.mubr.bf16.mxu0 0
    %679 = vmatmul.mubr.bf16.gmra.mrb[0].mxu0 %v456
    %v680 = vpop.f32.mrb[0].mxu0
    %v681 = vadd.f32 0.0, %v680
    %v682 = vpop.f32.mrb[0].mxu0
    %v683 = vpop.f32.mrb[0].mxu0
    %v684 = vadd.f32 0.0, %v683
    %v685 = vpop.f32.mrb[0].mxu0
    %686 = vmatprep.mubr.bf16.mxu0 0
    %687 = vmatmul.mubr.bf16.gmra.mrb[0].mxu0 %v459
    %v688 = vpop.f32.mrb[0].mxu0
    %v689 = vadd.f32 0.0, %v688
    %v690 = vpop.f32.mrb[0].mxu0
    %v691 = vpop.f32.mrb[0].mxu0
    %v692 = vadd.f32 0.0, %v691
    %v693 = vpop.f32.mrb[0].mxu0
    %694 = vmatprep.mubr.bf16.mxu0 0
    %695 = vmatmul.mubr.bf16.gmra.mrb[0].mxu0 %v462
    %v696 = vpop.f32.mrb[0].mxu0
    %v697 = vadd.f32 0.0, %v696
    %v698 = vpop.f32.mrb[0].mxu0
    %v699 = vpop.f32.mrb[0].mxu0
    %v700 = vadd.f32 0.0, %v699
    %v701 = vpop.f32.mrb[0].mxu0
    %702 = vmatprep.mubr.bf16.mxu0 0
    %703 = vmatmul.mubr.bf16.gmra.mrb[0].mxu0 %v465
    %v704 = vpop.f32.mrb[0].mxu0
    %v705 = vadd.f32 0.0, %v704
    %v706 = vpop.f32.mrb[0].mxu0
    %v707 = vpop.f32.mrb[0].mxu0
    %v708 = vadd.f32 0.0, %v707
    %v709 = vpop.f32.mrb[0].mxu0
    %710 = vmatprep.mubr.bf16.mxu0 0
    %711 = vmatmul.mubr.bf16.gmra.mrb[0].mxu0 %v468
    %v712 = vpop.f32.mrb[0].mxu0
    %v713 = vadd.f32 0.0, %v712
    %v714 = vpop.f32.mrb[0].mxu0
    %v715 = vpop.f32.mrb[0].mxu0
    %v716 = vadd.f32 0.0, %v715
    %v717 = vpop.f32.mrb[0].mxu0
    %718 = vmatprep.mubr.bf16.mxu0 0
    %719 = vmatmul.mubr.bf16.gmra.mrb[0].mxu0 %v471
    %v720 = vpop.f32.mrb[0].mxu0
    %v721 = vadd.f32 0.0, %v720
    %v722 = vpop.f32.mrb[0].mxu0
    %v723 = vpop.f32.mrb[0].mxu0
    %v724 = vadd.f32 0.0, %v723
    %v725 = vpop.f32.mrb[0].mxu0
    %726 = vmatprep.mubr.bf16.mxu0 0
    %727 = vmatmul.mubr.bf16.gmra.mrb[0].mxu0 %v474
    %v728 = vpop.f32.mrb[0].mxu0
    %v729 = vadd.f32 0.0, %v728
    %v730 = vpop.f32.mrb[0].mxu0
    %v731 = vpop.f32.mrb[0].mxu0
    %v732 = vadd.f32 0.0, %v731
    %v733 = vpop.f32.mrb[0].mxu0
    %734 = vmatprep.mubr.bf16.mxu0 0
    %735 = vmatmul.mubr.bf16.gmra.mrb[0].mxu0 %v477
    %v736 = vpop.f32.mrb[0].mxu0
    %v737 = vadd.f32 0.0, %v736
    %v738 = vpop.f32.mrb[0].mxu0
    %v739 = vpop.f32.mrb[0].mxu0
    %v740 = vadd.f32 0.0, %v739
    %v741 = vpop.f32.mrb[0].mxu0
    %742 = vmatprep.mubr.bf16.mxu0 0
    %743 = vmatmul.mubr.bf16.gmra.mrb[0].mxu0 %v480
    %v744 = vpop.f32.mrb[0].mxu0
    %v745 = vadd.f32 0.0, %v744
    %v746 = vpop.f32.mrb[0].mxu0
    %v747 = vpop.f32.mrb[0].mxu0
    %v748 = vadd.f32 0.0, %v747
    %v749 = vpop.f32.mrb[0].mxu0
    %750 = vmatprep.mubr.bf16.mxu0 0
    %751 = vmatmul.mubr.bf16.gmra.mrb[0].mxu0 %v483
    %v752 = vpop.f32.mrb[0].mxu0
    %v753 = vadd.f32 0.0, %v752
    %v754 = vpop.f32.mrb[0].mxu0
    %v755 = vpop.f32.mrb[0].mxu0
    %v756 = vadd.f32 0.0, %v755
    %v757 = vpop.f32.mrb[0].mxu0
    %758 = vmatprep.mubr.bf16.mxu0 0
    %759 = vmatmul.mubr.bf16.gmra.mrb[0].mxu0 %v486
    %v760 = vpop.f32.mrb[0].mxu0
    %v761 = vadd.f32 0.0, %v760
    %v762 = vpop.f32.mrb[0].mxu0
    %v763 = vpop.f32.mrb[0].mxu0
    %v764 = vadd.f32 0.0, %v763
    %v765 = vpop.f32.mrb[0].mxu0
    %766 = vmatprep.mubr.bf16.mxu0 0
    %767 = vmatmul.mubr.bf16.gmra.mrb[0].mxu0 %v489
    %v768 = vpop.f32.mrb[0].mxu0
    %v769 = vadd.f32 0.0, %v768
    %v770 = vpop.f32.mrb[0].mxu0
    %v771 = vpop.f32.mrb[0].mxu0
    %v772 = vadd.f32 0.0, %v771
    %v773 = vpop.f32.mrb[0].mxu0
    %774 = vmatprep.mubr.bf16.mxu0 0
    %775 = vmatmul.mubr.bf16.gmra.mrb[0].mxu0 %v492
    %v776 = vpop.f32.mrb[0].mxu0
    %v777 = vadd.f32 0.0, %v776
    %v778 = vpop.f32.mrb[0].mxu0
    %v779 = vpop.f32.mrb[0].mxu0
    %v780 = vadd.f32 0.0, %v779
    %v781 = vpop.f32.mrb[0].mxu0
    %782 = vdwg.mxu0
    %v783 = vadd.f32 %v101, %v529
    %v784 = vadd.f32 %v102, %v532
    %v785 = vadd.f32 %v103, %v537
    %v786 = vadd.f32 %v104, %v540
    %v787 = vadd.f32 %v105, %v545
    %v788 = vadd.f32 %v106, %v548
    %v789 = vadd.f32 %v107, %v553
    %v790 = vadd.f32 %v108, %v556
    %v791 = vadd.f32 %v109, %v561
    %v792 = vadd.f32 %v110, %v564
    %v793 = vadd.f32 %v111, %v569
    %v794 = vadd.f32 %v112, %v572
    %v795 = vadd.f32 %v113, %v577
    %v796 = vadd.f32 %v114, %v580
    %v797 = vadd.f32 %v115, %v585
    %v798 = vadd.f32 %v116, %v588
    %v799 = vadd.f32 %v117, %v593
    %v800 = vadd.f32 %v118, %v596
    %v801 = vadd.f32 %v119, %v601
    %v802 = vadd.f32 %v120, %v604
    %v803 = vadd.f32 %v121, %v609
    %v804 = vadd.f32 %v122, %v612
    %v805 = vadd.f32 %v123, %v617
    %v806 = vadd.f32 %v124, %v620
    %v807 = vadd.f32 %v125, %v625
    %v808 = vadd.f32 %v126, %v628
    %v809 = vadd.f32 %v127, %v633
    %v810 = vadd.f32 %v128, %v636
    %v811 = vadd.f32 %v129, %v641
    %v812 = vadd.f32 %v130, %v644
    %v813 = vadd.f32 %v131, %v649
    %v814 = vadd.f32 %v132, %v652
    %v815 = vadd.f32 %v133, %v657
    %v816 = vadd.f32 %v134, %v660
    %v817 = vadd.f32 %v135, %v665
    %v818 = vadd.f32 %v136, %v668
    %v819 = vadd.f32 %v137, %v673
    %v820 = vadd.f32 %v138, %v676
    %v821 = vadd.f32 %v139, %v681
    %v822 = vadd.f32 %v140, %v684
    %v823 = vadd.f32 %v141, %v689
    %v824 = vadd.f32 %v142, %v692
    %v825 = vadd.f32 %v143, %v697
    %v826 = vadd.f32 %v144, %v700
    %v827 = vadd.f32 %v145, %v705
    %v828 = vadd.f32 %v146, %v708
    %v829 = vadd.f32 %v147, %v713
    %v830 = vadd.f32 %v148, %v716
    %v831 = vadd.f32 %v149, %v721
    %v832 = vadd.f32 %v150, %v724
    %v833 = vadd.f32 %v151, %v729
    %v834 = vadd.f32 %v152, %v732
    %v835 = vadd.f32 %v153, %v737
    %v836 = vadd.f32 %v154, %v740
    %v837 = vadd.f32 %v155, %v745
    %v838 = vadd.f32 %v156, %v748
    %v839 = vadd.f32 %v157, %v753
    %v840 = vadd.f32 %v158, %v756
    %v841 = vadd.f32 %v159, %v761
    %v842 = vadd.f32 %v160, %v764
    %v843 = vadd.f32 %v161, %v769
    %v844 = vadd.f32 %v162, %v772
    %v845 = vadd.f32 %v163, %v777
    %v846 = vadd.f32 %v164, %v780
    %847 = vst.msk [vmem:[#allocation2] sm:$0xff] %vm397, %v783
    %848 = vst.msk [vmem:[#allocation2 + $0x8] sm:$0xff] %vm397, %v784
    %849 = vst.msk [vmem:[#allocation2 + $0x10] sm:$0xff] %vm397, %v785
    %850 = vst.msk [vmem:[#allocation2 + $0x18] sm:$0xff] %vm397, %v786
    %851 = vst.msk [vmem:[#allocation2 + $0x20] sm:$0xff] %vm397, %v787
    %852 = vst.msk [vmem:[#allocation2 + $0x28] sm:$0xff] %vm397, %v788
    %853 = vst.msk [vmem:[#allocation2 + $0x30] sm:$0xff] %vm397, %v789
    %854 = vst.msk [vmem:[#allocation2 + $0x38] sm:$0xff] %vm397, %v790
    %855 = vst.msk [vmem:[#allocation2 + $0x40] sm:$0xff] %vm397, %v791
    %856 = vst.msk [vmem:[#allocation2 + $0x48] sm:$0xff] %vm397, %v792
    %857 = vst.msk [vmem:[#allocation2 + $0x50] sm:$0xff] %vm397, %v793
    %858 = vst.msk [vmem:[#allocation2 + $0x58] sm:$0xff] %vm397, %v794
    %859 = vst.msk [vmem:[#allocation2 + $0x60] sm:$0xff] %vm397, %v795
    %860 = vst.msk [vmem:[#allocation2 + $0x68] sm:$0xff] %vm397, %v796
    %861 = vst.msk [vmem:[#allocation2 + $0x70] sm:$0xff] %vm397, %v797
    %862 = vst.msk [vmem:[#allocation2 + $0x78] sm:$0xff] %vm397, %v798
    %863 = vst.msk [vmem:[#allocation2 + $0x80] sm:$0xff] %vm397, %v799
    %864 = vst.msk [vmem:[#allocation2 + $0x88] sm:$0xff] %vm397, %v800
    %865 = vst.msk [vmem:[#allocation2 + $0x90] sm:$0xff] %vm397, %v801
    %866 = vst.msk [vmem:[#allocation2 + $0x98] sm:$0xff] %vm397, %v802
    %867 = vst.msk [vmem:[#allocation2 + $0xa0] sm:$0xff] %vm397, %v803
    %868 = vst.msk [vmem:[#allocation2 + $0xa8] sm:$0xff] %vm397, %v804
    %869 = vst.msk [vmem:[#allocation2 + $0xb0] sm:$0xff] %vm397, %v805
    %870 = vst.msk [vmem:[#allocation2 + $0xb8] sm:$0xff] %vm397, %v806
    %871 = vst.msk [vmem:[#allocation2 + $0xc0] sm:$0xff] %vm397, %v807
    %872 = vst.msk [vmem:[#allocation2 + $0xc8] sm:$0xff] %vm397, %v808
    %873 = vst.msk [vmem:[#allocation2 + $0xd0] sm:$0xff] %vm397, %v809
    %874 = vst.msk [vmem:[#allocation2 + $0xd8] sm:$0xff] %vm397, %v810
    %875 = vst.msk [vmem:[#allocation2 + $0xe0] sm:$0xff] %vm397, %v811
    %876 = vst.msk [vmem:[#allocation2 + $0xe8] sm:$0xff] %vm397, %v812
    %877 = vst.msk [vmem:[#allocation2 + $0xf0] sm:$0xff] %vm397, %v813
    %878 = vst.msk [vmem:[#allocation2 + $0xf8] sm:$0xff] %vm397, %v814
    %879 = vst.msk [vmem:[#allocation2 + $0x100] sm:$0xff] %vm397, %v815
    %880 = vst.msk [vmem:[#allocation2 + $0x108] sm:$0xff] %vm397, %v816
    %881 = vst.msk [vmem:[#allocation2 + $0x110] sm:$0xff] %vm397, %v817
    %882 = vst.msk [vmem:[#allocation2 + $0x118] sm:$0xff] %vm397, %v818
    %883 = vst.msk [vmem:[#allocation2 + $0x120] sm:$0xff] %vm397, %v819
    %884 = vst.msk [vmem:[#allocation2 + $0x128] sm:$0xff] %vm397, %v820
    %885 = vst.msk [vmem:[#allocation2 + $0x130] sm:$0xff] %vm397, %v821
    %886 = vst.msk [vmem:[#allocation2 + $0x138] sm:$0xff] %vm397, %v822
    %887 = vst.msk [vmem:[#allocation2 + $0x140] sm:$0xff] %vm397, %v823
    %888 = vst.msk [vmem:[#allocation2 + $0x148] sm:$0xff] %vm397, %v824
    %889 = vst.msk [vmem:[#allocation2 + $0x150] sm:$0xff] %vm397, %v825
    %890 = vst.msk [vmem:[#allocation2 + $0x158] sm:$0xff] %vm397, %v826
    %891 = vst.msk [vmem:[#allocation2 + $0x160] sm:$0xff] %vm397, %v827
    %892 = vst.msk [vmem:[#allocation2 + $0x168] sm:$0xff] %vm397, %v828
    %893 = vst.msk [vmem:[#allocation2 + $0x170] sm:$0xff] %vm397, %v829
    %894 = vst.msk [vmem:[#allocation2 + $0x178] sm:$0xff] %vm397, %v830
    %895 = vst.msk [vmem:[#allocation2 + $0x180] sm:$0xff] %vm397, %v831
    %896 = vst.msk [vmem:[#allocation2 + $0x188] sm:$0xff] %vm397, %v832
    %897 = vst.msk [vmem:[#allocation2 + $0x190] sm:$0xff] %vm397, %v833
    %898 = vst.msk [vmem:[#allocation2 + $0x198] sm:$0xff] %vm397, %v834
    %899 = vst.msk [vmem:[#allocation2 + $0x1a0] sm:$0xff] %vm397, %v835
    %900 = vst.msk [vmem:[#allocation2 + $0x1a8] sm:$0xff] %vm397, %v836
    %901 = vst.msk [vmem:[#allocation2 + $0x1b0] sm:$0xff] %vm397, %v837
    %902 = vst.msk [vmem:[#allocation2 + $0x1b8] sm:$0xff] %vm397, %v838
    %903 = vst.msk [vmem:[#allocation2 + $0x1c0] sm:$0xff] %vm397, %v839
    %904 = vst.msk [vmem:[#allocation2 + $0x1c8] sm:$0xff] %vm397, %v840
    %905 = vst.msk [vmem:[#allocation2 + $0x1d0] sm:$0xff] %vm397, %v841
    %906 = vst.msk [vmem:[#allocation2 + $0x1d8] sm:$0xff] %vm397, %v842
    %907 = vst.msk [vmem:[#allocation2 + $0x1e0] sm:$0xff] %vm397, %v843
    %908 = vst.msk [vmem:[#allocation2 + $0x1e8] sm:$0xff] %vm397, %v844
    %909 = vst.msk [vmem:[#allocation2 + $0x1f0] sm:$0xff] %vm397, %v845
    %910 = vst.msk [vmem:[#allocation2 + $0x1f8] sm:$0xff] %vm397, %v846
    // Predicated region
    $region26: #{_lambda_.5} parent=1 // pred_check
      %p911 = pneg %p32
    $region27: #{_lambda_.5} parent=1 // pred_check_branch
      %913 = sbr.rel (%p911) target = $region29
    $region28: #{_lambda_.5} parent=1 // pred_region
      %v914 = vld [vmem:[#allocation2] sm:$0xff]
      %v915 = vld [vmem:[#allocation2 + $0x8] sm:$0xff]
      %v916 = vld [vmem:[#allocation2 + $0x10] sm:$0xff]
      %v917 = vld [vmem:[#allocation2 + $0x18] sm:$0xff]
      %v918 = vld [vmem:[#allocation2 + $0x20] sm:$0xff]
      %v919 = vld [vmem:[#allocation2 + $0x28] sm:$0xff]
      %v920 = vld [vmem:[#allocation2 + $0x30] sm:$0xff]
      %v921 = vld [vmem:[#allocation2 + $0x38] sm:$0xff]
      %v922 = vld [vmem:[#allocation2 + $0x40] sm:$0xff]
      %v923 = vld [vmem:[#allocation2 + $0x48] sm:$0xff]
      %v924 = vld [vmem:[#allocation2 + $0x50] sm:$0xff]
      %v925 = vld [vmem:[#allocation2 + $0x58] sm:$0xff]
      %v926 = vld [vmem:[#allocation2 + $0x60] sm:$0xff]
      %v927 = vld [vmem:[#allocation2 + $0x68] sm:$0xff]
      %v928 = vld [vmem:[#allocation2 + $0x70] sm:$0xff]
      %v929 = vld [vmem:[#allocation2 + $0x78] sm:$0xff]
      %v930 = vld [vmem:[#allocation2 + $0x80] sm:$0xff]
      %v931 = vld [vmem:[#allocation2 + $0x88] sm:$0xff]
      %v932 = vld [vmem:[#allocation2 + $0x90] sm:$0xff]
      %v933 = vld [vmem:[#allocation2 + $0x98] sm:$0xff]
      %v934 = vld [vmem:[#allocation2 + $0xa0] sm:$0xff]
      %v935 = vld [vmem:[#allocation2 + $0xa8] sm:$0xff]
      %v936 = vld [vmem:[#allocation2 + $0xb0] sm:$0xff]
      %v937 = vld [vmem:[#allocation2 + $0xb8] sm:$0xff]
      %v938 = vld [vmem:[#allocation2 + $0xc0] sm:$0xff]
      %v939 = vld [vmem:[#allocation2 + $0xc8] sm:$0xff]
      %v940 = vld [vmem:[#allocation2 + $0xd0] sm:$0xff]
      %v941 = vld [vmem:[#allocation2 + $0xd8] sm:$0xff]
      %v942 = vld [vmem:[#allocation2 + $0xe0] sm:$0xff]
      %v943 = vld [vmem:[#allocation2 + $0xe8] sm:$0xff]
      %v944 = vld [vmem:[#allocation2 + $0xf0] sm:$0xff]
      %v945 = vld [vmem:[#allocation2 + $0xf8] sm:$0xff]
      %v946 = vld [vmem:[#allocation2 + $0x100] sm:$0xff]
      %v947 = vld [vmem:[#allocation2 + $0x108] sm:$0xff]
      %v948 = vld [vmem:[#allocation2 + $0x110] sm:$0xff]
      %v949 = vld [vmem:[#allocation2 + $0x118] sm:$0xff]
      %v950 = vld [vmem:[#allocation2 + $0x120] sm:$0xff]
      %v951 = vld [vmem:[#allocation2 + $0x128] sm:$0xff]
      %v952 = vld [vmem:[#allocation2 + $0x130] sm:$0xff]
      %v953 = vld [vmem:[#allocation2 + $0x138] sm:$0xff]
      %v954 = vld [vmem:[#allocation2 + $0x140] sm:$0xff]
      %v955 = vld [vmem:[#allocation2 + $0x148] sm:$0xff]
      %v956 = vld [vmem:[#allocation2 + $0x150] sm:$0xff]
      %v957 = vld [vmem:[#allocation2 + $0x158] sm:$0xff]
      %v958 = vld [vmem:[#allocation2 + $0x160] sm:$0xff]
      %v959 = vld [vmem:[#allocation2 + $0x168] sm:$0xff]
      %v960 = vld [vmem:[#allocation2 + $0x170] sm:$0xff]
      %v961 = vld [vmem:[#allocation2 + $0x178] sm:$0xff]
      %v962 = vld [vmem:[#allocation2 + $0x180] sm:$0xff]
      %v963 = vld [vmem:[#allocation2 + $0x188] sm:$0xff]
      %v964 = vld [vmem:[#allocation2 + $0x190] sm:$0xff]
      %v965 = vld [vmem:[#allocation2 + $0x198] sm:$0xff]
      %v966 = vld [vmem:[#allocation2 + $0x1a0] sm:$0xff]
      %v967 = vld [vmem:[#allocation2 + $0x1a8] sm:$0xff]
      %v968 = vld [vmem:[#allocation2 + $0x1b0] sm:$0xff]
      %v969 = vld [vmem:[#allocation2 + $0x1b8] sm:$0xff]
      %v970 = vld [vmem:[#allocation2 + $0x1c0] sm:$0xff]
      %v971 = vld [vmem:[#allocation2 + $0x1c8] sm:$0xff]
      %v972 = vld [vmem:[#allocation2 + $0x1d0] sm:$0xff]
      %v973 = vld [vmem:[#allocation2 + $0x1d8] sm:$0xff]
      %v974 = vld [vmem:[#allocation2 + $0x1e0] sm:$0xff]
      %v975 = vld [vmem:[#allocation2 + $0x1e8] sm:$0xff]
      %v976 = vld [vmem:[#allocation2 + $0x1f0] sm:$0xff]
      %v977 = vld [vmem:[#allocation2 + $0x1f8] sm:$0xff]
      %v978 = vld [vmem:[%s2] sm:$0x1]
      %v980 = vlaneseq
      %v981 = vshrl.u32 %v980, 7
      %v982 = vsub.s32 0, %v981
      %v983 = vrot.slane %v978, %v982
      %v985 = vmul.f32 %v914, %v983
      %v986 = vmul.f32 %v915, %v983
      %v987 = vmul.f32 %v916, %v983
      %v988 = vmul.f32 %v917, %v983
      %v989 = vmul.f32 %v918, %v983
      %v990 = vmul.f32 %v919, %v983
      %v991 = vmul.f32 %v920, %v983
      %v992 = vmul.f32 %v921, %v983
      %v993 = vmul.f32 %v922, %v983
      %v994 = vmul.f32 %v923, %v983
      %v995 = vmul.f32 %v924, %v983
      %v996 = vmul.f32 %v925, %v983
      %v997 = vmul.f32 %v926, %v983
      %v998 = vmul.f32 %v927, %v983
      %v999 = vmul.f32 %v928, %v983
      %v1000 = vmul.f32 %v929, %v983
      %v1001 = vmul.f32 %v930, %v983
      %v1002 = vmul.f32 %v931, %v983
      %v1003 = vmul.f32 %v932, %v983
      %v1004 = vmul.f32 %v933, %v983
      %v1005 = vmul.f32 %v934, %v983
      %v1006 = vmul.f32 %v935, %v983
      %v1007 = vmul.f32 %v936, %v983
      %v1008 = vmul.f32 %v937, %v983
      %v1009 = vmul.f32 %v938, %v983
      %v1010 = vmul.f32 %v939, %v983
      %v1011 = vmul.f32 %v940, %v983
      %v1012 = vmul.f32 %v941, %v983
      %v1013 = vmul.f32 %v942, %v983
      %v1014 = vmul.f32 %v943, %v983
      %v1015 = vmul.f32 %v944, %v983
      %v1016 = vmul.f32 %v945, %v983
      %v1017 = vmul.f32 %v946, %v983
      %v1018 = vmul.f32 %v947, %v983
      %v1019 = vmul.f32 %v948, %v983
      %v1020 = vmul.f32 %v949, %v983
      %v1021 = vmul.f32 %v950, %v983
      %v1022 = vmul.f32 %v951, %v983
      %v1023 = vmul.f32 %v952, %v983
      %v1024 = vmul.f32 %v953, %v983
      %v1025 = vmul.f32 %v954, %v983
      %v1026 = vmul.f32 %v955, %v983
      %v1027 = vmul.f32 %v956, %v983
      %v1028 = vmul.f32 %v957, %v983
      %v1029 = vmul.f32 %v958, %v983
      %v1030 = vmul.f32 %v959, %v983
      %v1031 = vmul.f32 %v960, %v983
      %v1032 = vmul.f32 %v961, %v983
      %v1033 = vmul.f32 %v962, %v983
      %v1034 = vmul.f32 %v963, %v983
      %v1035 = vmul.f32 %v964, %v983
      %v1036 = vmul.f32 %v965, %v983
      %v1037 = vmul.f32 %v966, %v983
      %v1038 = vmul.f32 %v967, %v983
      %v1039 = vmul.f32 %v968, %v983
      %v1040 = vmul.f32 %v969, %v983
      %v1041 = vmul.f32 %v970, %v983
      %v1042 = vmul.f32 %v971, %v983
      %v1043 = vmul.f32 %v972, %v983
      %v1044 = vmul.f32 %v973, %v983
      %v1045 = vmul.f32 %v974, %v983
      %v1046 = vmul.f32 %v975, %v983
      %v1047 = vmul.f32 %v976, %v983
      %v1048 = vmul.f32 %v977, %v983
      %v1049 = vld [vmem:[%s3] sm:$0x1]
      %v1051 = vlaneseq
      %v1052 = vshrl.u32 %v1051, 7
      %v1053 = vsub.s32 0, %v1052
      %v1054 = vrot.slane %v1049, %v1053
      %v1056 = vadd.f32 %v985, %v1054
      %v1057 = vadd.f32 %v986, %v1054
      %v1058 = vadd.f32 %v987, %v1054
      %v1059 = vadd.f32 %v988, %v1054
      %v1060 = vadd.f32 %v989, %v1054
      %v1061 = vadd.f32 %v990, %v1054
      %v1062 = vadd.f32 %v991, %v1054
      %v1063 = vadd.f32 %v992, %v1054
      %v1064 = vadd.f32 %v993, %v1054
      %v1065 = vadd.f32 %v994, %v1054
      %v1066 = vadd.f32 %v995, %v1054
      %v1067 = vadd.f32 %v996, %v1054
      %v1068 = vadd.f32 %v997, %v1054
      %v1069 = vadd.f32 %v998, %v1054
      %v1070 = vadd.f32 %v999, %v1054
      %v1071 = vadd.f32 %v1000, %v1054
      %v1072 = vadd.f32 %v1001, %v1054
      %v1073 = vadd.f32 %v1002, %v1054
      %v1074 = vadd.f32 %v1003, %v1054
      %v1075 = vadd.f32 %v1004, %v1054
      %v1076 = vadd.f32 %v1005, %v1054
      %v1077 = vadd.f32 %v1006, %v1054
      %v1078 = vadd.f32 %v1007, %v1054
      %v1079 = vadd.f32 %v1008, %v1054
      %v1080 = vadd.f32 %v1009, %v1054
      %v1081 = vadd.f32 %v1010, %v1054
      %v1082 = vadd.f32 %v1011, %v1054
      %v1083 = vadd.f32 %v1012, %v1054
      %v1084 = vadd.f32 %v1013, %v1054
      %v1085 = vadd.f32 %v1014, %v1054
      %v1086 = vadd.f32 %v1015, %v1054
      %v1087 = vadd.f32 %v1016, %v1054
      %v1088 = vadd.f32 %v1017, %v1054
      %v1089 = vadd.f32 %v1018, %v1054
      %v1090 = vadd.f32 %v1019, %v1054
      %v1091 = vadd.f32 %v1020, %v1054
      %v1092 = vadd.f32 %v1021, %v1054
      %v1093 = vadd.f32 %v1022, %v1054
      %v1094 = vadd.f32 %v1023, %v1054
      %v1095 = vadd.f32 %v1024, %v1054
      %v1096 = vadd.f32 %v1025, %v1054
      %v1097 = vadd.f32 %v1026, %v1054
      %v1098 = vadd.f32 %v1027, %v1054
      %v1099 = vadd.f32 %v1028, %v1054
      %v1100 = vadd.f32 %v1029, %v1054
      %v1101 = vadd.f32 %v1030, %v1054
      %v1102 = vadd.f32 %v1031, %v1054
      %v1103 = vadd.f32 %v1032, %v1054
      %v1104 = vadd.f32 %v1033, %v1054
      %v1105 = vadd.f32 %v1034, %v1054
      %v1106 = vadd.f32 %v1035, %v1054
      %v1107 = vadd.f32 %v1036, %v1054
      %v1108 = vadd.f32 %v1037, %v1054
      %v1109 = vadd.f32 %v1038, %v1054
      %v1110 = vadd.f32 %v1039, %v1054
      %v1111 = vadd.f32 %v1040, %v1054
      %v1112 = vadd.f32 %v1041, %v1054
      %v1113 = vadd.f32 %v1042, %v1054
      %v1114 = vadd.f32 %v1043, %v1054
      %v1115 = vadd.f32 %v1044, %v1054
      %v1116 = vadd.f32 %v1045, %v1054
      %v1117 = vadd.f32 %v1046, %v1054
      %v1118 = vadd.f32 %v1047, %v1054
      %v1119 = vadd.f32 %v1048, %v1054
      %v1120 = vxor.u32 %v1056, 2147483648
      %v1121 = vxor.u32 %v1057, 2147483648
      %v1122 = vxor.u32 %v1058, 2147483648
      %v1123 = vxor.u32 %v1059, 2147483648
      %v1124 = vxor.u32 %v1060, 2147483648
      %v1125 = vxor.u32 %v1061, 2147483648
      %v1126 = vxor.u32 %v1062, 2147483648
      %v1127 = vxor.u32 %v1063, 2147483648
      %v1128 = vxor.u32 %v1064, 2147483648
      %v1129 = vxor.u32 %v1065, 2147483648
      %v1130 = vxor.u32 %v1066, 2147483648
      %v1131 = vxor.u32 %v1067, 2147483648
      %v1132 = vxor.u32 %v1068, 2147483648
      %v1133 = vxor.u32 %v1069, 2147483648
      %v1134 = vxor.u32 %v1070, 2147483648
      %v1135 = vxor.u32 %v1071, 2147483648
      %v1136 = vxor.u32 %v1072, 2147483648
      %v1137 = vxor.u32 %v1073, 2147483648
      %v1138 = vxor.u32 %v1074, 2147483648
      %v1139 = vxor.u32 %v1075, 2147483648
      %v1140 = vxor.u32 %v1076, 2147483648
      %v1141 = vxor.u32 %v1077, 2147483648
      %v1142 = vxor.u32 %v1078, 2147483648
      %v1143 = vxor.u32 %v1079, 2147483648
      %v1144 = vxor.u32 %v1080, 2147483648
      %v1145 = vxor.u32 %v1081, 2147483648
      %v1146 = vxor.u32 %v1082, 2147483648
      %v1147 = vxor.u32 %v1083, 2147483648
      %v1148 = vxor.u32 %v1084, 2147483648
      %v1149 = vxor.u32 %v1085, 2147483648
      %v1150 = vxor.u32 %v1086, 2147483648
      %v1151 = vxor.u32 %v1087, 2147483648
      %v1152 = vxor.u32 %v1088, 2147483648
      %v1153 = vxor.u32 %v1089, 2147483648
      %v1154 = vxor.u32 %v1090, 2147483648
      %v1155 = vxor.u32 %v1091, 2147483648
      %v1156 = vxor.u32 %v1092, 2147483648
      %v1157 = vxor.u32 %v1093, 2147483648
      %v1158 = vxor.u32 %v1094, 2147483648
      %v1159 = vxor.u32 %v1095, 2147483648
      %v1160 = vxor.u32 %v1096, 2147483648
      %v1161 = vxor.u32 %v1097, 2147483648
      %v1162 = vxor.u32 %v1098, 2147483648
      %v1163 = vxor.u32 %v1099, 2147483648
      %v1164 = vxor.u32 %v1100, 2147483648
      %v1165 = vxor.u32 %v1101, 2147483648
      %v1166 = vxor.u32 %v1102, 2147483648
      %v1167 = vxor.u32 %v1103, 2147483648
      %v1168 = vxor.u32 %v1104, 2147483648
      %v1169 = vxor.u32 %v1105, 2147483648
      %v1170 = vxor.u32 %v1106, 2147483648
      %v1171 = vxor.u32 %v1107, 2147483648
      %v1172 = vxor.u32 %v1108, 2147483648
      %v1173 = vxor.u32 %v1109, 2147483648
      %v1174 = vxor.u32 %v1110, 2147483648
      %v1175 = vxor.u32 %v1111, 2147483648
      %v1176 = vxor.u32 %v1112, 2147483648
      %v1177 = vxor.u32 %v1113, 2147483648
      %v1178 = vxor.u32 %v1114, 2147483648
      %v1179 = vxor.u32 %v1115, 2147483648
      %v1180 = vxor.u32 %v1116, 2147483648
      %v1181 = vxor.u32 %v1117, 2147483648
      %v1182 = vxor.u32 %v1118, 2147483648
      %v1183 = vxor.u32 %v1119, 2147483648
      %v1184 = vmul.f32 %v1120, 1.442695
      %v1185 = vpow.pop %v1184
      %v1186 = vmul.f32 %v1121, 1.442695
      %v1187 = vpow.pop %v1186
      %v1188 = vmul.f32 %v1122, 1.442695
      %v1189 = vpow.pop %v1188
      %v1190 = vmul.f32 %v1123, 1.442695
      %v1191 = vpow.pop %v1190
      %v1192 = vmul.f32 %v1124, 1.442695
      %v1193 = vpow.pop %v1192
      %v1194 = vmul.f32 %v1125, 1.442695
      %v1195 = vpow.pop %v1194
      %v1196 = vmul.f32 %v1126, 1.442695
      %v1197 = vpow.pop %v1196
      %v1198 = vmul.f32 %v1127, 1.442695
      %v1199 = vpow.pop %v1198
      %v1200 = vmul.f32 %v1128, 1.442695
      %v1201 = vpow.pop %v1200
      %v1202 = vmul.f32 %v1129, 1.442695
      %v1203 = vpow.pop %v1202
      %v1204 = vmul.f32 %v1130, 1.442695
      %v1205 = vpow.pop %v1204
      %v1206 = vmul.f32 %v1131, 1.442695
      %v1207 = vpow.pop %v1206
      %v1208 = vmul.f32 %v1132, 1.442695
      %v1209 = vpow.pop %v1208
      %v1210 = vmul.f32 %v1133, 1.442695
      %v1211 = vpow.pop %v1210
      %v1212 = vmul.f32 %v1134, 1.442695
      %v1213 = vpow.pop %v1212
      %v1214 = vmul.f32 %v1135, 1.442695
      %v1215 = vpow.pop %v1214
      %v1216 = vmul.f32 %v1136, 1.442695
      %v1217 = vpow.pop %v1216
      %v1218 = vmul.f32 %v1137, 1.442695
      %v1219 = vpow.pop %v1218
      %v1220 = vmul.f32 %v1138, 1.442695
      %v1221 = vpow.pop %v1220
      %v1222 = vmul.f32 %v1139, 1.442695
      %v1223 = vpow.pop %v1222
      %v1224 = vmul.f32 %v1140, 1.442695
      %v1225 = vpow.pop %v1224
      %v1226 = vmul.f32 %v1141, 1.442695
      %v1227 = vpow.pop %v1226
      %v1228 = vmul.f32 %v1142, 1.442695
      %v1229 = vpow.pop %v1228
      %v1230 = vmul.f32 %v1143, 1.442695
      %v1231 = vpow.pop %v1230
      %v1232 = vmul.f32 %v1144, 1.442695
      %v1233 = vpow.pop %v1232
      %v1234 = vmul.f32 %v1145, 1.442695
      %v1235 = vpow.pop %v1234
      %v1236 = vmul.f32 %v1146, 1.442695
      %v1237 = vpow.pop %v1236
      %v1238 = vmul.f32 %v1147, 1.442695
      %v1239 = vpow.pop %v1238
      %v1240 = vmul.f32 %v1148, 1.442695
      %v1241 = vpow.pop %v1240
      %v1242 = vmul.f32 %v1149, 1.442695
      %v1243 = vpow.pop %v1242
      %v1244 = vmul.f32 %v1150, 1.442695
      %v1245 = vpow.pop %v1244
      %v1246 = vmul.f32 %v1151, 1.442695
      %v1247 = vpow.pop %v1246
      %v1248 = vmul.f32 %v1152, 1.442695
      %v1249 = vpow.pop %v1248
      %v1250 = vmul.f32 %v1153, 1.442695
      %v1251 = vpow.pop %v1250
      %v1252 = vmul.f32 %v1154, 1.442695
      %v1253 = vpow.pop %v1252
      %v1254 = vmul.f32 %v1155, 1.442695
      %v1255 = vpow.pop %v1254
      %v1256 = vmul.f32 %v1156, 1.442695
      %v1257 = vpow.pop %v1256
      %v1258 = vmul.f32 %v1157, 1.442695
      %v1259 = vpow.pop %v1258
      %v1260 = vmul.f32 %v1158, 1.442695
      %v1261 = vpow.pop %v1260
      %v1262 = vmul.f32 %v1159, 1.442695
      %v1263 = vpow.pop %v1262
      %v1264 = vmul.f32 %v1160, 1.442695
      %v1265 = vpow.pop %v1264
      %v1266 = vmul.f32 %v1161, 1.442695
      %v1267 = vpow.pop %v1266
      %v1268 = vmul.f32 %v1162, 1.442695
      %v1269 = vpow.pop %v1268
      %v1270 = vmul.f32 %v1163, 1.442695
      %v1271 = vpow.pop %v1270
      %v1272 = vmul.f32 %v1164, 1.442695
      %v1273 = vpow.pop %v1272
      %v1274 = vmul.f32 %v1165, 1.442695
      %v1275 = vpow.pop %v1274
      %v1276 = vmul.f32 %v1166, 1.442695
      %v1277 = vpow.pop %v1276
      %v1278 = vmul.f32 %v1167, 1.442695
      %v1279 = vpow.pop %v1278
      %v1280 = vmul.f32 %v1168, 1.442695
      %v1281 = vpow.pop %v1280
      %v1282 = vmul.f32 %v1169, 1.442695
      %v1283 = vpow.pop %v1282
      %v1284 = vmul.f32 %v1170, 1.442695
      %v1285 = vpow.pop %v1284
      %v1286 = vmul.f32 %v1171, 1.442695
      %v1287 = vpow.pop %v1286
      %v1288 = vmul.f32 %v1172, 1.442695
      %v1289 = vpow.pop %v1288
      %v1290 = vmul.f32 %v1173, 1.442695
      %v1291 = vpow.pop %v1290
      %v1292 = vmul.f32 %v1174, 1.442695
      %v1293 = vpow.pop %v1292
      %v1294 = vmul.f32 %v1175, 1.442695
      %v1295 = vpow.pop %v1294
      %v1296 = vmul.f32 %v1176, 1.442695
      %v1297 = vpow.pop %v1296
      %v1298 = vmul.f32 %v1177, 1.442695
      %v1299 = vpow.pop %v1298
      %v1300 = vmul.f32 %v1178, 1.442695
      %v1301 = vpow.pop %v1300
      %v1302 = vmul.f32 %v1179, 1.442695
      %v1303 = vpow.pop %v1302
      %v1304 = vmul.f32 %v1180, 1.442695
      %v1305 = vpow.pop %v1304
      %v1306 = vmul.f32 %v1181, 1.442695
      %v1307 = vpow.pop %v1306
      %v1308 = vmul.f32 %v1182, 1.442695
      %v1309 = vpow.pop %v1308
      %v1310 = vmul.f32 %v1183, 1.442695
      %v1311 = vpow.pop %v1310
      %v1312 = vadd.f32 %v1185, 1.0
      %v1313 = vadd.f32 %v1187, 1.0
      %v1314 = vadd.f32 %v1189, 1.0
      %v1315 = vadd.f32 %v1191, 1.0
      %v1316 = vadd.f32 %v1193, 1.0
      %v1317 = vadd.f32 %v1195, 1.0
      %v1318 = vadd.f32 %v1197, 1.0
      %v1319 = vadd.f32 %v1199, 1.0
      %v1320 = vadd.f32 %v1201, 1.0
      %v1321 = vadd.f32 %v1203, 1.0
      %v1322 = vadd.f32 %v1205, 1.0
      %v1323 = vadd.f32 %v1207, 1.0
      %v1324 = vadd.f32 %v1209, 1.0
      %v1325 = vadd.f32 %v1211, 1.0
      %v1326 = vadd.f32 %v1213, 1.0
      %v1327 = vadd.f32 %v1215, 1.0
      %v1328 = vadd.f32 %v1217, 1.0
      %v1329 = vadd.f32 %v1219, 1.0
      %v1330 = vadd.f32 %v1221, 1.0
      %v1331 = vadd.f32 %v1223, 1.0
      %v1332 = vadd.f32 %v1225, 1.0
      %v1333 = vadd.f32 %v1227, 1.0
      %v1334 = vadd.f32 %v1229, 1.0
      %v1335 = vadd.f32 %v1231, 1.0
      %v1336 = vadd.f32 %v1233, 1.0
      %v1337 = vadd.f32 %v1235, 1.0
      %v1338 = vadd.f32 %v1237, 1.0
      %v1339 = vadd.f32 %v1239, 1.0
      %v1340 = vadd.f32 %v1241, 1.0
      %v1341 = vadd.f32 %v1243, 1.0
      %v1342 = vadd.f32 %v1245, 1.0
      %v1343 = vadd.f32 %v1247, 1.0
      %v1344 = vadd.f32 %v1249, 1.0
      %v1345 = vadd.f32 %v1251, 1.0
      %v1346 = vadd.f32 %v1253, 1.0
      %v1347 = vadd.f32 %v1255, 1.0
      %v1348 = vadd.f32 %v1257, 1.0
      %v1349 = vadd.f32 %v1259, 1.0
      %v1350 = vadd.f32 %v1261, 1.0
      %v1351 = vadd.f32 %v1263, 1.0
      %v1352 = vadd.f32 %v1265, 1.0
      %v1353 = vadd.f32 %v1267, 1.0
      %v1354 = vadd.f32 %v1269, 1.0
      %v1355 = vadd.f32 %v1271, 1.0
      %v1356 = vadd.f32 %v1273, 1.0
      %v1357 = vadd.f32 %v1275, 1.0
      %v1358 = vadd.f32 %v1277, 1.0
      %v1359 = vadd.f32 %v1279, 1.0
      %v1360 = vadd.f32 %v1281, 1.0
      %v1361 = vadd.f32 %v1283, 1.0
      %v1362 = vadd.f32 %v1285, 1.0
      %v1363 = vadd.f32 %v1287, 1.0
      %v1364 = vadd.f32 %v1289, 1.0
      %v1365 = vadd.f32 %v1291, 1.0
      %v1366 = vadd.f32 %v1293, 1.0
      %v1367 = vadd.f32 %v1295, 1.0
      %v1368 = vadd.f32 %v1297, 1.0
      %v1369 = vadd.f32 %v1299, 1.0
      %v1370 = vadd.f32 %v1301, 1.0
      %v1371 = vadd.f32 %v1303, 1.0
      %v1372 = vadd.f32 %v1305, 1.0
      %v1373 = vadd.f32 %v1307, 1.0
      %v1374 = vadd.f32 %v1309, 1.0
      %v1375 = vadd.f32 %v1311, 1.0
      %v1376 = vrcp.pop %v1312
      %v1377 = vmul.f32 1.0, %v1376
      %v1378 = vrcp.pop %v1313
      %v1379 = vmul.f32 1.0, %v1378
      %v1380 = vrcp.pop %v1314
      %v1381 = vmul.f32 1.0, %v1380
      %v1382 = vrcp.pop %v1315
      %v1383 = vmul.f32 1.0, %v1382
      %v1384 = vrcp.pop %v1316
      %v1385 = vmul.f32 1.0, %v1384
      %v1386 = vrcp.pop %v1317
      %v1387 = vmul.f32 1.0, %v1386
      %v1388 = vrcp.pop %v1318
      %v1389 = vmul.f32 1.0, %v1388
      %v1390 = vrcp.pop %v1319
      %v1391 = vmul.f32 1.0, %v1390
      %v1392 = vrcp.pop %v1320
      %v1393 = vmul.f32 1.0, %v1392
      %v1394 = vrcp.pop %v1321
      %v1395 = vmul.f32 1.0, %v1394
      %v1396 = vrcp.pop %v1322
      %v1397 = vmul.f32 1.0, %v1396
      %v1398 = vrcp.pop %v1323
      %v1399 = vmul.f32 1.0, %v1398
      %v1400 = vrcp.pop %v1324
      %v1401 = vmul.f32 1.0, %v1400
      %v1402 = vrcp.pop %v1325
      %v1403 = vmul.f32 1.0, %v1402
      %v1404 = vrcp.pop %v1326
      %v1405 = vmul.f32 1.0, %v1404
      %v1406 = vrcp.pop %v1327
      %v1407 = vmul.f32 1.0, %v1406
      %v1408 = vrcp.pop %v1328
      %v1409 = vmul.f32 1.0, %v1408
      %v1410 = vrcp.pop %v1329
      %v1411 = vmul.f32 1.0, %v1410
      %v1412 = vrcp.pop %v1330
      %v1413 = vmul.f32 1.0, %v1412
      %v1414 = vrcp.pop %v1331
      %v1415 = vmul.f32 1.0, %v1414
      %v1416 = vrcp.pop %v1332
      %v1417 = vmul.f32 1.0, %v1416
      %v1418 = vrcp.pop %v1333
      %v1419 = vmul.f32 1.0, %v1418
      %v1420 = vrcp.pop %v1334
      %v1421 = vmul.f32 1.0, %v1420
      %v1422 = vrcp.pop %v1335
      %v1423 = vmul.f32 1.0, %v1422
      %v1424 = vrcp.pop %v1336
      %v1425 = vmul.f32 1.0, %v1424
      %v1426 = vrcp.pop %v1337
      %v1427 = vmul.f32 1.0, %v1426
      %v1428 = vrcp.pop %v1338
      %v1429 = vmul.f32 1.0, %v1428
      %v1430 = vrcp.pop %v1339
      %v1431 = vmul.f32 1.0, %v1430
      %v1432 = vrcp.pop %v1340
      %v1433 = vmul.f32 1.0, %v1432
      %v1434 = vrcp.pop %v1341
      %v1435 = vmul.f32 1.0, %v1434
      %v1436 = vrcp.pop %v1342
      %v1437 = vmul.f32 1.0, %v1436
      %v1438 = vrcp.pop %v1343
      %v1439 = vmul.f32 1.0, %v1438
      %v1440 = vrcp.pop %v1344
      %v1441 = vmul.f32 1.0, %v1440
      %v1442 = vrcp.pop %v1345
      %v1443 = vmul.f32 1.0, %v1442
      %v1444 = vrcp.pop %v1346
      %v1445 = vmul.f32 1.0, %v1444
      %v1446 = vrcp.pop %v1347
      %v1447 = vmul.f32 1.0, %v1446
      %v1448 = vrcp.pop %v1348
      %v1449 = vmul.f32 1.0, %v1448
      %v1450 = vrcp.pop %v1349
      %v1451 = vmul.f32 1.0, %v1450
      %v1452 = vrcp.pop %v1350
      %v1453 = vmul.f32 1.0, %v1452
      %v1454 = vrcp.pop %v1351
      %v1455 = vmul.f32 1.0, %v1454
      %v1456 = vrcp.pop %v1352
      %v1457 = vmul.f32 1.0, %v1456
      %v1458 = vrcp.pop %v1353
      %v1459 = vmul.f32 1.0, %v1458
      %v1460 = vrcp.pop %v1354
      %v1461 = vmul.f32 1.0, %v1460
      %v1462 = vrcp.pop %v1355
      %v1463 = vmul.f32 1.0, %v1462
      %v1464 = vrcp.pop %v1356
      %v1465 = vmul.f32 1.0, %v1464
      %v1466 = vrcp.pop %v1357
      %v1467 = vmul.f32 1.0, %v1466
      %v1468 = vrcp.pop %v1358
      %v1469 = vmul.f32 1.0, %v1468
      %v1470 = vrcp.pop %v1359
      %v1471 = vmul.f32 1.0, %v1470
      %v1472 = vrcp.pop %v1360
      %v1473 = vmul.f32 1.0, %v1472
      %v1474 = vrcp.pop %v1361
      %v1475 = vmul.f32 1.0, %v1474
      %v1476 = vrcp.pop %v1362
      %v1477 = vmul.f32 1.0, %v1476
      %v1478 = vrcp.pop %v1363
      %v1479 = vmul.f32 1.0, %v1478
      %v1480 = vrcp.pop %v1364
      %v1481 = vmul.f32 1.0, %v1480
      %v1482 = vrcp.pop %v1365
      %v1483 = vmul.f32 1.0, %v1482
      %v1484 = vrcp.pop %v1366
      %v1485 = vmul.f32 1.0, %v1484
      %v1486 = vrcp.pop %v1367
      %v1487 = vmul.f32 1.0, %v1486
      %v1488 = vrcp.pop %v1368
      %v1489 = vmul.f32 1.0, %v1488
      %v1490 = vrcp.pop %v1369
      %v1491 = vmul.f32 1.0, %v1490
      %v1492 = vrcp.pop %v1370
      %v1493 = vmul.f32 1.0, %v1492
      %v1494 = vrcp.pop %v1371
      %v1495 = vmul.f32 1.0, %v1494
      %v1496 = vrcp.pop %v1372
      %v1497 = vmul.f32 1.0, %v1496
      %v1498 = vrcp.pop %v1373
      %v1499 = vmul.f32 1.0, %v1498
      %v1500 = vrcp.pop %v1374
      %v1501 = vmul.f32 1.0, %v1500
      %v1502 = vrcp.pop %v1375
      %v1503 = vmul.f32 1.0, %v1502
      %v1504 = vmul.f32 %v1056, %v1377
      %v1505 = vmul.f32 %v1057, %v1379
      %v1506 = vmul.f32 %v1058, %v1381
      %v1507 = vmul.f32 %v1059, %v1383
      %v1508 = vmul.f32 %v1060, %v1385
      %v1509 = vmul.f32 %v1061, %v1387
      %v1510 = vmul.f32 %v1062, %v1389
      %v1511 = vmul.f32 %v1063, %v1391
      %v1512 = vmul.f32 %v1064, %v1393
      %v1513 = vmul.f32 %v1065, %v1395
      %v1514 = vmul.f32 %v1066, %v1397
      %v1515 = vmul.f32 %v1067, %v1399
      %v1516 = vmul.f32 %v1068, %v1401
      %v1517 = vmul.f32 %v1069, %v1403
      %v1518 = vmul.f32 %v1070, %v1405
      %v1519 = vmul.f32 %v1071, %v1407
      %v1520 = vmul.f32 %v1072, %v1409
      %v1521 = vmul.f32 %v1073, %v1411
      %v1522 = vmul.f32 %v1074, %v1413
      %v1523 = vmul.f32 %v1075, %v1415
      %v1524 = vmul.f32 %v1076, %v1417
      %v1525 = vmul.f32 %v1077, %v1419
      %v1526 = vmul.f32 %v1078, %v1421
      %v1527 = vmul.f32 %v1079, %v1423
      %v1528 = vmul.f32 %v1080, %v1425
      %v1529 = vmul.f32 %v1081, %v1427
      %v1530 = vmul.f32 %v1082, %v1429
      %v1531 = vmul.f32 %v1083, %v1431
      %v1532 = vmul.f32 %v1084, %v1433
      %v1533 = vmul.f32 %v1085, %v1435
      %v1534 = vmul.f32 %v1086, %v1437
      %v1535 = vmul.f32 %v1087, %v1439
      %v1536 = vmul.f32 %v1088, %v1441
      %v1537 = vmul.f32 %v1089, %v1443
      %v1538 = vmul.f32 %v1090, %v1445
      %v1539 = vmul.f32 %v1091, %v1447
      %v1540 = vmul.f32 %v1092, %v1449
      %v1541 = vmul.f32 %v1093, %v1451
      %v1542 = vmul.f32 %v1094, %v1453
      %v1543 = vmul.f32 %v1095, %v1455
      %v1544 = vmul.f32 %v1096, %v1457
      %v1545 = vmul.f32 %v1097, %v1459
      %v1546 = vmul.f32 %v1098, %v1461
      %v1547 = vmul.f32 %v1099, %v1463
      %v1548 = vmul.f32 %v1100, %v1465
      %v1549 = vmul.f32 %v1101, %v1467
      %v1550 = vmul.f32 %v1102, %v1469
      %v1551 = vmul.f32 %v1103, %v1471
      %v1552 = vmul.f32 %v1104, %v1473
      %v1553 = vmul.f32 %v1105, %v1475
      %v1554 = vmul.f32 %v1106, %v1477
      %v1555 = vmul.f32 %v1107, %v1479
      %v1556 = vmul.f32 %v1108, %v1481
      %v1557 = vmul.f32 %v1109, %v1483
      %v1558 = vmul.f32 %v1110, %v1485
      %v1559 = vmul.f32 %v1111, %v1487
      %v1560 = vmul.f32 %v1112, %v1489
      %v1561 = vmul.f32 %v1113, %v1491
      %v1562 = vmul.f32 %v1114, %v1493
      %v1563 = vmul.f32 %v1115, %v1495
      %v1564 = vmul.f32 %v1116, %v1497
      %v1565 = vmul.f32 %v1117, %v1499
      %v1566 = vmul.f32 %v1118, %v1501
      %v1567 = vmul.f32 %v1119, %v1503
      %v1568 = vpack.c.bf16 %v1505, %v1504
      %v1569 = vpack.c.bf16 %v1507, %v1506
      %v1570 = vpack.c.bf16 %v1509, %v1508
      %v1571 = vpack.c.bf16 %v1511, %v1510
      %v1572 = vpack.c.bf16 %v1513, %v1512
      %v1573 = vpack.c.bf16 %v1515, %v1514
      %v1574 = vpack.c.bf16 %v1517, %v1516
      %v1575 = vpack.c.bf16 %v1519, %v1518
      %v1576 = vpack.c.bf16 %v1521, %v1520
      %v1577 = vpack.c.bf16 %v1523, %v1522
      %v1578 = vpack.c.bf16 %v1525, %v1524
      %v1579 = vpack.c.bf16 %v1527, %v1526
      %v1580 = vpack.c.bf16 %v1529, %v1528
      %v1581 = vpack.c.bf16 %v1531, %v1530
      %v1582 = vpack.c.bf16 %v1533, %v1532
      %v1583 = vpack.c.bf16 %v1535, %v1534
      %v1584 = vpack.c.bf16 %v1537, %v1536
      %v1585 = vpack.c.bf16 %v1539, %v1538
      %v1586 = vpack.c.bf16 %v1541, %v1540
      %v1587 = vpack.c.bf16 %v1543, %v1542
      %v1588 = vpack.c.bf16 %v1545, %v1544
      %v1589 = vpack.c.bf16 %v1547, %v1546
      %v1590 = vpack.c.bf16 %v1549, %v1548
      %v1591 = vpack.c.bf16 %v1551, %v1550
      %v1592 = vpack.c.bf16 %v1553, %v1552
      %v1593 = vpack.c.bf16 %v1555, %v1554
      %v1594 = vpack.c.bf16 %v1557, %v1556
      %v1595 = vpack.c.bf16 %v1559, %v1558
      %v1596 = vpack.c.bf16 %v1561, %v1560
      %v1597 = vpack.c.bf16 %v1563, %v1562
      %v1598 = vpack.c.bf16 %v1565, %v1564
      %v1599 = vpack.c.bf16 %v1567, %v1566
      %v1632 = vunpack.c.l.b16 %v1568
      %v1633 = vunpack.c.h.b16 %v1568
      %v1634 = vunpack.c.l.b16 %v1569
      %v1635 = vunpack.c.h.b16 %v1569
      %v1636 = vunpack.c.l.b16 %v1570
      %v1637 = vunpack.c.h.b16 %v1570
      %v1638 = vunpack.c.l.b16 %v1571
      %v1639 = vunpack.c.h.b16 %v1571
      %v1640 = vunpack.c.l.b16 %v1572
      %v1641 = vunpack.c.h.b16 %v1572
      %v1642 = vunpack.c.l.b16 %v1573
      %v1643 = vunpack.c.h.b16 %v1573
      %v1644 = vunpack.c.l.b16 %v1574
      %v1645 = vunpack.c.h.b16 %v1574
      %v1646 = vunpack.c.l.b16 %v1575
      %v1647 = vunpack.c.h.b16 %v1575
      %v1648 = vunpack.c.l.b16 %v1576
      %v1649 = vunpack.c.h.b16 %v1576
      %v1650 = vunpack.c.l.b16 %v1577
      %v1651 = vunpack.c.h.b16 %v1577
      %v1652 = vunpack.c.l.b16 %v1578
      %v1653 = vunpack.c.h.b16 %v1578
      %v1654 = vunpack.c.l.b16 %v1579
      %v1655 = vunpack.c.h.b16 %v1579
      %v1656 = vunpack.c.l.b16 %v1580
      %v1657 = vunpack.c.h.b16 %v1580
      %v1658 = vunpack.c.l.b16 %v1581
      %v1659 = vunpack.c.h.b16 %v1581
      %v1660 = vunpack.c.l.b16 %v1582
      %v1661 = vunpack.c.h.b16 %v1582
      %v1662 = vunpack.c.l.b16 %v1583
      %v1663 = vunpack.c.h.b16 %v1583
      %v1664 = vunpack.c.l.b16 %v1584
      %v1665 = vunpack.c.h.b16 %v1584
      %v1666 = vunpack.c.l.b16 %v1585
      %v1667 = vunpack.c.h.b16 %v1585
      %v1668 = vunpack.c.l.b16 %v1586
      %v1669 = vunpack.c.h.b16 %v1586
      %v1670 = vunpack.c.l.b16 %v1587
      %v1671 = vunpack.c.h.b16 %v1587
      %v1672 = vunpack.c.l.b16 %v1588
      %v1673 = vunpack.c.h.b16 %v1588
      %v1674 = vunpack.c.l.b16 %v1589
      %v1675 = vunpack.c.h.b16 %v1589
      %v1676 = vunpack.c.l.b16 %v1590
      %v1677 = vunpack.c.h.b16 %v1590
      %v1678 = vunpack.c.l.b16 %v1591
      %v1679 = vunpack.c.h.b16 %v1591
      %v1680 = vunpack.c.l.b16 %v1592
      %v1681 = vunpack.c.h.b16 %v1592
      %v1682 = vunpack.c.l.b16 %v1593
      %v1683 = vunpack.c.h.b16 %v1593
      %v1684 = vunpack.c.l.b16 %v1594
      %v1685 = vunpack.c.h.b16 %v1594
      %v1686 = vunpack.c.l.b16 %v1595
      %v1687 = vunpack.c.h.b16 %v1595
      %v1688 = vunpack.c.l.b16 %v1596
      %v1689 = vunpack.c.h.b16 %v1596
      %v1690 = vunpack.c.l.b16 %v1597
      %v1691 = vunpack.c.h.b16 %v1597
      %v1692 = vunpack.c.l.b16 %v1598
      %v1693 = vunpack.c.h.b16 %v1598
      %v1694 = vunpack.c.l.b16 %v1599
      %v1695 = vunpack.c.h.b16 %v1599
      %v1696 = vpack.c.b16 %v1632, %v1632
      %v1697 = vpack.c.b16 %v1633, %v1633
      %v1698 = vpack.c.b16 %v1634, %v1634
      %v1699 = vpack.c.b16 %v1635, %v1635
      %v1700 = vpack.c.b16 %v1636, %v1636
      %v1701 = vpack.c.b16 %v1637, %v1637
      %v1702 = vpack.c.b16 %v1638, %v1638
      %v1703 = vpack.c.b16 %v1639, %v1639
      %v1704 = vpack.c.b16 %v1640, %v1640
      %v1705 = vpack.c.b16 %v1641, %v1641
      %v1706 = vpack.c.b16 %v1642, %v1642
      %v1707 = vpack.c.b16 %v1643, %v1643
      %v1708 = vpack.c.b16 %v1644, %v1644
      %v1709 = vpack.c.b16 %v1645, %v1645
      %v1710 = vpack.c.b16 %v1646, %v1646
      %v1711 = vpack.c.b16 %v1647, %v1647
      %v1712 = vpack.c.b16 %v1648, %v1648
      %v1713 = vpack.c.b16 %v1649, %v1649
      %v1714 = vpack.c.b16 %v1650, %v1650
      %v1715 = vpack.c.b16 %v1651, %v1651
      %v1716 = vpack.c.b16 %v1652, %v1652
      %v1717 = vpack.c.b16 %v1653, %v1653
      %v1718 = vpack.c.b16 %v1654, %v1654
      %v1719 = vpack.c.b16 %v1655, %v1655
      %v1720 = vpack.c.b16 %v1656, %v1656
      %v1721 = vpack.c.b16 %v1657, %v1657
      %v1722 = vpack.c.b16 %v1658, %v1658
      %v1723 = vpack.c.b16 %v1659, %v1659
      %v1724 = vpack.c.b16 %v1660, %v1660
      %v1725 = vpack.c.b16 %v1661, %v1661
      %v1726 = vpack.c.b16 %v1662, %v1662
      %v1727 = vpack.c.b16 %v1663, %v1663
      %v1728 = vpack.c.b16 %v1664, %v1664
      %v1729 = vpack.c.b16 %v1665, %v1665
      %v1730 = vpack.c.b16 %v1666, %v1666
      %v1731 = vpack.c.b16 %v1667, %v1667
      %v1732 = vpack.c.b16 %v1668, %v1668
      %v1733 = vpack.c.b16 %v1669, %v1669
      %v1734 = vpack.c.b16 %v1670, %v1670
      %v1735 = vpack.c.b16 %v1671, %v1671
      %v1736 = vpack.c.b16 %v1672, %v1672
      %v1737 = vpack.c.b16 %v1673, %v1673
      %v1738 = vpack.c.b16 %v1674, %v1674
      %v1739 = vpack.c.b16 %v1675, %v1675
      %v1740 = vpack.c.b16 %v1676, %v1676
      %v1741 = vpack.c.b16 %v1677, %v1677
      %v1742 = vpack.c.b16 %v1678, %v1678
      %v1743 = vpack.c.b16 %v1679, %v1679
      %v1744 = vpack.c.b16 %v1680, %v1680
      %v1745 = vpack.c.b16 %v1681, %v1681
      %v1746 = vpack.c.b16 %v1682, %v1682
      %v1747 = vpack.c.b16 %v1683, %v1683
      %v1748 = vpack.c.b16 %v1684, %v1684
      %v1749 = vpack.c.b16 %v1685, %v1685
      %v1750 = vpack.c.b16 %v1686, %v1686
      %v1751 = vpack.c.b16 %v1687, %v1687
      %v1752 = vpack.c.b16 %v1688, %v1688
      %v1753 = vpack.c.b16 %v1689, %v1689
      %v1754 = vpack.c.b16 %v1690, %v1690
      %v1755 = vpack.c.b16 %v1691, %v1691
      %v1756 = vpack.c.b16 %v1692, %v1692
      %v1757 = vpack.c.b16 %v1693, %v1693
      %v1758 = vpack.c.b16 %v1694, %v1694
      %v1759 = vpack.c.b16 %v1695, %v1695
      %vm1824 = vcmask 125952
      %1825 = vst.msk [vmem:[%s4] sm:$0xf] %vm1824, %v1696
      %1826 = vst.msk [vmem:[%s4 + $0x4] sm:$0xf] %vm1824, %v1697
      %1827 = vst.msk [vmem:[%s4 + $0x8] sm:$0xf] %vm1824, %v1698
      %1828 = vst.msk [vmem:[%s4 + $0xc] sm:$0xf] %vm1824, %v1699
      %1829 = vst.msk [vmem:[%s4 + $0x10] sm:$0xf] %vm1824, %v1700
      %1830 = vst.msk [vmem:[%s4 + $0x14] sm:$0xf] %vm1824, %v1701
      %1831 = vst.msk [vmem:[%s4 + $0x18] sm:$0xf] %vm1824, %v1702
      %1832 = vst.msk [vmem:[%s4 + $0x1c] sm:$0xf] %vm1824, %v1703
      %1833 = vst.msk [vmem:[%s4 + $0x20] sm:$0xf] %vm1824, %v1704
      %1834 = vst.msk [vmem:[%s4 + $0x24] sm:$0xf] %vm1824, %v1705
      %1835 = vst.msk [vmem:[%s4 + $0x28] sm:$0xf] %vm1824, %v1706
      %1836 = vst.msk [vmem:[%s4 + $0x2c] sm:$0xf] %vm1824, %v1707
      %1837 = vst.msk [vmem:[%s4 + $0x30] sm:$0xf] %vm1824, %v1708
      %1838 = vst.msk [vmem:[%s4 + $0x34] sm:$0xf] %vm1824, %v1709
      %1839 = vst.msk [vmem:[%s4 + $0x38] sm:$0xf] %vm1824, %v1710
      %1840 = vst.msk [vmem:[%s4 + $0x3c] sm:$0xf] %vm1824, %v1711
      %1841 = vst.msk [vmem:[%s4 + $0x40] sm:$0xf] %vm1824, %v1712
      %1842 = vst.msk [vmem:[%s4 + $0x44] sm:$0xf] %vm1824, %v1713
      %1843 = vst.msk [vmem:[%s4 + $0x48] sm:$0xf] %vm1824, %v1714
      %1844 = vst.msk [vmem:[%s4 + $0x4c] sm:$0xf] %vm1824, %v1715
      %1845 = vst.msk [vmem:[%s4 + $0x50] sm:$0xf] %vm1824, %v1716
      %1846 = vst.msk [vmem:[%s4 + $0x54] sm:$0xf] %vm1824, %v1717
      %1847 = vst.msk [vmem:[%s4 + $0x58] sm:$0xf] %vm1824, %v1718
      %1848 = vst.msk [vmem:[%s4 + $0x5c] sm:$0xf] %vm1824, %v1719
      %1849 = vst.msk [vmem:[%s4 + $0x60] sm:$0xf] %vm1824, %v1720
      %1850 = vst.msk [vmem:[%s4 + $0x64] sm:$0xf] %vm1824, %v1721
      %1851 = vst.msk [vmem:[%s4 + $0x68] sm:$0xf] %vm1824, %v1722
      %1852 = vst.msk [vmem:[%s4 + $0x6c] sm:$0xf] %vm1824, %v1723
      %1853 = vst.msk [vmem:[%s4 + $0x70] sm:$0xf] %vm1824, %v1724
      %1854 = vst.msk [vmem:[%s4 + $0x74] sm:$0xf] %vm1824, %v1725
      %1855 = vst.msk [vmem:[%s4 + $0x78] sm:$0xf] %vm1824, %v1726
      %1856 = vst.msk [vmem:[%s4 + $0x7c] sm:$0xf] %vm1824, %v1727
      %1857 = vst.msk [vmem:[%s4 + $0x80] sm:$0xf] %vm1824, %v1728
      %1858 = vst.msk [vmem:[%s4 + $0x84] sm:$0xf] %vm1824, %v1729
      %1859 = vst.msk [vmem:[%s4 + $0x88] sm:$0xf] %vm1824, %v1730
      %1860 = vst.msk [vmem:[%s4 + $0x8c] sm:$0xf] %vm1824, %v1731
      %1861 = vst.msk [vmem:[%s4 + $0x90] sm:$0xf] %vm1824, %v1732
      %1862 = vst.msk [vmem:[%s4 + $0x94] sm:$0xf] %vm1824, %v1733
      %1863 = vst.msk [vmem:[%s4 + $0x98] sm:$0xf] %vm1824, %v1734
      %1864 = vst.msk [vmem:[%s4 + $0x9c] sm:$0xf] %vm1824, %v1735
      %1865 = vst.msk [vmem:[%s4 + $0xa0] sm:$0xf] %vm1824, %v1736
      %1866 = vst.msk [vmem:[%s4 + $0xa4] sm:$0xf] %vm1824, %v1737
      %1867 = vst.msk [vmem:[%s4 + $0xa8] sm:$0xf] %vm1824, %v1738
      %1868 = vst.msk [vmem:[%s4 + $0xac] sm:$0xf] %vm1824, %v1739
      %1869 = vst.msk [vmem:[%s4 + $0xb0] sm:$0xf] %vm1824, %v1740
      %1870 = vst.msk [vmem:[%s4 + $0xb4] sm:$0xf] %vm1824, %v1741
      %1871 = vst.msk [vmem:[%s4 + $0xb8] sm:$0xf] %vm1824, %v1742
      %1872 = vst.msk [vmem:[%s4 + $0xbc] sm:$0xf] %vm1824, %v1743
      %1873 = vst.msk [vmem:[%s4 + $0xc0] sm:$0xf] %vm1824, %v1744
      %1874 = vst.msk [vmem:[%s4 + $0xc4] sm:$0xf] %vm1824, %v1745
      %1875 = vst.msk [vmem:[%s4 + $0xc8] sm:$0xf] %vm1824, %v1746
      %1876 = vst.msk [vmem:[%s4 + $0xcc] sm:$0xf] %vm1824, %v1747
      %1877 = vst.msk [vmem:[%s4 + $0xd0] sm:$0xf] %vm1824, %v1748
      %1878 = vst.msk [vmem:[%s4 + $0xd4] sm:$0xf] %vm1824, %v1749
      %1879 = vst.msk [vmem:[%s4 + $0xd8] sm:$0xf] %vm1824, %v1750
      %1880 = vst.msk [vmem:[%s4 + $0xdc] sm:$0xf] %vm1824, %v1751
      %1881 = vst.msk [vmem:[%s4 + $0xe0] sm:$0xf] %vm1824, %v1752
      %1882 = vst.msk [vmem:[%s4 + $0xe4] sm:$0xf] %vm1824, %v1753
      %1883 = vst.msk [vmem:[%s4 + $0xe8] sm:$0xf] %vm1824, %v1754
      %1884 = vst.msk [vmem:[%s4 + $0xec] sm:$0xf] %vm1824, %v1755
      %1885 = vst.msk [vmem:[%s4 + $0xf0] sm:$0xf] %vm1824, %v1756
      %1886 = vst.msk [vmem:[%s4 + $0xf4] sm:$0xf] %vm1824, %v1757
      %1887 = vst.msk [vmem:[%s4 + $0xf8] sm:$0xf] %vm1824, %v1758
      %1888 = vst.msk [vmem:[%s4 + $0xfc] sm:$0xf] %vm1824, %v1759
    $region29: #{_lambda_.5} parent=1 // pred_fallthru
      _
    // Predicated region
    $region30: #{_lambda_.5} parent=1 // pred_check
      _
    $region31: #{_lambda_.5} parent=1 // pred_check_branch
      %1890 = sbr.rel (0) target = $region33
    $region32: #{_lambda_.5} parent=1 // pred_region
      _
    $region33: #{_lambda_.5} parent=1 // pred_fallthru
      _
    // Predicated region
    $region34: #{_lambda_.5} parent=1 // pred_check
      _
    $region35: #{_lambda_.5} parent=1 // pred_check_branch
      %1892 = sbr.rel (0) target = $region37
    $region36: #{_lambda_.5} parent=1 // pred_region
      _
    $region37: #{_lambda_.5} parent=1 // pred_fallthru
      _
    %1893 = vsyncpa [#allocation4], 1

// kernel: _lambda_.8
$region0: #{_lambda_.8}
  #allocation0 [shape = 'u32[]', space=smem, size = 0x4, offset = 0x4, fixed_abs, tag = 'smem constant byte address 0x4 - core index']
  #allocation1 [shape = 'u32[144,128]{1,0:T(1,128)}', space=vmem, size = 0x12000, scoped, tag = 'internal scratch']
  %s0 = inlined_call_operand.vmem [shape: bf16[2,256,8], index: 0, kind: input, shape index: {}]
  %s1 = inlined_call_operand.vmem [shape: bf16[2,25,8], index: 1, kind: input, shape index: {}]
  %s2 = inlined_call_operand.vmem [shape: bf16[256,25], index: 2, kind: input, shape index: {}]
  %s3 = inlined_call_operand.vmem [shape: bf16[2,256,8], index: 3, kind: output, shape index: {}]
  %s4 = sld [smem:[#allocation0]]
  $region45: #{_lambda_.8} parent=0
    _
  %s6 = ssub.s32 1, %s4
  %s7 = scalar_select 0, %s6, %s4
  loop: start=0, step=1, limit=4
  $region2: #{_lambda_.8} parent=0 // loop_pre_header
    _
  $region3: #{_lambda_.8} parent=0 // loop_header
    %s9 = sphi 0, %s13
    %p10 = scmp.ge.s32.totalorder %s9, 4
    %s16 = sphi 0, %s35
    %s17 = sphi 0, %s31
    %s18 = sphi 0, %s27
    %s19 = sphi 0, %s16
    %s20 = sphi 0, %s17
    %s21 = sphi 0, %s18
    %s22 = sphi 0, %s19
    %s23 = sphi 0, %s20
    %s24 = sphi 0, %s21
    %s42 = sphi 0, %s44
    %s45 = sphi 0, %s42
    %s46 = sphi 0, %s45
    %s62 = sphi 0, %s46
    %s70 = sphi 0, %s72
    %s73 = sphi 0, %s70
    %s74 = sphi 0, %s73
    %s90 = sphi 0, %s74
    %s96 = sphi 0, %s98
    %s99 = sphi 0, %s96
    %s100 = sphi 0, %s99
    %s116 = sphi 0, %s100
    %s126 = sphi 0, %s128
    %s129 = sphi 0, %s126
    %s130 = sphi 0, %s129
    %s146 = sphi 0, %s130
  $region4: #{_lambda_.8} parent=0 // loop_header_branch
    %12 = sbr.rel (%p10) target = $region8
  $region5: #{_lambda_.8} parent=0 // loop_body
    %s14 = ssub.s32 %s9, 1
    %s15 = ssub.s32 %s9, 2
    %s25 = sadd.s32 1, %s18
    %p26 = scmp.ge.s32.totalorder %s25, 1
    %s27 = scalar_select %p26, 0, %s25
    %s28 = sadd.s32 1, %s17
    %s29 = scalar_select %p26, %s28, %s17
    %p30 = scmp.ge.s32.totalorder %s29, 1
    %s31 = scalar_select %p30, 0, %s29
    %s32 = sadd.s32 1, %s16
    %s33 = scalar_select %p30, %s32, %s16
    %p34 = scmp.ge.s32.totalorder %s33, 2
    %s35 = scalar_select %p34, 0, %s33
    %s36 = ssub.s32 %s16, %s35
    %s37 = ssub.s32 %s17, %s31
    %s38 = sor.u32 %s36, %s37
    %s39 = ssub.s32 %s18, %s27
    %s40 = sor.u32 %s38, %s39
    %p41 = scmp.eq.s32.totalorder %s40, 0
    %s43 = sadd.s32 %s42, 1
    %s44 = scalar_select %p41, %s42, %s43
    %p47 = pneg %p41
    %p48 = scmp.eq.s32.totalorder %s9, 1
    %p49 = por %p47, %p48
    %p50 = scmp.ne.s32.totalorder %s42, %s45
    %p51 = scmp.eq.s32.totalorder %s9, 0
    %p52 = por %p50, %p51
    %p53 = scmp.ne.s32.totalorder %s42, %s45
    %p54 = scmp.eq.s32.totalorder %s14, 1
    %p55 = por %p53, %p54
    %p56 = scmp.ne.s32.totalorder %s45, %s46
    %p57 = scmp.eq.s32.totalorder %s14, 0
    %p58 = por %p56, %p57
    %p59 = scmp.ne.s32.totalorder %s45, %s46
    %p60 = scmp.eq.s32.totalorder %s15, 1
    %p61 = por %p59, %p60
    %p63 = scmp.ne.s32.totalorder %s46, %s62
    %p64 = scmp.eq.s32.totalorder %s15, 0
    %p65 = por %p63, %p64
    %s66 = ssub.s32 %s16, %s35
    %s67 = ssub.s32 %s18, %s27
    %s68 = sor.u32 %s66, %s67
    %p69 = scmp.eq.s32.totalorder %s68, 0
    %s71 = sadd.s32 %s70, 1
    %s72 = scalar_select %p69, %s70, %s71
    %p75 = pneg %p69
    %p76 = scmp.eq.s32.totalorder %s9, 1
    %p77 = por %p75, %p76
    %p78 = scmp.ne.s32.totalorder %s70, %s73
    %p79 = scmp.eq.s32.totalorder %s9, 0
    %p80 = por %p78, %p79
    %p81 = scmp.ne.s32.totalorder %s70, %s73
    %p82 = scmp.eq.s32.totalorder %s14, 1
    %p83 = por %p81, %p82
    %p84 = scmp.ne.s32.totalorder %s73, %s74
    %p85 = scmp.eq.s32.totalorder %s14, 0
    %p86 = por %p84, %p85
    %p87 = scmp.ne.s32.totalorder %s73, %s74
    %p88 = scmp.eq.s32.totalorder %s15, 1
    %p89 = por %p87, %p88
    %p91 = scmp.ne.s32.totalorder %s74, %s90
    %p92 = scmp.eq.s32.totalorder %s15, 0
    %p93 = por %p91, %p92
    %s94 = ssub.s32 %s17, %s31
    %p95 = scmp.eq.s32.totalorder %s94, 0
    %s97 = sadd.s32 %s96, 1
    %s98 = scalar_select %p95, %s96, %s97
    %p101 = pneg %p95
    %p102 = scmp.eq.s32.totalorder %s9, 1
    %p103 = por %p101, %p102
    %p104 = scmp.ne.s32.totalorder %s96, %s99
    %p105 = scmp.eq.s32.totalorder %s9, 0
    %p106 = por %p104, %p105
    %p107 = scmp.ne.s32.totalorder %s96, %s99
    %p108 = scmp.eq.s32.totalorder %s14, 1
    %p109 = por %p107, %p108
    %p110 = scmp.ne.s32.totalorder %s99, %s100
    %p111 = scmp.eq.s32.totalorder %s14, 0
    %p112 = por %p110, %p111
    %p113 = scmp.ne.s32.totalorder %s99, %s100
    %p114 = scmp.eq.s32.totalorder %s15, 1
    %p115 = por %p113, %p114
    %p117 = scmp.ne.s32.totalorder %s100, %s116
    %p118 = scmp.eq.s32.totalorder %s15, 0
    %p119 = por %p117, %p118
    %s120 = ssub.s32 %s16, %s35
    %s121 = ssub.s32 %s17, %s31
    %s122 = sor.u32 %s120, %s121
    %s123 = ssub.s32 %s18, %s27
    %s124 = sor.u32 %s122, %s123
    %p125 = scmp.eq.s32.totalorder %s124, 0
    %s127 = sadd.s32 %s126, 1
    %s128 = scalar_select %p125, %s126, %s127
    %p131 = pneg %p125
    %p132 = scmp.eq.s32.totalorder %s9, 1
    %p133 = por %p131, %p132
    %p134 = scmp.ne.s32.totalorder %s126, %s129
    %p135 = scmp.eq.s32.totalorder %s9, 0
    %p136 = por %p134, %p135
    %p137 = scmp.ne.s32.totalorder %s126, %s129
    %p138 = scmp.eq.s32.totalorder %s14, 1
    %p139 = por %p137, %p138
    %p140 = scmp.ne.s32.totalorder %s129, %s130
    %p141 = scmp.eq.s32.totalorder %s14, 0
    %p142 = por %p140, %p141
    %p143 = scmp.ne.s32.totalorder %s129, %s130
    %p144 = scmp.eq.s32.totalorder %s15, 1
    %p145 = por %p143, %p144
    %p147 = scmp.ne.s32.totalorder %s130, %s146
    %p148 = scmp.eq.s32.totalorder %s15, 0
    %p149 = por %p147, %p148
    %p150 = scmp.le.s32.totalorder 1, %s9
    %p151 = scmp.lt.s32.totalorder %s9, 3
    %p152 = pnand %p150, %p151
    %p153 = pneg %p152
    // Predicated region
    $region9: #{_lambda_.8} parent=5 // pred_check
      _
    $region10: #{_lambda_.8} parent=5 // pred_check_branch
      %155 = sbr.rel (%p152) target = $region12
    $region11: #{_lambda_.8} parent=5 // pred_region
      %s156 = ssub.s32 %s9, 1
      // Predicated region
      $region13: #{_lambda_.8} parent=11 // pred_check
        %p157 = pneg %p112
      $region14: #{_lambda_.8} parent=11 // pred_check_branch
        %159 = sbr.rel (%p157) target = $region16
      $region15: #{_lambda_.8} parent=11 // pred_region
        %s160 = smul.u32 32, %s20
        %p161 = scmp.lt.s32.totalorder %s160, 31
        %s162 = scalar_select %p161, %s160, 31
        %s163 = smul.addr %s162, 4
        %s164 = scalar_lea.vmem %s2, %s163
        %s165 = smul.u32 32, %s20
      $region16: #{_lambda_.8} parent=11 // pred_fallthru
        _
    $region12: #{_lambda_.8} parent=5 // pred_fallthru
      _
    %p166 = scmp.lt.s32.totalorder %s9, 2
    // Predicated region
    $region17: #{_lambda_.8} parent=5 // pred_check
      %p167 = pneg %p166
    $region18: #{_lambda_.8} parent=5 // pred_check_branch
      %169 = sbr.rel (%p167) target = $region20
    $region19: #{_lambda_.8} parent=5 // pred_region
      // Predicated region
      $region21: #{_lambda_.8} parent=19 // pred_check
        %p170 = pneg %p52
      $region22: #{_lambda_.8} parent=19 // pred_check_branch
        %172 = sbr.rel (%p170) target = $region24
      $region23: #{_lambda_.8} parent=19 // pred_region
        %s173 = smul.u32 32, %s17
        %p174 = scmp.lt.s32.totalorder %s16, 1
        %s175 = scalar_select %p174, %s16, 1
        %p176 = scmp.lt.s32.totalorder %s173, 31
        %s177 = scalar_select %p176, %s173, 31
        %p178 = scmp.lt.s32.totalorder %s18, 0
        %s179 = scalar_select %p178, %s18, 0
        %s180 = sadd.s32 %s179, %s177
        %s181 = smul.addr %s175, 32
        %s182 = sadd.s32 %s180, %s181
        %s183 = smul.addr %s182, 4
        %s184 = scalar_lea.vmem %s0, %s183
        %s185 = smul.u32 32, %s17
      $region24: #{_lambda_.8} parent=19 // pred_fallthru
        _
      // Predicated region
      $region25: #{_lambda_.8} parent=19 // pred_check
        %p186 = pneg %p80
      $region26: #{_lambda_.8} parent=19 // pred_check_branch
        %188 = sbr.rel (%p186) target = $region28
      $region27: #{_lambda_.8} parent=19 // pred_region
        %p189 = scmp.lt.s32.totalorder %s16, 1
        %s190 = scalar_select %p189, %s16, 1
        %p191 = scmp.lt.s32.totalorder %s18, 0
        %s192 = scalar_select %p191, %s18, 0
        %s193 = smul.addr %s190, 4
        %s194 = sadd.s32 %s192, %s193
        %s195 = smul.addr %s194, 4
        %s196 = scalar_lea.vmem %s1, %s195
      $region28: #{_lambda_.8} parent=19 // pred_fallthru
        _
    $region20: #{_lambda_.8} parent=5 // pred_fallthru
      _
    %p197 = scmp.le.s32.totalorder 1, %s9
    %p198 = scmp.lt.s32.totalorder %s9, 3
    %p199 = pnand %p197, %p198
    %p200 = pneg %p199
    // Predicated region
    $region29: #{_lambda_.8} parent=5 // pred_check
      _
    $region30: #{_lambda_.8} parent=5 // pred_check_branch
      %202 = sbr.rel (%p199) target = $region32
    $region31: #{_lambda_.8} parent=5 // pred_region
      %s203 = ssub.s32 %s9, 1
      %s204 = smul.u32 32, %s20
      %p205 = scmp.lt.s32.totalorder %s19, 1
      %s206 = scalar_select %p205, %s19, 1
      %p207 = scmp.lt.s32.totalorder %s204, 31
      %s208 = scalar_select %p207, %s204, 31
      %p209 = scmp.lt.s32.totalorder %s21, 0
      %s210 = scalar_select %p209, %s21, 0
      %s211 = sadd.s32 %s210, %s208
      %s212 = smul.addr %s206, 32
      %s213 = sadd.s32 %s211, %s212
      %s214 = smul.addr %s213, 4
      %s215 = scalar_lea.vmem %s0, %s214
      %p216 = pneg %p58
      %p217 = pneg %p55
      %p218 = scmp.lt.s32.totalorder %s19, 1
      %s219 = scalar_select %p218, %s19, 1
      %p220 = scmp.lt.s32.totalorder %s21, 0
      %s221 = scalar_select %p220, %s21, 0
      %s222 = smul.addr %s219, 4
      %s223 = sadd.s32 %s221, %s222
      %s224 = smul.addr %s223, 4
      %s225 = scalar_lea.vmem %s1, %s224
      %p226 = pneg %p86
      %p227 = pneg %p83
      %s228 = smul.u32 32, %s20
      %p229 = scmp.lt.s32.totalorder %s228, 31
      %s230 = scalar_select %p229, %s228, 31
      %s231 = smul.addr %s230, 4
      %s232 = scalar_lea.vmem %s2, %s231
      %p233 = pneg %p112
      %p234 = pneg %p109
      %p235 = pneg %p142
      %p236 = pneg %p139
      %s237 = smul.u32 32, %s20
      %p238 = scmp.lt.s32.totalorder %s19, 1
      %s239 = scalar_select %p238, %s19, 1
      %p240 = scmp.lt.s32.totalorder %s237, 31
      %s241 = scalar_select %p240, %s237, 31
      %p242 = scmp.lt.s32.totalorder %s21, 0
      %s243 = scalar_select %p242, %s21, 0
      %s244 = sadd.s32 %s243, %s241
      %s245 = smul.addr %s239, 32
      %s246 = sadd.s32 %s244, %s245
      %s247 = smul.addr %s246, 4
      %s248 = scalar_lea.vmem %s3, %s247
      %s249 = smul.u32 32, %s20
      %p250 = scmp.lt.s32.totalorder %s19, 1
      %s251 = scalar_select %p250, %s19, 1
      %p252 = scmp.lt.s32.totalorder %s249, 31
      %s253 = scalar_select %p252, %s249, 31
      %p254 = scmp.lt.s32.totalorder %s21, 0
      %s255 = scalar_select %p254, %s21, 0
      %s256 = sadd.s32 %s255, %s253
      %s257 = smul.addr %s251, 32
      %s258 = sadd.s32 %s256, %s257
      %s259 = smul.addr %s258, 4
      %s260 = scalar_lea.vmem %s0, %s259
      %s261 = smul.u32 32, %s20
      %p262 = scmp.lt.s32.totalorder %s19, 1
      %s263 = scalar_select %p262, %s19, 1
      %p264 = scmp.lt.s32.totalorder %s21, 0
      %s265 = scalar_select %p264, %s21, 0
      %s266 = smul.addr %s263, 4
      %s267 = sadd.s32 %s265, %s266
      %s268 = smul.addr %s267, 4
      %s269 = scalar_lea.vmem %s1, %s268
      %s270 = smul.u32 32, %s20
      %p271 = scmp.lt.s32.totalorder %s270, 31
      %s272 = scalar_select %p271, %s270, 31
      %s273 = smul.addr %s272, 4
      %s274 = scalar_lea.vmem %s2, %s273
      %s275 = smul.u32 32, %s20
      %s276 = smul.u32 32, %s20
      %p277 = scmp.lt.s32.totalorder %s19, 1
      %s278 = scalar_select %p277, %s19, 1
      %p279 = scmp.lt.s32.totalorder %s276, 31
      %s280 = scalar_select %p279, %s276, 31
      %p281 = scmp.lt.s32.totalorder %s21, 0
      %s282 = scalar_select %p281, %s21, 0
      %s283 = sadd.s32 %s282, %s280
      %s284 = smul.addr %s278, 32
      %s285 = sadd.s32 %s283, %s284
      %s286 = smul.addr %s285, 4
      %s287 = scalar_lea.vmem %s3, %s286
      %s288 = smul.u32 32, %s20
      %v290 = vld [vmem:[%s274] sm:$0xf]
      %v291 = vld [vmem:[%s274 + $0x4] sm:$0xf]
      %v292 = vld [vmem:[%s274 + $0x8] sm:$0xf]
      %v293 = vld [vmem:[%s274 + $0xc] sm:$0xf]
      %v294 = vld [vmem:[%s274 + $0x10] sm:$0xf]
      %v295 = vld [vmem:[%s274 + $0x14] sm:$0xf]
      %v296 = vld [vmem:[%s274 + $0x18] sm:$0xf]
      %v297 = vld [vmem:[%s274 + $0x1c] sm:$0xf]
      %v298 = vld [vmem:[%s274 + $0x20] sm:$0xf]
      %v299 = vld [vmem:[%s274 + $0x24] sm:$0xf]
      %v300 = vld [vmem:[%s274 + $0x28] sm:$0xf]
      %v301 = vld [vmem:[%s274 + $0x2c] sm:$0xf]
      %v302 = vld [vmem:[%s274 + $0x30] sm:$0xf]
      %v303 = vld [vmem:[%s274 + $0x34] sm:$0xf]
      %v304 = vld [vmem:[%s274 + $0x38] sm:$0xf]
      %v305 = vld [vmem:[%s274 + $0x3c] sm:$0xf]
      %v306 = vld [vmem:[%s274 + $0x40] sm:$0xf]
      %v307 = vld [vmem:[%s274 + $0x44] sm:$0xf]
      %v308 = vld [vmem:[%s274 + $0x48] sm:$0xf]
      %v309 = vld [vmem:[%s274 + $0x4c] sm:$0xf]
      %v310 = vld [vmem:[%s274 + $0x50] sm:$0xf]
      %v311 = vld [vmem:[%s274 + $0x54] sm:$0xf]
      %v312 = vld [vmem:[%s274 + $0x58] sm:$0xf]
      %v313 = vld [vmem:[%s274 + $0x5c] sm:$0xf]
      %v314 = vld [vmem:[%s274 + $0x60] sm:$0xf]
      %v315 = vld [vmem:[%s274 + $0x64] sm:$0xf]
      %v316 = vld [vmem:[%s274 + $0x68] sm:$0xf]
      %v317 = vld [vmem:[%s274 + $0x6c] sm:$0xf]
      %v318 = vld [vmem:[%s274 + $0x70] sm:$0xf]
      %v319 = vld [vmem:[%s274 + $0x74] sm:$0xf]
      %v320 = vld [vmem:[%s274 + $0x78] sm:$0xf]
      %v321 = vld [vmem:[%s274 + $0x7c] sm:$0xf]
      %v322 = vld [vmem:[%s269] sm:$0xf]
      %v323 = vld [vmem:[%s269 + $0x4] sm:$0xf]
      %v324 = vld [vmem:[%s269 + $0x8] sm:$0xf]
      %v325 = vld [vmem:[%s269 + $0xc] sm:$0x1]
      %v358 = vunpack.c.l.b16 %v290
      %v359 = vunpack.c.l.b16 %v291
      %v360 = vunpack.c.l.b16 %v292
      %v361 = vunpack.c.l.b16 %v293
      %v362 = vunpack.c.l.b16 %v294
      %v363 = vunpack.c.l.b16 %v295
      %v364 = vunpack.c.l.b16 %v296
      %v365 = vunpack.c.l.b16 %v297
      %v366 = vunpack.c.l.b16 %v298
      %v367 = vunpack.c.l.b16 %v299
      %v368 = vunpack.c.l.b16 %v300
      %v369 = vunpack.c.l.b16 %v301
      %v370 = vunpack.c.l.b16 %v302
      %v371 = vunpack.c.l.b16 %v303
      %v372 = vunpack.c.l.b16 %v304
      %v373 = vunpack.c.l.b16 %v305
      %v374 = vunpack.c.l.b16 %v306
      %v375 = vunpack.c.l.b16 %v307
      %v376 = vunpack.c.l.b16 %v308
      %v377 = vunpack.c.l.b16 %v309
      %v378 = vunpack.c.l.b16 %v310
      %v379 = vunpack.c.l.b16 %v311
      %v380 = vunpack.c.l.b16 %v312
      %v381 = vunpack.c.l.b16 %v313
      %v382 = vunpack.c.l.b16 %v314
      %v383 = vunpack.c.l.b16 %v315
      %v384 = vunpack.c.l.b16 %v316
      %v385 = vunpack.c.l.b16 %v317
      %v386 = vunpack.c.l.b16 %v318
      %v387 = vunpack.c.l.b16 %v319
      %v388 = vunpack.c.l.b16 %v320
      %v389 = vunpack.c.l.b16 %v321
      %v390 = vpack.c.b16 %v359, %v358
      %v391 = vpack.c.b16 %v361, %v360
      %v392 = vpack.c.b16 %v363, %v362
      %v393 = vpack.c.b16 %v365, %v364
      %v394 = vpack.c.b16 %v367, %v366
      %v395 = vpack.c.b16 %v369, %v368
      %v396 = vpack.c.b16 %v371, %v370
      %v397 = vpack.c.b16 %v373, %v372
      %v398 = vpack.c.b16 %v375, %v374
      %v399 = vpack.c.b16 %v377, %v376
      %v400 = vpack.c.b16 %v379, %v378
      %v401 = vpack.c.b16 %v381, %v380
      %v402 = vpack.c.b16 %v383, %v382
      %v403 = vpack.c.b16 %v385, %v384
      %v404 = vpack.c.b16 %v387, %v386
      %v405 = vpack.c.b16 %v389, %v388
      %v410 = vunpack.c.l.b16 %v322
      %v411 = vunpack.c.l.b16 %v323
      %v412 = vunpack.c.l.b16 %v324
      %v413 = vunpack.c.l.b16 %v325
      %v414 = vpack.c.b16 %v411, %v410
      %v415 = vpack.c.b16 %v413, %v412
      %vm417 = vcmask 203776
      %v419 = vsel %vm417, %v390, 0
      %v422 = vsel %vm417, %v391, 0
      %v425 = vsel %vm417, %v392, 0
      %v428 = vsel %vm417, %v393, 0
      %v431 = vsel %vm417, %v394, 0
      %v434 = vsel %vm417, %v395, 0
      %v437 = vsel %vm417, %v396, 0
      %v440 = vsel %vm417, %v397, 0
      %v443 = vsel %vm417, %v398, 0
      %v446 = vsel %vm417, %v399, 0
      %v449 = vsel %vm417, %v400, 0
      %v452 = vsel %vm417, %v401, 0
      %v455 = vsel %vm417, %v402, 0
      %v458 = vsel %vm417, %v403, 0
      %v461 = vsel %vm417, %v404, 0
      %v464 = vsel %vm417, %v405, 0
      %vm466 = vcmask 1043456
      %vm467 = vcmask 1044480
      %v468 = vsel %vm466, 4294967295, 65535
      %v469 = vsel %vm467, %v468, 0
      %v471 = vand.u32 %v415, %v469
      %473 = vmatprep.subr.bf16.mxu0 0
      %474 = vmatpush1.bf16.msra.mxu0 %v414
      %475 = vmatprep.subr.bf16.mxu0 0
      %476 = vmatpush1.bf16.msra.mxu0 %v471
      %477 = vmatprep.subr.bf16.mxu0 0
      %478 = vmatpush1.bf16.msra.mxu0 0
      %479 = vmatprep.subr.bf16.mxu0 0
      %480 = vmatpush1.bf16.msra.mxu0 0
      %481 = vmatprep.subr.bf16.mxu0 0
      %482 = vmatpush1.bf16.msra.mxu0 0
      %483 = vmatprep.subr.bf16.mxu0 0
      %484 = vmatpush1.bf16.msra.mxu0 0
      %485 = vmatprep.subr.bf16.mxu0 0
      %486 = vmatpush1.bf16.msra.mxu0 0
      %487 = vmatprep.subr.bf16.mxu0 0
      %488 = vmatpush1.bf16.msra.mxu0 0
      %489 = vmatprep.subr.bf16.mxu0 0
      %490 = vmatpush1.bf16.msra.mxu0 0
      %491 = vmatprep.subr.bf16.mxu0 0
      %492 = vmatpush1.bf16.msra.mxu0 0
      %493 = vmatprep.subr.bf16.mxu0 0
      %494 = vmatpush1.bf16.msra.mxu0 0
      %495 = vmatprep.subr.bf16.mxu0 0
      %496 = vmatpush1.bf16.msra.mxu0 0
      %497 = vmatprep.subr.bf16.mxu0 0
      %498 = vmatpush1.bf16.msra.mxu0 0
      %499 = vmatprep.subr.bf16.mxu0 0
      %500 = vmatpush1.bf16.msra.mxu0 0
      %501 = vmatprep.subr.bf16.mxu0 0
      %502 = vmatpush1.bf16.msra.mxu0 0
      %503 = vmatprep.subr.bf16.mxu0 0
      %504 = vmatpush1.bf16.msra.mxu0 0
      %505 = vmatprep.mubr.bf16.mxu0 0
      %506 = vmatmul.mubr.bf16.gmra.mrb[0].mxu0 %v419
      %v507 = vpop.f32.mrb[0].mxu0
      %v508 = vadd.f32 0.0, %v507
      %v509 = vpop.f32.mrb[0].mxu0
      %v510 = vpop.f32.mrb[0].mxu0
      %v511 = vadd.f32 0.0, %v510
      %v512 = vpop.f32.mrb[0].mxu0
      %513 = vmatprep.mubr.bf16.mxu0 0
      %514 = vmatmul.mubr.bf16.gmra.mrb[0].mxu0 %v422
      %v515 = vpop.f32.mrb[0].mxu0
      %v516 = vadd.f32 0.0, %v515
      %v517 = vpop.f32.mrb[0].mxu0
      %v518 = vpop.f32.mrb[0].mxu0
      %v519 = vadd.f32 0.0, %v518
      %v520 = vpop.f32.mrb[0].mxu0
      %521 = vmatprep.mubr.bf16.mxu0 0
      %522 = vmatmul.mubr.bf16.gmra.mrb[0].mxu0 %v425
      %v523 = vpop.f32.mrb[0].mxu0
      %v524 = vadd.f32 0.0, %v523
      %v525 = vpop.f32.mrb[0].mxu0
      %v526 = vpop.f32.mrb[0].mxu0
      %v527 = vadd.f32 0.0, %v526
      %v528 = vpop.f32.mrb[0].mxu0
      %529 = vmatprep.mubr.bf16.mxu0 0
      %530 = vmatmul.mubr.bf16.gmra.mrb[0].mxu0 %v428
      %v531 = vpop.f32.mrb[0].mxu0
      %v532 = vadd.f32 0.0, %v531
      %v533 = vpop.f32.mrb[0].mxu0
      %v534 = vpop.f32.mrb[0].mxu0
      %v535 = vadd.f32 0.0, %v534
      %v536 = vpop.f32.mrb[0].mxu0
      %537 = vmatprep.mubr.bf16.mxu0 0
      %538 = vmatmul.mubr.bf16.gmra.mrb[0].mxu0 %v431
      %v539 = vpop.f32.mrb[0].mxu0
      %v540 = vadd.f32 0.0, %v539
      %v541 = vpop.f32.mrb[0].mxu0
      %v542 = vpop.f32.mrb[0].mxu0
      %v543 = vadd.f32 0.0, %v542
      %v544 = vpop.f32.mrb[0].mxu0
      %545 = vmatprep.mubr.bf16.mxu0 0
      %546 = vmatmul.mubr.bf16.gmra.mrb[0].mxu0 %v434
      %v547 = vpop.f32.mrb[0].mxu0
      %v548 = vadd.f32 0.0, %v547
      %v549 = vpop.f32.mrb[0].mxu0
      %v550 = vpop.f32.mrb[0].mxu0
      %v551 = vadd.f32 0.0, %v550
      %v552 = vpop.f32.mrb[0].mxu0
      %553 = vmatprep.mubr.bf16.mxu0 0
      %554 = vmatmul.mubr.bf16.gmra.mrb[0].mxu0 %v437
      %v555 = vpop.f32.mrb[0].mxu0
      %v556 = vadd.f32 0.0, %v555
      %v557 = vpop.f32.mrb[0].mxu0
      %v558 = vpop.f32.mrb[0].mxu0
      %v559 = vadd.f32 0.0, %v558
      %v560 = vpop.f32.mrb[0].mxu0
      %561 = vmatprep.mubr.bf16.mxu0 0
      %562 = vmatmul.mubr.bf16.gmra.mrb[0].mxu0 %v440
      %v563 = vpop.f32.mrb[0].mxu0
      %v564 = vadd.f32 0.0, %v563
      %v565 = vpop.f32.mrb[0].mxu0
      %v566 = vpop.f32.mrb[0].mxu0
      %v567 = vadd.f32 0.0, %v566
      %v568 = vpop.f32.mrb[0].mxu0
      %569 = vmatprep.mubr.bf16.mxu0 0
      %570 = vmatmul.mubr.bf16.gmra.mrb[0].mxu0 %v443
      %v571 = vpop.f32.mrb[0].mxu0
      %v572 = vadd.f32 0.0, %v571
      %v573 = vpop.f32.mrb[0].mxu0
      %v574 = vpop.f32.mrb[0].mxu0
      %v575 = vadd.f32 0.0, %v574
      %v576 = vpop.f32.mrb[0].mxu0
      %577 = vmatprep.mubr.bf16.mxu0 0
      %578 = vmatmul.mubr.bf16.gmra.mrb[0].mxu0 %v446
      %v579 = vpop.f32.mrb[0].mxu0
      %v580 = vadd.f32 0.0, %v579
      %v581 = vpop.f32.mrb[0].mxu0
      %v582 = vpop.f32.mrb[0].mxu0
      %v583 = vadd.f32 0.0, %v582
      %v584 = vpop.f32.mrb[0].mxu0
      %585 = vmatprep.mubr.bf16.mxu0 0
      %586 = vmatmul.mubr.bf16.gmra.mrb[0].mxu0 %v449
      %v587 = vpop.f32.mrb[0].mxu0
      %v588 = vadd.f32 0.0, %v587
      %v589 = vpop.f32.mrb[0].mxu0
      %v590 = vpop.f32.mrb[0].mxu0
      %v591 = vadd.f32 0.0, %v590
      %v592 = vpop.f32.mrb[0].mxu0
      %593 = vmatprep.mubr.bf16.mxu0 0
      %594 = vmatmul.mubr.bf16.gmra.mrb[0].mxu0 %v452
      %v595 = vpop.f32.mrb[0].mxu0
      %v596 = vadd.f32 0.0, %v595
      %v597 = vpop.f32.mrb[0].mxu0
      %v598 = vpop.f32.mrb[0].mxu0
      %v599 = vadd.f32 0.0, %v598
      %v600 = vpop.f32.mrb[0].mxu0
      %601 = vmatprep.mubr.bf16.mxu0 0
      %602 = vmatmul.mubr.bf16.gmra.mrb[0].mxu0 %v455
      %v603 = vpop.f32.mrb[0].mxu0
      %v604 = vadd.f32 0.0, %v603
      %v605 = vpop.f32.mrb[0].mxu0
      %v606 = vpop.f32.mrb[0].mxu0
      %v607 = vadd.f32 0.0, %v606
      %v608 = vpop.f32.mrb[0].mxu0
      %609 = vmatprep.mubr.bf16.mxu0 0
      %610 = vmatmul.mubr.bf16.gmra.mrb[0].mxu0 %v458
      %v611 = vpop.f32.mrb[0].mxu0
      %v612 = vadd.f32 0.0, %v611
      %v613 = vpop.f32.mrb[0].mxu0
      %v614 = vpop.f32.mrb[0].mxu0
      %v615 = vadd.f32 0.0, %v614
      %v616 = vpop.f32.mrb[0].mxu0
      %617 = vmatprep.mubr.bf16.mxu0 0
      %618 = vmatmul.mubr.bf16.gmra.mrb[0].mxu0 %v461
      %v619 = vpop.f32.mrb[0].mxu0
      %v620 = vadd.f32 0.0, %v619
      %v621 = vpop.f32.mrb[0].mxu0
      %v622 = vpop.f32.mrb[0].mxu0
      %v623 = vadd.f32 0.0, %v622
      %v624 = vpop.f32.mrb[0].mxu0
      %625 = vmatprep.mubr.bf16.mxu0 0
      %626 = vmatmul.mubr.bf16.gmra.mrb[0].mxu0 %v464
      %v627 = vpop.f32.mrb[0].mxu0
      %v628 = vadd.f32 0.0, %v627
      %v629 = vpop.f32.mrb[0].mxu0
      %v630 = vpop.f32.mrb[0].mxu0
      %v631 = vadd.f32 0.0, %v630
      %v632 = vpop.f32.mrb[0].mxu0
      %633 = vdwg.mxu0
      %v634 = vld [vmem:[%s260] sm:$0xf]
      %v635 = vld [vmem:[%s260 + $0x4] sm:$0xf]
      %v636 = vld [vmem:[%s260 + $0x8] sm:$0xf]
      %v637 = vld [vmem:[%s260 + $0xc] sm:$0xf]
      %v638 = vld [vmem:[%s260 + $0x10] sm:$0xf]
      %v639 = vld [vmem:[%s260 + $0x14] sm:$0xf]
      %v640 = vld [vmem:[%s260 + $0x18] sm:$0xf]
      %v641 = vld [vmem:[%s260 + $0x1c] sm:$0xf]
      %v642 = vld [vmem:[%s260 + $0x20] sm:$0xf]
      %v643 = vld [vmem:[%s260 + $0x24] sm:$0xf]
      %v644 = vld [vmem:[%s260 + $0x28] sm:$0xf]
      %v645 = vld [vmem:[%s260 + $0x2c] sm:$0xf]
      %v646 = vld [vmem:[%s260 + $0x30] sm:$0xf]
      %v647 = vld [vmem:[%s260 + $0x34] sm:$0xf]
      %v648 = vld [vmem:[%s260 + $0x38] sm:$0xf]
      %v649 = vld [vmem:[%s260 + $0x3c] sm:$0xf]
      %v650 = vld [vmem:[%s260 + $0x40] sm:$0xf]
      %v651 = vld [vmem:[%s260 + $0x44] sm:$0xf]
      %v652 = vld [vmem:[%s260 + $0x48] sm:$0xf]
      %v653 = vld [vmem:[%s260 + $0x4c] sm:$0xf]
      %v654 = vld [vmem:[%s260 + $0x50] sm:$0xf]
      %v655 = vld [vmem:[%s260 + $0x54] sm:$0xf]
      %v656 = vld [vmem:[%s260 + $0x58] sm:$0xf]
      %v657 = vld [vmem:[%s260 + $0x5c] sm:$0xf]
      %v658 = vld [vmem:[%s260 + $0x60] sm:$0xf]
      %v659 = vld [vmem:[%s260 + $0x64] sm:$0xf]
      %v660 = vld [vmem:[%s260 + $0x68] sm:$0xf]
      %v661 = vld [vmem:[%s260 + $0x6c] sm:$0xf]
      %v662 = vld [vmem:[%s260 + $0x70] sm:$0xf]
      %v663 = vld [vmem:[%s260 + $0x74] sm:$0xf]
      %v664 = vld [vmem:[%s260 + $0x78] sm:$0xf]
      %v665 = vld [vmem:[%s260 + $0x7c] sm:$0xf]
      %v666 = vunpack.c.l.bf16 %v634
      %v667 = vunpack.c.l.bf16 %v635
      %v668 = vunpack.c.l.bf16 %v636
      %v669 = vunpack.c.l.bf16 %v637
      %v670 = vunpack.c.l.bf16 %v638
      %v671 = vunpack.c.l.bf16 %v639
      %v672 = vunpack.c.l.bf16 %v640
      %v673 = vunpack.c.l.bf16 %v641
      %v674 = vunpack.c.l.bf16 %v642
      %v675 = vunpack.c.l.bf16 %v643
      %v676 = vunpack.c.l.bf16 %v644
      %v677 = vunpack.c.l.bf16 %v645
      %v678 = vunpack.c.l.bf16 %v646
      %v679 = vunpack.c.l.bf16 %v647
      %v680 = vunpack.c.l.bf16 %v648
      %v681 = vunpack.c.l.bf16 %v649
      %v682 = vunpack.c.l.bf16 %v650
      %v683 = vunpack.c.l.bf16 %v651
      %v684 = vunpack.c.l.bf16 %v652
      %v685 = vunpack.c.l.bf16 %v653
      %v686 = vunpack.c.l.bf16 %v654
      %v687 = vunpack.c.l.bf16 %v655
      %v688 = vunpack.c.l.bf16 %v656
      %v689 = vunpack.c.l.bf16 %v657
      %v690 = vunpack.c.l.bf16 %v658
      %v691 = vunpack.c.l.bf16 %v659
      %v692 = vunpack.c.l.bf16 %v660
      %v693 = vunpack.c.l.bf16 %v661
      %v694 = vunpack.c.l.bf16 %v662
      %v695 = vunpack.c.l.bf16 %v663
      %v696 = vunpack.c.l.bf16 %v664
      %v697 = vunpack.c.l.bf16 %v665
      %v698 = vmul.f32 %v666, %v508
      %v699 = vmul.f32 %v667, %v511
      %v700 = vmul.f32 %v668, %v516
      %v701 = vmul.f32 %v669, %v519
      %v702 = vmul.f32 %v670, %v524
      %v703 = vmul.f32 %v671, %v527
      %v704 = vmul.f32 %v672, %v532
      %v705 = vmul.f32 %v673, %v535
      %v706 = vmul.f32 %v674, %v540
      %v707 = vmul.f32 %v675, %v543
      %v708 = vmul.f32 %v676, %v548
      %v709 = vmul.f32 %v677, %v551
      %v710 = vmul.f32 %v678, %v556
      %v711 = vmul.f32 %v679, %v559
      %v712 = vmul.f32 %v680, %v564
      %v713 = vmul.f32 %v681, %v567
      %v714 = vmul.f32 %v682, %v572
      %v715 = vmul.f32 %v683, %v575
      %v716 = vmul.f32 %v684, %v580
      %v717 = vmul.f32 %v685, %v583
      %v718 = vmul.f32 %v686, %v588
      %v719 = vmul.f32 %v687, %v591
      %v720 = vmul.f32 %v688, %v596
      %v721 = vmul.f32 %v689, %v599
      %v722 = vmul.f32 %v690, %v604
      %v723 = vmul.f32 %v691, %v607
      %v724 = vmul.f32 %v692, %v612
      %v725 = vmul.f32 %v693, %v615
      %v726 = vmul.f32 %v694, %v620
      %v727 = vmul.f32 %v695, %v623
      %v728 = vmul.f32 %v696, %v628
      %v729 = vmul.f32 %v697, %v631
      %v730 = vpack.c.bf16 %v699, %v698
      %v731 = vpack.c.bf16 %v701, %v700
      %v732 = vpack.c.bf16 %v703, %v702
      %v733 = vpack.c.bf16 %v705, %v704
      %v734 = vpack.c.bf16 %v707, %v706
      %v735 = vpack.c.bf16 %v709, %v708
      %v736 = vpack.c.bf16 %v711, %v710
      %v737 = vpack.c.bf16 %v713, %v712
      %v738 = vpack.c.bf16 %v715, %v714
      %v739 = vpack.c.bf16 %v717, %v716
      %v740 = vpack.c.bf16 %v719, %v718
      %v741 = vpack.c.bf16 %v721, %v720
      %v742 = vpack.c.bf16 %v723, %v722
      %v743 = vpack.c.bf16 %v725, %v724
      %v744 = vpack.c.bf16 %v727, %v726
      %v745 = vpack.c.bf16 %v729, %v728
      %v762 = vunpack.c.l.b16 %v730
      %v763 = vunpack.c.h.b16 %v730
      %v764 = vunpack.c.l.b16 %v731
      %v765 = vunpack.c.h.b16 %v731
      %v766 = vunpack.c.l.b16 %v732
      %v767 = vunpack.c.h.b16 %v732
      %v768 = vunpack.c.l.b16 %v733
      %v769 = vunpack.c.h.b16 %v733
      %v770 = vunpack.c.l.b16 %v734
      %v771 = vunpack.c.h.b16 %v734
      %v772 = vunpack.c.l.b16 %v735
      %v773 = vunpack.c.h.b16 %v735
      %v774 = vunpack.c.l.b16 %v736
      %v775 = vunpack.c.h.b16 %v736
      %v776 = vunpack.c.l.b16 %v737
      %v777 = vunpack.c.h.b16 %v737
      %v778 = vunpack.c.l.b16 %v738
      %v779 = vunpack.c.h.b16 %v738
      %v780 = vunpack.c.l.b16 %v739
      %v781 = vunpack.c.h.b16 %v739
      %v782 = vunpack.c.l.b16 %v740
      %v783 = vunpack.c.h.b16 %v740
      %v784 = vunpack.c.l.b16 %v741
      %v785 = vunpack.c.h.b16 %v741
      %v786 = vunpack.c.l.b16 %v742
      %v787 = vunpack.c.h.b16 %v742
      %v788 = vunpack.c.l.b16 %v743
      %v789 = vunpack.c.h.b16 %v743
      %v790 = vunpack.c.l.b16 %v744
      %v791 = vunpack.c.h.b16 %v744
      %v792 = vunpack.c.l.b16 %v745
      %v793 = vunpack.c.h.b16 %v745
      %v794 = vpack.c.b16 %v762, %v762
      %v795 = vpack.c.b16 %v763, %v763
      %v796 = vpack.c.b16 %v764, %v764
      %v797 = vpack.c.b16 %v765, %v765
      %v798 = vpack.c.b16 %v766, %v766
      %v799 = vpack.c.b16 %v767, %v767
      %v800 = vpack.c.b16 %v768, %v768
      %v801 = vpack.c.b16 %v769, %v769
      %v802 = vpack.c.b16 %v770, %v770
      %v803 = vpack.c.b16 %v771, %v771
      %v804 = vpack.c.b16 %v772, %v772
      %v805 = vpack.c.b16 %v773, %v773
      %v806 = vpack.c.b16 %v774, %v774
      %v807 = vpack.c.b16 %v775, %v775
      %v808 = vpack.c.b16 %v776, %v776
      %v809 = vpack.c.b16 %v777, %v777
      %v810 = vpack.c.b16 %v778, %v778
      %v811 = vpack.c.b16 %v779, %v779
      %v812 = vpack.c.b16 %v780, %v780
      %v813 = vpack.c.b16 %v781, %v781
      %v814 = vpack.c.b16 %v782, %v782
      %v815 = vpack.c.b16 %v783, %v783
      %v816 = vpack.c.b16 %v784, %v784
      %v817 = vpack.c.b16 %v785, %v785
      %v818 = vpack.c.b16 %v786, %v786
      %v819 = vpack.c.b16 %v787, %v787
      %v820 = vpack.c.b16 %v788, %v788
      %v821 = vpack.c.b16 %v789, %v789
      %v822 = vpack.c.b16 %v790, %v790
      %v823 = vpack.c.b16 %v791, %v791
      %v824 = vpack.c.b16 %v792, %v792
      %v825 = vpack.c.b16 %v793, %v793
      %vm858 = vcmask 60416
      %859 = vst.msk [vmem:[%s287] sm:$0xf] %vm858, %v794
      %860 = vst.msk [vmem:[%s287 + $0x4] sm:$0xf] %vm858, %v795
      %861 = vst.msk [vmem:[%s287 + $0x8] sm:$0xf] %vm858, %v796
      %862 = vst.msk [vmem:[%s287 + $0xc] sm:$0xf] %vm858, %v797
      %863 = vst.msk [vmem:[%s287 + $0x10] sm:$0xf] %vm858, %v798
      %864 = vst.msk [vmem:[%s287 + $0x14] sm:$0xf] %vm858, %v799
      %865 = vst.msk [vmem:[%s287 + $0x18] sm:$0xf] %vm858, %v800
      %866 = vst.msk [vmem:[%s287 + $0x1c] sm:$0xf] %vm858, %v801
      %867 = vst.msk [vmem:[%s287 + $0x20] sm:$0xf] %vm858, %v802
      %868 = vst.msk [vmem:[%s287 + $0x24] sm:$0xf] %vm858, %v803
      %869 = vst.msk [vmem:[%s287 + $0x28] sm:$0xf] %vm858, %v804
      %870 = vst.msk [vmem:[%s287 + $0x2c] sm:$0xf] %vm858, %v805
      %871 = vst.msk [vmem:[%s287 + $0x30] sm:$0xf] %vm858, %v806
      %872 = vst.msk [vmem:[%s287 + $0x34] sm:$0xf] %vm858, %v807
      %873 = vst.msk [vmem:[%s287 + $0x38] sm:$0xf] %vm858, %v808
      %874 = vst.msk [vmem:[%s287 + $0x3c] sm:$0xf] %vm858, %v809
      %875 = vst.msk [vmem:[%s287 + $0x40] sm:$0xf] %vm858, %v810
      %876 = vst.msk [vmem:[%s287 + $0x44] sm:$0xf] %vm858, %v811
      %877 = vst.msk [vmem:[%s287 + $0x48] sm:$0xf] %vm858, %v812
      %878 = vst.msk [vmem:[%s287 + $0x4c] sm:$0xf] %vm858, %v813
      %879 = vst.msk [vmem:[%s287 + $0x50] sm:$0xf] %vm858, %v814
      %880 = vst.msk [vmem:[%s287 + $0x54] sm:$0xf] %vm858, %v815
      %881 = vst.msk [vmem:[%s287 + $0x58] sm:$0xf] %vm858, %v816
      %882 = vst.msk [vmem:[%s287 + $0x5c] sm:$0xf] %vm858, %v817
      %883 = vst.msk [vmem:[%s287 + $0x60] sm:$0xf] %vm858, %v818
      %884 = vst.msk [vmem:[%s287 + $0x64] sm:$0xf] %vm858, %v819
      %885 = vst.msk [vmem:[%s287 + $0x68] sm:$0xf] %vm858, %v820
      %886 = vst.msk [vmem:[%s287 + $0x6c] sm:$0xf] %vm858, %v821
      %887 = vst.msk [vmem:[%s287 + $0x70] sm:$0xf] %vm858, %v822
      %888 = vst.msk [vmem:[%s287 + $0x74] sm:$0xf] %vm858, %v823
      %889 = vst.msk [vmem:[%s287 + $0x78] sm:$0xf] %vm858, %v824
      %890 = vst.msk [vmem:[%s287 + $0x7c] sm:$0xf] %vm858, %v825
      %s891 = smul.u32 32, %s20
      %p892 = scmp.lt.s32.totalorder %s19, 1
      %s893 = scalar_select %p892, %s19, 1
      %p894 = scmp.lt.s32.totalorder %s891, 31
      %s895 = scalar_select %p894, %s891, 31
      %p896 = scmp.lt.s32.totalorder %s21, 0
      %s897 = scalar_select %p896, %s21, 0
      %s898 = sadd.s32 %s897, %s895
      %s899 = smul.addr %s893, 32
      %s900 = sadd.s32 %s898, %s899
      %s901 = smul.addr %s900, 4
      %s902 = scalar_lea.vmem %s3, %s901
      // Predicated region
      $region33: #{_lambda_.8} parent=31 // pred_check
        %p903 = pneg %p139
      $region34: #{_lambda_.8} parent=31 // pred_check_branch
        %905 = sbr.rel (%p903) target = $region36
      $region35: #{_lambda_.8} parent=31 // pred_region
        %s906 = smul.u32 32, %s20
      $region36: #{_lambda_.8} parent=31 // pred_fallthru
        _
    $region32: #{_lambda_.8} parent=5 // pred_fallthru
      _
    %p907 = scmp.le.s32.totalorder 2, %s9
    // Predicated region
    $region37: #{_lambda_.8} parent=5 // pred_check
      %p908 = pneg %p907
    $region38: #{_lambda_.8} parent=5 // pred_check_branch
      %910 = sbr.rel (%p908) target = $region40
    $region39: #{_lambda_.8} parent=5 // pred_region
      %s911 = ssub.s32 %s9, 2
      // Predicated region
      $region41: #{_lambda_.8} parent=39 // pred_check
        %p912 = pneg %p145
      $region42: #{_lambda_.8} parent=39 // pred_check_branch
        %914 = sbr.rel (%p912) target = $region44
      $region43: #{_lambda_.8} parent=39 // pred_region
        %s915 = smul.u32 32, %s23
        %p916 = scmp.lt.s32.totalorder %s22, 1
        %s917 = scalar_select %p916, %s22, 1
        %p918 = scmp.lt.s32.totalorder %s915, 31
        %s919 = scalar_select %p918, %s915, 31
        %p920 = scmp.lt.s32.totalorder %s24, 0
        %s921 = scalar_select %p920, %s24, 0
        %s922 = sadd.s32 %s921, %s919
        %s923 = smul.addr %s917, 32
        %s924 = sadd.s32 %s922, %s923
        %s925 = smul.addr %s924, 4
        %s926 = scalar_lea.vmem %s3, %s925
      $region44: #{_lambda_.8} parent=39 // pred_fallthru
        _
    $region40: #{_lambda_.8} parent=5 // pred_fallthru
      _
  $region6: #{_lambda_.8} parent=0 // loop_footer
    %s13 = sadd.s32 1, %s9
  $region7: #{_lambda_.8} parent=0 // loop_footer_branch
    %8 = sbr.rel target = $region3
  $region8: #{_lambda_.8} parent=0 // loop_exit
    _

// kernel: _lambda_.7
$region0: #{_lambda_.7}
  #allocation0 [shape = 'u32[]', space=smem, size = 0x4, offset = 0x4, fixed_abs, tag = 'smem constant byte address 0x4 - core index']
  #allocation1 [shape = 'u32[144,128]{1,0:T(1,128)}', space=vmem, size = 0x12000, scoped, tag = 'internal scratch']
  #allocation2 [shape = 'bf16[188,8]{1,0:T(8,128)(2,1)}', space=vmem, size = 0xc000, scoped, tag = 'scratch operand']
  %s0 = inlined_call_operand.vmem [shape: bf16[2,16,16,8], index: 0, kind: input, shape index: {}, may-alias: {0,1,2}]
  %s1 = inlined_call_operand.vmem [shape: bf16[2,16,16,8], index: 1, kind: input, shape index: {}, may-alias: {0,1,2}]
  %s2 = inlined_call_operand.vmem [shape: bf16[2,16,16,8], index: 2, kind: input, shape index: {}, may-alias: {0,1,2}]
  %s3 = inlined_call_operand.vmem [shape: bf16[9,8,8], index: 3, kind: input, shape index: {}]
  %s4 = inlined_call_operand.vmem [shape: f32[1,8], index: 4, kind: input, shape index: {}]
  %s5 = inlined_call_operand.vmem [shape: f32[1,8], index: 5, kind: input, shape index: {}]
  %s6 = inlined_call_operand.vmem [shape: bf16[2,25,144], index: 6, kind: input, shape index: {}]
  %s7 = inlined_call_operand.vmem [shape: bf16[2,16,16,8], index: 7, kind: output, shape index: {0}]
  %s8 = inlined_call_operand.vmem [shape: f32[2,25,8], index: 8, kind: output, shape index: {1}]
  %9 = xla_tuple %s7, %s8
  %s10 = sld [smem:[#allocation0]]
  $region81: #{_lambda_.7} parent=0
    _
  %s12 = ssub.s32 1, %s10
  %s13 = scalar_select 0, %s12, %s10
  loop: start=0, step=1, limit=6
  $region2: #{_lambda_.7} parent=0 // loop_pre_header
    _
  $region3: #{_lambda_.7} parent=0 // loop_header
    %s15 = sphi 0, %s19
    %p16 = scmp.ge.s32.totalorder %s15, 6
    %s22 = sphi 0, %s34
    %s23 = sphi 0, %s30
    %s24 = sphi 0, %s22
    %s25 = sphi 0, %s23
    %s26 = sphi 0, %s24
    %s27 = sphi 0, %s25
    %s39 = sphi 0, %s41
    %s42 = sphi 0, %s39
    %s43 = sphi 0, %s42
    %s59 = sphi 0, %s43
    %s75 = sphi 0, %s77
    %s78 = sphi 0, %s75
    %s79 = sphi 0, %s78
    %s95 = sphi 0, %s79
    %s111 = sphi 0, %s113
    %s114 = sphi 0, %s111
    %s115 = sphi 0, %s114
    %s131 = sphi 0, %s115
    %s135 = sphi 0, %s135
    %s137 = sphi 0, %s135
    %s138 = sphi 0, %s137
    %s152 = sphi 0, %s138
    %s156 = sphi 0, %s156
    %s158 = sphi 0, %s156
    %s159 = sphi 0, %s158
    %s173 = sphi 0, %s159
    %s177 = sphi 0, %s177
    %s179 = sphi 0, %s177
    %s180 = sphi 0, %s179
    %s194 = sphi 0, %s180
    %s200 = sphi 0, %s202
    %s203 = sphi 0, %s200
    %s204 = sphi 0, %s203
    %s220 = sphi 0, %s204
    %s228 = sphi 0, %s230
    %s231 = sphi 0, %s228
    %s232 = sphi 0, %s231
    %s248 = sphi 0, %s232
    %s254 = sphi 0, %s256
    %s257 = sphi 0, %s254
    %s258 = sphi 0, %s257
    %s274 = sphi 0, %s258
  $region4: #{_lambda_.7} parent=0 // loop_header_branch
    %18 = sbr.rel (%p16) target = $region8
  $region5: #{_lambda_.7} parent=0 // loop_body
    %s20 = ssub.s32 %s15, 1
    %s21 = ssub.s32 %s15, 2
    %s28 = sadd.s32 1, %s23
    %p29 = scmp.ge.s32.totalorder %s28, 2
    %s30 = scalar_select %p29, 0, %s28
    %s31 = sadd.s32 1, %s22
    %s32 = scalar_select %p29, %s31, %s22
    %p33 = scmp.ge.s32.totalorder %s32, 2
    %s34 = scalar_select %p33, 0, %s32
    %s35 = ssub.s32 %s22, %s34
    %s36 = ssub.s32 %s23, %s30
    %s37 = sor.u32 %s35, %s36
    %p38 = scmp.eq.s32.totalorder %s37, 0
    %s40 = sadd.s32 %s39, 1
    %s41 = scalar_select %p38, %s39, %s40
    %p44 = pneg %p38
    %p45 = scmp.eq.s32.totalorder %s15, 3
    %p46 = por %p44, %p45
    %p47 = scmp.ne.s32.totalorder %s39, %s42
    %p48 = scmp.eq.s32.totalorder %s15, 0
    %p49 = por %p47, %p48
    %p50 = scmp.ne.s32.totalorder %s39, %s42
    %p51 = scmp.eq.s32.totalorder %s20, 3
    %p52 = por %p50, %p51
    %p53 = scmp.ne.s32.totalorder %s42, %s43
    %p54 = scmp.eq.s32.totalorder %s20, 0
    %p55 = por %p53, %p54
    %p56 = scmp.ne.s32.totalorder %s42, %s43
    %p57 = scmp.eq.s32.totalorder %s21, 3
    %p58 = por %p56, %p57
    %p60 = scmp.ne.s32.totalorder %s43, %s59
    %p61 = scmp.eq.s32.totalorder %s21, 0
    %p62 = por %p60, %p61
    %s63 = smul.u32 %s23, 8
    %s64 = ssub.s32 %s63, 1
    %p65 = scmp.gt.s32.totalorder %s64, 0
    %s66 = scalar_select %p65, %s64, 0
    %s67 = smul.u32 %s30, 8
    %s68 = ssub.s32 %s67, 1
    %p69 = scmp.gt.s32.totalorder %s68, 0
    %s70 = scalar_select %p69, %s68, 0
    %s71 = ssub.s32 %s22, %s34
    %s72 = ssub.s32 %s66, %s70
    %s73 = sor.u32 %s71, %s72
    %p74 = scmp.eq.s32.totalorder %s73, 0
    %s76 = sadd.s32 %s75, 1
    %s77 = scalar_select %p74, %s75, %s76
    %p80 = pneg %p74
    %p81 = scmp.eq.s32.totalorder %s15, 3
    %p82 = por %p80, %p81
    %p83 = scmp.ne.s32.totalorder %s75, %s78
    %p84 = scmp.eq.s32.totalorder %s15, 0
    %p85 = por %p83, %p84
    %p86 = scmp.ne.s32.totalorder %s75, %s78
    %p87 = scmp.eq.s32.totalorder %s20, 3
    %p88 = por %p86, %p87
    %p89 = scmp.ne.s32.totalorder %s78, %s79
    %p90 = scmp.eq.s32.totalorder %s20, 0
    %p91 = por %p89, %p90
    %p92 = scmp.ne.s32.totalorder %s78, %s79
    %p93 = scmp.eq.s32.totalorder %s21, 3
    %p94 = por %p92, %p93
    %p96 = scmp.ne.s32.totalorder %s79, %s95
    %p97 = scmp.eq.s32.totalorder %s21, 0
    %p98 = por %p96, %p97
    %s99 = smul.u32 %s23, 8
    %s100 = sadd.s32 %s99, 8
    %p101 = scmp.lt.s32.totalorder %s100, 15
    %s102 = scalar_select %p101, %s100, 15
    %s103 = smul.u32 %s30, 8
    %s104 = sadd.s32 %s103, 8
    %p105 = scmp.lt.s32.totalorder %s104, 15
    %s106 = scalar_select %p105, %s104, 15
    %s107 = ssub.s32 %s22, %s34
    %s108 = ssub.s32 %s102, %s106
    %s109 = sor.u32 %s107, %s108
    %p110 = scmp.eq.s32.totalorder %s109, 0
    %s112 = sadd.s32 %s111, 1
    %s113 = scalar_select %p110, %s111, %s112
    %p116 = pneg %p110
    %p117 = scmp.eq.s32.totalorder %s15, 3
    %p118 = por %p116, %p117
    %p119 = scmp.ne.s32.totalorder %s111, %s114
    %p120 = scmp.eq.s32.totalorder %s15, 0
    %p121 = por %p119, %p120
    %p122 = scmp.ne.s32.totalorder %s111, %s114
    %p123 = scmp.eq.s32.totalorder %s20, 3
    %p124 = por %p122, %p123
    %p125 = scmp.ne.s32.totalorder %s114, %s115
    %p126 = scmp.eq.s32.totalorder %s20, 0
    %p127 = por %p125, %p126
    %p128 = scmp.ne.s32.totalorder %s114, %s115
    %p129 = scmp.eq.s32.totalorder %s21, 3
    %p130 = por %p128, %p129
    %p132 = scmp.ne.s32.totalorder %s115, %s131
    %p133 = scmp.eq.s32.totalorder %s21, 0
    %p134 = por %p132, %p133
    %s136 = sadd.s32 %s135, 1
    %p139 = scmp.eq.s32.totalorder %s15, 3
    %p140 = scmp.ne.s32.totalorder %s135, %s137
    %p141 = scmp.eq.s32.totalorder %s15, 0
    %p142 = por %p140, %p141
    %p143 = scmp.ne.s32.totalorder %s135, %s137
    %p144 = scmp.eq.s32.totalorder %s20, 3
    %p145 = por %p143, %p144
    %p146 = scmp.ne.s32.totalorder %s137, %s138
    %p147 = scmp.eq.s32.totalorder %s20, 0
    %p148 = por %p146, %p147
    %p149 = scmp.ne.s32.totalorder %s137, %s138
    %p150 = scmp.eq.s32.totalorder %s21, 3
    %p151 = por %p149, %p150
    %p153 = scmp.ne.s32.totalorder %s138, %s152
    %p154 = scmp.eq.s32.totalorder %s21, 0
    %p155 = por %p153, %p154
    %s157 = sadd.s32 %s156, 1
    %p160 = scmp.eq.s32.totalorder %s15, 3
    %p161 = scmp.ne.s32.totalorder %s156, %s158
    %p162 = scmp.eq.s32.totalorder %s15, 0
    %p163 = por %p161, %p162
    %p164 = scmp.ne.s32.totalorder %s156, %s158
    %p165 = scmp.eq.s32.totalorder %s20, 3
    %p166 = por %p164, %p165
    %p167 = scmp.ne.s32.totalorder %s158, %s159
    %p168 = scmp.eq.s32.totalorder %s20, 0
    %p169 = por %p167, %p168
    %p170 = scmp.ne.s32.totalorder %s158, %s159
    %p171 = scmp.eq.s32.totalorder %s21, 3
    %p172 = por %p170, %p171
    %p174 = scmp.ne.s32.totalorder %s159, %s173
    %p175 = scmp.eq.s32.totalorder %s21, 0
    %p176 = por %p174, %p175
    %s178 = sadd.s32 %s177, 1
    %p181 = scmp.eq.s32.totalorder %s15, 3
    %p182 = scmp.ne.s32.totalorder %s177, %s179
    %p183 = scmp.eq.s32.totalorder %s15, 0
    %p184 = por %p182, %p183
    %p185 = scmp.ne.s32.totalorder %s177, %s179
    %p186 = scmp.eq.s32.totalorder %s20, 3
    %p187 = por %p185, %p186
    %p188 = scmp.ne.s32.totalorder %s179, %s180
    %p189 = scmp.eq.s32.totalorder %s20, 0
    %p190 = por %p188, %p189
    %p191 = scmp.ne.s32.totalorder %s179, %s180
    %p192 = scmp.eq.s32.totalorder %s21, 3
    %p193 = por %p191, %p192
    %p195 = scmp.ne.s32.totalorder %s180, %s194
    %p196 = scmp.eq.s32.totalorder %s21, 0
    %p197 = por %p195, %p196
    %s198 = ssub.s32 %s23, %s30
    %p199 = scmp.eq.s32.totalorder %s198, 0
    %s201 = sadd.s32 %s200, 1
    %s202 = scalar_select %p199, %s200, %s201
    %p205 = pneg %p199
    %p206 = scmp.eq.s32.totalorder %s15, 3
    %p207 = por %p205, %p206
    %p208 = scmp.ne.s32.totalorder %s200, %s203
    %p209 = scmp.eq.s32.totalorder %s15, 0
    %p210 = por %p208, %p209
    %p211 = scmp.ne.s32.totalorder %s200, %s203
    %p212 = scmp.eq.s32.totalorder %s20, 3
    %p213 = por %p211, %p212
    %p214 = scmp.ne.s32.totalorder %s203, %s204
    %p215 = scmp.eq.s32.totalorder %s20, 0
    %p216 = por %p214, %p215
    %p217 = scmp.ne.s32.totalorder %s203, %s204
    %p218 = scmp.eq.s32.totalorder %s21, 3
    %p219 = por %p217, %p218
    %p221 = scmp.ne.s32.totalorder %s204, %s220
    %p222 = scmp.eq.s32.totalorder %s21, 0
    %p223 = por %p221, %p222
    %s224 = ssub.s32 %s22, %s34
    %s225 = ssub.s32 %s23, %s30
    %s226 = sor.u32 %s224, %s225
    %p227 = scmp.eq.s32.totalorder %s226, 0
    %s229 = sadd.s32 %s228, 1
    %s230 = scalar_select %p227, %s228, %s229
    %p233 = pneg %p227
    %p234 = scmp.eq.s32.totalorder %s15, 3
    %p235 = por %p233, %p234
    %p236 = scmp.ne.s32.totalorder %s228, %s231
    %p237 = scmp.eq.s32.totalorder %s15, 0
    %p238 = por %p236, %p237
    %p239 = scmp.ne.s32.totalorder %s228, %s231
    %p240 = scmp.eq.s32.totalorder %s20, 3
    %p241 = por %p239, %p240
    %p242 = scmp.ne.s32.totalorder %s231, %s232
    %p243 = scmp.eq.s32.totalorder %s20, 0
    %p244 = por %p242, %p243
    %p245 = scmp.ne.s32.totalorder %s231, %s232
    %p246 = scmp.eq.s32.totalorder %s21, 3
    %p247 = por %p245, %p246
    %p249 = scmp.ne.s32.totalorder %s232, %s248
    %p250 = scmp.eq.s32.totalorder %s21, 0
    %p251 = por %p249, %p250
    %s252 = ssub.s32 %s22, %s34
    %p253 = scmp.eq.s32.totalorder %s252, 0
    %s255 = sadd.s32 %s254, 1
    %s256 = scalar_select %p253, %s254, %s255
    %p259 = pneg %p253
    %p260 = scmp.eq.s32.totalorder %s15, 3
    %p261 = por %p259, %p260
    %p262 = scmp.ne.s32.totalorder %s254, %s257
    %p263 = scmp.eq.s32.totalorder %s15, 0
    %p264 = por %p262, %p263
    %p265 = scmp.ne.s32.totalorder %s254, %s257
    %p266 = scmp.eq.s32.totalorder %s20, 3
    %p267 = por %p265, %p266
    %p268 = scmp.ne.s32.totalorder %s257, %s258
    %p269 = scmp.eq.s32.totalorder %s20, 0
    %p270 = por %p268, %p269
    %p271 = scmp.ne.s32.totalorder %s257, %s258
    %p272 = scmp.eq.s32.totalorder %s21, 3
    %p273 = por %p271, %p272
    %p275 = scmp.ne.s32.totalorder %s258, %s274
    %p276 = scmp.eq.s32.totalorder %s21, 0
    %p277 = por %p275, %p276
    %p278 = scmp.le.s32.totalorder 1, %s15
    %p279 = scmp.lt.s32.totalorder %s15, 5
    %p280 = pnand %p278, %p279
    %p281 = pneg %p280
    // Predicated region
    $region9: #{_lambda_.7} parent=5 // pred_check
      _
    $region10: #{_lambda_.7} parent=5 // pred_check_branch
      %283 = sbr.rel (%p280) target = $region12
    $region11: #{_lambda_.7} parent=5 // pred_region
      %s284 = ssub.s32 %s15, 1
      // Predicated region
      $region13: #{_lambda_.7} parent=11 // pred_check
        %p285 = pneg %p148
      $region14: #{_lambda_.7} parent=11 // pred_check_branch
        %287 = sbr.rel (%p285) target = $region16
      $region15: #{_lambda_.7} parent=11 // pred_region
        _
      $region16: #{_lambda_.7} parent=11 // pred_fallthru
        _
      // Predicated region
      $region17: #{_lambda_.7} parent=11 // pred_check
        %p288 = pneg %p169
      $region18: #{_lambda_.7} parent=11 // pred_check_branch
        %290 = sbr.rel (%p288) target = $region20
      $region19: #{_lambda_.7} parent=11 // pred_region
        _
      $region20: #{_lambda_.7} parent=11 // pred_fallthru
        _
      // Predicated region
      $region21: #{_lambda_.7} parent=11 // pred_check
        %p291 = pneg %p190
      $region22: #{_lambda_.7} parent=11 // pred_check_branch
        %293 = sbr.rel (%p291) target = $region24
      $region23: #{_lambda_.7} parent=11 // pred_region
        _
      $region24: #{_lambda_.7} parent=11 // pred_fallthru
        _
    $region12: #{_lambda_.7} parent=5 // pred_fallthru
      _
    %p294 = scmp.lt.s32.totalorder %s15, 4
    // Predicated region
    $region25: #{_lambda_.7} parent=5 // pred_check
      %p295 = pneg %p294
    $region26: #{_lambda_.7} parent=5 // pred_check_branch
      %297 = sbr.rel (%p295) target = $region28
    $region27: #{_lambda_.7} parent=5 // pred_region
      // Predicated region
      $region29: #{_lambda_.7} parent=27 // pred_check
        %p298 = pneg %p49
      $region30: #{_lambda_.7} parent=27 // pred_check_branch
        %300 = sbr.rel (%p298) target = $region32
      $region31: #{_lambda_.7} parent=27 // pred_region
        %s301 = smul.u32 8, %s23
        %p302 = scmp.lt.s32.totalorder %s22, 1
        %s303 = scalar_select %p302, %s22, 1
        %p304 = scmp.lt.s32.totalorder %s301, 15
        %s305 = scalar_select %p304, %s301, 15
        %s306 = smul.addr %s305, 2
        %s307 = smul.addr %s303, 32
        %s308 = sadd.s32 %s306, %s307
        %s309 = smul.addr %s308, 4
        %s310 = scalar_lea.vmem %s0, %s309
        %s311 = smul.u32 8, %s23
      $region32: #{_lambda_.7} parent=27 // pred_fallthru
        _
      // Predicated region
      $region33: #{_lambda_.7} parent=27 // pred_check
        %p312 = pneg %p85
      $region34: #{_lambda_.7} parent=27 // pred_check_branch
        %314 = sbr.rel (%p312) target = $region36
      $region35: #{_lambda_.7} parent=27 // pred_region
        %s315 = smul.u32 %s23, 8
        %s316 = ssub.s32 %s315, 1
        %p317 = scmp.gt.s32.totalorder %s316, 0
        %s318 = scalar_select %p317, %s316, 0
        %p319 = scmp.lt.s32.totalorder %s22, 1
        %s320 = scalar_select %p319, %s22, 1
        %p321 = scmp.lt.s32.totalorder %s318, 15
        %s322 = scalar_select %p321, %s318, 15
        %s323 = smul.addr %s322, 2
        %s324 = smul.addr %s320, 32
        %s325 = sadd.s32 %s323, %s324
        %s326 = smul.addr %s325, 4
        %s327 = scalar_lea.vmem %s1, %s326
        %s328 = smul.u32 %s23, 8
        %s329 = ssub.s32 %s328, 1
        %p330 = scmp.gt.s32.totalorder %s329, 0
        %s331 = scalar_select %p330, %s329, 0
      $region36: #{_lambda_.7} parent=27 // pred_fallthru
        _
      // Predicated region
      $region37: #{_lambda_.7} parent=27 // pred_check
        %p332 = pneg %p121
      $region38: #{_lambda_.7} parent=27 // pred_check_branch
        %334 = sbr.rel (%p332) target = $region40
      $region39: #{_lambda_.7} parent=27 // pred_region
        %s335 = smul.u32 %s23, 8
        %s336 = sadd.s32 %s335, 8
        %p337 = scmp.lt.s32.totalorder %s336, 15
        %s338 = scalar_select %p337, %s336, 15
        %p339 = scmp.lt.s32.totalorder %s22, 1
        %s340 = scalar_select %p339, %s22, 1
        %p341 = scmp.lt.s32.totalorder %s338, 15
        %s342 = scalar_select %p341, %s338, 15
        %s343 = smul.addr %s342, 2
        %s344 = smul.addr %s340, 32
        %s345 = sadd.s32 %s343, %s344
        %s346 = smul.addr %s345, 4
        %s347 = scalar_lea.vmem %s2, %s346
        %s348 = smul.u32 %s23, 8
        %s349 = sadd.s32 %s348, 8
        %p350 = scmp.lt.s32.totalorder %s349, 15
        %s351 = scalar_select %p350, %s349, 15
      $region40: #{_lambda_.7} parent=27 // pred_fallthru
        _
      // Predicated region
      $region41: #{_lambda_.7} parent=27 // pred_check
        %p352 = pneg %p210
      $region42: #{_lambda_.7} parent=27 // pred_check_branch
        %354 = sbr.rel (%p352) target = $region44
      $region43: #{_lambda_.7} parent=27 // pred_region
        %p355 = scmp.lt.s32.totalorder %s23, 1
        %s356 = scalar_select %p355, %s23, 1
        %s357 = smul.addr %s356, 8
        %s358 = smul.addr %s357, 4
        %s359 = scalar_lea.vmem %s6, %s358
      $region44: #{_lambda_.7} parent=27 // pred_fallthru
        _
    $region28: #{_lambda_.7} parent=5 // pred_fallthru
      _
    %p360 = scmp.le.s32.totalorder 1, %s15
    %p361 = scmp.lt.s32.totalorder %s15, 5
    %p362 = pnand %p360, %p361
    %p363 = pneg %p362
    // Predicated region
    $region45: #{_lambda_.7} parent=5 // pred_check
      _
    $region46: #{_lambda_.7} parent=5 // pred_check_branch
      %365 = sbr.rel (%p362) target = $region48
    $region47: #{_lambda_.7} parent=5 // pred_region
      %s366 = ssub.s32 %s15, 1
      %s367 = smul.u32 8, %s25
      %p368 = scmp.lt.s32.totalorder %s24, 1
      %s369 = scalar_select %p368, %s24, 1
      %p370 = scmp.lt.s32.totalorder %s367, 15
      %s371 = scalar_select %p370, %s367, 15
      %s372 = smul.addr %s371, 2
      %s373 = smul.addr %s369, 32
      %s374 = sadd.s32 %s372, %s373
      %s375 = smul.addr %s374, 4
      %s376 = scalar_lea.vmem %s0, %s375
      %p377 = pneg %p55
      %p378 = pneg %p52
      %s379 = smul.u32 %s25, 8
      %s380 = ssub.s32 %s379, 1
      %p381 = scmp.gt.s32.totalorder %s380, 0
      %s382 = scalar_select %p381, %s380, 0
      %p383 = scmp.lt.s32.totalorder %s24, 1
      %s384 = scalar_select %p383, %s24, 1
      %p385 = scmp.lt.s32.totalorder %s382, 15
      %s386 = scalar_select %p385, %s382, 15
      %s387 = smul.addr %s386, 2
      %s388 = smul.addr %s384, 32
      %s389 = sadd.s32 %s387, %s388
      %s390 = smul.addr %s389, 4
      %s391 = scalar_lea.vmem %s1, %s390
      %p392 = pneg %p91
      %p393 = pneg %p88
      %s394 = smul.u32 %s25, 8
      %s395 = sadd.s32 %s394, 8
      %p396 = scmp.lt.s32.totalorder %s395, 15
      %s397 = scalar_select %p396, %s395, 15
      %p398 = scmp.lt.s32.totalorder %s24, 1
      %s399 = scalar_select %p398, %s24, 1
      %p400 = scmp.lt.s32.totalorder %s397, 15
      %s401 = scalar_select %p400, %s397, 15
      %s402 = smul.addr %s401, 2
      %s403 = smul.addr %s399, 32
      %s404 = sadd.s32 %s402, %s403
      %s405 = smul.addr %s404, 4
      %s406 = scalar_lea.vmem %s2, %s405
      %p407 = pneg %p127
      %p408 = pneg %p124
      %p409 = pneg %p148
      %p410 = pneg %p145
      %p411 = pneg %p169
      %p412 = pneg %p166
      %p413 = pneg %p190
      %p414 = pneg %p187
      %p415 = scmp.lt.s32.totalorder %s25, 1
      %s416 = scalar_select %p415, %s25, 1
      %s417 = smul.addr %s416, 8
      %s418 = smul.addr %s417, 4
      %s419 = scalar_lea.vmem %s6, %s418
      %p420 = pneg %p216
      %p421 = pneg %p213
      %p422 = pneg %p244
      %p423 = pneg %p241
      %s424 = smul.u32 8, %s25
      %p425 = scmp.lt.s32.totalorder %s24, 1
      %s426 = scalar_select %p425, %s24, 1
      %p427 = scmp.lt.s32.totalorder %s424, 15
      %s428 = scalar_select %p427, %s424, 15
      %s429 = smul.addr %s428, 2
      %s430 = smul.addr %s426, 32
      %s431 = sadd.s32 %s429, %s430
      %s432 = smul.addr %s431, 4
      %s433 = scalar_lea.vmem %s7, %s432
      %p434 = pneg %p270
      %p435 = pneg %p267
      %p436 = scmp.lt.s32.totalorder %s24, 1
      %s437 = scalar_select %p436, %s24, 1
      %s438 = smul.addr %s437, 4
      %s439 = smul.addr %s438, 8
      %s440 = scalar_lea.vmem %s8, %s439
      %s441 = smul.u32 8, %s25
      %p442 = scmp.lt.s32.totalorder %s24, 1
      %s443 = scalar_select %p442, %s24, 1
      %p444 = scmp.lt.s32.totalorder %s441, 15
      %s445 = scalar_select %p444, %s441, 15
      %s446 = smul.addr %s445, 2
      %s447 = smul.addr %s443, 32
      %s448 = sadd.s32 %s446, %s447
      %s449 = smul.addr %s448, 4
      %s450 = scalar_lea.vmem %s0, %s449
      %s451 = smul.u32 8, %s25
      %s452 = smul.u32 %s25, 8
      %s453 = ssub.s32 %s452, 1
      %p454 = scmp.gt.s32.totalorder %s453, 0
      %s455 = scalar_select %p454, %s453, 0
      %p456 = scmp.lt.s32.totalorder %s24, 1
      %s457 = scalar_select %p456, %s24, 1
      %p458 = scmp.lt.s32.totalorder %s455, 15
      %s459 = scalar_select %p458, %s455, 15
      %s460 = smul.addr %s459, 2
      %s461 = smul.addr %s457, 32
      %s462 = sadd.s32 %s460, %s461
      %s463 = smul.addr %s462, 4
      %s464 = scalar_lea.vmem %s1, %s463
      %s465 = smul.u32 %s25, 8
      %s466 = ssub.s32 %s465, 1
      %p467 = scmp.gt.s32.totalorder %s466, 0
      %s468 = scalar_select %p467, %s466, 0
      %s469 = smul.u32 %s25, 8
      %s470 = sadd.s32 %s469, 8
      %p471 = scmp.lt.s32.totalorder %s470, 15
      %s472 = scalar_select %p471, %s470, 15
      %p473 = scmp.lt.s32.totalorder %s24, 1
      %s474 = scalar_select %p473, %s24, 1
      %p475 = scmp.lt.s32.totalorder %s472, 15
      %s476 = scalar_select %p475, %s472, 15
      %s477 = smul.addr %s476, 2
      %s478 = smul.addr %s474, 32
      %s479 = sadd.s32 %s477, %s478
      %s480 = smul.addr %s479, 4
      %s481 = scalar_lea.vmem %s2, %s480
      %s482 = smul.u32 %s25, 8
      %s483 = sadd.s32 %s482, 8
      %p484 = scmp.lt.s32.totalorder %s483, 15
      %s485 = scalar_select %p484, %s483, 15
      %p486 = scmp.lt.s32.totalorder %s25, 1
      %s487 = scalar_select %p486, %s25, 1
      %s488 = smul.addr %s487, 8
      %s489 = smul.addr %s488, 4
      %s490 = scalar_lea.vmem %s6, %s489
      %s491 = smul.u32 8, %s25
      %p492 = scmp.lt.s32.totalorder %s24, 1
      %s493 = scalar_select %p492, %s24, 1
      %p494 = scmp.lt.s32.totalorder %s491, 15
      %s495 = scalar_select %p494, %s491, 15
      %s496 = smul.addr %s495, 2
      %s497 = smul.addr %s493, 32
      %s498 = sadd.s32 %s496, %s497
      %s499 = smul.addr %s498, 4
      %s500 = scalar_lea.vmem %s7, %s499
      %s501 = smul.u32 8, %s25
      %p502 = scmp.lt.s32.totalorder %s24, 1
      %s503 = scalar_select %p502, %s24, 1
      %s504 = smul.addr %s503, 4
      %s505 = smul.addr %s504, 8
      %s506 = scalar_lea.vmem %s8, %s505
      %vm508 = vcmask 60416
      %509 = vst.msk [vmem:[#allocation2] sm:$0xf] %vm508, 0
      %510 = vst.msk [vmem:[#allocation2 + $0x4] sm:$0xf] %vm508, 0
      %511 = vst.msk [vmem:[#allocation2 + $0x8] sm:$0xf] %vm508, 0
      %512 = vst.msk [vmem:[#allocation2 + $0xc] sm:$0xf] %vm508, 0
      %513 = vst.msk [vmem:[#allocation2 + $0x10] sm:$0xf] %vm508, 0
      %514 = vst.msk [vmem:[#allocation2 + $0x14] sm:$0xf] %vm508, 0
      %515 = vst.msk [vmem:[#allocation2 + $0x18] sm:$0xf] %vm508, 0
      %516 = vst.msk [vmem:[#allocation2 + $0x1c] sm:$0xf] %vm508, 0
      %517 = vst.msk [vmem:[#allocation2 + $0x20] sm:$0xf] %vm508, 0
      %518 = vst.msk [vmem:[#allocation2 + $0x24] sm:$0xf] %vm508, 0
      %519 = vst.msk [vmem:[#allocation2 + $0x28] sm:$0xf] %vm508, 0
      %520 = vst.msk [vmem:[#allocation2 + $0x2c] sm:$0xf] %vm508, 0
      %521 = vst.msk [vmem:[#allocation2 + $0x30] sm:$0xf] %vm508, 0
      %522 = vst.msk [vmem:[#allocation2 + $0x34] sm:$0xf] %vm508, 0
      %523 = vst.msk [vmem:[#allocation2 + $0x38] sm:$0xf] %vm508, 0
      %524 = vst.msk [vmem:[#allocation2 + $0x3c] sm:$0xf] %vm508, 0
      %525 = vst.msk [vmem:[#allocation2 + $0x40] sm:$0xf] %vm508, 0
      %526 = vst.msk [vmem:[#allocation2 + $0x44] sm:$0xf] %vm508, 0
      %527 = vst.msk [vmem:[#allocation2 + $0x48] sm:$0xf] %vm508, 0
      %528 = vst.msk [vmem:[#allocation2 + $0x4c] sm:$0xf] %vm508, 0
      %529 = vst.msk [vmem:[#allocation2 + $0x50] sm:$0xf] %vm508, 0
      %530 = vst.msk [vmem:[#allocation2 + $0x54] sm:$0xf] %vm508, 0
      %531 = vst.msk [vmem:[#allocation2 + $0x58] sm:$0xf] %vm508, 0
      %vm532 = vcmask 58368
      %533 = vst.msk [vmem:[#allocation2 + $0x5c] sm:$0x3] %vm532, 0
      %p534 = scmp.gt.s32.totalorder %s25, 0
      // Predicated region
      $region49: #{_lambda_.7} parent=47 // pred_check
        %p535 = pneg %p534
      $region50: #{_lambda_.7} parent=47 // pred_check_branch
        %537 = sbr.rel (%p535) target = $region52
      $region51: #{_lambda_.7} parent=47 // pred_region
        %v538 = vld [vmem:[%s464] sm:$0xf]
        %v539 = vld [vmem:[%s464 + $0x4] sm:$0xf]
        %vm540 = vsmask.f32 256
        %vm541 = vsmask.f32 4368
        %vm542 = vmor %vm540, %vm541
        %v544 = vshrl.u32 %v538, 16
        %v546 = vrot.slane %v544, 7
        %v547 = vshll.u32 %v538, 16
        %v549 = vor.u32 %v546, %v547
        %v550 = vrot.slane %v546, 4
        %v552 = vshrl.u32 %v539, 16
        %v554 = vrot.slane %v552, 7
        %v555 = vshll.u32 %v539, 16
        %v557 = vor.u32 %v554, %v555
        %v558 = vsel %vm542, %v550, %v557
        %v559 = vrot.slane %v554, 4
        %vm563 = vcmask 60416
        %vm564 = vsmask.f32 7938
        %vm565 = vmand %vm563, %vm564
        %v566 = vld [vmem:[#allocation2] sm:$0xf]
        %v567 = vsel %vm565, %v549, %v566
        %568 = vst [vmem:[#allocation2] sm:$0xf] %v567
        %569 = vst.msk [vmem:[#allocation2 + $0x4] sm:$0xf] %vm508, %v558
        %vm570 = vcmask 57344
        %vm571 = vmand %vm570, %vm540
        %v572 = vld [vmem:[#allocation2 + $0x8] sm:$0x1]
        %v573 = vsel %vm571, %v559, %v572
        %574 = vst [vmem:[#allocation2 + $0x8] sm:$0x1] %v573
      $region52: #{_lambda_.7} parent=47 // pred_fallthru
        _
      %v575 = vld [vmem:[%s450] sm:$0xf]
      %v576 = vld [vmem:[%s450 + $0x4] sm:$0xf]
      %vm577 = vsmask.f32 1280
      %vm578 = vsmask.f32 5392
      %vm579 = vmor %vm577, %vm578
      %v581 = vshrl.u32 %v575, 16
      %v583 = vrot.slane %v581, 6
      %v584 = vshll.u32 %v575, 16
      %v586 = vrot.slane %v584, 7
      %v587 = vor.u32 %v583, %v586
      %v588 = vrot.slane %v587, 4
      %v590 = vshrl.u32 %v576, 16
      %v592 = vrot.slane %v590, 6
      %v593 = vshll.u32 %v576, 16
      %v595 = vrot.slane %v593, 7
      %v596 = vor.u32 %v592, %v595
      %v597 = vsel %vm579, %v588, %v596
      %v598 = vrot.slane %v596, 4
      %vm602 = vcmask 60417
      %vm603 = vsmask.f32 7942
      %vm604 = vmand %vm602, %vm603
      %v605 = vld [vmem:[#allocation2 + $0x8] sm:$0xe]
      %v606 = vsel %vm604, %v587, %v605
      %607 = vst [vmem:[#allocation2 + $0x8] sm:$0xe] %v606
      %608 = vst.msk [vmem:[#allocation2 + $0xc] sm:$0xf] %vm508, %v597
      %vm609 = vcmask 58368
      %vm610 = vmand %vm609, %vm577
      %v611 = vld [vmem:[#allocation2 + $0x10] sm:$0x3]
      %v612 = vsel %vm610, %v598, %v611
      %613 = vst [vmem:[#allocation2 + $0x10] sm:$0x3] %v612
      %s614 = scalar_lea.vmem %s450, 8
      %v615 = vld [vmem:[%s614] sm:$0xf]
      %v616 = vld [vmem:[%s614 + $0x4] sm:$0xf]
      %vm617 = vsmask.f32 2304
      %vm618 = vsmask.f32 6416
      %vm619 = vmor %vm617, %vm618
      %v621 = vshrl.u32 %v615, 16
      %v623 = vrot.slane %v621, 5
      %v624 = vshll.u32 %v615, 16
      %v626 = vrot.slane %v624, 6
      %v627 = vor.u32 %v623, %v626
      %v628 = vrot.slane %v627, 4
      %v630 = vshrl.u32 %v616, 16
      %v632 = vrot.slane %v630, 5
      %v633 = vshll.u32 %v616, 16
      %v635 = vrot.slane %v633, 6
      %v636 = vor.u32 %v632, %v635
      %v637 = vsel %vm619, %v628, %v636
      %v638 = vrot.slane %v636, 4
      %vm642 = vcmask 60418
      %vm643 = vsmask.f32 7946
      %vm644 = vmand %vm642, %vm643
      %v645 = vld [vmem:[#allocation2 + $0x10] sm:$0xc]
      %v646 = vsel %vm644, %v627, %v645
      %647 = vst [vmem:[#allocation2 + $0x10] sm:$0xc] %v646
      %648 = vst.msk [vmem:[#allocation2 + $0x14] sm:$0xf] %vm508, %v637
      %vm649 = vcmask 59392
      %vm650 = vmand %vm649, %vm617
      %v651 = vld [vmem:[#allocation2 + $0x18] sm:$0x7]
      %v652 = vsel %vm650, %v638, %v651
      %653 = vst [vmem:[#allocation2 + $0x18] sm:$0x7] %v652
      %s654 = scalar_lea.vmem %s450, 16
      %v655 = vld [vmem:[%s654] sm:$0xf]
      %v656 = vld [vmem:[%s654 + $0x4] sm:$0xf]
      %vm657 = vsmask.f32 3328
      %vm658 = vsmask.f32 7440
      %vm659 = vmor %vm657, %vm658
      %v661 = vshll.u32 %v655, 16
      %v663 = vrot.slane %v661, 5
      %v664 = vshrl.u32 %v655, 16
      %v666 = vrot.slane %v664, 4
      %v667 = vor.u32 %v666, %v663
      %v668 = vrot.slane %v667, 4
      %v670 = vshll.u32 %v656, 16
      %v672 = vrot.slane %v670, 5
      %v673 = vsel %vm659, %v668, %v672
      %v674 = vshrl.u32 %v656, 16
      %v676 = vrot.slane %v674, 4
      %v677 = vor.u32 %v676, %v672
      %v678 = vrot.slane %v677, 4
      %vm682 = vcmask 60419
      %vm683 = vsmask.f32 7950
      %vm684 = vmand %vm682, %vm683
      %v685 = vld [vmem:[#allocation2 + $0x18] sm:$0x8]
      %v686 = vsel %vm684, %v663, %v685
      %687 = vst [vmem:[#allocation2 + $0x18] sm:$0x8] %v686
      %688 = vst.msk [vmem:[#allocation2 + $0x1c] sm:$0xf] %vm508, %v673
      %vm689 = vcmask 60416
      %vm690 = vmand %vm689, %vm657
      %v691 = vld [vmem:[#allocation2 + $0x20] sm:$0xf]
      %v692 = vsel %vm690, %v678, %v691
      %693 = vst [vmem:[#allocation2 + $0x20] sm:$0xf] %v692
      %s694 = scalar_lea.vmem %s450, 24
      %v695 = vld [vmem:[%s694] sm:$0xf]
      %v696 = vld [vmem:[%s694 + $0x4] sm:$0xf]
      %vm697 = vsmask.f32 256
      %vm698 = vsmask.f32 4368
      %vm699 = vmor %vm697, %vm698
      %v701 = vshrl.u32 %v695, 16
      %v703 = vrot.slane %v701, 7
      %v704 = vshll.u32 %v695, 16
      %v706 = vor.u32 %v703, %v704
      %v707 = vrot.slane %v703, 4
      %v709 = vshrl.u32 %v696, 16
      %v711 = vrot.slane %v709, 7
      %v712 = vshll.u32 %v696, 16
      %v714 = vor.u32 %v711, %v712
      %v715 = vsel %vm699, %v707, %v714
      %v716 = vrot.slane %v711, 4
      %vm720 = vsmask.f32 7938
      %vm721 = vmand %vm689, %vm720
      %v722 = vld [vmem:[#allocation2 + $0x24] sm:$0xf]
      %v723 = vsel %vm721, %v706, %v722
      %724 = vst [vmem:[#allocation2 + $0x24] sm:$0xf] %v723
      %725 = vst.msk [vmem:[#allocation2 + $0x28] sm:$0xf] %vm508, %v715
      %vm726 = vcmask 57344
      %vm727 = vmand %vm726, %vm697
      %v728 = vld [vmem:[#allocation2 + $0x2c] sm:$0x1]
      %v729 = vsel %vm727, %v716, %v728
      %730 = vst [vmem:[#allocation2 + $0x2c] sm:$0x1] %v729
      %s731 = scalar_lea.vmem %s450, 32
      %v732 = vld [vmem:[%s731] sm:$0xf]
      %v733 = vld [vmem:[%s731 + $0x4] sm:$0xf]
      %v735 = vshrl.u32 %v732, 16
      %v737 = vrot.slane %v735, 6
      %v738 = vshll.u32 %v732, 16
      %v740 = vrot.slane %v738, 7
      %v741 = vor.u32 %v737, %v740
      %v742 = vrot.slane %v741, 4
      %v744 = vshrl.u32 %v733, 16
      %v746 = vrot.slane %v744, 6
      %v747 = vshll.u32 %v733, 16
      %v749 = vrot.slane %v747, 7
      %v750 = vor.u32 %v746, %v749
      %v751 = vsel %vm579, %v742, %v750
      %v752 = vrot.slane %v750, 4
      %v756 = vld [vmem:[#allocation2 + $0x2c] sm:$0xe]
      %v757 = vsel %vm604, %v741, %v756
      %758 = vst [vmem:[#allocation2 + $0x2c] sm:$0xe] %v757
      %759 = vst.msk [vmem:[#allocation2 + $0x30] sm:$0xf] %vm508, %v751
      %v760 = vld [vmem:[#allocation2 + $0x34] sm:$0x3]
      %v761 = vsel %vm610, %v752, %v760
      %762 = vst [vmem:[#allocation2 + $0x34] sm:$0x3] %v761
      %s763 = scalar_lea.vmem %s450, 40
      %v764 = vld [vmem:[%s763] sm:$0xf]
      %v765 = vld [vmem:[%s763 + $0x4] sm:$0xf]
      %v767 = vshrl.u32 %v764, 16
      %v769 = vrot.slane %v767, 5
      %v770 = vshll.u32 %v764, 16
      %v772 = vrot.slane %v770, 6
      %v773 = vor.u32 %v769, %v772
      %v774 = vrot.slane %v773, 4
      %v776 = vshrl.u32 %v765, 16
      %v778 = vrot.slane %v776, 5
      %v779 = vshll.u32 %v765, 16
      %v781 = vrot.slane %v779, 6
      %v782 = vor.u32 %v778, %v781
      %v783 = vsel %vm619, %v774, %v782
      %v784 = vrot.slane %v782, 4
      %v788 = vld [vmem:[#allocation2 + $0x34] sm:$0xc]
      %v789 = vsel %vm644, %v773, %v788
      %790 = vst [vmem:[#allocation2 + $0x34] sm:$0xc] %v789
      %791 = vst.msk [vmem:[#allocation2 + $0x38] sm:$0xf] %vm508, %v783
      %v792 = vld [vmem:[#allocation2 + $0x3c] sm:$0x7]
      %v793 = vsel %vm650, %v784, %v792
      %794 = vst [vmem:[#allocation2 + $0x3c] sm:$0x7] %v793
      %s795 = scalar_lea.vmem %s450, 48
      %v796 = vld [vmem:[%s795] sm:$0xf]
      %v797 = vld [vmem:[%s795 + $0x4] sm:$0xf]
      %v799 = vshll.u32 %v796, 16
      %v801 = vrot.slane %v799, 5
      %v802 = vshrl.u32 %v796, 16
      %v804 = vrot.slane %v802, 4
      %v805 = vor.u32 %v804, %v801
      %v806 = vrot.slane %v805, 4
      %v808 = vshll.u32 %v797, 16
      %v810 = vrot.slane %v808, 5
      %v811 = vsel %vm659, %v806, %v810
      %v812 = vshrl.u32 %v797, 16
      %v814 = vrot.slane %v812, 4
      %v815 = vor.u32 %v814, %v810
      %v816 = vrot.slane %v815, 4
      %v820 = vld [vmem:[#allocation2 + $0x3c] sm:$0x8]
      %v821 = vsel %vm684, %v801, %v820
      %822 = vst [vmem:[#allocation2 + $0x3c] sm:$0x8] %v821
      %823 = vst.msk [vmem:[#allocation2 + $0x40] sm:$0xf] %vm508, %v811
      %v824 = vld [vmem:[#allocation2 + $0x44] sm:$0xf]
      %v825 = vsel %vm690, %v816, %v824
      %826 = vst [vmem:[#allocation2 + $0x44] sm:$0xf] %v825
      %s827 = scalar_lea.vmem %s450, 56
      %v828 = vld [vmem:[%s827] sm:$0xf]
      %v829 = vld [vmem:[%s827 + $0x4] sm:$0xf]
      %v831 = vshrl.u32 %v828, 16
      %v833 = vrot.slane %v831, 7
      %v834 = vshll.u32 %v828, 16
      %v836 = vor.u32 %v833, %v834
      %v837 = vrot.slane %v833, 4
      %v839 = vshrl.u32 %v829, 16
      %v841 = vrot.slane %v839, 7
      %v842 = vshll.u32 %v829, 16
      %v844 = vor.u32 %v841, %v842
      %v845 = vsel %vm699, %v837, %v844
      %v846 = vrot.slane %v841, 4
      %v850 = vld [vmem:[#allocation2 + $0x48] sm:$0xf]
      %v851 = vsel %vm721, %v836, %v850
      %852 = vst [vmem:[#allocation2 + $0x48] sm:$0xf] %v851
      %853 = vst.msk [vmem:[#allocation2 + $0x4c] sm:$0xf] %vm508, %v845
      %v854 = vld [vmem:[#allocation2 + $0x50] sm:$0x1]
      %v855 = vsel %vm727, %v846, %v854
      %856 = vst [vmem:[#allocation2 + $0x50] sm:$0x1] %v855
      %p857 = scmp.lt.s32.totalorder %s25, 1
      // Predicated region
      $region53: #{_lambda_.7} parent=47 // pred_check
        %p858 = pneg %p857
      $region54: #{_lambda_.7} parent=47 // pred_check_branch
        %860 = sbr.rel (%p858) target = $region56
      $region55: #{_lambda_.7} parent=47 // pred_region
        %v861 = vld [vmem:[%s481] sm:$0xf]
        %v862 = vld [vmem:[%s481 + $0x4] sm:$0xf]
        %v864 = vshrl.u32 %v861, 16
        %v866 = vrot.slane %v864, 6
        %v867 = vshll.u32 %v861, 16
        %v869 = vrot.slane %v867, 7
        %v870 = vor.u32 %v866, %v869
        %v871 = vrot.slane %v870, 4
        %v873 = vshrl.u32 %v862, 16
        %v875 = vrot.slane %v873, 6
        %v876 = vshll.u32 %v862, 16
        %v878 = vrot.slane %v876, 7
        %v879 = vor.u32 %v875, %v878
        %v880 = vsel %vm579, %v871, %v879
        %v881 = vrot.slane %v879, 4
        %v885 = vld [vmem:[#allocation2 + $0x50] sm:$0xe]
        %v886 = vsel %vm604, %v870, %v885
        %887 = vst [vmem:[#allocation2 + $0x50] sm:$0xe] %v886
        %888 = vst.msk [vmem:[#allocation2 + $0x54] sm:$0xf] %vm508, %v880
        %v889 = vld [vmem:[#allocation2 + $0x58] sm:$0x3]
        %v890 = vsel %vm610, %v881, %v889
        %891 = vst [vmem:[#allocation2 + $0x58] sm:$0x3] %v890
      $region56: #{_lambda_.7} parent=47 // pred_fallthru
        _
      %v892 = vld [vmem:[#allocation2] sm:$0xf]
      %v893 = vld [vmem:[#allocation2 + $0x4] sm:$0xf]
      %v894 = vld [vmem:[#allocation2 + $0x8] sm:$0xf]
      %v895 = vld [vmem:[#allocation2 + $0xc] sm:$0xf]
      %v896 = vld [vmem:[#allocation2 + $0x10] sm:$0xf]
      %v897 = vld [vmem:[#allocation2 + $0x14] sm:$0xf]
      %v898 = vld [vmem:[#allocation2 + $0x18] sm:$0xf]
      %v899 = vld [vmem:[#allocation2 + $0x1c] sm:$0xf]
      %v900 = vld [vmem:[#allocation2 + $0x20] sm:$0xf]
      %v901 = vld [vmem:[#allocation2 + $0x24] sm:$0xf]
      %v902 = vld [vmem:[#allocation2 + $0x28] sm:$0xf]
      %v903 = vld [vmem:[#allocation2 + $0x2c] sm:$0xf]
      %v904 = vld [vmem:[#allocation2 + $0x30] sm:$0xf]
      %v905 = vld [vmem:[#allocation2 + $0x34] sm:$0xf]
      %v906 = vld [vmem:[#allocation2 + $0x38] sm:$0xf]
      %v907 = vld [vmem:[#allocation2 + $0x3c] sm:$0xf]
      %v908 = vld [vmem:[#allocation2 + $0x40] sm:$0xf]
      %v909 = vld [vmem:[#allocation2 + $0x44] sm:$0xf]
      %v910 = vld [vmem:[%s3] sm:$0xf]
      %v911 = vld [vmem:[#allocation2 + $0x48] sm:$0x1]
      %s912 = scalar_lea.vmem %s3, 4
      %v913 = vld [vmem:[%s912] sm:$0xf]
      %v933 = vunpack.c.l.b16 %v892
      %v934 = vunpack.c.l.b16 %v893
      %v935 = vunpack.c.l.b16 %v894
      %v936 = vunpack.c.l.b16 %v895
      %v937 = vunpack.c.l.b16 %v896
      %v938 = vunpack.c.l.b16 %v897
      %v939 = vunpack.c.l.b16 %v898
      %v940 = vunpack.c.l.b16 %v899
      %v941 = vunpack.c.l.b16 %v900
      %v942 = vunpack.c.l.b16 %v901
      %v943 = vunpack.c.l.b16 %v902
      %v944 = vunpack.c.l.b16 %v903
      %v945 = vunpack.c.l.b16 %v904
      %v946 = vunpack.c.l.b16 %v905
      %v947 = vunpack.c.l.b16 %v906
      %v948 = vunpack.c.l.b16 %v907
      %v949 = vunpack.c.l.b16 %v908
      %v950 = vunpack.c.l.b16 %v909
      %v951 = vunpack.c.l.b16 %v911
      %v952 = vpack.c.b16 %v934, %v933
      %v953 = vpack.c.b16 %v936, %v935
      %v954 = vpack.c.b16 %v938, %v937
      %v955 = vpack.c.b16 %v940, %v939
      %v956 = vpack.c.b16 %v942, %v941
      %v957 = vpack.c.b16 %v944, %v943
      %v958 = vpack.c.b16 %v946, %v945
      %v959 = vpack.c.b16 %v948, %v947
      %v960 = vpack.c.b16 %v950, %v949
      %v961 = vpack.c.b16 %v951, %v951
      %vm962 = vsmask.f32 7424
      %v964 = vshrl.u32 %v952, 16
      %v966 = vshll.u32 %v952, 16
      %v968 = vrot.slane %v966, 1
      %v969 = vor.u32 %v964, %v968
      %v971 = vshll.u32 %v953, 16
      %v973 = vrot.slane %v971, 1
      %v974 = vsel %vm962, %v969, %v973
      %v975 = vshrl.u32 %v953, 16
      %v977 = vor.u32 %v975, %v973
      %v979 = vshll.u32 %v954, 16
      %v981 = vrot.slane %v979, 1
      %v982 = vsel %vm962, %v977, %v981
      %v983 = vshrl.u32 %v954, 16
      %v985 = vor.u32 %v983, %v981
      %v987 = vshll.u32 %v955, 16
      %v989 = vrot.slane %v987, 1
      %v990 = vsel %vm962, %v985, %v989
      %v991 = vshrl.u32 %v955, 16
      %v993 = vor.u32 %v991, %v989
      %v995 = vshll.u32 %v956, 16
      %v997 = vrot.slane %v995, 1
      %v998 = vsel %vm962, %v993, %v997
      %v999 = vshrl.u32 %v956, 16
      %v1001 = vor.u32 %v999, %v997
      %v1003 = vshll.u32 %v957, 16
      %v1005 = vrot.slane %v1003, 1
      %v1006 = vsel %vm962, %v1001, %v1005
      %v1007 = vshrl.u32 %v957, 16
      %v1009 = vor.u32 %v1007, %v1005
      %v1011 = vshll.u32 %v958, 16
      %v1013 = vrot.slane %v1011, 1
      %v1014 = vsel %vm962, %v1009, %v1013
      %v1015 = vshrl.u32 %v958, 16
      %v1017 = vor.u32 %v1015, %v1013
      %v1019 = vshll.u32 %v959, 16
      %v1021 = vrot.slane %v1019, 1
      %v1022 = vsel %vm962, %v1017, %v1021
      %v1023 = vshrl.u32 %v959, 16
      %v1025 = vor.u32 %v1023, %v1021
      %v1027 = vshll.u32 %v960, 16
      %v1029 = vrot.slane %v1027, 1
      %v1030 = vsel %vm962, %v1025, %v1029
      %v1031 = vshrl.u32 %v960, 16
      %v1033 = vor.u32 %v1031, %v1029
      %v1035 = vshll.u32 %v961, 16
      %v1037 = vrot.slane %v1035, 1
      %v1038 = vsel %vm962, %v1033, %v1037
      %vm1039 = vcmask 64512
      %v1041 = vsel %vm1039, %v974, 0
      %v1044 = vsel %vm1039, %v982, 0
      %v1047 = vsel %vm1039, %v990, 0
      %v1050 = vsel %vm1039, %v998, 0
      %v1053 = vsel %vm1039, %v1006, 0
      %v1056 = vsel %vm1039, %v1014, 0
      %v1059 = vsel %vm1039, %v1022, 0
      %v1062 = vsel %vm1039, %v1030, 0
      %v1065 = vsel %vm1039, %v1038, 0
      %vm1067 = vcmask 1043456
      %v1069 = vsel %vm1067, %v913, 0
      %1071 = vmatprep.subr.bf16.mxu0 0
      %1072 = vmatpush1.bf16.msra.mxu0 %v1069
      %1073 = vmatprep.subr.bf16.mxu0 0
      %1074 = vmatpush1.bf16.msra.mxu0 0
      %1075 = vmatprep.subr.bf16.mxu0 0
      %1076 = vmatpush1.bf16.msra.mxu0 0
      %1077 = vmatprep.subr.bf16.mxu0 0
      %1078 = vmatpush1.bf16.msra.mxu0 0
      %1079 = vmatprep.subr.bf16.mxu0 0
      %1080 = vmatpush1.bf16.msra.mxu0 0
      %1081 = vmatprep.subr.bf16.mxu0 0
      %1082 = vmatpush1.bf16.msra.mxu0 0
      %1083 = vmatprep.subr.bf16.mxu0 0
      %1084 = vmatpush1.bf16.msra.mxu0 0
      %1085 = vmatprep.subr.bf16.mxu0 0
      %1086 = vmatpush1.bf16.msra.mxu0 0
      %1087 = vmatprep.subr.bf16.mxu0 0
      %1088 = vmatpush1.bf16.msra.mxu0 0
      %1089 = vmatprep.subr.bf16.mxu0 0
      %1090 = vmatpush1.bf16.msra.mxu0 0
      %1091 = vmatprep.subr.bf16.mxu0 0
      %1092 = vmatpush1.bf16.msra.mxu0 0
      %1093 = vmatprep.subr.bf16.mxu0 0
      %1094 = vmatpush1.bf16.msra.mxu0 0
      %1095 = vmatprep.subr.bf16.mxu0 0
      %1096 = vmatpush1.bf16.msra.mxu0 0
      %1097 = vmatprep.subr.bf16.mxu0 0
      %1098 = vmatpush1.bf16.msra.mxu0 0
      %1099 = vmatprep.subr.bf16.mxu0 0
      %1100 = vmatpush1.bf16.msra.mxu0 0
      %1101 = vmatprep.subr.bf16.mxu0 0
      %1102 = vmatpush1.bf16.msra.mxu0 0
      %1103 = vmatprep.mubr.bf16.mxu0 0
      %1104 = vmatmul.mubr.bf16.gmra.mrb[0].mxu0 %v1041
      %v1105 = vpop.f32.mrb[0].mxu0
      %v1106 = vadd.f32 0.0, %v1105
      %v1107 = vpop.f32.mrb[0].mxu0
      %v1108 = vpop.f32.mrb[0].mxu0
      %v1109 = vadd.f32 0.0, %v1108
      %v1110 = vpop.f32.mrb[0].mxu0
      %1111 = vmatprep.mubr.bf16.mxu0 0
      %1112 = vmatmul.mubr.bf16.gmra.mrb[0].mxu0 %v1044
      %v1113 = vpop.f32.mrb[0].mxu0
      %v1114 = vadd.f32 0.0, %v1113
      %v1115 = vpop.f32.mrb[0].mxu0
      %v1116 = vpop.f32.mrb[0].mxu0
      %v1117 = vadd.f32 0.0, %v1116
      %v1118 = vpop.f32.mrb[0].mxu0
      %1119 = vmatprep.mubr.bf16.mxu0 0
      %1120 = vmatmul.mubr.bf16.gmra.mrb[0].mxu0 %v1047
      %v1121 = vpop.f32.mrb[0].mxu0
      %v1122 = vadd.f32 0.0, %v1121
      %v1123 = vpop.f32.mrb[0].mxu0
      %v1124 = vpop.f32.mrb[0].mxu0
      %v1125 = vadd.f32 0.0, %v1124
      %v1126 = vpop.f32.mrb[0].mxu0
      %1127 = vmatprep.mubr.bf16.mxu0 0
      %1128 = vmatmul.mubr.bf16.gmra.mrb[0].mxu0 %v1050
      %v1129 = vpop.f32.mrb[0].mxu0
      %v1130 = vadd.f32 0.0, %v1129
      %v1131 = vpop.f32.mrb[0].mxu0
      %v1132 = vpop.f32.mrb[0].mxu0
      %v1133 = vadd.f32 0.0, %v1132
      %v1134 = vpop.f32.mrb[0].mxu0
      %1135 = vmatprep.mubr.bf16.mxu0 0
      %1136 = vmatmul.mubr.bf16.gmra.mrb[0].mxu0 %v1053
      %v1137 = vpop.f32.mrb[0].mxu0
      %v1138 = vadd.f32 0.0, %v1137
      %v1139 = vpop.f32.mrb[0].mxu0
      %v1140 = vpop.f32.mrb[0].mxu0
      %v1141 = vadd.f32 0.0, %v1140
      %v1142 = vpop.f32.mrb[0].mxu0
      %1143 = vmatprep.mubr.bf16.mxu0 0
      %1144 = vmatmul.mubr.bf16.gmra.mrb[0].mxu0 %v1056
      %v1145 = vpop.f32.mrb[0].mxu0
      %v1146 = vadd.f32 0.0, %v1145
      %v1147 = vpop.f32.mrb[0].mxu0
      %v1148 = vpop.f32.mrb[0].mxu0
      %v1149 = vadd.f32 0.0, %v1148
      %v1150 = vpop.f32.mrb[0].mxu0
      %1151 = vmatprep.mubr.bf16.mxu0 0
      %1152 = vmatmul.mubr.bf16.gmra.mrb[0].mxu0 %v1059
      %v1153 = vpop.f32.mrb[0].mxu0
      %v1154 = vadd.f32 0.0, %v1153
      %v1155 = vpop.f32.mrb[0].mxu0
      %v1156 = vpop.f32.mrb[0].mxu0
      %v1157 = vadd.f32 0.0, %v1156
      %v1158 = vpop.f32.mrb[0].mxu0
      %1159 = vmatprep.mubr.bf16.mxu0 0
      %1160 = vmatmul.mubr.bf16.gmra.mrb[0].mxu0 %v1062
      %v1161 = vpop.f32.mrb[0].mxu0
      %v1162 = vadd.f32 0.0, %v1161
      %v1163 = vpop.f32.mrb[0].mxu0
      %v1164 = vpop.f32.mrb[0].mxu0
      %v1165 = vadd.f32 0.0, %v1164
      %v1166 = vpop.f32.mrb[0].mxu0
      %1167 = vmatprep.mubr.bf16.mxu0 0
      %1168 = vmatmul.mubr.bf16.gmra.mrb[0].mxu0 %v1065
      %v1169 = vpop.f32.mrb[0].mxu0
      %v1170 = vadd.f32 0.0, %v1169
      %v1171 = vpop.f32.mrb[0].mxu0
      %v1172 = vpop.f32.mrb[0].mxu0
      %v1173 = vadd.f32 0.0, %v1172
      %v1174 = vpop.f32.mrb[0].mxu0
      %1175 = vdwg.mxu0
      %v1176 = vsel %vm1039, %v952, 0
      %v1178 = vsel %vm1039, %v953, 0
      %v1180 = vsel %vm1039, %v954, 0
      %v1182 = vsel %vm1039, %v955, 0
      %v1184 = vsel %vm1039, %v956, 0
      %v1186 = vsel %vm1039, %v957, 0
      %v1188 = vsel %vm1039, %v958, 0
      %v1190 = vsel %vm1039, %v959, 0
      %v1192 = vsel %vm1039, %v960, 0
      %v1195 = vsel %vm1067, %v910, 0
      %1197 = vmatprep.subr.bf16.mxu0 0
      %1198 = vmatpush1.bf16.msra.mxu0 %v1195
      %1199 = vmatprep.subr.bf16.mxu0 0
      %1200 = vmatpush1.bf16.msra.mxu0 0
      %1201 = vmatprep.subr.bf16.mxu0 0
      %1202 = vmatpush1.bf16.msra.mxu0 0
      %1203 = vmatprep.subr.bf16.mxu0 0
      %1204 = vmatpush1.bf16.msra.mxu0 0
      %1205 = vmatprep.subr.bf16.mxu0 0
      %1206 = vmatpush1.bf16.msra.mxu0 0
      %1207 = vmatprep.subr.bf16.mxu0 0
      %1208 = vmatpush1.bf16.msra.mxu0 0
      %1209 = vmatprep.subr.bf16.mxu0 0
      %1210 = vmatpush1.bf16.msra.mxu0 0
      %1211 = vmatprep.subr.bf16.mxu0 0
      %1212 = vmatpush1.bf16.msra.mxu0 0
      %1213 = vmatprep.subr.bf16.mxu0 0
      %1214 = vmatpush1.bf16.msra.mxu0 0
      %1215 = vmatprep.subr.bf16.mxu0 0
      %1216 = vmatpush1.bf16.msra.mxu0 0
      %1217 = vmatprep.subr.bf16.mxu0 0
      %1218 = vmatpush1.bf16.msra.mxu0 0
      %1219 = vmatprep.subr.bf16.mxu0 0
      %1220 = vmatpush1.bf16.msra.mxu0 0
      %1221 = vmatprep.subr.bf16.mxu0 0
      %1222 = vmatpush1.bf16.msra.mxu0 0
      %1223 = vmatprep.subr.bf16.mxu0 0
      %1224 = vmatpush1.bf16.msra.mxu0 0
      %1225 = vmatprep.subr.bf16.mxu0 0
      %1226 = vmatpush1.bf16.msra.mxu0 0
      %1227 = vmatprep.subr.bf16.mxu0 0
      %1228 = vmatpush1.bf16.msra.mxu0 0
      %1229 = vmatprep.mubr.bf16.mxu0 0
      %1230 = vmatmul.mubr.bf16.gmra.mrb[0].mxu0 %v1176
      %v1231 = vpop.f32.mrb[0].mxu0
      %v1232 = vadd.f32 %v1106, %v1231
      %v1233 = vpop.f32.mrb[0].mxu0
      %v1234 = vpop.f32.mrb[0].mxu0
      %v1235 = vadd.f32 %v1109, %v1234
      %v1236 = vpop.f32.mrb[0].mxu0
      %1237 = vmatprep.mubr.bf16.mxu0 0
      %1238 = vmatmul.mubr.bf16.gmra.mrb[0].mxu0 %v1178
      %v1239 = vpop.f32.mrb[0].mxu0
      %v1240 = vadd.f32 %v1114, %v1239
      %v1241 = vpop.f32.mrb[0].mxu0
      %v1242 = vpop.f32.mrb[0].mxu0
      %v1243 = vadd.f32 %v1117, %v1242
      %v1244 = vpop.f32.mrb[0].mxu0
      %1245 = vmatprep.mubr.bf16.mxu0 0
      %1246 = vmatmul.mubr.bf16.gmra.mrb[0].mxu0 %v1180
      %v1247 = vpop.f32.mrb[0].mxu0
      %v1248 = vadd.f32 %v1122, %v1247
      %v1249 = vpop.f32.mrb[0].mxu0
      %v1250 = vpop.f32.mrb[0].mxu0
      %v1251 = vadd.f32 %v1125, %v1250
      %v1252 = vpop.f32.mrb[0].mxu0
      %1253 = vmatprep.mubr.bf16.mxu0 0
      %1254 = vmatmul.mubr.bf16.gmra.mrb[0].mxu0 %v1182
      %v1255 = vpop.f32.mrb[0].mxu0
      %v1256 = vadd.f32 %v1130, %v1255
      %v1257 = vpop.f32.mrb[0].mxu0
      %v1258 = vpop.f32.mrb[0].mxu0
      %v1259 = vadd.f32 %v1133, %v1258
      %v1260 = vpop.f32.mrb[0].mxu0
      %1261 = vmatprep.mubr.bf16.mxu0 0
      %1262 = vmatmul.mubr.bf16.gmra.mrb[0].mxu0 %v1184
      %v1263 = vpop.f32.mrb[0].mxu0
      %v1264 = vadd.f32 %v1138, %v1263
      %v1265 = vpop.f32.mrb[0].mxu0
      %v1266 = vpop.f32.mrb[0].mxu0
      %v1267 = vadd.f32 %v1141, %v1266
      %v1268 = vpop.f32.mrb[0].mxu0
      %1269 = vmatprep.mubr.bf16.mxu0 0
      %1270 = vmatmul.mubr.bf16.gmra.mrb[0].mxu0 %v1186
      %v1271 = vpop.f32.mrb[0].mxu0
      %v1272 = vadd.f32 %v1146, %v1271
      %v1273 = vpop.f32.mrb[0].mxu0
      %v1274 = vpop.f32.mrb[0].mxu0
      %v1275 = vadd.f32 %v1149, %v1274
      %v1276 = vpop.f32.mrb[0].mxu0
      %1277 = vmatprep.mubr.bf16.mxu0 0
      %1278 = vmatmul.mubr.bf16.gmra.mrb[0].mxu0 %v1188
      %v1279 = vpop.f32.mrb[0].mxu0
      %v1280 = vadd.f32 %v1154, %v1279
      %v1281 = vpop.f32.mrb[0].mxu0
      %v1282 = vpop.f32.mrb[0].mxu0
      %v1283 = vadd.f32 %v1157, %v1282
      %v1284 = vpop.f32.mrb[0].mxu0
      %1285 = vmatprep.mubr.bf16.mxu0 0
      %1286 = vmatmul.mubr.bf16.gmra.mrb[0].mxu0 %v1190
      %v1287 = vpop.f32.mrb[0].mxu0
      %v1288 = vadd.f32 %v1162, %v1287
      %v1289 = vpop.f32.mrb[0].mxu0
      %v1290 = vpop.f32.mrb[0].mxu0
      %v1291 = vadd.f32 %v1165, %v1290
      %v1292 = vpop.f32.mrb[0].mxu0
      %1293 = vmatprep.mubr.bf16.mxu0 0
      %1294 = vmatmul.mubr.bf16.gmra.mrb[0].mxu0 %v1192
      %v1295 = vpop.f32.mrb[0].mxu0
      %v1296 = vadd.f32 %v1170, %v1295
      %v1297 = vpop.f32.mrb[0].mxu0
      %v1298 = vpop.f32.mrb[0].mxu0
      %v1299 = vadd.f32 %v1173, %v1298
      %v1300 = vpop.f32.mrb[0].mxu0
      %1301 = vdwg.mxu0
      %v1302 = vld [vmem:[#allocation2] sm:$0xe]
      %s1303 = scalar_lea.vmem %s3, 8
      %v1304 = vld [vmem:[%s1303] sm:$0xf]
      %v1306 = vunpack.c.l.b16 %v1302
      %v1307 = vpack.c.b16 %v934, %v1306
      %vm1308 = vcmask 1046528
      %v1309 = vrot.slane %v1307, 1
      %v1310 = vrot.slane %v953, 1
      %v1311 = vsel %vm1308, %v1309, %v1310
      %v1312 = vrot.slane %v954, 1
      %v1313 = vsel %vm1308, %v1310, %v1312
      %v1314 = vrot.slane %v955, 1
      %v1315 = vsel %vm1308, %v1312, %v1314
      %v1316 = vrot.slane %v956, 1
      %v1317 = vsel %vm1308, %v1314, %v1316
      %v1318 = vrot.slane %v957, 1
      %v1319 = vsel %vm1308, %v1316, %v1318
      %v1320 = vrot.slane %v958, 1
      %v1321 = vsel %vm1308, %v1318, %v1320
      %v1322 = vrot.slane %v959, 1
      %v1323 = vsel %vm1308, %v1320, %v1322
      %v1324 = vrot.slane %v960, 1
      %v1325 = vsel %vm1308, %v1322, %v1324
      %v1326 = vrot.slane %v961, 1
      %v1327 = vsel %vm1308, %v1324, %v1326
      %v1329 = vsel %vm1039, %v1311, 0
      %v1332 = vsel %vm1039, %v1313, 0
      %v1335 = vsel %vm1039, %v1315, 0
      %v1338 = vsel %vm1039, %v1317, 0
      %v1341 = vsel %vm1039, %v1319, 0
      %v1344 = vsel %vm1039, %v1321, 0
      %v1347 = vsel %vm1039, %v1323, 0
      %v1350 = vsel %vm1039, %v1325, 0
      %v1353 = vsel %vm1039, %v1327, 0
      %v1356 = vsel %vm1067, %v1304, 0
      %1358 = vmatprep.subr.bf16.mxu0 0
      %1359 = vmatpush1.bf16.msra.mxu0 %v1356
      %1360 = vmatprep.subr.bf16.mxu0 0
      %1361 = vmatpush1.bf16.msra.mxu0 0
      %1362 = vmatprep.subr.bf16.mxu0 0
      %1363 = vmatpush1.bf16.msra.mxu0 0
      %1364 = vmatprep.subr.bf16.mxu0 0
      %1365 = vmatpush1.bf16.msra.mxu0 0
      %1366 = vmatprep.subr.bf16.mxu0 0
      %1367 = vmatpush1.bf16.msra.mxu0 0
      %1368 = vmatprep.subr.bf16.mxu0 0
      %1369 = vmatpush1.bf16.msra.mxu0 0
      %1370 = vmatprep.subr.bf16.mxu0 0
      %1371 = vmatpush1.bf16.msra.mxu0 0
      %1372 = vmatprep.subr.bf16.mxu0 0
      %1373 = vmatpush1.bf16.msra.mxu0 0
      %1374 = vmatprep.subr.bf16.mxu0 0
      %1375 = vmatpush1.bf16.msra.mxu0 0
      %1376 = vmatprep.subr.bf16.mxu0 0
      %1377 = vmatpush1.bf16.msra.mxu0 0
      %1378 = vmatprep.subr.bf16.mxu0 0
      %1379 = vmatpush1.bf16.msra.mxu0 0
      %1380 = vmatprep.subr.bf16.mxu0 0
      %1381 = vmatpush1.bf16.msra.mxu0 0
      %1382 = vmatprep.subr.bf16.mxu0 0
      %1383 = vmatpush1.bf16.msra.mxu0 0
      %1384 = vmatprep.subr.bf16.mxu0 0
      %1385 = vmatpush1.bf16.msra.mxu0 0
      %1386 = vmatprep.subr.bf16.mxu0 0
      %1387 = vmatpush1.bf16.msra.mxu0 0
      %1388 = vmatprep.subr.bf16.mxu0 0
      %1389 = vmatpush1.bf16.msra.mxu0 0
      %1390 = vmatprep.mubr.bf16.mxu0 0
      %1391 = vmatmul.mubr.bf16.gmra.mrb[0].mxu0 %v1329
      %v1392 = vpop.f32.mrb[0].mxu0
      %v1393 = vadd.f32 0.0, %v1392
      %v1394 = vpop.f32.mrb[0].mxu0
      %v1395 = vpop.f32.mrb[0].mxu0
      %v1396 = vadd.f32 0.0, %v1395
      %v1397 = vpop.f32.mrb[0].mxu0
      %1398 = vmatprep.mubr.bf16.mxu0 0
      %1399 = vmatmul.mubr.bf16.gmra.mrb[0].mxu0 %v1332
      %v1400 = vpop.f32.mrb[0].mxu0
      %v1401 = vadd.f32 0.0, %v1400
      %v1402 = vpop.f32.mrb[0].mxu0
      %v1403 = vpop.f32.mrb[0].mxu0
      %v1404 = vadd.f32 0.0, %v1403
      %v1405 = vpop.f32.mrb[0].mxu0
      %1406 = vmatprep.mubr.bf16.mxu0 0
      %1407 = vmatmul.mubr.bf16.gmra.mrb[0].mxu0 %v1335
      %v1408 = vpop.f32.mrb[0].mxu0
      %v1409 = vadd.f32 0.0, %v1408
      %v1410 = vpop.f32.mrb[0].mxu0
      %v1411 = vpop.f32.mrb[0].mxu0
      %v1412 = vadd.f32 0.0, %v1411
      %v1413 = vpop.f32.mrb[0].mxu0
      %1414 = vmatprep.mubr.bf16.mxu0 0
      %1415 = vmatmul.mubr.bf16.gmra.mrb[0].mxu0 %v1338
      %v1416 = vpop.f32.mrb[0].mxu0
      %v1417 = vadd.f32 0.0, %v1416
      %v1418 = vpop.f32.mrb[0].mxu0
      %v1419 = vpop.f32.mrb[0].mxu0
      %v1420 = vadd.f32 0.0, %v1419
      %v1421 = vpop.f32.mrb[0].mxu0
      %1422 = vmatprep.mubr.bf16.mxu0 0
      %1423 = vmatmul.mubr.bf16.gmra.mrb[0].mxu0 %v1341
      %v1424 = vpop.f32.mrb[0].mxu0
      %v1425 = vadd.f32 0.0, %v1424
      %v1426 = vpop.f32.mrb[0].mxu0
      %v1427 = vpop.f32.mrb[0].mxu0
      %v1428 = vadd.f32 0.0, %v1427
      %v1429 = vpop.f32.mrb[0].mxu0
      %1430 = vmatprep.mubr.bf16.mxu0 0
      %1431 = vmatmul.mubr.bf16.gmra.mrb[0].mxu0 %v1344
      %v1432 = vpop.f32.mrb[0].mxu0
      %v1433 = vadd.f32 0.0, %v1432
      %v1434 = vpop.f32.mrb[0].mxu0
      %v1435 = vpop.f32.mrb[0].mxu0
      %v1436 = vadd.f32 0.0, %v1435
      %v1437 = vpop.f32.mrb[0].mxu0
      %1438 = vmatprep.mubr.bf16.mxu0 0
      %1439 = vmatmul.mubr.bf16.gmra.mrb[0].mxu0 %v1347
      %v1440 = vpop.f32.mrb[0].mxu0
      %v1441 = vadd.f32 0.0, %v1440
      %v1442 = vpop.f32.mrb[0].mxu0
      %v1443 = vpop.f32.mrb[0].mxu0
      %v1444 = vadd.f32 0.0, %v1443
      %v1445 = vpop.f32.mrb[0].mxu0
      %1446 = vmatprep.mubr.bf16.mxu0 0
      %1447 = vmatmul.mubr.bf16.gmra.mrb[0].mxu0 %v1350
      %v1448 = vpop.f32.mrb[0].mxu0
      %v1449 = vadd.f32 0.0, %v1448
      %v1450 = vpop.f32.mrb[0].mxu0
      %v1451 = vpop.f32.mrb[0].mxu0
      %v1452 = vadd.f32 0.0, %v1451
      %v1453 = vpop.f32.mrb[0].mxu0
      %1454 = vmatprep.mubr.bf16.mxu0 0
      %1455 = vmatmul.mubr.bf16.gmra.mrb[0].mxu0 %v1353
      %v1456 = vpop.f32.mrb[0].mxu0
      %v1457 = vadd.f32 0.0, %v1456
      %v1458 = vpop.f32.mrb[0].mxu0
      %v1459 = vpop.f32.mrb[0].mxu0
      %v1460 = vadd.f32 0.0, %v1459
      %v1461 = vpop.f32.mrb[0].mxu0
      %1462 = vdwg.mxu0
      %v1463 = vadd.f32 %v1232, %v1393
      %v1464 = vadd.f32 %v1235, %v1396
      %v1465 = vadd.f32 %v1240, %v1401
      %v1466 = vadd.f32 %v1243, %v1404
      %v1467 = vadd.f32 %v1248, %v1409
      %v1468 = vadd.f32 %v1251, %v1412
      %v1469 = vadd.f32 %v1256, %v1417
      %v1470 = vadd.f32 %v1259, %v1420
      %v1471 = vadd.f32 %v1264, %v1425
      %v1472 = vadd.f32 %v1267, %v1428
      %v1473 = vadd.f32 %v1272, %v1433
      %v1474 = vadd.f32 %v1275, %v1436
      %v1475 = vadd.f32 %v1280, %v1441
      %v1476 = vadd.f32 %v1283, %v1444
      %v1477 = vadd.f32 %v1288, %v1449
      %v1478 = vadd.f32 %v1291, %v1452
      %v1479 = vadd.f32 %v1296, %v1457
      %v1480 = vadd.f32 %v1299, %v1460
      %v1481 = vld [vmem:[#allocation2 + $0x8] sm:$0xe]
      %v1482 = vld [vmem:[#allocation2 + $0xc] sm:$0xf]
      %v1483 = vld [vmem:[#allocation2 + $0x10] sm:$0xf]
      %v1484 = vld [vmem:[#allocation2 + $0x14] sm:$0xf]
      %v1485 = vld [vmem:[#allocation2 + $0x18] sm:$0xf]
      %v1486 = vld [vmem:[#allocation2 + $0x1c] sm:$0xf]
      %v1487 = vld [vmem:[#allocation2 + $0x20] sm:$0xf]
      %v1488 = vld [vmem:[#allocation2 + $0x24] sm:$0xf]
      %v1489 = vld [vmem:[#allocation2 + $0x28] sm:$0xf]
      %v1490 = vld [vmem:[#allocation2 + $0x2c] sm:$0xf]
      %v1491 = vld [vmem:[#allocation2 + $0x30] sm:$0xf]
      %v1492 = vld [vmem:[#allocation2 + $0x34] sm:$0xf]
      %v1493 = vld [vmem:[#allocation2 + $0x38] sm:$0xf]
      %v1494 = vld [vmem:[#allocation2 + $0x3c] sm:$0xf]
      %v1495 = vld [vmem:[#allocation2 + $0x40] sm:$0xf]
      %v1496 = vld [vmem:[#allocation2 + $0x44] sm:$0xf]
      %v1497 = vld [vmem:[#allocation2 + $0x48] sm:$0xf]
      %v1498 = vld [vmem:[#allocation2 + $0x4c] sm:$0xf]
      %v1499 = vld [vmem:[#allocation2 + $0x50] sm:$0x1]
      %s1500 = scalar_lea.vmem %s3, 12
      %v1501 = vld [vmem:[%s1500] sm:$0xf]
      %v1521 = vunpack.c.l.b16 %v1481
      %v1522 = vunpack.c.l.b16 %v1482
      %v1523 = vunpack.c.l.b16 %v1483
      %v1524 = vunpack.c.l.b16 %v1484
      %v1525 = vunpack.c.l.b16 %v1485
      %v1526 = vunpack.c.l.b16 %v1486
      %v1527 = vunpack.c.l.b16 %v1487
      %v1528 = vunpack.c.l.b16 %v1488
      %v1529 = vunpack.c.l.b16 %v1489
      %v1530 = vunpack.c.l.b16 %v1490
      %v1531 = vunpack.c.l.b16 %v1491
      %v1532 = vunpack.c.l.b16 %v1492
      %v1533 = vunpack.c.l.b16 %v1493
      %v1534 = vunpack.c.l.b16 %v1494
      %v1535 = vunpack.c.l.b16 %v1495
      %v1536 = vunpack.c.l.b16 %v1496
      %v1537 = vunpack.c.l.b16 %v1497
      %v1538 = vunpack.c.l.b16 %v1498
      %v1539 = vunpack.c.l.b16 %v1499
      %v1540 = vpack.c.b16 %v1522, %v1521
      %v1541 = vpack.c.b16 %v1524, %v1523
      %v1542 = vpack.c.b16 %v1526, %v1525
      %v1543 = vpack.c.b16 %v1528, %v1527
      %v1544 = vpack.c.b16 %v1530, %v1529
      %v1545 = vpack.c.b16 %v1532, %v1531
      %v1546 = vpack.c.b16 %v1534, %v1533
      %v1547 = vpack.c.b16 %v1536, %v1535
      %v1548 = vpack.c.b16 %v1538, %v1537
      %v1549 = vpack.c.b16 %v1539, %v1539
      %v1550 = vrot.slane %v1540, 1
      %v1551 = vrot.slane %v1541, 1
      %v1552 = vsel %vm1308, %v1550, %v1551
      %v1553 = vrot.slane %v1542, 1
      %v1554 = vsel %vm1308, %v1551, %v1553
      %v1555 = vrot.slane %v1543, 1
      %v1556 = vsel %vm1308, %v1553, %v1555
      %v1557 = vrot.slane %v1544, 1
      %v1558 = vsel %vm1308, %v1555, %v1557
      %v1559 = vrot.slane %v1545, 1
      %v1560 = vsel %vm1308, %v1557, %v1559
      %v1561 = vrot.slane %v1546, 1
      %v1562 = vsel %vm1308, %v1559, %v1561
      %v1563 = vrot.slane %v1547, 1
      %v1564 = vsel %vm1308, %v1561, %v1563
      %v1565 = vrot.slane %v1548, 1
      %v1566 = vsel %vm1308, %v1563, %v1565
      %v1567 = vrot.slane %v1549, 1
      %v1568 = vsel %vm1308, %v1565, %v1567
      %v1570 = vsel %vm1039, %v1552, 0
      %v1573 = vsel %vm1039, %v1554, 0
      %v1576 = vsel %vm1039, %v1556, 0
      %v1579 = vsel %vm1039, %v1558, 0
      %v1582 = vsel %vm1039, %v1560, 0
      %v1585 = vsel %vm1039, %v1562, 0
      %v1588 = vsel %vm1039, %v1564, 0
      %v1591 = vsel %vm1039, %v1566, 0
      %v1594 = vsel %vm1039, %v1568, 0
      %v1597 = vsel %vm1067, %v1501, 0
      %1599 = vmatprep.subr.bf16.mxu0 0
      %1600 = vmatpush1.bf16.msra.mxu0 %v1597
      %1601 = vmatprep.subr.bf16.mxu0 0
      %1602 = vmatpush1.bf16.msra.mxu0 0
      %1603 = vmatprep.subr.bf16.mxu0 0
      %1604 = vmatpush1.bf16.msra.mxu0 0
      %1605 = vmatprep.subr.bf16.mxu0 0
      %1606 = vmatpush1.bf16.msra.mxu0 0
      %1607 = vmatprep.subr.bf16.mxu0 0
      %1608 = vmatpush1.bf16.msra.mxu0 0
      %1609 = vmatprep.subr.bf16.mxu0 0
      %1610 = vmatpush1.bf16.msra.mxu0 0
      %1611 = vmatprep.subr.bf16.mxu0 0
      %1612 = vmatpush1.bf16.msra.mxu0 0
      %1613 = vmatprep.subr.bf16.mxu0 0
      %1614 = vmatpush1.bf16.msra.mxu0 0
      %1615 = vmatprep.subr.bf16.mxu0 0
      %1616 = vmatpush1.bf16.msra.mxu0 0
      %1617 = vmatprep.subr.bf16.mxu0 0
      %1618 = vmatpush1.bf16.msra.mxu0 0
      %1619 = vmatprep.subr.bf16.mxu0 0
      %1620 = vmatpush1.bf16.msra.mxu0 0
      %1621 = vmatprep.subr.bf16.mxu0 0
      %1622 = vmatpush1.bf16.msra.mxu0 0
      %1623 = vmatprep.subr.bf16.mxu0 0
      %1624 = vmatpush1.bf16.msra.mxu0 0
      %1625 = vmatprep.subr.bf16.mxu0 0
      %1626 = vmatpush1.bf16.msra.mxu0 0
      %1627 = vmatprep.subr.bf16.mxu0 0
      %1628 = vmatpush1.bf16.msra.mxu0 0
      %1629 = vmatprep.subr.bf16.mxu0 0
      %1630 = vmatpush1.bf16.msra.mxu0 0
      %1631 = vmatprep.mubr.bf16.mxu0 0
      %1632 = vmatmul.mubr.bf16.gmra.mrb[0].mxu0 %v1570
      %v1633 = vpop.f32.mrb[0].mxu0
      %v1634 = vadd.f32 0.0, %v1633
      %v1635 = vpop.f32.mrb[0].mxu0
      %v1636 = vpop.f32.mrb[0].mxu0
      %v1637 = vadd.f32 0.0, %v1636
      %v1638 = vpop.f32.mrb[0].mxu0
      %1639 = vmatprep.mubr.bf16.mxu0 0
      %1640 = vmatmul.mubr.bf16.gmra.mrb[0].mxu0 %v1573
      %v1641 = vpop.f32.mrb[0].mxu0
      %v1642 = vadd.f32 0.0, %v1641
      %v1643 = vpop.f32.mrb[0].mxu0
      %v1644 = vpop.f32.mrb[0].mxu0
      %v1645 = vadd.f32 0.0, %v1644
      %v1646 = vpop.f32.mrb[0].mxu0
      %1647 = vmatprep.mubr.bf16.mxu0 0
      %1648 = vmatmul.mubr.bf16.gmra.mrb[0].mxu0 %v1576
      %v1649 = vpop.f32.mrb[0].mxu0
      %v1650 = vadd.f32 0.0, %v1649
      %v1651 = vpop.f32.mrb[0].mxu0
      %v1652 = vpop.f32.mrb[0].mxu0
      %v1653 = vadd.f32 0.0, %v1652
      %v1654 = vpop.f32.mrb[0].mxu0
      %1655 = vmatprep.mubr.bf16.mxu0 0
      %1656 = vmatmul.mubr.bf16.gmra.mrb[0].mxu0 %v1579
      %v1657 = vpop.f32.mrb[0].mxu0
      %v1658 = vadd.f32 0.0, %v1657
      %v1659 = vpop.f32.mrb[0].mxu0
      %v1660 = vpop.f32.mrb[0].mxu0
      %v1661 = vadd.f32 0.0, %v1660
      %v1662 = vpop.f32.mrb[0].mxu0
      %1663 = vmatprep.mubr.bf16.mxu0 0
      %1664 = vmatmul.mubr.bf16.gmra.mrb[0].mxu0 %v1582
      %v1665 = vpop.f32.mrb[0].mxu0
      %v1666 = vadd.f32 0.0, %v1665
      %v1667 = vpop.f32.mrb[0].mxu0
      %v1668 = vpop.f32.mrb[0].mxu0
      %v1669 = vadd.f32 0.0, %v1668
      %v1670 = vpop.f32.mrb[0].mxu0
      %1671 = vmatprep.mubr.bf16.mxu0 0
      %1672 = vmatmul.mubr.bf16.gmra.mrb[0].mxu0 %v1585
      %v1673 = vpop.f32.mrb[0].mxu0
      %v1674 = vadd.f32 0.0, %v1673
      %v1675 = vpop.f32.mrb[0].mxu0
      %v1676 = vpop.f32.mrb[0].mxu0
      %v1677 = vadd.f32 0.0, %v1676
      %v1678 = vpop.f32.mrb[0].mxu0
      %1679 = vmatprep.mubr.bf16.mxu0 0
      %1680 = vmatmul.mubr.bf16.gmra.mrb[0].mxu0 %v1588
      %v1681 = vpop.f32.mrb[0].mxu0
      %v1682 = vadd.f32 0.0, %v1681
      %v1683 = vpop.f32.mrb[0].mxu0
      %v1684 = vpop.f32.mrb[0].mxu0
      %v1685 = vadd.f32 0.0, %v1684
      %v1686 = vpop.f32.mrb[0].mxu0
      %1687 = vmatprep.mubr.bf16.mxu0 0
      %1688 = vmatmul.mubr.bf16.gmra.mrb[0].mxu0 %v1591
      %v1689 = vpop.f32.mrb[0].mxu0
      %v1690 = vadd.f32 0.0, %v1689
      %v1691 = vpop.f32.mrb[0].mxu0
      %v1692 = vpop.f32.mrb[0].mxu0
      %v1693 = vadd.f32 0.0, %v1692
      %v1694 = vpop.f32.mrb[0].mxu0
      %1695 = vmatprep.mubr.bf16.mxu0 0
      %1696 = vmatmul.mubr.bf16.gmra.mrb[0].mxu0 %v1594
      %v1697 = vpop.f32.mrb[0].mxu0
      %v1698 = vadd.f32 0.0, %v1697
      %v1699 = vpop.f32.mrb[0].mxu0
      %v1700 = vpop.f32.mrb[0].mxu0
      %v1701 = vadd.f32 0.0, %v1700
      %v1702 = vpop.f32.mrb[0].mxu0
      %1703 = vdwg.mxu0
      %v1704 = vadd.f32 %v1463, %v1634
      %v1705 = vadd.f32 %v1464, %v1637
      %v1706 = vadd.f32 %v1465, %v1642
      %v1707 = vadd.f32 %v1466, %v1645
      %v1708 = vadd.f32 %v1467, %v1650
      %v1709 = vadd.f32 %v1468, %v1653
      %v1710 = vadd.f32 %v1469, %v1658
      %v1711 = vadd.f32 %v1470, %v1661
      %v1712 = vadd.f32 %v1471, %v1666
      %v1713 = vadd.f32 %v1472, %v1669
      %v1714 = vadd.f32 %v1473, %v1674
      %v1715 = vadd.f32 %v1474, %v1677
      %v1716 = vadd.f32 %v1475, %v1682
      %v1717 = vadd.f32 %v1476, %v1685
      %v1718 = vadd.f32 %v1477, %v1690
      %v1719 = vadd.f32 %v1478, %v1693
      %v1720 = vadd.f32 %v1479, %v1698
      %v1721 = vadd.f32 %v1480, %v1701
      %v1722 = vld [vmem:[#allocation2 + $0x50] sm:$0x3]
      %s1723 = scalar_lea.vmem %s3, 16
      %v1724 = vld [vmem:[%s1723] sm:$0xf]
      %v1726 = vunpack.c.l.b16 %v1722
      %v1727 = vpack.c.b16 %v1726, %v1726
      %vm1728 = vsmask.f32 6400
      %v1730 = vshrl.u32 %v1540, 16
      %v1732 = vrot.slane %v1730, 1
      %v1733 = vshll.u32 %v1540, 16
      %v1735 = vrot.slane %v1733, 2
      %v1736 = vor.u32 %v1732, %v1735
      %v1738 = vshrl.u32 %v1541, 16
      %v1740 = vrot.slane %v1738, 1
      %v1741 = vshll.u32 %v1541, 16
      %v1743 = vrot.slane %v1741, 2
      %v1744 = vor.u32 %v1740, %v1743
      %v1745 = vsel %vm1728, %v1736, %v1744
      %v1747 = vshrl.u32 %v1542, 16
      %v1749 = vrot.slane %v1747, 1
      %v1750 = vshll.u32 %v1542, 16
      %v1752 = vrot.slane %v1750, 2
      %v1753 = vor.u32 %v1749, %v1752
      %v1754 = vsel %vm1728, %v1744, %v1753
      %v1756 = vshrl.u32 %v1543, 16
      %v1758 = vrot.slane %v1756, 1
      %v1759 = vshll.u32 %v1543, 16
      %v1761 = vrot.slane %v1759, 2
      %v1762 = vor.u32 %v1758, %v1761
      %v1763 = vsel %vm1728, %v1753, %v1762
      %v1765 = vshrl.u32 %v1544, 16
      %v1767 = vrot.slane %v1765, 1
      %v1768 = vshll.u32 %v1544, 16
      %v1770 = vrot.slane %v1768, 2
      %v1771 = vor.u32 %v1767, %v1770
      %v1772 = vsel %vm1728, %v1762, %v1771
      %v1774 = vshrl.u32 %v1545, 16
      %v1776 = vrot.slane %v1774, 1
      %v1777 = vshll.u32 %v1545, 16
      %v1779 = vrot.slane %v1777, 2
      %v1780 = vor.u32 %v1776, %v1779
      %v1781 = vsel %vm1728, %v1771, %v1780
      %v1783 = vshrl.u32 %v1546, 16
      %v1785 = vrot.slane %v1783, 1
      %v1786 = vshll.u32 %v1546, 16
      %v1788 = vrot.slane %v1786, 2
      %v1789 = vor.u32 %v1785, %v1788
      %v1790 = vsel %vm1728, %v1780, %v1789
      %v1792 = vshrl.u32 %v1547, 16
      %v1794 = vrot.slane %v1792, 1
      %v1795 = vshll.u32 %v1547, 16
      %v1797 = vrot.slane %v1795, 2
      %v1798 = vor.u32 %v1794, %v1797
      %v1799 = vsel %vm1728, %v1789, %v1798
      %v1801 = vshrl.u32 %v1548, 16
      %v1803 = vrot.slane %v1801, 1
      %v1804 = vshll.u32 %v1548, 16
      %v1806 = vrot.slane %v1804, 2
      %v1807 = vor.u32 %v1803, %v1806
      %v1808 = vsel %vm1728, %v1798, %v1807
      %v1810 = vshrl.u32 %v1727, 16
      %v1812 = vrot.slane %v1810, 1
      %v1813 = vshll.u32 %v1727, 16
      %v1815 = vrot.slane %v1813, 2
      %v1816 = vor.u32 %v1812, %v1815
      %v1817 = vsel %vm1728, %v1807, %v1816
      %v1819 = vsel %vm1039, %v1745, 0
      %v1822 = vsel %vm1039, %v1754, 0
      %v1825 = vsel %vm1039, %v1763, 0
      %v1828 = vsel %vm1039, %v1772, 0
      %v1831 = vsel %vm1039, %v1781, 0
      %v1834 = vsel %vm1039, %v1790, 0
      %v1837 = vsel %vm1039, %v1799, 0
      %v1840 = vsel %vm1039, %v1808, 0
      %v1843 = vsel %vm1039, %v1817, 0
      %v1846 = vsel %vm1067, %v1724, 0
      %1848 = vmatprep.subr.bf16.mxu0 0
      %1849 = vmatpush1.bf16.msra.mxu0 %v1846
      %1850 = vmatprep.subr.bf16.mxu0 0
      %1851 = vmatpush1.bf16.msra.mxu0 0
      %1852 = vmatprep.subr.bf16.mxu0 0
      %1853 = vmatpush1.bf16.msra.mxu0 0
      %1854 = vmatprep.subr.bf16.mxu0 0
      %1855 = vmatpush1.bf16.msra.mxu0 0
      %1856 = vmatprep.subr.bf16.mxu0 0
      %1857 = vmatpush1.bf16.msra.mxu0 0
      %1858 = vmatprep.subr.bf16.mxu0 0
      %1859 = vmatpush1.bf16.msra.mxu0 0
      %1860 = vmatprep.subr.bf16.mxu0 0
      %1861 = vmatpush1.bf16.msra.mxu0 0
      %1862 = vmatprep.subr.bf16.mxu0 0
      %1863 = vmatpush1.bf16.msra.mxu0 0
      %1864 = vmatprep.subr.bf16.mxu0 0
      %1865 = vmatpush1.bf16.msra.mxu0 0
      %1866 = vmatprep.subr.bf16.mxu0 0
      %1867 = vmatpush1.bf16.msra.mxu0 0
      %1868 = vmatprep.subr.bf16.mxu0 0
      %1869 = vmatpush1.bf16.msra.mxu0 0
      %1870 = vmatprep.subr.bf16.mxu0 0
      %1871 = vmatpush1.bf16.msra.mxu0 0
      %1872 = vmatprep.subr.bf16.mxu0 0
      %1873 = vmatpush1.bf16.msra.mxu0 0
      %1874 = vmatprep.subr.bf16.mxu0 0
      %1875 = vmatpush1.bf16.msra.mxu0 0
      %1876 = vmatprep.subr.bf16.mxu0 0
      %1877 = vmatpush1.bf16.msra.mxu0 0
      %1878 = vmatprep.subr.bf16.mxu0 0
      %1879 = vmatpush1.bf16.msra.mxu0 0
      %1880 = vmatprep.mubr.bf16.mxu0 0
      %1881 = vmatmul.mubr.bf16.gmra.mrb[0].mxu0 %v1819
      %v1882 = vpop.f32.mrb[0].mxu0
      %v1883 = vadd.f32 0.0, %v1882
      %v1884 = vpop.f32.mrb[0].mxu0
      %v1885 = vpop.f32.mrb[0].mxu0
      %v1886 = vadd.f32 0.0, %v1885
      %v1887 = vpop.f32.mrb[0].mxu0
      %1888 = vmatprep.mubr.bf16.mxu0 0
      %1889 = vmatmul.mubr.bf16.gmra.mrb[0].mxu0 %v1822
      %v1890 = vpop.f32.mrb[0].mxu0
      %v1891 = vadd.f32 0.0, %v1890
      %v1892 = vpop.f32.mrb[0].mxu0
      %v1893 = vpop.f32.mrb[0].mxu0
      %v1894 = vadd.f32 0.0, %v1893
      %v1895 = vpop.f32.mrb[0].mxu0
      %1896 = vmatprep.mubr.bf16.mxu0 0
      %1897 = vmatmul.mubr.bf16.gmra.mrb[0].mxu0 %v1825
      %v1898 = vpop.f32.mrb[0].mxu0
      %v1899 = vadd.f32 0.0, %v1898
      %v1900 = vpop.f32.mrb[0].mxu0
      %v1901 = vpop.f32.mrb[0].mxu0
      %v1902 = vadd.f32 0.0, %v1901
      %v1903 = vpop.f32.mrb[0].mxu0
      %1904 = vmatprep.mubr.bf16.mxu0 0
      %1905 = vmatmul.mubr.bf16.gmra.mrb[0].mxu0 %v1828
      %v1906 = vpop.f32.mrb[0].mxu0
      %v1907 = vadd.f32 0.0, %v1906
      %v1908 = vpop.f32.mrb[0].mxu0
      %v1909 = vpop.f32.mrb[0].mxu0
      %v1910 = vadd.f32 0.0, %v1909
      %v1911 = vpop.f32.mrb[0].mxu0
      %1912 = vmatprep.mubr.bf16.mxu0 0
      %1913 = vmatmul.mubr.bf16.gmra.mrb[0].mxu0 %v1831
      %v1914 = vpop.f32.mrb[0].mxu0
      %v1915 = vadd.f32 0.0, %v1914
      %v1916 = vpop.f32.mrb[0].mxu0
      %v1917 = vpop.f32.mrb[0].mxu0
      %v1918 = vadd.f32 0.0, %v1917
      %v1919 = vpop.f32.mrb[0].mxu0
      %1920 = vmatprep.mubr.bf16.mxu0 0
      %1921 = vmatmul.mubr.bf16.gmra.mrb[0].mxu0 %v1834
      %v1922 = vpop.f32.mrb[0].mxu0
      %v1923 = vadd.f32 0.0, %v1922
      %v1924 = vpop.f32.mrb[0].mxu0
      %v1925 = vpop.f32.mrb[0].mxu0
      %v1926 = vadd.f32 0.0, %v1925
      %v1927 = vpop.f32.mrb[0].mxu0
      %1928 = vmatprep.mubr.bf16.mxu0 0
      %1929 = vmatmul.mubr.bf16.gmra.mrb[0].mxu0 %v1837
      %v1930 = vpop.f32.mrb[0].mxu0
      %v1931 = vadd.f32 0.0, %v1930
      %v1932 = vpop.f32.mrb[0].mxu0
      %v1933 = vpop.f32.mrb[0].mxu0
      %v1934 = vadd.f32 0.0, %v1933
      %v1935 = vpop.f32.mrb[0].mxu0
      %1936 = vmatprep.mubr.bf16.mxu0 0
      %1937 = vmatmul.mubr.bf16.gmra.mrb[0].mxu0 %v1840
      %v1938 = vpop.f32.mrb[0].mxu0
      %v1939 = vadd.f32 0.0, %v1938
      %v1940 = vpop.f32.mrb[0].mxu0
      %v1941 = vpop.f32.mrb[0].mxu0
      %v1942 = vadd.f32 0.0, %v1941
      %v1943 = vpop.f32.mrb[0].mxu0
      %1944 = vmatprep.mubr.bf16.mxu0 0
      %1945 = vmatmul.mubr.bf16.gmra.mrb[0].mxu0 %v1843
      %v1946 = vpop.f32.mrb[0].mxu0
      %v1947 = vadd.f32 0.0, %v1946
      %v1948 = vpop.f32.mrb[0].mxu0
      %v1949 = vpop.f32.mrb[0].mxu0
      %v1950 = vadd.f32 0.0, %v1949
      %v1951 = vpop.f32.mrb[0].mxu0
      %1952 = vdwg.mxu0
      %v1953 = vadd.f32 %v1704, %v1883
      %v1954 = vadd.f32 %v1705, %v1886
      %v1955 = vadd.f32 %v1706, %v1891
      %v1956 = vadd.f32 %v1707, %v1894
      %v1957 = vadd.f32 %v1708, %v1899
      %v1958 = vadd.f32 %v1709, %v1902
      %v1959 = vadd.f32 %v1710, %v1907
      %v1960 = vadd.f32 %v1711, %v1910
      %v1961 = vadd.f32 %v1712, %v1915
      %v1962 = vadd.f32 %v1713, %v1918
      %v1963 = vadd.f32 %v1714, %v1923
      %v1964 = vadd.f32 %v1715, %v1926
      %v1965 = vadd.f32 %v1716, %v1931
      %v1966 = vadd.f32 %v1717, %v1934
      %v1967 = vadd.f32 %v1718, %v1939
      %v1968 = vadd.f32 %v1719, %v1942
      %v1969 = vadd.f32 %v1720, %v1947
      %v1970 = vadd.f32 %v1721, %v1950
      %v1971 = vld [vmem:[#allocation2 + $0x8] sm:$0xc]
      %s1972 = scalar_lea.vmem %s3, 20
      %v1973 = vld [vmem:[%s1972] sm:$0xf]
      %v1975 = vunpack.c.l.b16 %v1971
      %v1976 = vpack.c.b16 %v1522, %v1975
      %vm1977 = vcmask 1045504
      %v1978 = vrot.slane %v1976, 2
      %v1979 = vrot.slane %v1541, 2
      %v1980 = vsel %vm1977, %v1978, %v1979
      %v1981 = vrot.slane %v1542, 2
      %v1982 = vsel %vm1977, %v1979, %v1981
      %v1983 = vrot.slane %v1543, 2
      %v1984 = vsel %vm1977, %v1981, %v1983
      %v1985 = vrot.slane %v1544, 2
      %v1986 = vsel %vm1977, %v1983, %v1985
      %v1987 = vrot.slane %v1545, 2
      %v1988 = vsel %vm1977, %v1985, %v1987
      %v1989 = vrot.slane %v1546, 2
      %v1990 = vsel %vm1977, %v1987, %v1989
      %v1991 = vrot.slane %v1547, 2
      %v1992 = vsel %vm1977, %v1989, %v1991
      %v1993 = vrot.slane %v1548, 2
      %v1994 = vsel %vm1977, %v1991, %v1993
      %v1995 = vrot.slane %v1727, 2
      %v1996 = vsel %vm1977, %v1993, %v1995
      %v1998 = vsel %vm1039, %v1980, 0
      %v2001 = vsel %vm1039, %v1982, 0
      %v2004 = vsel %vm1039, %v1984, 0
      %v2007 = vsel %vm1039, %v1986, 0
      %v2010 = vsel %vm1039, %v1988, 0
      %v2013 = vsel %vm1039, %v1990, 0
      %v2016 = vsel %vm1039, %v1992, 0
      %v2019 = vsel %vm1039, %v1994, 0
      %v2022 = vsel %vm1039, %v1996, 0
      %v2025 = vsel %vm1067, %v1973, 0
      %2027 = vmatprep.subr.bf16.mxu0 0
      %2028 = vmatpush1.bf16.msra.mxu0 %v2025
      %2029 = vmatprep.subr.bf16.mxu0 0
      %2030 = vmatpush1.bf16.msra.mxu0 0
      %2031 = vmatprep.subr.bf16.mxu0 0
      %2032 = vmatpush1.bf16.msra.mxu0 0
      %2033 = vmatprep.subr.bf16.mxu0 0
      %2034 = vmatpush1.bf16.msra.mxu0 0
      %2035 = vmatprep.subr.bf16.mxu0 0
      %2036 = vmatpush1.bf16.msra.mxu0 0
      %2037 = vmatprep.subr.bf16.mxu0 0
      %2038 = vmatpush1.bf16.msra.mxu0 0
      %2039 = vmatprep.subr.bf16.mxu0 0
      %2040 = vmatpush1.bf16.msra.mxu0 0
      %2041 = vmatprep.subr.bf16.mxu0 0
      %2042 = vmatpush1.bf16.msra.mxu0 0
      %2043 = vmatprep.subr.bf16.mxu0 0
      %2044 = vmatpush1.bf16.msra.mxu0 0
      %2045 = vmatprep.subr.bf16.mxu0 0
      %2046 = vmatpush1.bf16.msra.mxu0 0
      %2047 = vmatprep.subr.bf16.mxu0 0
      %2048 = vmatpush1.bf16.msra.mxu0 0
      %2049 = vmatprep.subr.bf16.mxu0 0
      %2050 = vmatpush1.bf16.msra.mxu0 0
      %2051 = vmatprep.subr.bf16.mxu0 0
      %2052 = vmatpush1.bf16.msra.mxu0 0
      %2053 = vmatprep.subr.bf16.mxu0 0
      %2054 = vmatpush1.bf16.msra.mxu0 0
      %2055 = vmatprep.subr.bf16.mxu0 0
      %2056 = vmatpush1.bf16.msra.mxu0 0
      %2057 = vmatprep.subr.bf16.mxu0 0
      %2058 = vmatpush1.bf16.msra.mxu0 0
      %2059 = vmatprep.mubr.bf16.mxu0 0
      %2060 = vmatmul.mubr.bf16.gmra.mrb[0].mxu0 %v1998
      %v2061 = vpop.f32.mrb[0].mxu0
      %v2062 = vadd.f32 0.0, %v2061
      %v2063 = vpop.f32.mrb[0].mxu0
      %v2064 = vpop.f32.mrb[0].mxu0
      %v2065 = vadd.f32 0.0, %v2064
      %v2066 = vpop.f32.mrb[0].mxu0
      %2067 = vmatprep.mubr.bf16.mxu0 0
      %2068 = vmatmul.mubr.bf16.gmra.mrb[0].mxu0 %v2001
      %v2069 = vpop.f32.mrb[0].mxu0
      %v2070 = vadd.f32 0.0, %v2069
      %v2071 = vpop.f32.mrb[0].mxu0
      %v2072 = vpop.f32.mrb[0].mxu0
      %v2073 = vadd.f32 0.0, %v2072
      %v2074 = vpop.f32.mrb[0].mxu0
      %2075 = vmatprep.mubr.bf16.mxu0 0
      %2076 = vmatmul.mubr.bf16.gmra.mrb[0].mxu0 %v2004
      %v2077 = vpop.f32.mrb[0].mxu0
      %v2078 = vadd.f32 0.0, %v2077
      %v2079 = vpop.f32.mrb[0].mxu0
      %v2080 = vpop.f32.mrb[0].mxu0
      %v2081 = vadd.f32 0.0, %v2080
      %v2082 = vpop.f32.mrb[0].mxu0
      %2083 = vmatprep.mubr.bf16.mxu0 0
      %2084 = vmatmul.mubr.bf16.gmra.mrb[0].mxu0 %v2007
      %v2085 = vpop.f32.mrb[0].mxu0
      %v2086 = vadd.f32 0.0, %v2085
      %v2087 = vpop.f32.mrb[0].mxu0
      %v2088 = vpop.f32.mrb[0].mxu0
      %v2089 = vadd.f32 0.0, %v2088
      %v2090 = vpop.f32.mrb[0].mxu0
      %2091 = vmatprep.mubr.bf16.mxu0 0
      %2092 = vmatmul.mubr.bf16.gmra.mrb[0].mxu0 %v2010
      %v2093 = vpop.f32.mrb[0].mxu0
      %v2094 = vadd.f32 0.0, %v2093
      %v2095 = vpop.f32.mrb[0].mxu0
      %v2096 = vpop.f32.mrb[0].mxu0
      %v2097 = vadd.f32 0.0, %v2096
      %v2098 = vpop.f32.mrb[0].mxu0
      %2099 = vmatprep.mubr.bf16.mxu0 0
      %2100 = vmatmul.mubr.bf16.gmra.mrb[0].mxu0 %v2013
      %v2101 = vpop.f32.mrb[0].mxu0
      %v2102 = vadd.f32 0.0, %v2101
      %v2103 = vpop.f32.mrb[0].mxu0
      %v2104 = vpop.f32.mrb[0].mxu0
      %v2105 = vadd.f32 0.0, %v2104
      %v2106 = vpop.f32.mrb[0].mxu0
      %2107 = vmatprep.mubr.bf16.mxu0 0
      %2108 = vmatmul.mubr.bf16.gmra.mrb[0].mxu0 %v2016
      %v2109 = vpop.f32.mrb[0].mxu0
      %v2110 = vadd.f32 0.0, %v2109
      %v2111 = vpop.f32.mrb[0].mxu0
      %v2112 = vpop.f32.mrb[0].mxu0
      %v2113 = vadd.f32 0.0, %v2112
      %v2114 = vpop.f32.mrb[0].mxu0
      %2115 = vmatprep.mubr.bf16.mxu0 0
      %2116 = vmatmul.mubr.bf16.gmra.mrb[0].mxu0 %v2019
      %v2117 = vpop.f32.mrb[0].mxu0
      %v2118 = vadd.f32 0.0, %v2117
      %v2119 = vpop.f32.mrb[0].mxu0
      %v2120 = vpop.f32.mrb[0].mxu0
      %v2121 = vadd.f32 0.0, %v2120
      %v2122 = vpop.f32.mrb[0].mxu0
      %2123 = vmatprep.mubr.bf16.mxu0 0
      %2124 = vmatmul.mubr.bf16.gmra.mrb[0].mxu0 %v2022
      %v2125 = vpop.f32.mrb[0].mxu0
      %v2126 = vadd.f32 0.0, %v2125
      %v2127 = vpop.f32.mrb[0].mxu0
      %v2128 = vpop.f32.mrb[0].mxu0
      %v2129 = vadd.f32 0.0, %v2128
      %v2130 = vpop.f32.mrb[0].mxu0
      %2131 = vdwg.mxu0
      %v2132 = vadd.f32 %v1953, %v2062
      %v2133 = vadd.f32 %v1954, %v2065
      %v2134 = vadd.f32 %v1955, %v2070
      %v2135 = vadd.f32 %v1956, %v2073
      %v2136 = vadd.f32 %v1957, %v2078
      %v2137 = vadd.f32 %v1958, %v2081
      %v2138 = vadd.f32 %v1959, %v2086
      %v2139 = vadd.f32 %v1960, %v2089
      %v2140 = vadd.f32 %v1961, %v2094
      %v2141 = vadd.f32 %v1962, %v2097
      %v2142 = vadd.f32 %v1963, %v2102
      %v2143 = vadd.f32 %v1964, %v2105
      %v2144 = vadd.f32 %v1965, %v2110
      %v2145 = vadd.f32 %v1966, %v2113
      %v2146 = vadd.f32 %v1967, %v2118
      %v2147 = vadd.f32 %v1968, %v2121
      %v2148 = vadd.f32 %v1969, %v2126
      %v2149 = vadd.f32 %v1970, %v2129
      %v2150 = vld [vmem:[#allocation2 + $0x10] sm:$0xc]
      %v2151 = vld [vmem:[#allocation2 + $0x14] sm:$0xf]
      %v2152 = vld [vmem:[#allocation2 + $0x18] sm:$0xf]
      %v2153 = vld [vmem:[#allocation2 + $0x1c] sm:$0xf]
      %v2154 = vld [vmem:[#allocation2 + $0x20] sm:$0xf]
      %v2155 = vld [vmem:[#allocation2 + $0x24] sm:$0xf]
      %v2156 = vld [vmem:[#allocation2 + $0x28] sm:$0xf]
      %v2157 = vld [vmem:[#allocation2 + $0x2c] sm:$0xf]
      %v2158 = vld [vmem:[#allocation2 + $0x30] sm:$0xf]
      %v2159 = vld [vmem:[#allocation2 + $0x34] sm:$0xf]
      %v2160 = vld [vmem:[#allocation2 + $0x38] sm:$0xf]
      %v2161 = vld [vmem:[#allocation2 + $0x3c] sm:$0xf]
      %v2162 = vld [vmem:[#allocation2 + $0x40] sm:$0xf]
      %v2163 = vld [vmem:[#allocation2 + $0x44] sm:$0xf]
      %v2164 = vld [vmem:[#allocation2 + $0x48] sm:$0xf]
      %v2165 = vld [vmem:[#allocation2 + $0x4c] sm:$0xf]
      %v2166 = vld [vmem:[#allocation2 + $0x50] sm:$0xf]
      %v2167 = vld [vmem:[#allocation2 + $0x54] sm:$0xf]
      %v2168 = vld [vmem:[#allocation2 + $0x58] sm:$0x3]
      %s2169 = scalar_lea.vmem %s3, 24
      %v2170 = vld [vmem:[%s2169] sm:$0xf]
      %v2190 = vunpack.c.l.b16 %v2150
      %v2191 = vunpack.c.l.b16 %v2151
      %v2192 = vunpack.c.l.b16 %v2152
      %v2193 = vunpack.c.l.b16 %v2153
      %v2194 = vunpack.c.l.b16 %v2154
      %v2195 = vunpack.c.l.b16 %v2155
      %v2196 = vunpack.c.l.b16 %v2156
      %v2197 = vunpack.c.l.b16 %v2157
      %v2198 = vunpack.c.l.b16 %v2158
      %v2199 = vunpack.c.l.b16 %v2159
      %v2200 = vunpack.c.l.b16 %v2160
      %v2201 = vunpack.c.l.b16 %v2161
      %v2202 = vunpack.c.l.b16 %v2162
      %v2203 = vunpack.c.l.b16 %v2163
      %v2204 = vunpack.c.l.b16 %v2164
      %v2205 = vunpack.c.l.b16 %v2165
      %v2206 = vunpack.c.l.b16 %v2166
      %v2207 = vunpack.c.l.b16 %v2167
      %v2208 = vunpack.c.l.b16 %v2168
      %v2209 = vpack.c.b16 %v2191, %v2190
      %v2210 = vpack.c.b16 %v2193, %v2192
      %v2211 = vpack.c.b16 %v2195, %v2194
      %v2212 = vpack.c.b16 %v2197, %v2196
      %v2213 = vpack.c.b16 %v2199, %v2198
      %v2214 = vpack.c.b16 %v2201, %v2200
      %v2215 = vpack.c.b16 %v2203, %v2202
      %v2216 = vpack.c.b16 %v2205, %v2204
      %v2217 = vpack.c.b16 %v2207, %v2206
      %v2218 = vpack.c.b16 %v2208, %v2208
      %v2219 = vrot.slane %v2209, 2
      %v2220 = vrot.slane %v2210, 2
      %v2221 = vsel %vm1977, %v2219, %v2220
      %v2222 = vrot.slane %v2211, 2
      %v2223 = vsel %vm1977, %v2220, %v2222
      %v2224 = vrot.slane %v2212, 2
      %v2225 = vsel %vm1977, %v2222, %v2224
      %v2226 = vrot.slane %v2213, 2
      %v2227 = vsel %vm1977, %v2224, %v2226
      %v2228 = vrot.slane %v2214, 2
      %v2229 = vsel %vm1977, %v2226, %v2228
      %v2230 = vrot.slane %v2215, 2
      %v2231 = vsel %vm1977, %v2228, %v2230
      %v2232 = vrot.slane %v2216, 2
      %v2233 = vsel %vm1977, %v2230, %v2232
      %v2234 = vrot.slane %v2217, 2
      %v2235 = vsel %vm1977, %v2232, %v2234
      %v2236 = vrot.slane %v2218, 2
      %v2237 = vsel %vm1977, %v2234, %v2236
      %v2239 = vsel %vm1039, %v2221, 0
      %v2242 = vsel %vm1039, %v2223, 0
      %v2245 = vsel %vm1039, %v2225, 0
      %v2248 = vsel %vm1039, %v2227, 0
      %v2251 = vsel %vm1039, %v2229, 0
      %v2254 = vsel %vm1039, %v2231, 0
      %v2257 = vsel %vm1039, %v2233, 0
      %v2260 = vsel %vm1039, %v2235, 0
      %v2263 = vsel %vm1039, %v2237, 0
      %v2266 = vsel %vm1067, %v2170, 0
      %2268 = vmatprep.subr.bf16.mxu0 0
      %2269 = vmatpush1.bf16.msra.mxu0 %v2266
      %2270 = vmatprep.subr.bf16.mxu0 0
      %2271 = vmatpush1.bf16.msra.mxu0 0
      %2272 = vmatprep.subr.bf16.mxu0 0
      %2273 = vmatpush1.bf16.msra.mxu0 0
      %2274 = vmatprep.subr.bf16.mxu0 0
      %2275 = vmatpush1.bf16.msra.mxu0 0
      %2276 = vmatprep.subr.bf16.mxu0 0
      %2277 = vmatpush1.bf16.msra.mxu0 0
      %2278 = vmatprep.subr.bf16.mxu0 0
      %2279 = vmatpush1.bf16.msra.mxu0 0
      %2280 = vmatprep.subr.bf16.mxu0 0
      %2281 = vmatpush1.bf16.msra.mxu0 0
      %2282 = vmatprep.subr.bf16.mxu0 0
      %2283 = vmatpush1.bf16.msra.mxu0 0
      %2284 = vmatprep.subr.bf16.mxu0 0
      %2285 = vmatpush1.bf16.msra.mxu0 0
      %2286 = vmatprep.subr.bf16.mxu0 0
      %2287 = vmatpush1.bf16.msra.mxu0 0
      %2288 = vmatprep.subr.bf16.mxu0 0
      %2289 = vmatpush1.bf16.msra.mxu0 0
      %2290 = vmatprep.subr.bf16.mxu0 0
      %2291 = vmatpush1.bf16.msra.mxu0 0
      %2292 = vmatprep.subr.bf16.mxu0 0
      %2293 = vmatpush1.bf16.msra.mxu0 0
      %2294 = vmatprep.subr.bf16.mxu0 0
      %2295 = vmatpush1.bf16.msra.mxu0 0
      %2296 = vmatprep.subr.bf16.mxu0 0
      %2297 = vmatpush1.bf16.msra.mxu0 0
      %2298 = vmatprep.subr.bf16.mxu0 0
      %2299 = vmatpush1.bf16.msra.mxu0 0
      %2300 = vmatprep.mubr.bf16.mxu0 0
      %2301 = vmatmul.mubr.bf16.gmra.mrb[0].mxu0 %v2239
      %v2302 = vpop.f32.mrb[0].mxu0
      %v2303 = vadd.f32 0.0, %v2302
      %v2304 = vpop.f32.mrb[0].mxu0
      %v2305 = vpop.f32.mrb[0].mxu0
      %v2306 = vadd.f32 0.0, %v2305
      %v2307 = vpop.f32.mrb[0].mxu0
      %2308 = vmatprep.mubr.bf16.mxu0 0
      %2309 = vmatmul.mubr.bf16.gmra.mrb[0].mxu0 %v2242
      %v2310 = vpop.f32.mrb[0].mxu0
      %v2311 = vadd.f32 0.0, %v2310
      %v2312 = vpop.f32.mrb[0].mxu0
      %v2313 = vpop.f32.mrb[0].mxu0
      %v2314 = vadd.f32 0.0, %v2313
      %v2315 = vpop.f32.mrb[0].mxu0
      %2316 = vmatprep.mubr.bf16.mxu0 0
      %2317 = vmatmul.mubr.bf16.gmra.mrb[0].mxu0 %v2245
      %v2318 = vpop.f32.mrb[0].mxu0
      %v2319 = vadd.f32 0.0, %v2318
      %v2320 = vpop.f32.mrb[0].mxu0
      %v2321 = vpop.f32.mrb[0].mxu0
      %v2322 = vadd.f32 0.0, %v2321
      %v2323 = vpop.f32.mrb[0].mxu0
      %2324 = vmatprep.mubr.bf16.mxu0 0
      %2325 = vmatmul.mubr.bf16.gmra.mrb[0].mxu0 %v2248
      %v2326 = vpop.f32.mrb[0].mxu0
      %v2327 = vadd.f32 0.0, %v2326
      %v2328 = vpop.f32.mrb[0].mxu0
      %v2329 = vpop.f32.mrb[0].mxu0
      %v2330 = vadd.f32 0.0, %v2329
      %v2331 = vpop.f32.mrb[0].mxu0
      %2332 = vmatprep.mubr.bf16.mxu0 0
      %2333 = vmatmul.mubr.bf16.gmra.mrb[0].mxu0 %v2251
      %v2334 = vpop.f32.mrb[0].mxu0
      %v2335 = vadd.f32 0.0, %v2334
      %v2336 = vpop.f32.mrb[0].mxu0
      %v2337 = vpop.f32.mrb[0].mxu0
      %v2338 = vadd.f32 0.0, %v2337
      %v2339 = vpop.f32.mrb[0].mxu0
      %2340 = vmatprep.mubr.bf16.mxu0 0
      %2341 = vmatmul.mubr.bf16.gmra.mrb[0].mxu0 %v2254
      %v2342 = vpop.f32.mrb[0].mxu0
      %v2343 = vadd.f32 0.0, %v2342
      %v2344 = vpop.f32.mrb[0].mxu0
      %v2345 = vpop.f32.mrb[0].mxu0
      %v2346 = vadd.f32 0.0, %v2345
      %v2347 = vpop.f32.mrb[0].mxu0
      %2348 = vmatprep.mubr.bf16.mxu0 0
      %2349 = vmatmul.mubr.bf16.gmra.mrb[0].mxu0 %v2257
      %v2350 = vpop.f32.mrb[0].mxu0
      %v2351 = vadd.f32 0.0, %v2350
      %v2352 = vpop.f32.mrb[0].mxu0
      %v2353 = vpop.f32.mrb[0].mxu0
      %v2354 = vadd.f32 0.0, %v2353
      %v2355 = vpop.f32.mrb[0].mxu0
      %2356 = vmatprep.mubr.bf16.mxu0 0
      %2357 = vmatmul.mubr.bf16.gmra.mrb[0].mxu0 %v2260
      %v2358 = vpop.f32.mrb[0].mxu0
      %v2359 = vadd.f32 0.0, %v2358
      %v2360 = vpop.f32.mrb[0].mxu0
      %v2361 = vpop.f32.mrb[0].mxu0
      %v2362 = vadd.f32 0.0, %v2361
      %v2363 = vpop.f32.mrb[0].mxu0
      %2364 = vmatprep.mubr.bf16.mxu0 0
      %2365 = vmatmul.mubr.bf16.gmra.mrb[0].mxu0 %v2263
      %v2366 = vpop.f32.mrb[0].mxu0
      %v2367 = vadd.f32 0.0, %v2366
      %v2368 = vpop.f32.mrb[0].mxu0
      %v2369 = vpop.f32.mrb[0].mxu0
      %v2370 = vadd.f32 0.0, %v2369
      %v2371 = vpop.f32.mrb[0].mxu0
      %2372 = vdwg.mxu0
      %v2373 = vadd.f32 %v2132, %v2303
      %v2374 = vadd.f32 %v2133, %v2306
      %v2375 = vadd.f32 %v2134, %v2311
      %v2376 = vadd.f32 %v2135, %v2314
      %v2377 = vadd.f32 %v2136, %v2319
      %v2378 = vadd.f32 %v2137, %v2322
      %v2379 = vadd.f32 %v2138, %v2327
      %v2380 = vadd.f32 %v2139, %v2330
      %v2381 = vadd.f32 %v2140, %v2335
      %v2382 = vadd.f32 %v2141, %v2338
      %v2383 = vadd.f32 %v2142, %v2343
      %v2384 = vadd.f32 %v2143, %v2346
      %v2385 = vadd.f32 %v2144, %v2351
      %v2386 = vadd.f32 %v2145, %v2354
      %v2387 = vadd.f32 %v2146, %v2359
      %v2388 = vadd.f32 %v2147, %v2362
      %v2389 = vadd.f32 %v2148, %v2367
      %v2390 = vadd.f32 %v2149, %v2370
      %v2391 = vld [vmem:[#allocation2 + $0x58] sm:$0x7]
      %s2392 = scalar_lea.vmem %s3, 28
      %v2393 = vld [vmem:[%s2392] sm:$0xf]
      %v2395 = vunpack.c.l.b16 %v2391
      %v2396 = vpack.c.b16 %v2395, %v2395
      %vm2397 = vsmask.f32 5376
      %v2399 = vshrl.u32 %v2209, 16
      %v2401 = vrot.slane %v2399, 2
      %v2402 = vshll.u32 %v2209, 16
      %v2404 = vrot.slane %v2402, 3
      %v2405 = vor.u32 %v2401, %v2404
      %v2407 = vshrl.u32 %v2210, 16
      %v2409 = vrot.slane %v2407, 2
      %v2410 = vshll.u32 %v2210, 16
      %v2412 = vrot.slane %v2410, 3
      %v2413 = vor.u32 %v2409, %v2412
      %v2414 = vsel %vm2397, %v2405, %v2413
      %v2416 = vshrl.u32 %v2211, 16
      %v2418 = vrot.slane %v2416, 2
      %v2419 = vshll.u32 %v2211, 16
      %v2421 = vrot.slane %v2419, 3
      %v2422 = vor.u32 %v2418, %v2421
      %v2423 = vsel %vm2397, %v2413, %v2422
      %v2425 = vshrl.u32 %v2212, 16
      %v2427 = vrot.slane %v2425, 2
      %v2428 = vshll.u32 %v2212, 16
      %v2430 = vrot.slane %v2428, 3
      %v2431 = vor.u32 %v2427, %v2430
      %v2432 = vsel %vm2397, %v2422, %v2431
      %v2434 = vshrl.u32 %v2213, 16
      %v2436 = vrot.slane %v2434, 2
      %v2437 = vshll.u32 %v2213, 16
      %v2439 = vrot.slane %v2437, 3
      %v2440 = vor.u32 %v2436, %v2439
      %v2441 = vsel %vm2397, %v2431, %v2440
      %v2443 = vshrl.u32 %v2214, 16
      %v2445 = vrot.slane %v2443, 2
      %v2446 = vshll.u32 %v2214, 16
      %v2448 = vrot.slane %v2446, 3
      %v2449 = vor.u32 %v2445, %v2448
      %v2450 = vsel %vm2397, %v2440, %v2449
      %v2452 = vshrl.u32 %v2215, 16
      %v2454 = vrot.slane %v2452, 2
      %v2455 = vshll.u32 %v2215, 16
      %v2457 = vrot.slane %v2455, 3
      %v2458 = vor.u32 %v2454, %v2457
      %v2459 = vsel %vm2397, %v2449, %v2458
      %v2461 = vshrl.u32 %v2216, 16
      %v2463 = vrot.slane %v2461, 2
      %v2464 = vshll.u32 %v2216, 16
      %v2466 = vrot.slane %v2464, 3
      %v2467 = vor.u32 %v2463, %v2466
      %v2468 = vsel %vm2397, %v2458, %v2467
      %v2470 = vshrl.u32 %v2217, 16
      %v2472 = vrot.slane %v2470, 2
      %v2473 = vshll.u32 %v2217, 16
      %v2475 = vrot.slane %v2473, 3
      %v2476 = vor.u32 %v2472, %v2475
      %v2477 = vsel %vm2397, %v2467, %v2476
      %v2479 = vshrl.u32 %v2396, 16
      %v2481 = vrot.slane %v2479, 2
      %v2482 = vshll.u32 %v2396, 16
      %v2484 = vrot.slane %v2482, 3
      %v2485 = vor.u32 %v2481, %v2484
      %v2486 = vsel %vm2397, %v2476, %v2485
      %v2488 = vsel %vm1039, %v2414, 0
      %v2491 = vsel %vm1039, %v2423, 0
      %v2494 = vsel %vm1039, %v2432, 0
      %v2497 = vsel %vm1039, %v2441, 0
      %v2500 = vsel %vm1039, %v2450, 0
      %v2503 = vsel %vm1039, %v2459, 0
      %v2506 = vsel %vm1039, %v2468, 0
      %v2509 = vsel %vm1039, %v2477, 0
      %v2512 = vsel %vm1039, %v2486, 0
      %v2515 = vsel %vm1067, %v2393, 0
      %2517 = vmatprep.subr.bf16.mxu0 0
      %2518 = vmatpush1.bf16.msra.mxu0 %v2515
      %2519 = vmatprep.subr.bf16.mxu0 0
      %2520 = vmatpush1.bf16.msra.mxu0 0
      %2521 = vmatprep.subr.bf16.mxu0 0
      %2522 = vmatpush1.bf16.msra.mxu0 0
      %2523 = vmatprep.subr.bf16.mxu0 0
      %2524 = vmatpush1.bf16.msra.mxu0 0
      %2525 = vmatprep.subr.bf16.mxu0 0
      %2526 = vmatpush1.bf16.msra.mxu0 0
      %2527 = vmatprep.subr.bf16.mxu0 0
      %2528 = vmatpush1.bf16.msra.mxu0 0
      %2529 = vmatprep.subr.bf16.mxu0 0
      %2530 = vmatpush1.bf16.msra.mxu0 0
      %2531 = vmatprep.subr.bf16.mxu0 0
      %2532 = vmatpush1.bf16.msra.mxu0 0
      %2533 = vmatprep.subr.bf16.mxu0 0
      %2534 = vmatpush1.bf16.msra.mxu0 0
      %2535 = vmatprep.subr.bf16.mxu0 0
      %2536 = vmatpush1.bf16.msra.mxu0 0
      %2537 = vmatprep.subr.bf16.mxu0 0
      %2538 = vmatpush1.bf16.msra.mxu0 0
      %2539 = vmatprep.subr.bf16.mxu0 0
      %2540 = vmatpush1.bf16.msra.mxu0 0
      %2541 = vmatprep.subr.bf16.mxu0 0
      %2542 = vmatpush1.bf16.msra.mxu0 0
      %2543 = vmatprep.subr.bf16.mxu0 0
      %2544 = vmatpush1.bf16.msra.mxu0 0
      %2545 = vmatprep.subr.bf16.mxu0 0
      %2546 = vmatpush1.bf16.msra.mxu0 0
      %2547 = vmatprep.subr.bf16.mxu0 0
      %2548 = vmatpush1.bf16.msra.mxu0 0
      %2549 = vmatprep.mubr.bf16.mxu0 0
      %2550 = vmatmul.mubr.bf16.gmra.mrb[0].mxu0 %v2488
      %v2551 = vpop.f32.mrb[0].mxu0
      %v2552 = vadd.f32 0.0, %v2551
      %v2553 = vpop.f32.mrb[0].mxu0
      %v2554 = vpop.f32.mrb[0].mxu0
      %v2555 = vadd.f32 0.0, %v2554
      %v2556 = vpop.f32.mrb[0].mxu0
      %2557 = vmatprep.mubr.bf16.mxu0 0
      %2558 = vmatmul.mubr.bf16.gmra.mrb[0].mxu0 %v2491
      %v2559 = vpop.f32.mrb[0].mxu0
      %v2560 = vadd.f32 0.0, %v2559
      %v2561 = vpop.f32.mrb[0].mxu0
      %v2562 = vpop.f32.mrb[0].mxu0
      %v2563 = vadd.f32 0.0, %v2562
      %v2564 = vpop.f32.mrb[0].mxu0
      %2565 = vmatprep.mubr.bf16.mxu0 0
      %2566 = vmatmul.mubr.bf16.gmra.mrb[0].mxu0 %v2494
      %v2567 = vpop.f32.mrb[0].mxu0
      %v2568 = vadd.f32 0.0, %v2567
      %v2569 = vpop.f32.mrb[0].mxu0
      %v2570 = vpop.f32.mrb[0].mxu0
      %v2571 = vadd.f32 0.0, %v2570
      %v2572 = vpop.f32.mrb[0].mxu0
      %2573 = vmatprep.mubr.bf16.mxu0 0
      %2574 = vmatmul.mubr.bf16.gmra.mrb[0].mxu0 %v2497
      %v2575 = vpop.f32.mrb[0].mxu0
      %v2576 = vadd.f32 0.0, %v2575
      %v2577 = vpop.f32.mrb[0].mxu0
      %v2578 = vpop.f32.mrb[0].mxu0
      %v2579 = vadd.f32 0.0, %v2578
      %v2580 = vpop.f32.mrb[0].mxu0
      %2581 = vmatprep.mubr.bf16.mxu0 0
      %2582 = vmatmul.mubr.bf16.gmra.mrb[0].mxu0 %v2500
      %v2583 = vpop.f32.mrb[0].mxu0
      %v2584 = vadd.f32 0.0, %v2583
      %v2585 = vpop.f32.mrb[0].mxu0
      %v2586 = vpop.f32.mrb[0].mxu0
      %v2587 = vadd.f32 0.0, %v2586
      %v2588 = vpop.f32.mrb[0].mxu0
      %2589 = vmatprep.mubr.bf16.mxu0 0
      %2590 = vmatmul.mubr.bf16.gmra.mrb[0].mxu0 %v2503
      %v2591 = vpop.f32.mrb[0].mxu0
      %v2592 = vadd.f32 0.0, %v2591
      %v2593 = vpop.f32.mrb[0].mxu0
      %v2594 = vpop.f32.mrb[0].mxu0
      %v2595 = vadd.f32 0.0, %v2594
      %v2596 = vpop.f32.mrb[0].mxu0
      %2597 = vmatprep.mubr.bf16.mxu0 0
      %2598 = vmatmul.mubr.bf16.gmra.mrb[0].mxu0 %v2506
      %v2599 = vpop.f32.mrb[0].mxu0
      %v2600 = vadd.f32 0.0, %v2599
      %v2601 = vpop.f32.mrb[0].mxu0
      %v2602 = vpop.f32.mrb[0].mxu0
      %v2603 = vadd.f32 0.0, %v2602
      %v2604 = vpop.f32.mrb[0].mxu0
      %2605 = vmatprep.mubr.bf16.mxu0 0
      %2606 = vmatmul.mubr.bf16.gmra.mrb[0].mxu0 %v2509
      %v2607 = vpop.f32.mrb[0].mxu0
      %v2608 = vadd.f32 0.0, %v2607
      %v2609 = vpop.f32.mrb[0].mxu0
      %v2610 = vpop.f32.mrb[0].mxu0
      %v2611 = vadd.f32 0.0, %v2610
      %v2612 = vpop.f32.mrb[0].mxu0
      %2613 = vmatprep.mubr.bf16.mxu0 0
      %2614 = vmatmul.mubr.bf16.gmra.mrb[0].mxu0 %v2512
      %v2615 = vpop.f32.mrb[0].mxu0
      %v2616 = vadd.f32 0.0, %v2615
      %v2617 = vpop.f32.mrb[0].mxu0
      %v2618 = vpop.f32.mrb[0].mxu0
      %v2619 = vadd.f32 0.0, %v2618
      %v2620 = vpop.f32.mrb[0].mxu0
      %2621 = vdwg.mxu0
      %v2622 = vadd.f32 %v2373, %v2552
      %v2623 = vadd.f32 %v2374, %v2555
      %v2624 = vadd.f32 %v2375, %v2560
      %v2625 = vadd.f32 %v2376, %v2563
      %v2626 = vadd.f32 %v2377, %v2568
      %v2627 = vadd.f32 %v2378, %v2571
      %v2628 = vadd.f32 %v2379, %v2576
      %v2629 = vadd.f32 %v2380, %v2579
      %v2630 = vadd.f32 %v2381, %v2584
      %v2631 = vadd.f32 %v2382, %v2587
      %v2632 = vadd.f32 %v2383, %v2592
      %v2633 = vadd.f32 %v2384, %v2595
      %v2634 = vadd.f32 %v2385, %v2600
      %v2635 = vadd.f32 %v2386, %v2603
      %v2636 = vadd.f32 %v2387, %v2608
      %v2637 = vadd.f32 %v2388, %v2611
      %v2638 = vadd.f32 %v2389, %v2616
      %v2639 = vadd.f32 %v2390, %v2619
      %v2640 = vld [vmem:[#allocation2 + $0x10] sm:$0x8]
      %s2641 = scalar_lea.vmem %s3, 32
      %v2642 = vld [vmem:[%s2641] sm:$0xf]
      %v2644 = vunpack.c.l.b16 %v2640
      %v2645 = vpack.c.b16 %v2191, %v2644
      %vm2646 = vcmask 1044480
      %v2647 = vrot.slane %v2645, 3
      %v2648 = vrot.slane %v2210, 3
      %v2649 = vsel %vm2646, %v2647, %v2648
      %v2650 = vrot.slane %v2211, 3
      %v2651 = vsel %vm2646, %v2648, %v2650
      %v2652 = vrot.slane %v2212, 3
      %v2653 = vsel %vm2646, %v2650, %v2652
      %v2654 = vrot.slane %v2213, 3
      %v2655 = vsel %vm2646, %v2652, %v2654
      %v2656 = vrot.slane %v2214, 3
      %v2657 = vsel %vm2646, %v2654, %v2656
      %v2658 = vrot.slane %v2215, 3
      %v2659 = vsel %vm2646, %v2656, %v2658
      %v2660 = vrot.slane %v2216, 3
      %v2661 = vsel %vm2646, %v2658, %v2660
      %v2662 = vrot.slane %v2217, 3
      %v2663 = vsel %vm2646, %v2660, %v2662
      %v2664 = vrot.slane %v2396, 3
      %v2665 = vsel %vm2646, %v2662, %v2664
      %v2667 = vsel %vm1039, %v2649, 0
      %v2670 = vsel %vm1039, %v2651, 0
      %v2673 = vsel %vm1039, %v2653, 0
      %v2676 = vsel %vm1039, %v2655, 0
      %v2679 = vsel %vm1039, %v2657, 0
      %v2682 = vsel %vm1039, %v2659, 0
      %v2685 = vsel %vm1039, %v2661, 0
      %v2688 = vsel %vm1039, %v2663, 0
      %v2691 = vsel %vm1039, %v2665, 0
      %v2694 = vsel %vm1067, %v2642, 0
      %2696 = vmatprep.subr.bf16.mxu0 0
      %2697 = vmatpush1.bf16.msra.mxu0 %v2694
      %2698 = vmatprep.subr.bf16.mxu0 0
      %2699 = vmatpush1.bf16.msra.mxu0 0
      %2700 = vmatprep.subr.bf16.mxu0 0
      %2701 = vmatpush1.bf16.msra.mxu0 0
      %2702 = vmatprep.subr.bf16.mxu0 0
      %2703 = vmatpush1.bf16.msra.mxu0 0
      %2704 = vmatprep.subr.bf16.mxu0 0
      %2705 = vmatpush1.bf16.msra.mxu0 0
      %2706 = vmatprep.subr.bf16.mxu0 0
      %2707 = vmatpush1.bf16.msra.mxu0 0
      %2708 = vmatprep.subr.bf16.mxu0 0
      %2709 = vmatpush1.bf16.msra.mxu0 0
      %2710 = vmatprep.subr.bf16.mxu0 0
      %2711 = vmatpush1.bf16.msra.mxu0 0
      %2712 = vmatprep.subr.bf16.mxu0 0
      %2713 = vmatpush1.bf16.msra.mxu0 0
      %2714 = vmatprep.subr.bf16.mxu0 0
      %2715 = vmatpush1.bf16.msra.mxu0 0
      %2716 = vmatprep.subr.bf16.mxu0 0
      %2717 = vmatpush1.bf16.msra.mxu0 0
      %2718 = vmatprep.subr.bf16.mxu0 0
      %2719 = vmatpush1.bf16.msra.mxu0 0
      %2720 = vmatprep.subr.bf16.mxu0 0
      %2721 = vmatpush1.bf16.msra.mxu0 0
      %2722 = vmatprep.subr.bf16.mxu0 0
      %2723 = vmatpush1.bf16.msra.mxu0 0
      %2724 = vmatprep.subr.bf16.mxu0 0
      %2725 = vmatpush1.bf16.msra.mxu0 0
      %2726 = vmatprep.subr.bf16.mxu0 0
      %2727 = vmatpush1.bf16.msra.mxu0 0
      %2728 = vmatprep.mubr.bf16.mxu0 0
      %2729 = vmatmul.mubr.bf16.gmra.mrb[0].mxu0 %v2667
      %v2730 = vpop.f32.mrb[0].mxu0
      %v2731 = vadd.f32 0.0, %v2730
      %v2732 = vpop.f32.mrb[0].mxu0
      %v2733 = vpop.f32.mrb[0].mxu0
      %v2734 = vadd.f32 0.0, %v2733
      %v2735 = vpop.f32.mrb[0].mxu0
      %2736 = vmatprep.mubr.bf16.mxu0 0
      %2737 = vmatmul.mubr.bf16.gmra.mrb[0].mxu0 %v2670
      %v2738 = vpop.f32.mrb[0].mxu0
      %v2739 = vadd.f32 0.0, %v2738
      %v2740 = vpop.f32.mrb[0].mxu0
      %v2741 = vpop.f32.mrb[0].mxu0
      %v2742 = vadd.f32 0.0, %v2741
      %v2743 = vpop.f32.mrb[0].mxu0
      %2744 = vmatprep.mubr.bf16.mxu0 0
      %2745 = vmatmul.mubr.bf16.gmra.mrb[0].mxu0 %v2673
      %v2746 = vpop.f32.mrb[0].mxu0
      %v2747 = vadd.f32 0.0, %v2746
      %v2748 = vpop.f32.mrb[0].mxu0
      %v2749 = vpop.f32.mrb[0].mxu0
      %v2750 = vadd.f32 0.0, %v2749
      %v2751 = vpop.f32.mrb[0].mxu0
      %2752 = vmatprep.mubr.bf16.mxu0 0
      %2753 = vmatmul.mubr.bf16.gmra.mrb[0].mxu0 %v2676
      %v2754 = vpop.f32.mrb[0].mxu0
      %v2755 = vadd.f32 0.0, %v2754
      %v2756 = vpop.f32.mrb[0].mxu0
      %v2757 = vpop.f32.mrb[0].mxu0
      %v2758 = vadd.f32 0.0, %v2757
      %v2759 = vpop.f32.mrb[0].mxu0
      %2760 = vmatprep.mubr.bf16.mxu0 0
      %2761 = vmatmul.mubr.bf16.gmra.mrb[0].mxu0 %v2679
      %v2762 = vpop.f32.mrb[0].mxu0
      %v2763 = vadd.f32 0.0, %v2762
      %v2764 = vpop.f32.mrb[0].mxu0
      %v2765 = vpop.f32.mrb[0].mxu0
      %v2766 = vadd.f32 0.0, %v2765
      %v2767 = vpop.f32.mrb[0].mxu0
      %2768 = vmatprep.mubr.bf16.mxu0 0
      %2769 = vmatmul.mubr.bf16.gmra.mrb[0].mxu0 %v2682
      %v2770 = vpop.f32.mrb[0].mxu0
      %v2771 = vadd.f32 0.0, %v2770
      %v2772 = vpop.f32.mrb[0].mxu0
      %v2773 = vpop.f32.mrb[0].mxu0
      %v2774 = vadd.f32 0.0, %v2773
      %v2775 = vpop.f32.mrb[0].mxu0
      %2776 = vmatprep.mubr.bf16.mxu0 0
      %2777 = vmatmul.mubr.bf16.gmra.mrb[0].mxu0 %v2685
      %v2778 = vpop.f32.mrb[0].mxu0
      %v2779 = vadd.f32 0.0, %v2778
      %v2780 = vpop.f32.mrb[0].mxu0
      %v2781 = vpop.f32.mrb[0].mxu0
      %v2782 = vadd.f32 0.0, %v2781
      %v2783 = vpop.f32.mrb[0].mxu0
      %2784 = vmatprep.mubr.bf16.mxu0 0
      %2785 = vmatmul.mubr.bf16.gmra.mrb[0].mxu0 %v2688
      %v2786 = vpop.f32.mrb[0].mxu0
      %v2787 = vadd.f32 0.0, %v2786
      %v2788 = vpop.f32.mrb[0].mxu0
      %v2789 = vpop.f32.mrb[0].mxu0
      %v2790 = vadd.f32 0.0, %v2789
      %v2791 = vpop.f32.mrb[0].mxu0
      %2792 = vmatprep.mubr.bf16.mxu0 0
      %2793 = vmatmul.mubr.bf16.gmra.mrb[0].mxu0 %v2691
      %v2794 = vpop.f32.mrb[0].mxu0
      %v2795 = vadd.f32 0.0, %v2794
      %v2796 = vpop.f32.mrb[0].mxu0
      %v2797 = vpop.f32.mrb[0].mxu0
      %v2798 = vadd.f32 0.0, %v2797
      %v2799 = vpop.f32.mrb[0].mxu0
      %2800 = vdwg.mxu0
      %v2801 = vadd.f32 %v2622, %v2731
      %v2802 = vadd.f32 %v2623, %v2734
      %v2803 = vadd.f32 %v2624, %v2739
      %v2804 = vadd.f32 %v2625, %v2742
      %v2805 = vadd.f32 %v2626, %v2747
      %v2806 = vadd.f32 %v2627, %v2750
      %v2807 = vadd.f32 %v2628, %v2755
      %v2808 = vadd.f32 %v2629, %v2758
      %v2809 = vadd.f32 %v2630, %v2763
      %v2810 = vadd.f32 %v2631, %v2766
      %v2811 = vadd.f32 %v2632, %v2771
      %v2812 = vadd.f32 %v2633, %v2774
      %v2813 = vadd.f32 %v2634, %v2779
      %v2814 = vadd.f32 %v2635, %v2782
      %v2815 = vadd.f32 %v2636, %v2787
      %v2816 = vadd.f32 %v2637, %v2790
      %v2817 = vadd.f32 %v2638, %v2795
      %v2818 = vadd.f32 %v2639, %v2798
      %v2819 = vld [vmem:[%s4] sm:$0x1]
      %v2821 = vlaneseq
      %v2822 = vshrl.u32 %v2821, 7
      %v2823 = vsub.s32 0, %v2822
      %v2824 = vrot.slane %v2819, %v2823
      %v2826 = vmul.f32 %v2801, %v2824
      %v2827 = vmul.f32 %v2802, %v2824
      %v2828 = vmul.f32 %v2803, %v2824
      %v2829 = vmul.f32 %v2804, %v2824
      %v2830 = vmul.f32 %v2805, %v2824
      %v2831 = vmul.f32 %v2806, %v2824
      %v2832 = vmul.f32 %v2807, %v2824
      %v2833 = vmul.f32 %v2808, %v2824
      %v2834 = vmul.f32 %v2809, %v2824
      %v2835 = vmul.f32 %v2810, %v2824
      %v2836 = vmul.f32 %v2811, %v2824
      %v2837 = vmul.f32 %v2812, %v2824
      %v2838 = vmul.f32 %v2813, %v2824
      %v2839 = vmul.f32 %v2814, %v2824
      %v2840 = vmul.f32 %v2815, %v2824
      %v2841 = vmul.f32 %v2816, %v2824
      %v2842 = vmul.f32 %v2817, %v2824
      %v2843 = vmul.f32 %v2818, %v2824
      %v2844 = vld [vmem:[%s5] sm:$0x1]
      %v2846 = vlaneseq
      %v2847 = vshrl.u32 %v2846, 7
      %v2848 = vsub.s32 0, %v2847
      %v2849 = vrot.slane %v2844, %v2848
      %v2851 = vadd.f32 %v2826, %v2849
      %v2852 = vadd.f32 %v2827, %v2849
      %v2853 = vadd.f32 %v2828, %v2849
      %v2854 = vadd.f32 %v2829, %v2849
      %v2855 = vadd.f32 %v2830, %v2849
      %v2856 = vadd.f32 %v2831, %v2849
      %v2857 = vadd.f32 %v2832, %v2849
      %v2858 = vadd.f32 %v2833, %v2849
      %v2859 = vadd.f32 %v2834, %v2849
      %v2860 = vadd.f32 %v2835, %v2849
      %v2861 = vadd.f32 %v2836, %v2849
      %v2862 = vadd.f32 %v2837, %v2849
      %v2863 = vadd.f32 %v2838, %v2849
      %v2864 = vadd.f32 %v2839, %v2849
      %v2865 = vadd.f32 %v2840, %v2849
      %v2866 = vadd.f32 %v2841, %v2849
      %v2867 = vadd.f32 %v2842, %v2849
      %v2868 = vadd.f32 %v2843, %v2849
      %v2869 = vxor.u32 %v2851, 2147483648
      %v2870 = vxor.u32 %v2852, 2147483648
      %v2871 = vxor.u32 %v2853, 2147483648
      %v2872 = vxor.u32 %v2854, 2147483648
      %v2873 = vxor.u32 %v2855, 2147483648
      %v2874 = vxor.u32 %v2856, 2147483648
      %v2875 = vxor.u32 %v2857, 2147483648
      %v2876 = vxor.u32 %v2858, 2147483648
      %v2877 = vxor.u32 %v2859, 2147483648
      %v2878 = vxor.u32 %v2860, 2147483648
      %v2879 = vxor.u32 %v2861, 2147483648
      %v2880 = vxor.u32 %v2862, 2147483648
      %v2881 = vxor.u32 %v2863, 2147483648
      %v2882 = vxor.u32 %v2864, 2147483648
      %v2883 = vxor.u32 %v2865, 2147483648
      %v2884 = vxor.u32 %v2866, 2147483648
      %v2885 = vxor.u32 %v2867, 2147483648
      %v2886 = vxor.u32 %v2868, 2147483648
      %v2887 = vmul.f32 %v2869, 1.442695
      %v2888 = vpow.pop %v2887
      %v2889 = vmul.f32 %v2870, 1.442695
      %v2890 = vpow.pop %v2889
      %v2891 = vmul.f32 %v2871, 1.442695
      %v2892 = vpow.pop %v2891
      %v2893 = vmul.f32 %v2872, 1.442695
      %v2894 = vpow.pop %v2893
      %v2895 = vmul.f32 %v2873, 1.442695
      %v2896 = vpow.pop %v2895
      %v2897 = vmul.f32 %v2874, 1.442695
      %v2898 = vpow.pop %v2897
      %v2899 = vmul.f32 %v2875, 1.442695
      %v2900 = vpow.pop %v2899
      %v2901 = vmul.f32 %v2876, 1.442695
      %v2902 = vpow.pop %v2901
      %v2903 = vmul.f32 %v2877, 1.442695
      %v2904 = vpow.pop %v2903
      %v2905 = vmul.f32 %v2878, 1.442695
      %v2906 = vpow.pop %v2905
      %v2907 = vmul.f32 %v2879, 1.442695
      %v2908 = vpow.pop %v2907
      %v2909 = vmul.f32 %v2880, 1.442695
      %v2910 = vpow.pop %v2909
      %v2911 = vmul.f32 %v2881, 1.442695
      %v2912 = vpow.pop %v2911
      %v2913 = vmul.f32 %v2882, 1.442695
      %v2914 = vpow.pop %v2913
      %v2915 = vmul.f32 %v2883, 1.442695
      %v2916 = vpow.pop %v2915
      %v2917 = vmul.f32 %v2884, 1.442695
      %v2918 = vpow.pop %v2917
      %v2919 = vmul.f32 %v2885, 1.442695
      %v2920 = vpow.pop %v2919
      %v2921 = vmul.f32 %v2886, 1.442695
      %v2922 = vpow.pop %v2921
      %v2923 = vadd.f32 %v2888, 1.0
      %v2924 = vadd.f32 %v2890, 1.0
      %v2925 = vadd.f32 %v2892, 1.0
      %v2926 = vadd.f32 %v2894, 1.0
      %v2927 = vadd.f32 %v2896, 1.0
      %v2928 = vadd.f32 %v2898, 1.0
      %v2929 = vadd.f32 %v2900, 1.0
      %v2930 = vadd.f32 %v2902, 1.0
      %v2931 = vadd.f32 %v2904, 1.0
      %v2932 = vadd.f32 %v2906, 1.0
      %v2933 = vadd.f32 %v2908, 1.0
      %v2934 = vadd.f32 %v2910, 1.0
      %v2935 = vadd.f32 %v2912, 1.0
      %v2936 = vadd.f32 %v2914, 1.0
      %v2937 = vadd.f32 %v2916, 1.0
      %v2938 = vadd.f32 %v2918, 1.0
      %v2939 = vadd.f32 %v2920, 1.0
      %v2940 = vadd.f32 %v2922, 1.0
      %v2941 = vrcp.pop %v2923
      %v2942 = vmul.f32 1.0, %v2941
      %v2943 = vrcp.pop %v2924
      %v2944 = vmul.f32 1.0, %v2943
      %v2945 = vrcp.pop %v2925
      %v2946 = vmul.f32 1.0, %v2945
      %v2947 = vrcp.pop %v2926
      %v2948 = vmul.f32 1.0, %v2947
      %v2949 = vrcp.pop %v2927
      %v2950 = vmul.f32 1.0, %v2949
      %v2951 = vrcp.pop %v2928
      %v2952 = vmul.f32 1.0, %v2951
      %v2953 = vrcp.pop %v2929
      %v2954 = vmul.f32 1.0, %v2953
      %v2955 = vrcp.pop %v2930
      %v2956 = vmul.f32 1.0, %v2955
      %v2957 = vrcp.pop %v2931
      %v2958 = vmul.f32 1.0, %v2957
      %v2959 = vrcp.pop %v2932
      %v2960 = vmul.f32 1.0, %v2959
      %v2961 = vrcp.pop %v2933
      %v2962 = vmul.f32 1.0, %v2961
      %v2963 = vrcp.pop %v2934
      %v2964 = vmul.f32 1.0, %v2963
      %v2965 = vrcp.pop %v2935
      %v2966 = vmul.f32 1.0, %v2965
      %v2967 = vrcp.pop %v2936
      %v2968 = vmul.f32 1.0, %v2967
      %v2969 = vrcp.pop %v2937
      %v2970 = vmul.f32 1.0, %v2969
      %v2971 = vrcp.pop %v2938
      %v2972 = vmul.f32 1.0, %v2971
      %v2973 = vrcp.pop %v2939
      %v2974 = vmul.f32 1.0, %v2973
      %v2975 = vrcp.pop %v2940
      %v2976 = vmul.f32 1.0, %v2975
      %v2977 = vmul.f32 %v2851, %v2942
      %v2978 = vmul.f32 %v2852, %v2944
      %v2979 = vmul.f32 %v2853, %v2946
      %v2980 = vmul.f32 %v2854, %v2948
      %v2981 = vmul.f32 %v2855, %v2950
      %v2982 = vmul.f32 %v2856, %v2952
      %v2983 = vmul.f32 %v2857, %v2954
      %v2984 = vmul.f32 %v2858, %v2956
      %v2985 = vmul.f32 %v2859, %v2958
      %v2986 = vmul.f32 %v2860, %v2960
      %v2987 = vmul.f32 %v2861, %v2962
      %v2988 = vmul.f32 %v2862, %v2964
      %v2989 = vmul.f32 %v2863, %v2966
      %v2990 = vmul.f32 %v2864, %v2968
      %v2991 = vmul.f32 %v2865, %v2970
      %v2992 = vmul.f32 %v2866, %v2972
      %v2993 = vmul.f32 %v2867, %v2974
      %v2994 = vmul.f32 %v2868, %v2976
      %v2995 = vpack.c.bf16 %v2978, %v2977
      %v2996 = vpack.c.bf16 %v2980, %v2979
      %v2997 = vpack.c.bf16 %v2982, %v2981
      %v2998 = vpack.c.bf16 %v2984, %v2983
      %v2999 = vpack.c.bf16 %v2986, %v2985
      %v3000 = vpack.c.bf16 %v2988, %v2987
      %v3001 = vpack.c.bf16 %v2990, %v2989
      %v3002 = vpack.c.bf16 %v2992, %v2991
      %v3003 = vpack.c.bf16 %v2994, %v2993
      %v3005 = vunpack.c.l.b16 %v2995
      %v3006 = vunpack.c.h.b16 %v2995
      %v3007 = vpack.c.b16 %v3005, %v3005
      %v3008 = vpack.c.b16 %v3006, %v3006
      %3011 = vst.msk [vmem:[%s500] sm:$0xf] %vm508, %v3007
      %3012 = vst.msk [vmem:[%s500 + $0x4] sm:$0xf] %vm508, %v3008
      %v3015 = vunpack.c.l.b16 %v2996
      %v3016 = vunpack.c.h.b16 %v2996
      %v3017 = vunpack.c.l.b16 %v2997
      %v3018 = vpack.c.b16 %v3015, %v3015
      %v3019 = vpack.c.b16 %v3016, %v3016
      %v3020 = vpack.c.b16 %v3017, %v3017
      %vm3021 = vcmask 1042432
      %vm3022 = vcmask 1046532
      %vm3023 = vmor %vm3021, %vm3022
      %v3024 = vrot.slane %v3018, 5
      %v3025 = vrot.slane %v3024, 4
      %v3026 = vrot.slane %v3019, 5
      %v3027 = vsel %vm3023, %v3025, %v3026
      %v3028 = vrot.slane %v3026, 4
      %v3029 = vrot.slane %v3020, 5
      %v3030 = vsel %vm3023, %v3028, %v3029
      %s3033 = scalar_lea.vmem %s500, 8
      %3034 = vst.msk [vmem:[%s3033] sm:$0xf] %vm508, %v3027
      %3035 = vst.msk [vmem:[%s3033 + $0x4] sm:$0xf] %vm508, %v3030
      %v3037 = vunpack.c.h.b16 %v2997
      %v3038 = vunpack.c.l.b16 %v2998
      %v3039 = vpack.c.b16 %v3037, %v3037
      %v3040 = vpack.c.b16 %v3038, %v3038
      %vm3041 = vcmask 1041408
      %vm3042 = vcmask 1045508
      %vm3043 = vmor %vm3041, %vm3042
      %v3044 = vrot.slane %v3020, 6
      %v3045 = vrot.slane %v3044, 4
      %v3046 = vrot.slane %v3039, 6
      %v3047 = vsel %vm3043, %v3045, %v3046
      %v3048 = vrot.slane %v3046, 4
      %v3049 = vrot.slane %v3040, 6
      %v3050 = vsel %vm3043, %v3048, %v3049
      %s3053 = scalar_lea.vmem %s500, 16
      %3054 = vst.msk [vmem:[%s3053] sm:$0xf] %vm508, %v3047
      %3055 = vst.msk [vmem:[%s3053 + $0x4] sm:$0xf] %vm508, %v3050
      %v3057 = vunpack.c.h.b16 %v2998
      %v3058 = vunpack.c.l.b16 %v2999
      %v3059 = vpack.c.b16 %v3057, %v3057
      %v3060 = vpack.c.b16 %v3058, %v3058
      %vm3061 = vcmask 1040384
      %vm3062 = vcmask 1044484
      %vm3063 = vmor %vm3061, %vm3062
      %v3064 = vrot.slane %v3040, 7
      %v3065 = vrot.slane %v3064, 4
      %v3066 = vrot.slane %v3059, 7
      %v3067 = vsel %vm3063, %v3065, %v3066
      %v3068 = vrot.slane %v3066, 4
      %v3069 = vrot.slane %v3060, 7
      %v3070 = vsel %vm3063, %v3068, %v3069
      %s3073 = scalar_lea.vmem %s500, 24
      %3074 = vst.msk [vmem:[%s3073] sm:$0xf] %vm508, %v3067
      %3075 = vst.msk [vmem:[%s3073 + $0x4] sm:$0xf] %vm508, %v3070
      %v3077 = vunpack.c.h.b16 %v2999
      %v3078 = vunpack.c.l.b16 %v3000
      %v3079 = vpack.c.b16 %v3077, %v3077
      %v3080 = vpack.c.b16 %v3078, %v3078
      %s3083 = scalar_lea.vmem %s500, 32
      %3084 = vst.msk [vmem:[%s3083] sm:$0xf] %vm508, %v3079
      %3085 = vst.msk [vmem:[%s3083 + $0x4] sm:$0xf] %vm508, %v3080
      %v3087 = vunpack.c.h.b16 %v3000
      %v3088 = vunpack.c.l.b16 %v3001
      %v3089 = vunpack.c.h.b16 %v3001
      %v3090 = vpack.c.b16 %v3087, %v3087
      %v3091 = vpack.c.b16 %v3088, %v3088
      %v3092 = vpack.c.b16 %v3089, %v3089
      %v3093 = vrot.slane %v3090, 5
      %v3094 = vrot.slane %v3093, 4
      %v3095 = vrot.slane %v3091, 5
      %v3096 = vsel %vm3023, %v3094, %v3095
      %v3097 = vrot.slane %v3095, 4
      %v3098 = vrot.slane %v3092, 5
      %v3099 = vsel %vm3023, %v3097, %v3098
      %s3102 = scalar_lea.vmem %s500, 40
      %3103 = vst.msk [vmem:[%s3102] sm:$0xf] %vm508, %v3096
      %3104 = vst.msk [vmem:[%s3102 + $0x4] sm:$0xf] %vm508, %v3099
      %v3106 = vunpack.c.l.b16 %v3002
      %v3107 = vunpack.c.h.b16 %v3002
      %v3108 = vpack.c.b16 %v3106, %v3106
      %v3109 = vpack.c.b16 %v3107, %v3107
      %v3110 = vrot.slane %v3092, 6
      %v3111 = vrot.slane %v3110, 4
      %v3112 = vrot.slane %v3108, 6
      %v3113 = vsel %vm3043, %v3111, %v3112
      %v3114 = vrot.slane %v3112, 4
      %v3115 = vrot.slane %v3109, 6
      %v3116 = vsel %vm3043, %v3114, %v3115
      %s3119 = scalar_lea.vmem %s500, 48
      %3120 = vst.msk [vmem:[%s3119] sm:$0xf] %vm508, %v3113
      %3121 = vst.msk [vmem:[%s3119 + $0x4] sm:$0xf] %vm508, %v3116
      %v3123 = vunpack.c.l.b16 %v3003
      %v3124 = vunpack.c.h.b16 %v3003
      %v3125 = vpack.c.b16 %v3123, %v3123
      %v3126 = vpack.c.b16 %v3124, %v3124
      %v3127 = vrot.slane %v3109, 7
      %v3128 = vrot.slane %v3127, 4
      %v3129 = vrot.slane %v3125, 7
      %v3130 = vsel %vm3063, %v3128, %v3129
      %v3131 = vrot.slane %v3129, 4
      %v3132 = vrot.slane %v3126, 7
      %v3133 = vsel %vm3063, %v3131, %v3132
      %s3136 = scalar_lea.vmem %s500, 56
      %3137 = vst.msk [vmem:[%s3136] sm:$0xf] %vm508, %v3130
      %3138 = vst.msk [vmem:[%s3136 + $0x4] sm:$0xf] %vm508, %v3133
      %v3139 = vld [vmem:[%s490] sm:$0xff]
      %v3140 = vld [vmem:[%s490 + $0x8] sm:$0xff]
      %v3141 = vld [vmem:[%s490 + $0x10] sm:$0xff]
      %v3142 = vld [vmem:[%s490 + $0x18] sm:$0x11]
      %v3147 = vunpack.c.l.b16 %v3139
      %v3148 = vunpack.c.h.b16 %v3139
      %v3149 = vunpack.c.l.b16 %v3140
      %v3150 = vunpack.c.h.b16 %v3140
      %v3151 = vunpack.c.l.b16 %v3141
      %v3152 = vunpack.c.h.b16 %v3141
      %v3153 = vunpack.c.l.b16 %v3142
      %v3154 = vunpack.c.h.b16 %v3142
      %v3155 = vpack.c.b16 %v3149, %v3147
      %v3156 = vpack.c.b16 %v3150, %v3148
      %v3157 = vpack.c.b16 %v3153, %v3151
      %v3158 = vpack.c.b16 %v3154, %v3152
      %vm3161 = vcmask 130048
      %v3163 = vsel %vm3161, %v3156, 0
      %v3166 = vsel %vm3161, %v3158, 0
      %3168 = vmatprep.subr.bf16.mxu0 0
      %3169 = vmatpush1.bf16.msra.mxu0 %v2995
      %3170 = vmatprep.subr.bf16.mxu0 0
      %3171 = vmatpush1.bf16.msra.mxu0 %v2996
      %3172 = vmatprep.subr.bf16.mxu0 0
      %3173 = vmatpush1.bf16.msra.mxu0 %v2997
      %3174 = vmatprep.subr.bf16.mxu0 0
      %3175 = vmatpush1.bf16.msra.mxu0 %v2998
      %3176 = vmatprep.subr.bf16.mxu0 0
      %3177 = vmatpush1.bf16.msra.mxu0 %v2999
      %3178 = vmatprep.subr.bf16.mxu0 0
      %3179 = vmatpush1.bf16.msra.mxu0 %v3000
      %3180 = vmatprep.subr.bf16.mxu0 0
      %3181 = vmatpush1.bf16.msra.mxu0 %v3001
      %3182 = vmatprep.subr.bf16.mxu0 0
      %3183 = vmatpush1.bf16.msra.mxu0 %v3002
      %3184 = vmatprep.subr.bf16.mxu0 0
      %3185 = vmatpush1.bf16.msra.mxu0 %v3003
      %3186 = vmatprep.subr.bf16.mxu0 0
      %3187 = vmatpush1.bf16.msra.mxu0 0
      %3188 = vmatprep.subr.bf16.mxu0 0
      %3189 = vmatpush1.bf16.msra.mxu0 0
      %3190 = vmatprep.subr.bf16.mxu0 0
      %3191 = vmatpush1.bf16.msra.mxu0 0
      %3192 = vmatprep.subr.bf16.mxu0 0
      %3193 = vmatpush1.bf16.msra.mxu0 0
      %3194 = vmatprep.subr.bf16.mxu0 0
      %3195 = vmatpush1.bf16.msra.mxu0 0
      %3196 = vmatprep.subr.bf16.mxu0 0
      %3197 = vmatpush1.bf16.msra.mxu0 0
      %3198 = vmatprep.subr.bf16.mxu0 0
      %3199 = vmatpush1.bf16.msra.mxu0 0
      %3200 = vmatprep.mubr.bf16.mxu0 %v3163
      %3201 = vmatmul.mubr.bf16.gmra.mrb[0].mxu0 %v3155
      %v3202 = vpop.f32.mrb[0].mxu0
      %v3203 = vadd.f32 0.0, %v3202
      %v3204 = vpop.f32.mrb[0].mxu0
      %v3205 = vpop.f32.mrb[0].mxu0
      %v3206 = vadd.f32 0.0, %v3205
      %v3207 = vpop.f32.mrb[0].mxu0
      %3208 = vmatprep.mubr.bf16.mxu0 %v3166
      %3209 = vmatmul.mubr.bf16.gmra.mrb[0].mxu0 %v3157
      %v3210 = vpop.f32.mrb[0].mxu0
      %v3211 = vadd.f32 0.0, %v3210
      %v3212 = vpop.f32.mrb[0].mxu0
      %v3213 = vpop.f32.mrb[0].mxu0
      %v3214 = vadd.f32 0.0, %v3213
      %v3215 = vpop.f32.mrb[0].mxu0
      %3216 = vdwg.mxu0
      %p3217 = scmp.eq.s32.totalorder %s25, 0
      // Predicated region
      $region57: #{_lambda_.7} parent=47 // pred_check
        %p3218 = pneg %p3217
      $region58: #{_lambda_.7} parent=47 // pred_check_branch
        %3220 = sbr.rel (%p3218) target = $region60
      $region59: #{_lambda_.7} parent=47 // pred_region
        %3221 = vst.msk [vmem:[%s506] sm:$0xff] %vm1039, 0.0
        %3222 = vst.msk [vmem:[%s506 + $0x8] sm:$0xff] %vm1039, 0.0
        %3223 = vst.msk [vmem:[%s506 + $0x10] sm:$0xff] %vm1039, 0.0
        %vm3224 = vcmask 57344
        %3225 = vst.msk [vmem:[%s506 + $0x18] sm:$0x1] %vm3224, 0.0
      $region60: #{_lambda_.7} parent=47 // pred_fallthru
        _
      %v3226 = vld [vmem:[%s506] sm:$0xff]
      %v3227 = vld [vmem:[%s506 + $0x8] sm:$0xff]
      %v3228 = vld [vmem:[%s506 + $0x10] sm:$0xff]
      %v3229 = vld [vmem:[%s506 + $0x18] sm:$0x1]
      %v3230 = vadd.f32 %v3226, %v3203
      %v3231 = vadd.f32 %v3227, %v3206
      %v3232 = vadd.f32 %v3228, %v3211
      %v3233 = vadd.f32 %v3229, %v3214
      %3234 = vst.msk [vmem:[%s506] sm:$0xff] %vm1039, %v3230
      %3235 = vst.msk [vmem:[%s506 + $0x8] sm:$0xff] %vm1039, %v3231
      %3236 = vst.msk [vmem:[%s506 + $0x10] sm:$0xff] %vm1039, %v3232
      %vm3237 = vcmask 57344
      %3238 = vst.msk [vmem:[%s506 + $0x18] sm:$0x1] %vm3237, %v3233
      %s3239 = smul.u32 8, %s25
      %p3240 = scmp.lt.s32.totalorder %s24, 1
      %s3241 = scalar_select %p3240, %s24, 1
      %p3242 = scmp.lt.s32.totalorder %s3239, 15
      %s3243 = scalar_select %p3242, %s3239, 15
      %s3244 = smul.addr %s3243, 2
      %s3245 = smul.addr %s3241, 32
      %s3246 = sadd.s32 %s3244, %s3245
      %s3247 = smul.addr %s3246, 4
      %s3248 = scalar_lea.vmem %s7, %s3247
      %p3249 = scmp.lt.s32.totalorder %s24, 1
      %s3250 = scalar_select %p3249, %s24, 1
      %s3251 = smul.addr %s3250, 4
      %s3252 = smul.addr %s3251, 8
      %s3253 = scalar_lea.vmem %s8, %s3252
      // Predicated region
      $region61: #{_lambda_.7} parent=47 // pred_check
        %p3254 = pneg %p241
      $region62: #{_lambda_.7} parent=47 // pred_check_branch
        %3256 = sbr.rel (%p3254) target = $region64
      $region63: #{_lambda_.7} parent=47 // pred_region
        %s3257 = smul.u32 8, %s25
      $region64: #{_lambda_.7} parent=47 // pred_fallthru
        _
      // Predicated region
      $region65: #{_lambda_.7} parent=47 // pred_check
        %p3258 = pneg %p267
      $region66: #{_lambda_.7} parent=47 // pred_check_branch
        %3260 = sbr.rel (%p3258) target = $region68
      $region67: #{_lambda_.7} parent=47 // pred_region
        _
      $region68: #{_lambda_.7} parent=47 // pred_fallthru
        _
    $region48: #{_lambda_.7} parent=5 // pred_fallthru
      _
    %p3261 = scmp.le.s32.totalorder 2, %s15
    // Predicated region
    $region69: #{_lambda_.7} parent=5 // pred_check
      %p3262 = pneg %p3261
    $region70: #{_lambda_.7} parent=5 // pred_check_branch
      %3264 = sbr.rel (%p3262) target = $region72
    $region71: #{_lambda_.7} parent=5 // pred_region
      %s3265 = ssub.s32 %s15, 2
      // Predicated region
      $region73: #{_lambda_.7} parent=71 // pred_check
        %p3266 = pneg %p247
      $region74: #{_lambda_.7} parent=71 // pred_check_branch
        %3268 = sbr.rel (%p3266) target = $region76
      $region75: #{_lambda_.7} parent=71 // pred_region
        %s3269 = smul.u32 8, %s27
        %p3270 = scmp.lt.s32.totalorder %s26, 1
        %s3271 = scalar_select %p3270, %s26, 1
        %p3272 = scmp.lt.s32.totalorder %s3269, 15
        %s3273 = scalar_select %p3272, %s3269, 15
        %s3274 = smul.addr %s3273, 2
        %s3275 = smul.addr %s3271, 32
        %s3276 = sadd.s32 %s3274, %s3275
        %s3277 = smul.addr %s3276, 4
        %s3278 = scalar_lea.vmem %s7, %s3277
      $region76: #{_lambda_.7} parent=71 // pred_fallthru
        _
      // Predicated region
      $region77: #{_lambda_.7} parent=71 // pred_check
        %p3279 = pneg %p273
      $region78: #{_lambda_.7} parent=71 // pred_check_branch
        %3281 = sbr.rel (%p3279) target = $region80
      $region79: #{_lambda_.7} parent=71 // pred_region
        %p3282 = scmp.lt.s32.totalorder %s26, 1
        %s3283 = scalar_select %p3282, %s26, 1
        %s3284 = smul.addr %s3283, 4
        %s3285 = smul.addr %s3284, 8
        %s3286 = scalar_lea.vmem %s8, %s3285
      $region80: #{_lambda_.7} parent=71 // pred_fallthru
        _
    $region72: #{_lambda_.7} parent=5 // pred_fallthru
      _
  $region6: #{_lambda_.7} parent=0 // loop_footer
    %s19 = sadd.s32 1, %s15
  $region7: #{_lambda_.7} parent=0 // loop_footer_branch
    %14 = sbr.rel target = $region3
  $region8: #{_lambda_.7} parent=0 // loop_exit
    _

// kernel: _lambda_.6
$region0: #{_lambda_.6}
  #allocation0 [shape = 'u32[]', space=smem, size = 0x4, offset = 0x4, fixed_abs, tag = 'smem constant byte address 0x4 - core index']
  #allocation1 [shape = 'u32[144,128]{1,0:T(1,128)}', space=vmem, size = 0x12000, scoped, tag = 'internal scratch']
  #allocation2 [shape = 'bf16[188,8]{1,0:T(8,128)(2,1)}', space=vmem, size = 0xc000, scoped, tag = 'scratch operand']
  %s0 = inlined_call_operand.vmem [shape: bf16[2,16,16,8], index: 0, kind: input, shape index: {}, may-alias: {0,1,2}]
  %s1 = inlined_call_operand.vmem [shape: bf16[2,16,16,8], index: 1, kind: input, shape index: {}, may-alias: {0,1,2}]
  %s2 = inlined_call_operand.vmem [shape: bf16[2,16,16,8], index: 2, kind: input, shape index: {}, may-alias: {0,1,2}]
  %s3 = inlined_call_operand.vmem [shape: bf16[9,8,8], index: 3, kind: input, shape index: {}]
  %s4 = inlined_call_operand.vmem [shape: f32[1,8], index: 4, kind: input, shape index: {}]
  %s5 = inlined_call_operand.vmem [shape: f32[1,8], index: 5, kind: input, shape index: {}]
  %s6 = inlined_call_operand.vmem [shape: bf16[2,16,16,8], index: 6, kind: output, shape index: {}]
  %s7 = sld [smem:[#allocation0]]
  $region65: #{_lambda_.6} parent=0
    _
  %s9 = ssub.s32 1, %s7
  %s10 = scalar_select 0, %s9, %s7
  loop: start=0, step=1, limit=6
  $region2: #{_lambda_.6} parent=0 // loop_pre_header
    _
  $region3: #{_lambda_.6} parent=0 // loop_header
    %s12 = sphi 0, %s16
    %p13 = scmp.ge.s32.totalorder %s12, 6
    %s19 = sphi 0, %s31
    %s20 = sphi 0, %s27
    %s21 = sphi 0, %s19
    %s22 = sphi 0, %s20
    %s23 = sphi 0, %s21
    %s24 = sphi 0, %s22
    %s36 = sphi 0, %s38
    %s39 = sphi 0, %s36
    %s40 = sphi 0, %s39
    %s56 = sphi 0, %s40
    %s72 = sphi 0, %s74
    %s75 = sphi 0, %s72
    %s76 = sphi 0, %s75
    %s92 = sphi 0, %s76
    %s108 = sphi 0, %s110
    %s111 = sphi 0, %s108
    %s112 = sphi 0, %s111
    %s128 = sphi 0, %s112
    %s132 = sphi 0, %s132
    %s134 = sphi 0, %s132
    %s135 = sphi 0, %s134
    %s149 = sphi 0, %s135
    %s153 = sphi 0, %s153
    %s155 = sphi 0, %s153
    %s156 = sphi 0, %s155
    %s170 = sphi 0, %s156
    %s174 = sphi 0, %s174
    %s176 = sphi 0, %s174
    %s177 = sphi 0, %s176
    %s191 = sphi 0, %s177
    %s199 = sphi 0, %s201
    %s202 = sphi 0, %s199
    %s203 = sphi 0, %s202
    %s219 = sphi 0, %s203
  $region4: #{_lambda_.6} parent=0 // loop_header_branch
    %15 = sbr.rel (%p13) target = $region8
  $region5: #{_lambda_.6} parent=0 // loop_body
    %s17 = ssub.s32 %s12, 1
    %s18 = ssub.s32 %s12, 2
    %s25 = sadd.s32 1, %s20
    %p26 = scmp.ge.s32.totalorder %s25, 2
    %s27 = scalar_select %p26, 0, %s25
    %s28 = sadd.s32 1, %s19
    %s29 = scalar_select %p26, %s28, %s19
    %p30 = scmp.ge.s32.totalorder %s29, 2
    %s31 = scalar_select %p30, 0, %s29
    %s32 = ssub.s32 %s19, %s31
    %s33 = ssub.s32 %s20, %s27
    %s34 = sor.u32 %s32, %s33
    %p35 = scmp.eq.s32.totalorder %s34, 0
    %s37 = sadd.s32 %s36, 1
    %s38 = scalar_select %p35, %s36, %s37
    %p41 = pneg %p35
    %p42 = scmp.eq.s32.totalorder %s12, 3
    %p43 = por %p41, %p42
    %p44 = scmp.ne.s32.totalorder %s36, %s39
    %p45 = scmp.eq.s32.totalorder %s12, 0
    %p46 = por %p44, %p45
    %p47 = scmp.ne.s32.totalorder %s36, %s39
    %p48 = scmp.eq.s32.totalorder %s17, 3
    %p49 = por %p47, %p48
    %p50 = scmp.ne.s32.totalorder %s39, %s40
    %p51 = scmp.eq.s32.totalorder %s17, 0
    %p52 = por %p50, %p51
    %p53 = scmp.ne.s32.totalorder %s39, %s40
    %p54 = scmp.eq.s32.totalorder %s18, 3
    %p55 = por %p53, %p54
    %p57 = scmp.ne.s32.totalorder %s40, %s56
    %p58 = scmp.eq.s32.totalorder %s18, 0
    %p59 = por %p57, %p58
    %s60 = smul.u32 %s20, 8
    %s61 = ssub.s32 %s60, 1
    %p62 = scmp.gt.s32.totalorder %s61, 0
    %s63 = scalar_select %p62, %s61, 0
    %s64 = smul.u32 %s27, 8
    %s65 = ssub.s32 %s64, 1
    %p66 = scmp.gt.s32.totalorder %s65, 0
    %s67 = scalar_select %p66, %s65, 0
    %s68 = ssub.s32 %s19, %s31
    %s69 = ssub.s32 %s63, %s67
    %s70 = sor.u32 %s68, %s69
    %p71 = scmp.eq.s32.totalorder %s70, 0
    %s73 = sadd.s32 %s72, 1
    %s74 = scalar_select %p71, %s72, %s73
    %p77 = pneg %p71
    %p78 = scmp.eq.s32.totalorder %s12, 3
    %p79 = por %p77, %p78
    %p80 = scmp.ne.s32.totalorder %s72, %s75
    %p81 = scmp.eq.s32.totalorder %s12, 0
    %p82 = por %p80, %p81
    %p83 = scmp.ne.s32.totalorder %s72, %s75
    %p84 = scmp.eq.s32.totalorder %s17, 3
    %p85 = por %p83, %p84
    %p86 = scmp.ne.s32.totalorder %s75, %s76
    %p87 = scmp.eq.s32.totalorder %s17, 0
    %p88 = por %p86, %p87
    %p89 = scmp.ne.s32.totalorder %s75, %s76
    %p90 = scmp.eq.s32.totalorder %s18, 3
    %p91 = por %p89, %p90
    %p93 = scmp.ne.s32.totalorder %s76, %s92
    %p94 = scmp.eq.s32.totalorder %s18, 0
    %p95 = por %p93, %p94
    %s96 = smul.u32 %s20, 8
    %s97 = sadd.s32 %s96, 8
    %p98 = scmp.lt.s32.totalorder %s97, 15
    %s99 = scalar_select %p98, %s97, 15
    %s100 = smul.u32 %s27, 8
    %s101 = sadd.s32 %s100, 8
    %p102 = scmp.lt.s32.totalorder %s101, 15
    %s103 = scalar_select %p102, %s101, 15
    %s104 = ssub.s32 %s19, %s31
    %s105 = ssub.s32 %s99, %s103
    %s106 = sor.u32 %s104, %s105
    %p107 = scmp.eq.s32.totalorder %s106, 0
    %s109 = sadd.s32 %s108, 1
    %s110 = scalar_select %p107, %s108, %s109
    %p113 = pneg %p107
    %p114 = scmp.eq.s32.totalorder %s12, 3
    %p115 = por %p113, %p114
    %p116 = scmp.ne.s32.totalorder %s108, %s111
    %p117 = scmp.eq.s32.totalorder %s12, 0
    %p118 = por %p116, %p117
    %p119 = scmp.ne.s32.totalorder %s108, %s111
    %p120 = scmp.eq.s32.totalorder %s17, 3
    %p121 = por %p119, %p120
    %p122 = scmp.ne.s32.totalorder %s111, %s112
    %p123 = scmp.eq.s32.totalorder %s17, 0
    %p124 = por %p122, %p123
    %p125 = scmp.ne.s32.totalorder %s111, %s112
    %p126 = scmp.eq.s32.totalorder %s18, 3
    %p127 = por %p125, %p126
    %p129 = scmp.ne.s32.totalorder %s112, %s128
    %p130 = scmp.eq.s32.totalorder %s18, 0
    %p131 = por %p129, %p130
    %s133 = sadd.s32 %s132, 1
    %p136 = scmp.eq.s32.totalorder %s12, 3
    %p137 = scmp.ne.s32.totalorder %s132, %s134
    %p138 = scmp.eq.s32.totalorder %s12, 0
    %p139 = por %p137, %p138
    %p140 = scmp.ne.s32.totalorder %s132, %s134
    %p141 = scmp.eq.s32.totalorder %s17, 3
    %p142 = por %p140, %p141
    %p143 = scmp.ne.s32.totalorder %s134, %s135
    %p144 = scmp.eq.s32.totalorder %s17, 0
    %p145 = por %p143, %p144
    %p146 = scmp.ne.s32.totalorder %s134, %s135
    %p147 = scmp.eq.s32.totalorder %s18, 3
    %p148 = por %p146, %p147
    %p150 = scmp.ne.s32.totalorder %s135, %s149
    %p151 = scmp.eq.s32.totalorder %s18, 0
    %p152 = por %p150, %p151
    %s154 = sadd.s32 %s153, 1
    %p157 = scmp.eq.s32.totalorder %s12, 3
    %p158 = scmp.ne.s32.totalorder %s153, %s155
    %p159 = scmp.eq.s32.totalorder %s12, 0
    %p160 = por %p158, %p159
    %p161 = scmp.ne.s32.totalorder %s153, %s155
    %p162 = scmp.eq.s32.totalorder %s17, 3
    %p163 = por %p161, %p162
    %p164 = scmp.ne.s32.totalorder %s155, %s156
    %p165 = scmp.eq.s32.totalorder %s17, 0
    %p166 = por %p164, %p165
    %p167 = scmp.ne.s32.totalorder %s155, %s156
    %p168 = scmp.eq.s32.totalorder %s18, 3
    %p169 = por %p167, %p168
    %p171 = scmp.ne.s32.totalorder %s156, %s170
    %p172 = scmp.eq.s32.totalorder %s18, 0
    %p173 = por %p171, %p172
    %s175 = sadd.s32 %s174, 1
    %p178 = scmp.eq.s32.totalorder %s12, 3
    %p179 = scmp.ne.s32.totalorder %s174, %s176
    %p180 = scmp.eq.s32.totalorder %s12, 0
    %p181 = por %p179, %p180
    %p182 = scmp.ne.s32.totalorder %s174, %s176
    %p183 = scmp.eq.s32.totalorder %s17, 3
    %p184 = por %p182, %p183
    %p185 = scmp.ne.s32.totalorder %s176, %s177
    %p186 = scmp.eq.s32.totalorder %s17, 0
    %p187 = por %p185, %p186
    %p188 = scmp.ne.s32.totalorder %s176, %s177
    %p189 = scmp.eq.s32.totalorder %s18, 3
    %p190 = por %p188, %p189
    %p192 = scmp.ne.s32.totalorder %s177, %s191
    %p193 = scmp.eq.s32.totalorder %s18, 0
    %p194 = por %p192, %p193
    %s195 = ssub.s32 %s19, %s31
    %s196 = ssub.s32 %s20, %s27
    %s197 = sor.u32 %s195, %s196
    %p198 = scmp.eq.s32.totalorder %s197, 0
    %s200 = sadd.s32 %s199, 1
    %s201 = scalar_select %p198, %s199, %s200
    %p204 = pneg %p198
    %p205 = scmp.eq.s32.totalorder %s12, 3
    %p206 = por %p204, %p205
    %p207 = scmp.ne.s32.totalorder %s199, %s202
    %p208 = scmp.eq.s32.totalorder %s12, 0
    %p209 = por %p207, %p208
    %p210 = scmp.ne.s32.totalorder %s199, %s202
    %p211 = scmp.eq.s32.totalorder %s17, 3
    %p212 = por %p210, %p211
    %p213 = scmp.ne.s32.totalorder %s202, %s203
    %p214 = scmp.eq.s32.totalorder %s17, 0
    %p215 = por %p213, %p214
    %p216 = scmp.ne.s32.totalorder %s202, %s203
    %p217 = scmp.eq.s32.totalorder %s18, 3
    %p218 = por %p216, %p217
    %p220 = scmp.ne.s32.totalorder %s203, %s219
    %p221 = scmp.eq.s32.totalorder %s18, 0
    %p222 = por %p220, %p221
    %p223 = scmp.le.s32.totalorder 1, %s12
    %p224 = scmp.lt.s32.totalorder %s12, 5
    %p225 = pnand %p223, %p224
    %p226 = pneg %p225
    // Predicated region
    $region9: #{_lambda_.6} parent=5 // pred_check
      _
    $region10: #{_lambda_.6} parent=5 // pred_check_branch
      %228 = sbr.rel (%p225) target = $region12
    $region11: #{_lambda_.6} parent=5 // pred_region
      %s229 = ssub.s32 %s12, 1
      // Predicated region
      $region13: #{_lambda_.6} parent=11 // pred_check
        %p230 = pneg %p145
      $region14: #{_lambda_.6} parent=11 // pred_check_branch
        %232 = sbr.rel (%p230) target = $region16
      $region15: #{_lambda_.6} parent=11 // pred_region
        _
      $region16: #{_lambda_.6} parent=11 // pred_fallthru
        _
      // Predicated region
      $region17: #{_lambda_.6} parent=11 // pred_check
        %p233 = pneg %p166
      $region18: #{_lambda_.6} parent=11 // pred_check_branch
        %235 = sbr.rel (%p233) target = $region20
      $region19: #{_lambda_.6} parent=11 // pred_region
        _
      $region20: #{_lambda_.6} parent=11 // pred_fallthru
        _
      // Predicated region
      $region21: #{_lambda_.6} parent=11 // pred_check
        %p236 = pneg %p187
      $region22: #{_lambda_.6} parent=11 // pred_check_branch
        %238 = sbr.rel (%p236) target = $region24
      $region23: #{_lambda_.6} parent=11 // pred_region
        _
      $region24: #{_lambda_.6} parent=11 // pred_fallthru
        _
    $region12: #{_lambda_.6} parent=5 // pred_fallthru
      _
    %p239 = scmp.lt.s32.totalorder %s12, 4
    // Predicated region
    $region25: #{_lambda_.6} parent=5 // pred_check
      %p240 = pneg %p239
    $region26: #{_lambda_.6} parent=5 // pred_check_branch
      %242 = sbr.rel (%p240) target = $region28
    $region27: #{_lambda_.6} parent=5 // pred_region
      // Predicated region
      $region29: #{_lambda_.6} parent=27 // pred_check
        %p243 = pneg %p46
      $region30: #{_lambda_.6} parent=27 // pred_check_branch
        %245 = sbr.rel (%p243) target = $region32
      $region31: #{_lambda_.6} parent=27 // pred_region
        %s246 = smul.u32 8, %s20
        %p247 = scmp.lt.s32.totalorder %s19, 1
        %s248 = scalar_select %p247, %s19, 1
        %p249 = scmp.lt.s32.totalorder %s246, 15
        %s250 = scalar_select %p249, %s246, 15
        %s251 = smul.addr %s250, 2
        %s252 = smul.addr %s248, 32
        %s253 = sadd.s32 %s251, %s252
        %s254 = smul.addr %s253, 4
        %s255 = scalar_lea.vmem %s0, %s254
        %s256 = smul.u32 8, %s20
      $region32: #{_lambda_.6} parent=27 // pred_fallthru
        _
      // Predicated region
      $region33: #{_lambda_.6} parent=27 // pred_check
        %p257 = pneg %p82
      $region34: #{_lambda_.6} parent=27 // pred_check_branch
        %259 = sbr.rel (%p257) target = $region36
      $region35: #{_lambda_.6} parent=27 // pred_region
        %s260 = smul.u32 %s20, 8
        %s261 = ssub.s32 %s260, 1
        %p262 = scmp.gt.s32.totalorder %s261, 0
        %s263 = scalar_select %p262, %s261, 0
        %p264 = scmp.lt.s32.totalorder %s19, 1
        %s265 = scalar_select %p264, %s19, 1
        %p266 = scmp.lt.s32.totalorder %s263, 15
        %s267 = scalar_select %p266, %s263, 15
        %s268 = smul.addr %s267, 2
        %s269 = smul.addr %s265, 32
        %s270 = sadd.s32 %s268, %s269
        %s271 = smul.addr %s270, 4
        %s272 = scalar_lea.vmem %s1, %s271
        %s273 = smul.u32 %s20, 8
        %s274 = ssub.s32 %s273, 1
        %p275 = scmp.gt.s32.totalorder %s274, 0
        %s276 = scalar_select %p275, %s274, 0
      $region36: #{_lambda_.6} parent=27 // pred_fallthru
        _
      // Predicated region
      $region37: #{_lambda_.6} parent=27 // pred_check
        %p277 = pneg %p118
      $region38: #{_lambda_.6} parent=27 // pred_check_branch
        %279 = sbr.rel (%p277) target = $region40
      $region39: #{_lambda_.6} parent=27 // pred_region
        %s280 = smul.u32 %s20, 8
        %s281 = sadd.s32 %s280, 8
        %p282 = scmp.lt.s32.totalorder %s281, 15
        %s283 = scalar_select %p282, %s281, 15
        %p284 = scmp.lt.s32.totalorder %s19, 1
        %s285 = scalar_select %p284, %s19, 1
        %p286 = scmp.lt.s32.totalorder %s283, 15
        %s287 = scalar_select %p286, %s283, 15
        %s288 = smul.addr %s287, 2
        %s289 = smul.addr %s285, 32
        %s290 = sadd.s32 %s288, %s289
        %s291 = smul.addr %s290, 4
        %s292 = scalar_lea.vmem %s2, %s291
        %s293 = smul.u32 %s20, 8
        %s294 = sadd.s32 %s293, 8
        %p295 = scmp.lt.s32.totalorder %s294, 15
        %s296 = scalar_select %p295, %s294, 15
      $region40: #{_lambda_.6} parent=27 // pred_fallthru
        _
    $region28: #{_lambda_.6} parent=5 // pred_fallthru
      _
    %p297 = scmp.le.s32.totalorder 1, %s12
    %p298 = scmp.lt.s32.totalorder %s12, 5
    %p299 = pnand %p297, %p298
    %p300 = pneg %p299
    // Predicated region
    $region41: #{_lambda_.6} parent=5 // pred_check
      _
    $region42: #{_lambda_.6} parent=5 // pred_check_branch
      %302 = sbr.rel (%p299) target = $region44
    $region43: #{_lambda_.6} parent=5 // pred_region
      %s303 = ssub.s32 %s12, 1
      %s304 = smul.u32 8, %s22
      %p305 = scmp.lt.s32.totalorder %s21, 1
      %s306 = scalar_select %p305, %s21, 1
      %p307 = scmp.lt.s32.totalorder %s304, 15
      %s308 = scalar_select %p307, %s304, 15
      %s309 = smul.addr %s308, 2
      %s310 = smul.addr %s306, 32
      %s311 = sadd.s32 %s309, %s310
      %s312 = smul.addr %s311, 4
      %s313 = scalar_lea.vmem %s0, %s312
      %p314 = pneg %p52
      %p315 = pneg %p49
      %s316 = smul.u32 %s22, 8
      %s317 = ssub.s32 %s316, 1
      %p318 = scmp.gt.s32.totalorder %s317, 0
      %s319 = scalar_select %p318, %s317, 0
      %p320 = scmp.lt.s32.totalorder %s21, 1
      %s321 = scalar_select %p320, %s21, 1
      %p322 = scmp.lt.s32.totalorder %s319, 15
      %s323 = scalar_select %p322, %s319, 15
      %s324 = smul.addr %s323, 2
      %s325 = smul.addr %s321, 32
      %s326 = sadd.s32 %s324, %s325
      %s327 = smul.addr %s326, 4
      %s328 = scalar_lea.vmem %s1, %s327
      %p329 = pneg %p88
      %p330 = pneg %p85
      %s331 = smul.u32 %s22, 8
      %s332 = sadd.s32 %s331, 8
      %p333 = scmp.lt.s32.totalorder %s332, 15
      %s334 = scalar_select %p333, %s332, 15
      %p335 = scmp.lt.s32.totalorder %s21, 1
      %s336 = scalar_select %p335, %s21, 1
      %p337 = scmp.lt.s32.totalorder %s334, 15
      %s338 = scalar_select %p337, %s334, 15
      %s339 = smul.addr %s338, 2
      %s340 = smul.addr %s336, 32
      %s341 = sadd.s32 %s339, %s340
      %s342 = smul.addr %s341, 4
      %s343 = scalar_lea.vmem %s2, %s342
      %p344 = pneg %p124
      %p345 = pneg %p121
      %p346 = pneg %p145
      %p347 = pneg %p142
      %p348 = pneg %p166
      %p349 = pneg %p163
      %p350 = pneg %p187
      %p351 = pneg %p184
      %p352 = pneg %p215
      %p353 = pneg %p212
      %s354 = smul.u32 8, %s22
      %p355 = scmp.lt.s32.totalorder %s21, 1
      %s356 = scalar_select %p355, %s21, 1
      %p357 = scmp.lt.s32.totalorder %s354, 15
      %s358 = scalar_select %p357, %s354, 15
      %s359 = smul.addr %s358, 2
      %s360 = smul.addr %s356, 32
      %s361 = sadd.s32 %s359, %s360
      %s362 = smul.addr %s361, 4
      %s363 = scalar_lea.vmem %s6, %s362
      %s364 = smul.u32 8, %s22
      %p365 = scmp.lt.s32.totalorder %s21, 1
      %s366 = scalar_select %p365, %s21, 1
      %p367 = scmp.lt.s32.totalorder %s364, 15
      %s368 = scalar_select %p367, %s364, 15
      %s369 = smul.addr %s368, 2
      %s370 = smul.addr %s366, 32
      %s371 = sadd.s32 %s369, %s370
      %s372 = smul.addr %s371, 4
      %s373 = scalar_lea.vmem %s0, %s372
      %s374 = smul.u32 8, %s22
      %s375 = smul.u32 %s22, 8
      %s376 = ssub.s32 %s375, 1
      %p377 = scmp.gt.s32.totalorder %s376, 0
      %s378 = scalar_select %p377, %s376, 0
      %p379 = scmp.lt.s32.totalorder %s21, 1
      %s380 = scalar_select %p379, %s21, 1
      %p381 = scmp.lt.s32.totalorder %s378, 15
      %s382 = scalar_select %p381, %s378, 15
      %s383 = smul.addr %s382, 2
      %s384 = smul.addr %s380, 32
      %s385 = sadd.s32 %s383, %s384
      %s386 = smul.addr %s385, 4
      %s387 = scalar_lea.vmem %s1, %s386
      %s388 = smul.u32 %s22, 8
      %s389 = ssub.s32 %s388, 1
      %p390 = scmp.gt.s32.totalorder %s389, 0
      %s391 = scalar_select %p390, %s389, 0
      %s392 = smul.u32 %s22, 8
      %s393 = sadd.s32 %s392, 8
      %p394 = scmp.lt.s32.totalorder %s393, 15
      %s395 = scalar_select %p394, %s393, 15
      %p396 = scmp.lt.s32.totalorder %s21, 1
      %s397 = scalar_select %p396, %s21, 1
      %p398 = scmp.lt.s32.totalorder %s395, 15
      %s399 = scalar_select %p398, %s395, 15
      %s400 = smul.addr %s399, 2
      %s401 = smul.addr %s397, 32
      %s402 = sadd.s32 %s400, %s401
      %s403 = smul.addr %s402, 4
      %s404 = scalar_lea.vmem %s2, %s403
      %s405 = smul.u32 %s22, 8
      %s406 = sadd.s32 %s405, 8
      %p407 = scmp.lt.s32.totalorder %s406, 15
      %s408 = scalar_select %p407, %s406, 15
      %s409 = smul.u32 8, %s22
      %p410 = scmp.lt.s32.totalorder %s21, 1
      %s411 = scalar_select %p410, %s21, 1
      %p412 = scmp.lt.s32.totalorder %s409, 15
      %s413 = scalar_select %p412, %s409, 15
      %s414 = smul.addr %s413, 2
      %s415 = smul.addr %s411, 32
      %s416 = sadd.s32 %s414, %s415
      %s417 = smul.addr %s416, 4
      %s418 = scalar_lea.vmem %s6, %s417
      %s419 = smul.u32 8, %s22
      %vm421 = vcmask 60416
      %422 = vst.msk [vmem:[#allocation2] sm:$0xf] %vm421, 0
      %423 = vst.msk [vmem:[#allocation2 + $0x4] sm:$0xf] %vm421, 0
      %424 = vst.msk [vmem:[#allocation2 + $0x8] sm:$0xf] %vm421, 0
      %425 = vst.msk [vmem:[#allocation2 + $0xc] sm:$0xf] %vm421, 0
      %426 = vst.msk [vmem:[#allocation2 + $0x10] sm:$0xf] %vm421, 0
      %427 = vst.msk [vmem:[#allocation2 + $0x14] sm:$0xf] %vm421, 0
      %428 = vst.msk [vmem:[#allocation2 + $0x18] sm:$0xf] %vm421, 0
      %429 = vst.msk [vmem:[#allocation2 + $0x1c] sm:$0xf] %vm421, 0
      %430 = vst.msk [vmem:[#allocation2 + $0x20] sm:$0xf] %vm421, 0
      %431 = vst.msk [vmem:[#allocation2 + $0x24] sm:$0xf] %vm421, 0
      %432 = vst.msk [vmem:[#allocation2 + $0x28] sm:$0xf] %vm421, 0
      %433 = vst.msk [vmem:[#allocation2 + $0x2c] sm:$0xf] %vm421, 0
      %434 = vst.msk [vmem:[#allocation2 + $0x30] sm:$0xf] %vm421, 0
      %435 = vst.msk [vmem:[#allocation2 + $0x34] sm:$0xf] %vm421, 0
      %436 = vst.msk [vmem:[#allocation2 + $0x38] sm:$0xf] %vm421, 0
      %437 = vst.msk [vmem:[#allocation2 + $0x3c] sm:$0xf] %vm421, 0
      %438 = vst.msk [vmem:[#allocation2 + $0x40] sm:$0xf] %vm421, 0
      %439 = vst.msk [vmem:[#allocation2 + $0x44] sm:$0xf] %vm421, 0
      %440 = vst.msk [vmem:[#allocation2 + $0x48] sm:$0xf] %vm421, 0
      %441 = vst.msk [vmem:[#allocation2 + $0x4c] sm:$0xf] %vm421, 0
      %442 = vst.msk [vmem:[#allocation2 + $0x50] sm:$0xf] %vm421, 0
      %443 = vst.msk [vmem:[#allocation2 + $0x54] sm:$0xf] %vm421, 0
      %444 = vst.msk [vmem:[#allocation2 + $0x58] sm:$0xf] %vm421, 0
      %vm445 = vcmask 58368
      %446 = vst.msk [vmem:[#allocation2 + $0x5c] sm:$0x3] %vm445, 0
      %p447 = scmp.gt.s32.totalorder %s22, 0
      // Predicated region
      $region45: #{_lambda_.6} parent=43 // pred_check
        %p448 = pneg %p447
      $region46: #{_lambda_.6} parent=43 // pred_check_branch
        %450 = sbr.rel (%p448) target = $region48
      $region47: #{_lambda_.6} parent=43 // pred_region
        %v451 = vld [vmem:[%s387] sm:$0xf]
        %v452 = vld [vmem:[%s387 + $0x4] sm:$0xf]
        %vm453 = vsmask.f32 256
        %vm454 = vsmask.f32 4368
        %vm455 = vmor %vm453, %vm454
        %v457 = vshrl.u32 %v451, 16
        %v459 = vrot.slane %v457, 7
        %v460 = vshll.u32 %v451, 16
        %v462 = vor.u32 %v459, %v460
        %v463 = vrot.slane %v459, 4
        %v465 = vshrl.u32 %v452, 16
        %v467 = vrot.slane %v465, 7
        %v468 = vshll.u32 %v452, 16
        %v470 = vor.u32 %v467, %v468
        %v471 = vsel %vm455, %v463, %v470
        %v472 = vrot.slane %v467, 4
        %vm476 = vcmask 60416
        %vm477 = vsmask.f32 7938
        %vm478 = vmand %vm476, %vm477
        %v479 = vld [vmem:[#allocation2] sm:$0xf]
        %v480 = vsel %vm478, %v462, %v479
        %481 = vst [vmem:[#allocation2] sm:$0xf] %v480
        %482 = vst.msk [vmem:[#allocation2 + $0x4] sm:$0xf] %vm421, %v471
        %vm483 = vcmask 57344
        %vm484 = vmand %vm483, %vm453
        %v485 = vld [vmem:[#allocation2 + $0x8] sm:$0x1]
        %v486 = vsel %vm484, %v472, %v485
        %487 = vst [vmem:[#allocation2 + $0x8] sm:$0x1] %v486
      $region48: #{_lambda_.6} parent=43 // pred_fallthru
        _
      %v488 = vld [vmem:[%s373] sm:$0xf]
      %v489 = vld [vmem:[%s373 + $0x4] sm:$0xf]
      %vm490 = vsmask.f32 1280
      %vm491 = vsmask.f32 5392
      %vm492 = vmor %vm490, %vm491
      %v494 = vshrl.u32 %v488, 16
      %v496 = vrot.slane %v494, 6
      %v497 = vshll.u32 %v488, 16
      %v499 = vrot.slane %v497, 7
      %v500 = vor.u32 %v496, %v499
      %v501 = vrot.slane %v500, 4
      %v503 = vshrl.u32 %v489, 16
      %v505 = vrot.slane %v503, 6
      %v506 = vshll.u32 %v489, 16
      %v508 = vrot.slane %v506, 7
      %v509 = vor.u32 %v505, %v508
      %v510 = vsel %vm492, %v501, %v509
      %v511 = vrot.slane %v509, 4
      %vm515 = vcmask 60417
      %vm516 = vsmask.f32 7942
      %vm517 = vmand %vm515, %vm516
      %v518 = vld [vmem:[#allocation2 + $0x8] sm:$0xe]
      %v519 = vsel %vm517, %v500, %v518
      %520 = vst [vmem:[#allocation2 + $0x8] sm:$0xe] %v519
      %521 = vst.msk [vmem:[#allocation2 + $0xc] sm:$0xf] %vm421, %v510
      %vm522 = vcmask 58368
      %vm523 = vmand %vm522, %vm490
      %v524 = vld [vmem:[#allocation2 + $0x10] sm:$0x3]
      %v525 = vsel %vm523, %v511, %v524
      %526 = vst [vmem:[#allocation2 + $0x10] sm:$0x3] %v525
      %s527 = scalar_lea.vmem %s373, 8
      %v528 = vld [vmem:[%s527] sm:$0xf]
      %v529 = vld [vmem:[%s527 + $0x4] sm:$0xf]
      %vm530 = vsmask.f32 2304
      %vm531 = vsmask.f32 6416
      %vm532 = vmor %vm530, %vm531
      %v534 = vshrl.u32 %v528, 16
      %v536 = vrot.slane %v534, 5
      %v537 = vshll.u32 %v528, 16
      %v539 = vrot.slane %v537, 6
      %v540 = vor.u32 %v536, %v539
      %v541 = vrot.slane %v540, 4
      %v543 = vshrl.u32 %v529, 16
      %v545 = vrot.slane %v543, 5
      %v546 = vshll.u32 %v529, 16
      %v548 = vrot.slane %v546, 6
      %v549 = vor.u32 %v545, %v548
      %v550 = vsel %vm532, %v541, %v549
      %v551 = vrot.slane %v549, 4
      %vm555 = vcmask 60418
      %vm556 = vsmask.f32 7946
      %vm557 = vmand %vm555, %vm556
      %v558 = vld [vmem:[#allocation2 + $0x10] sm:$0xc]
      %v559 = vsel %vm557, %v540, %v558
      %560 = vst [vmem:[#allocation2 + $0x10] sm:$0xc] %v559
      %561 = vst.msk [vmem:[#allocation2 + $0x14] sm:$0xf] %vm421, %v550
      %vm562 = vcmask 59392
      %vm563 = vmand %vm562, %vm530
      %v564 = vld [vmem:[#allocation2 + $0x18] sm:$0x7]
      %v565 = vsel %vm563, %v551, %v564
      %566 = vst [vmem:[#allocation2 + $0x18] sm:$0x7] %v565
      %s567 = scalar_lea.vmem %s373, 16
      %v568 = vld [vmem:[%s567] sm:$0xf]
      %v569 = vld [vmem:[%s567 + $0x4] sm:$0xf]
      %vm570 = vsmask.f32 3328
      %vm571 = vsmask.f32 7440
      %vm572 = vmor %vm570, %vm571
      %v574 = vshll.u32 %v568, 16
      %v576 = vrot.slane %v574, 5
      %v577 = vshrl.u32 %v568, 16
      %v579 = vrot.slane %v577, 4
      %v580 = vor.u32 %v579, %v576
      %v581 = vrot.slane %v580, 4
      %v583 = vshll.u32 %v569, 16
      %v585 = vrot.slane %v583, 5
      %v586 = vsel %vm572, %v581, %v585
      %v587 = vshrl.u32 %v569, 16
      %v589 = vrot.slane %v587, 4
      %v590 = vor.u32 %v589, %v585
      %v591 = vrot.slane %v590, 4
      %vm595 = vcmask 60419
      %vm596 = vsmask.f32 7950
      %vm597 = vmand %vm595, %vm596
      %v598 = vld [vmem:[#allocation2 + $0x18] sm:$0x8]
      %v599 = vsel %vm597, %v576, %v598
      %600 = vst [vmem:[#allocation2 + $0x18] sm:$0x8] %v599
      %601 = vst.msk [vmem:[#allocation2 + $0x1c] sm:$0xf] %vm421, %v586
      %vm602 = vcmask 60416
      %vm603 = vmand %vm602, %vm570
      %v604 = vld [vmem:[#allocation2 + $0x20] sm:$0xf]
      %v605 = vsel %vm603, %v591, %v604
      %606 = vst [vmem:[#allocation2 + $0x20] sm:$0xf] %v605
      %s607 = scalar_lea.vmem %s373, 24
      %v608 = vld [vmem:[%s607] sm:$0xf]
      %v609 = vld [vmem:[%s607 + $0x4] sm:$0xf]
      %vm610 = vsmask.f32 256
      %vm611 = vsmask.f32 4368
      %vm612 = vmor %vm610, %vm611
      %v614 = vshrl.u32 %v608, 16
      %v616 = vrot.slane %v614, 7
      %v617 = vshll.u32 %v608, 16
      %v619 = vor.u32 %v616, %v617
      %v620 = vrot.slane %v616, 4
      %v622 = vshrl.u32 %v609, 16
      %v624 = vrot.slane %v622, 7
      %v625 = vshll.u32 %v609, 16
      %v627 = vor.u32 %v624, %v625
      %v628 = vsel %vm612, %v620, %v627
      %v629 = vrot.slane %v624, 4
      %vm633 = vsmask.f32 7938
      %vm634 = vmand %vm602, %vm633
      %v635 = vld [vmem:[#allocation2 + $0x24] sm:$0xf]
      %v636 = vsel %vm634, %v619, %v635
      %637 = vst [vmem:[#allocation2 + $0x24] sm:$0xf] %v636
      %638 = vst.msk [vmem:[#allocation2 + $0x28] sm:$0xf] %vm421, %v628
      %vm639 = vcmask 57344
      %vm640 = vmand %vm639, %vm610
      %v641 = vld [vmem:[#allocation2 + $0x2c] sm:$0x1]
      %v642 = vsel %vm640, %v629, %v641
      %643 = vst [vmem:[#allocation2 + $0x2c] sm:$0x1] %v642
      %s644 = scalar_lea.vmem %s373, 32
      %v645 = vld [vmem:[%s644] sm:$0xf]
      %v646 = vld [vmem:[%s644 + $0x4] sm:$0xf]
      %v648 = vshrl.u32 %v645, 16
      %v650 = vrot.slane %v648, 6
      %v651 = vshll.u32 %v645, 16
      %v653 = vrot.slane %v651, 7
      %v654 = vor.u32 %v650, %v653
      %v655 = vrot.slane %v654, 4
      %v657 = vshrl.u32 %v646, 16
      %v659 = vrot.slane %v657, 6
      %v660 = vshll.u32 %v646, 16
      %v662 = vrot.slane %v660, 7
      %v663 = vor.u32 %v659, %v662
      %v664 = vsel %vm492, %v655, %v663
      %v665 = vrot.slane %v663, 4
      %v669 = vld [vmem:[#allocation2 + $0x2c] sm:$0xe]
      %v670 = vsel %vm517, %v654, %v669
      %671 = vst [vmem:[#allocation2 + $0x2c] sm:$0xe] %v670
      %672 = vst.msk [vmem:[#allocation2 + $0x30] sm:$0xf] %vm421, %v664
      %v673 = vld [vmem:[#allocation2 + $0x34] sm:$0x3]
      %v674 = vsel %vm523, %v665, %v673
      %675 = vst [vmem:[#allocation2 + $0x34] sm:$0x3] %v674
      %s676 = scalar_lea.vmem %s373, 40
      %v677 = vld [vmem:[%s676] sm:$0xf]
      %v678 = vld [vmem:[%s676 + $0x4] sm:$0xf]
      %v680 = vshrl.u32 %v677, 16
      %v682 = vrot.slane %v680, 5
      %v683 = vshll.u32 %v677, 16
      %v685 = vrot.slane %v683, 6
      %v686 = vor.u32 %v682, %v685
      %v687 = vrot.slane %v686, 4
      %v689 = vshrl.u32 %v678, 16
      %v691 = vrot.slane %v689, 5
      %v692 = vshll.u32 %v678, 16
      %v694 = vrot.slane %v692, 6
      %v695 = vor.u32 %v691, %v694
      %v696 = vsel %vm532, %v687, %v695
      %v697 = vrot.slane %v695, 4
      %v701 = vld [vmem:[#allocation2 + $0x34] sm:$0xc]
      %v702 = vsel %vm557, %v686, %v701
      %703 = vst [vmem:[#allocation2 + $0x34] sm:$0xc] %v702
      %704 = vst.msk [vmem:[#allocation2 + $0x38] sm:$0xf] %vm421, %v696
      %v705 = vld [vmem:[#allocation2 + $0x3c] sm:$0x7]
      %v706 = vsel %vm563, %v697, %v705
      %707 = vst [vmem:[#allocation2 + $0x3c] sm:$0x7] %v706
      %s708 = scalar_lea.vmem %s373, 48
      %v709 = vld [vmem:[%s708] sm:$0xf]
      %v710 = vld [vmem:[%s708 + $0x4] sm:$0xf]
      %v712 = vshll.u32 %v709, 16
      %v714 = vrot.slane %v712, 5
      %v715 = vshrl.u32 %v709, 16
      %v717 = vrot.slane %v715, 4
      %v718 = vor.u32 %v717, %v714
      %v719 = vrot.slane %v718, 4
      %v721 = vshll.u32 %v710, 16
      %v723 = vrot.slane %v721, 5
      %v724 = vsel %vm572, %v719, %v723
      %v725 = vshrl.u32 %v710, 16
      %v727 = vrot.slane %v725, 4
      %v728 = vor.u32 %v727, %v723
      %v729 = vrot.slane %v728, 4
      %v733 = vld [vmem:[#allocation2 + $0x3c] sm:$0x8]
      %v734 = vsel %vm597, %v714, %v733
      %735 = vst [vmem:[#allocation2 + $0x3c] sm:$0x8] %v734
      %736 = vst.msk [vmem:[#allocation2 + $0x40] sm:$0xf] %vm421, %v724
      %v737 = vld [vmem:[#allocation2 + $0x44] sm:$0xf]
      %v738 = vsel %vm603, %v729, %v737
      %739 = vst [vmem:[#allocation2 + $0x44] sm:$0xf] %v738
      %s740 = scalar_lea.vmem %s373, 56
      %v741 = vld [vmem:[%s740] sm:$0xf]
      %v742 = vld [vmem:[%s740 + $0x4] sm:$0xf]
      %v744 = vshrl.u32 %v741, 16
      %v746 = vrot.slane %v744, 7
      %v747 = vshll.u32 %v741, 16
      %v749 = vor.u32 %v746, %v747
      %v750 = vrot.slane %v746, 4
      %v752 = vshrl.u32 %v742, 16
      %v754 = vrot.slane %v752, 7
      %v755 = vshll.u32 %v742, 16
      %v757 = vor.u32 %v754, %v755
      %v758 = vsel %vm612, %v750, %v757
      %v759 = vrot.slane %v754, 4
      %v763 = vld [vmem:[#allocation2 + $0x48] sm:$0xf]
      %v764 = vsel %vm634, %v749, %v763
      %765 = vst [vmem:[#allocation2 + $0x48] sm:$0xf] %v764
      %766 = vst.msk [vmem:[#allocation2 + $0x4c] sm:$0xf] %vm421, %v758
      %v767 = vld [vmem:[#allocation2 + $0x50] sm:$0x1]
      %v768 = vsel %vm640, %v759, %v767
      %769 = vst [vmem:[#allocation2 + $0x50] sm:$0x1] %v768
      %p770 = scmp.lt.s32.totalorder %s22, 1
      // Predicated region
      $region49: #{_lambda_.6} parent=43 // pred_check
        %p771 = pneg %p770
      $region50: #{_lambda_.6} parent=43 // pred_check_branch
        %773 = sbr.rel (%p771) target = $region52
      $region51: #{_lambda_.6} parent=43 // pred_region
        %v774 = vld [vmem:[%s404] sm:$0xf]
        %v775 = vld [vmem:[%s404 + $0x4] sm:$0xf]
        %v777 = vshrl.u32 %v774, 16
        %v779 = vrot.slane %v777, 6
        %v780 = vshll.u32 %v774, 16
        %v782 = vrot.slane %v780, 7
        %v783 = vor.u32 %v779, %v782
        %v784 = vrot.slane %v783, 4
        %v786 = vshrl.u32 %v775, 16
        %v788 = vrot.slane %v786, 6
        %v789 = vshll.u32 %v775, 16
        %v791 = vrot.slane %v789, 7
        %v792 = vor.u32 %v788, %v791
        %v793 = vsel %vm492, %v784, %v792
        %v794 = vrot.slane %v792, 4
        %v798 = vld [vmem:[#allocation2 + $0x50] sm:$0xe]
        %v799 = vsel %vm517, %v783, %v798
        %800 = vst [vmem:[#allocation2 + $0x50] sm:$0xe] %v799
        %801 = vst.msk [vmem:[#allocation2 + $0x54] sm:$0xf] %vm421, %v793
        %v802 = vld [vmem:[#allocation2 + $0x58] sm:$0x3]
        %v803 = vsel %vm523, %v794, %v802
        %804 = vst [vmem:[#allocation2 + $0x58] sm:$0x3] %v803
      $region52: #{_lambda_.6} parent=43 // pred_fallthru
        _
      %v805 = vld [vmem:[#allocation2] sm:$0xf]
      %v806 = vld [vmem:[#allocation2 + $0x4] sm:$0xf]
      %v807 = vld [vmem:[#allocation2 + $0x8] sm:$0xf]
      %v808 = vld [vmem:[#allocation2 + $0xc] sm:$0xf]
      %v809 = vld [vmem:[#allocation2 + $0x10] sm:$0xf]
      %v810 = vld [vmem:[#allocation2 + $0x14] sm:$0xf]
      %v811 = vld [vmem:[#allocation2 + $0x18] sm:$0xf]
      %v812 = vld [vmem:[#allocation2 + $0x1c] sm:$0xf]
      %v813 = vld [vmem:[#allocation2 + $0x20] sm:$0xf]
      %v814 = vld [vmem:[#allocation2 + $0x24] sm:$0xf]
      %v815 = vld [vmem:[#allocation2 + $0x28] sm:$0xf]
      %v816 = vld [vmem:[#allocation2 + $0x2c] sm:$0xf]
      %v817 = vld [vmem:[#allocation2 + $0x30] sm:$0xf]
      %v818 = vld [vmem:[#allocation2 + $0x34] sm:$0xf]
      %v819 = vld [vmem:[#allocation2 + $0x38] sm:$0xf]
      %v820 = vld [vmem:[#allocation2 + $0x3c] sm:$0xf]
      %v821 = vld [vmem:[#allocation2 + $0x40] sm:$0xf]
      %v822 = vld [vmem:[#allocation2 + $0x44] sm:$0xf]
      %v823 = vld [vmem:[%s3] sm:$0xf]
      %v824 = vld [vmem:[#allocation2 + $0x48] sm:$0x1]
      %s825 = scalar_lea.vmem %s3, 4
      %v826 = vld [vmem:[%s825] sm:$0xf]
      %v846 = vunpack.c.l.b16 %v805
      %v847 = vunpack.c.l.b16 %v806
      %v848 = vunpack.c.l.b16 %v807
      %v849 = vunpack.c.l.b16 %v808
      %v850 = vunpack.c.l.b16 %v809
      %v851 = vunpack.c.l.b16 %v810
      %v852 = vunpack.c.l.b16 %v811
      %v853 = vunpack.c.l.b16 %v812
      %v854 = vunpack.c.l.b16 %v813
      %v855 = vunpack.c.l.b16 %v814
      %v856 = vunpack.c.l.b16 %v815
      %v857 = vunpack.c.l.b16 %v816
      %v858 = vunpack.c.l.b16 %v817
      %v859 = vunpack.c.l.b16 %v818
      %v860 = vunpack.c.l.b16 %v819
      %v861 = vunpack.c.l.b16 %v820
      %v862 = vunpack.c.l.b16 %v821
      %v863 = vunpack.c.l.b16 %v822
      %v864 = vunpack.c.l.b16 %v824
      %v865 = vpack.c.b16 %v847, %v846
      %v866 = vpack.c.b16 %v849, %v848
      %v867 = vpack.c.b16 %v851, %v850
      %v868 = vpack.c.b16 %v853, %v852
      %v869 = vpack.c.b16 %v855, %v854
      %v870 = vpack.c.b16 %v857, %v856
      %v871 = vpack.c.b16 %v859, %v858
      %v872 = vpack.c.b16 %v861, %v860
      %v873 = vpack.c.b16 %v863, %v862
      %v874 = vpack.c.b16 %v864, %v864
      %vm875 = vsmask.f32 7424
      %v877 = vshrl.u32 %v865, 16
      %v879 = vshll.u32 %v865, 16
      %v881 = vrot.slane %v879, 1
      %v882 = vor.u32 %v877, %v881
      %v884 = vshll.u32 %v866, 16
      %v886 = vrot.slane %v884, 1
      %v887 = vsel %vm875, %v882, %v886
      %v888 = vshrl.u32 %v866, 16
      %v890 = vor.u32 %v888, %v886
      %v892 = vshll.u32 %v867, 16
      %v894 = vrot.slane %v892, 1
      %v895 = vsel %vm875, %v890, %v894
      %v896 = vshrl.u32 %v867, 16
      %v898 = vor.u32 %v896, %v894
      %v900 = vshll.u32 %v868, 16
      %v902 = vrot.slane %v900, 1
      %v903 = vsel %vm875, %v898, %v902
      %v904 = vshrl.u32 %v868, 16
      %v906 = vor.u32 %v904, %v902
      %v908 = vshll.u32 %v869, 16
      %v910 = vrot.slane %v908, 1
      %v911 = vsel %vm875, %v906, %v910
      %v912 = vshrl.u32 %v869, 16
      %v914 = vor.u32 %v912, %v910
      %v916 = vshll.u32 %v870, 16
      %v918 = vrot.slane %v916, 1
      %v919 = vsel %vm875, %v914, %v918
      %v920 = vshrl.u32 %v870, 16
      %v922 = vor.u32 %v920, %v918
      %v924 = vshll.u32 %v871, 16
      %v926 = vrot.slane %v924, 1
      %v927 = vsel %vm875, %v922, %v926
      %v928 = vshrl.u32 %v871, 16
      %v930 = vor.u32 %v928, %v926
      %v932 = vshll.u32 %v872, 16
      %v934 = vrot.slane %v932, 1
      %v935 = vsel %vm875, %v930, %v934
      %v936 = vshrl.u32 %v872, 16
      %v938 = vor.u32 %v936, %v934
      %v940 = vshll.u32 %v873, 16
      %v942 = vrot.slane %v940, 1
      %v943 = vsel %vm875, %v938, %v942
      %v944 = vshrl.u32 %v873, 16
      %v946 = vor.u32 %v944, %v942
      %v948 = vshll.u32 %v874, 16
      %v950 = vrot.slane %v948, 1
      %v951 = vsel %vm875, %v946, %v950
      %vm952 = vcmask 64512
      %v954 = vsel %vm952, %v887, 0
      %v957 = vsel %vm952, %v895, 0
      %v960 = vsel %vm952, %v903, 0
      %v963 = vsel %vm952, %v911, 0
      %v966 = vsel %vm952, %v919, 0
      %v969 = vsel %vm952, %v927, 0
      %v972 = vsel %vm952, %v935, 0
      %v975 = vsel %vm952, %v943, 0
      %v978 = vsel %vm952, %v951, 0
      %vm980 = vcmask 1043456
      %v982 = vsel %vm980, %v826, 0
      %984 = vmatprep.subr.bf16.mxu0 0
      %985 = vmatpush1.bf16.msra.mxu0 %v982
      %986 = vmatprep.subr.bf16.mxu0 0
      %987 = vmatpush1.bf16.msra.mxu0 0
      %988 = vmatprep.subr.bf16.mxu0 0
      %989 = vmatpush1.bf16.msra.mxu0 0
      %990 = vmatprep.subr.bf16.mxu0 0
      %991 = vmatpush1.bf16.msra.mxu0 0
      %992 = vmatprep.subr.bf16.mxu0 0
      %993 = vmatpush1.bf16.msra.mxu0 0
      %994 = vmatprep.subr.bf16.mxu0 0
      %995 = vmatpush1.bf16.msra.mxu0 0
      %996 = vmatprep.subr.bf16.mxu0 0
      %997 = vmatpush1.bf16.msra.mxu0 0
      %998 = vmatprep.subr.bf16.mxu0 0
      %999 = vmatpush1.bf16.msra.mxu0 0
      %1000 = vmatprep.subr.bf16.mxu0 0
      %1001 = vmatpush1.bf16.msra.mxu0 0
      %1002 = vmatprep.subr.bf16.mxu0 0
      %1003 = vmatpush1.bf16.msra.mxu0 0
      %1004 = vmatprep.subr.bf16.mxu0 0
      %1005 = vmatpush1.bf16.msra.mxu0 0
      %1006 = vmatprep.subr.bf16.mxu0 0
      %1007 = vmatpush1.bf16.msra.mxu0 0
      %1008 = vmatprep.subr.bf16.mxu0 0
      %1009 = vmatpush1.bf16.msra.mxu0 0
      %1010 = vmatprep.subr.bf16.mxu0 0
      %1011 = vmatpush1.bf16.msra.mxu0 0
      %1012 = vmatprep.subr.bf16.mxu0 0
      %1013 = vmatpush1.bf16.msra.mxu0 0
      %1014 = vmatprep.subr.bf16.mxu0 0
      %1015 = vmatpush1.bf16.msra.mxu0 0
      %1016 = vmatprep.mubr.bf16.mxu0 0
      %1017 = vmatmul.mubr.bf16.gmra.mrb[0].mxu0 %v954
      %v1018 = vpop.f32.mrb[0].mxu0
      %v1019 = vadd.f32 0.0, %v1018
      %v1020 = vpop.f32.mrb[0].mxu0
      %v1021 = vpop.f32.mrb[0].mxu0
      %v1022 = vadd.f32 0.0, %v1021
      %v1023 = vpop.f32.mrb[0].mxu0
      %1024 = vmatprep.mubr.bf16.mxu0 0
      %1025 = vmatmul.mubr.bf16.gmra.mrb[0].mxu0 %v957
      %v1026 = vpop.f32.mrb[0].mxu0
      %v1027 = vadd.f32 0.0, %v1026
      %v1028 = vpop.f32.mrb[0].mxu0
      %v1029 = vpop.f32.mrb[0].mxu0
      %v1030 = vadd.f32 0.0, %v1029
      %v1031 = vpop.f32.mrb[0].mxu0
      %1032 = vmatprep.mubr.bf16.mxu0 0
      %1033 = vmatmul.mubr.bf16.gmra.mrb[0].mxu0 %v960
      %v1034 = vpop.f32.mrb[0].mxu0
      %v1035 = vadd.f32 0.0, %v1034
      %v1036 = vpop.f32.mrb[0].mxu0
      %v1037 = vpop.f32.mrb[0].mxu0
      %v1038 = vadd.f32 0.0, %v1037
      %v1039 = vpop.f32.mrb[0].mxu0
      %1040 = vmatprep.mubr.bf16.mxu0 0
      %1041 = vmatmul.mubr.bf16.gmra.mrb[0].mxu0 %v963
      %v1042 = vpop.f32.mrb[0].mxu0
      %v1043 = vadd.f32 0.0, %v1042
      %v1044 = vpop.f32.mrb[0].mxu0
      %v1045 = vpop.f32.mrb[0].mxu0
      %v1046 = vadd.f32 0.0, %v1045
      %v1047 = vpop.f32.mrb[0].mxu0
      %1048 = vmatprep.mubr.bf16.mxu0 0
      %1049 = vmatmul.mubr.bf16.gmra.mrb[0].mxu0 %v966
      %v1050 = vpop.f32.mrb[0].mxu0
      %v1051 = vadd.f32 0.0, %v1050
      %v1052 = vpop.f32.mrb[0].mxu0
      %v1053 = vpop.f32.mrb[0].mxu0
      %v1054 = vadd.f32 0.0, %v1053
      %v1055 = vpop.f32.mrb[0].mxu0
      %1056 = vmatprep.mubr.bf16.mxu0 0
      %1057 = vmatmul.mubr.bf16.gmra.mrb[0].mxu0 %v969
      %v1058 = vpop.f32.mrb[0].mxu0
      %v1059 = vadd.f32 0.0, %v1058
      %v1060 = vpop.f32.mrb[0].mxu0
      %v1061 = vpop.f32.mrb[0].mxu0
      %v1062 = vadd.f32 0.0, %v1061
      %v1063 = vpop.f32.mrb[0].mxu0
      %1064 = vmatprep.mubr.bf16.mxu0 0
      %1065 = vmatmul.mubr.bf16.gmra.mrb[0].mxu0 %v972
      %v1066 = vpop.f32.mrb[0].mxu0
      %v1067 = vadd.f32 0.0, %v1066
      %v1068 = vpop.f32.mrb[0].mxu0
      %v1069 = vpop.f32.mrb[0].mxu0
      %v1070 = vadd.f32 0.0, %v1069
      %v1071 = vpop.f32.mrb[0].mxu0
      %1072 = vmatprep.mubr.bf16.mxu0 0
      %1073 = vmatmul.mubr.bf16.gmra.mrb[0].mxu0 %v975
      %v1074 = vpop.f32.mrb[0].mxu0
      %v1075 = vadd.f32 0.0, %v1074
      %v1076 = vpop.f32.mrb[0].mxu0
      %v1077 = vpop.f32.mrb[0].mxu0
      %v1078 = vadd.f32 0.0, %v1077
      %v1079 = vpop.f32.mrb[0].mxu0
      %1080 = vmatprep.mubr.bf16.mxu0 0
      %1081 = vmatmul.mubr.bf16.gmra.mrb[0].mxu0 %v978
      %v1082 = vpop.f32.mrb[0].mxu0
      %v1083 = vadd.f32 0.0, %v1082
      %v1084 = vpop.f32.mrb[0].mxu0
      %v1085 = vpop.f32.mrb[0].mxu0
      %v1086 = vadd.f32 0.0, %v1085
      %v1087 = vpop.f32.mrb[0].mxu0
      %1088 = vdwg.mxu0
      %v1089 = vsel %vm952, %v865, 0
      %v1091 = vsel %vm952, %v866, 0
      %v1093 = vsel %vm952, %v867, 0
      %v1095 = vsel %vm952, %v868, 0
      %v1097 = vsel %vm952, %v869, 0
      %v1099 = vsel %vm952, %v870, 0
      %v1101 = vsel %vm952, %v871, 0
      %v1103 = vsel %vm952, %v872, 0
      %v1105 = vsel %vm952, %v873, 0
      %v1108 = vsel %vm980, %v823, 0
      %1110 = vmatprep.subr.bf16.mxu0 0
      %1111 = vmatpush1.bf16.msra.mxu0 %v1108
      %1112 = vmatprep.subr.bf16.mxu0 0
      %1113 = vmatpush1.bf16.msra.mxu0 0
      %1114 = vmatprep.subr.bf16.mxu0 0
      %1115 = vmatpush1.bf16.msra.mxu0 0
      %1116 = vmatprep.subr.bf16.mxu0 0
      %1117 = vmatpush1.bf16.msra.mxu0 0
      %1118 = vmatprep.subr.bf16.mxu0 0
      %1119 = vmatpush1.bf16.msra.mxu0 0
      %1120 = vmatprep.subr.bf16.mxu0 0
      %1121 = vmatpush1.bf16.msra.mxu0 0
      %1122 = vmatprep.subr.bf16.mxu0 0
      %1123 = vmatpush1.bf16.msra.mxu0 0
      %1124 = vmatprep.subr.bf16.mxu0 0
      %1125 = vmatpush1.bf16.msra.mxu0 0
      %1126 = vmatprep.subr.bf16.mxu0 0
      %1127 = vmatpush1.bf16.msra.mxu0 0
      %1128 = vmatprep.subr.bf16.mxu0 0
      %1129 = vmatpush1.bf16.msra.mxu0 0
      %1130 = vmatprep.subr.bf16.mxu0 0
      %1131 = vmatpush1.bf16.msra.mxu0 0
      %1132 = vmatprep.subr.bf16.mxu0 0
      %1133 = vmatpush1.bf16.msra.mxu0 0
      %1134 = vmatprep.subr.bf16.mxu0 0
      %1135 = vmatpush1.bf16.msra.mxu0 0
      %1136 = vmatprep.subr.bf16.mxu0 0
      %1137 = vmatpush1.bf16.msra.mxu0 0
      %1138 = vmatprep.subr.bf16.mxu0 0
      %1139 = vmatpush1.bf16.msra.mxu0 0
      %1140 = vmatprep.subr.bf16.mxu0 0
      %1141 = vmatpush1.bf16.msra.mxu0 0
      %1142 = vmatprep.mubr.bf16.mxu0 0
      %1143 = vmatmul.mubr.bf16.gmra.mrb[0].mxu0 %v1089
      %v1144 = vpop.f32.mrb[0].mxu0
      %v1145 = vadd.f32 %v1019, %v1144
      %v1146 = vpop.f32.mrb[0].mxu0
      %v1147 = vpop.f32.mrb[0].mxu0
      %v1148 = vadd.f32 %v1022, %v1147
      %v1149 = vpop.f32.mrb[0].mxu0
      %1150 = vmatprep.mubr.bf16.mxu0 0
      %1151 = vmatmul.mubr.bf16.gmra.mrb[0].mxu0 %v1091
      %v1152 = vpop.f32.mrb[0].mxu0
      %v1153 = vadd.f32 %v1027, %v1152
      %v1154 = vpop.f32.mrb[0].mxu0
      %v1155 = vpop.f32.mrb[0].mxu0
      %v1156 = vadd.f32 %v1030, %v1155
      %v1157 = vpop.f32.mrb[0].mxu0
      %1158 = vmatprep.mubr.bf16.mxu0 0
      %1159 = vmatmul.mubr.bf16.gmra.mrb[0].mxu0 %v1093
      %v1160 = vpop.f32.mrb[0].mxu0
      %v1161 = vadd.f32 %v1035, %v1160
      %v1162 = vpop.f32.mrb[0].mxu0
      %v1163 = vpop.f32.mrb[0].mxu0
      %v1164 = vadd.f32 %v1038, %v1163
      %v1165 = vpop.f32.mrb[0].mxu0
      %1166 = vmatprep.mubr.bf16.mxu0 0
      %1167 = vmatmul.mubr.bf16.gmra.mrb[0].mxu0 %v1095
      %v1168 = vpop.f32.mrb[0].mxu0
      %v1169 = vadd.f32 %v1043, %v1168
      %v1170 = vpop.f32.mrb[0].mxu0
      %v1171 = vpop.f32.mrb[0].mxu0
      %v1172 = vadd.f32 %v1046, %v1171
      %v1173 = vpop.f32.mrb[0].mxu0
      %1174 = vmatprep.mubr.bf16.mxu0 0
      %1175 = vmatmul.mubr.bf16.gmra.mrb[0].mxu0 %v1097
      %v1176 = vpop.f32.mrb[0].mxu0
      %v1177 = vadd.f32 %v1051, %v1176
      %v1178 = vpop.f32.mrb[0].mxu0
      %v1179 = vpop.f32.mrb[0].mxu0
      %v1180 = vadd.f32 %v1054, %v1179
      %v1181 = vpop.f32.mrb[0].mxu0
      %1182 = vmatprep.mubr.bf16.mxu0 0
      %1183 = vmatmul.mubr.bf16.gmra.mrb[0].mxu0 %v1099
      %v1184 = vpop.f32.mrb[0].mxu0
      %v1185 = vadd.f32 %v1059, %v1184
      %v1186 = vpop.f32.mrb[0].mxu0
      %v1187 = vpop.f32.mrb[0].mxu0
      %v1188 = vadd.f32 %v1062, %v1187
      %v1189 = vpop.f32.mrb[0].mxu0
      %1190 = vmatprep.mubr.bf16.mxu0 0
      %1191 = vmatmul.mubr.bf16.gmra.mrb[0].mxu0 %v1101
      %v1192 = vpop.f32.mrb[0].mxu0
      %v1193 = vadd.f32 %v1067, %v1192
      %v1194 = vpop.f32.mrb[0].mxu0
      %v1195 = vpop.f32.mrb[0].mxu0
      %v1196 = vadd.f32 %v1070, %v1195
      %v1197 = vpop.f32.mrb[0].mxu0
      %1198 = vmatprep.mubr.bf16.mxu0 0
      %1199 = vmatmul.mubr.bf16.gmra.mrb[0].mxu0 %v1103
      %v1200 = vpop.f32.mrb[0].mxu0
      %v1201 = vadd.f32 %v1075, %v1200
      %v1202 = vpop.f32.mrb[0].mxu0
      %v1203 = vpop.f32.mrb[0].mxu0
      %v1204 = vadd.f32 %v1078, %v1203
      %v1205 = vpop.f32.mrb[0].mxu0
      %1206 = vmatprep.mubr.bf16.mxu0 0
      %1207 = vmatmul.mubr.bf16.gmra.mrb[0].mxu0 %v1105
      %v1208 = vpop.f32.mrb[0].mxu0
      %v1209 = vadd.f32 %v1083, %v1208
      %v1210 = vpop.f32.mrb[0].mxu0
      %v1211 = vpop.f32.mrb[0].mxu0
      %v1212 = vadd.f32 %v1086, %v1211
      %v1213 = vpop.f32.mrb[0].mxu0
      %1214 = vdwg.mxu0
      %v1215 = vld [vmem:[#allocation2] sm:$0xe]
      %s1216 = scalar_lea.vmem %s3, 8
      %v1217 = vld [vmem:[%s1216] sm:$0xf]
      %v1219 = vunpack.c.l.b16 %v1215
      %v1220 = vpack.c.b16 %v847, %v1219
      %vm1221 = vcmask 1046528
      %v1222 = vrot.slane %v1220, 1
      %v1223 = vrot.slane %v866, 1
      %v1224 = vsel %vm1221, %v1222, %v1223
      %v1225 = vrot.slane %v867, 1
      %v1226 = vsel %vm1221, %v1223, %v1225
      %v1227 = vrot.slane %v868, 1
      %v1228 = vsel %vm1221, %v1225, %v1227
      %v1229 = vrot.slane %v869, 1
      %v1230 = vsel %vm1221, %v1227, %v1229
      %v1231 = vrot.slane %v870, 1
      %v1232 = vsel %vm1221, %v1229, %v1231
      %v1233 = vrot.slane %v871, 1
      %v1234 = vsel %vm1221, %v1231, %v1233
      %v1235 = vrot.slane %v872, 1
      %v1236 = vsel %vm1221, %v1233, %v1235
      %v1237 = vrot.slane %v873, 1
      %v1238 = vsel %vm1221, %v1235, %v1237
      %v1239 = vrot.slane %v874, 1
      %v1240 = vsel %vm1221, %v1237, %v1239
      %v1242 = vsel %vm952, %v1224, 0
      %v1245 = vsel %vm952, %v1226, 0
      %v1248 = vsel %vm952, %v1228, 0
      %v1251 = vsel %vm952, %v1230, 0
      %v1254 = vsel %vm952, %v1232, 0
      %v1257 = vsel %vm952, %v1234, 0
      %v1260 = vsel %vm952, %v1236, 0
      %v1263 = vsel %vm952, %v1238, 0
      %v1266 = vsel %vm952, %v1240, 0
      %v1269 = vsel %vm980, %v1217, 0
      %1271 = vmatprep.subr.bf16.mxu0 0
      %1272 = vmatpush1.bf16.msra.mxu0 %v1269
      %1273 = vmatprep.subr.bf16.mxu0 0
      %1274 = vmatpush1.bf16.msra.mxu0 0
      %1275 = vmatprep.subr.bf16.mxu0 0
      %1276 = vmatpush1.bf16.msra.mxu0 0
      %1277 = vmatprep.subr.bf16.mxu0 0
      %1278 = vmatpush1.bf16.msra.mxu0 0
      %1279 = vmatprep.subr.bf16.mxu0 0
      %1280 = vmatpush1.bf16.msra.mxu0 0
      %1281 = vmatprep.subr.bf16.mxu0 0
      %1282 = vmatpush1.bf16.msra.mxu0 0
      %1283 = vmatprep.subr.bf16.mxu0 0
      %1284 = vmatpush1.bf16.msra.mxu0 0
      %1285 = vmatprep.subr.bf16.mxu0 0
      %1286 = vmatpush1.bf16.msra.mxu0 0
      %1287 = vmatprep.subr.bf16.mxu0 0
      %1288 = vmatpush1.bf16.msra.mxu0 0
      %1289 = vmatprep.subr.bf16.mxu0 0
      %1290 = vmatpush1.bf16.msra.mxu0 0
      %1291 = vmatprep.subr.bf16.mxu0 0
      %1292 = vmatpush1.bf16.msra.mxu0 0
      %1293 = vmatprep.subr.bf16.mxu0 0
      %1294 = vmatpush1.bf16.msra.mxu0 0
      %1295 = vmatprep.subr.bf16.mxu0 0
      %1296 = vmatpush1.bf16.msra.mxu0 0
      %1297 = vmatprep.subr.bf16.mxu0 0
      %1298 = vmatpush1.bf16.msra.mxu0 0
      %1299 = vmatprep.subr.bf16.mxu0 0
      %1300 = vmatpush1.bf16.msra.mxu0 0
      %1301 = vmatprep.subr.bf16.mxu0 0
      %1302 = vmatpush1.bf16.msra.mxu0 0
      %1303 = vmatprep.mubr.bf16.mxu0 0
      %1304 = vmatmul.mubr.bf16.gmra.mrb[0].mxu0 %v1242
      %v1305 = vpop.f32.mrb[0].mxu0
      %v1306 = vadd.f32 0.0, %v1305
      %v1307 = vpop.f32.mrb[0].mxu0
      %v1308 = vpop.f32.mrb[0].mxu0
      %v1309 = vadd.f32 0.0, %v1308
      %v1310 = vpop.f32.mrb[0].mxu0
      %1311 = vmatprep.mubr.bf16.mxu0 0
      %1312 = vmatmul.mubr.bf16.gmra.mrb[0].mxu0 %v1245
      %v1313 = vpop.f32.mrb[0].mxu0
      %v1314 = vadd.f32 0.0, %v1313
      %v1315 = vpop.f32.mrb[0].mxu0
      %v1316 = vpop.f32.mrb[0].mxu0
      %v1317 = vadd.f32 0.0, %v1316
      %v1318 = vpop.f32.mrb[0].mxu0
      %1319 = vmatprep.mubr.bf16.mxu0 0
      %1320 = vmatmul.mubr.bf16.gmra.mrb[0].mxu0 %v1248
      %v1321 = vpop.f32.mrb[0].mxu0
      %v1322 = vadd.f32 0.0, %v1321
      %v1323 = vpop.f32.mrb[0].mxu0
      %v1324 = vpop.f32.mrb[0].mxu0
      %v1325 = vadd.f32 0.0, %v1324
      %v1326 = vpop.f32.mrb[0].mxu0
      %1327 = vmatprep.mubr.bf16.mxu0 0
      %1328 = vmatmul.mubr.bf16.gmra.mrb[0].mxu0 %v1251
      %v1329 = vpop.f32.mrb[0].mxu0
      %v1330 = vadd.f32 0.0, %v1329
      %v1331 = vpop.f32.mrb[0].mxu0
      %v1332 = vpop.f32.mrb[0].mxu0
      %v1333 = vadd.f32 0.0, %v1332
      %v1334 = vpop.f32.mrb[0].mxu0
      %1335 = vmatprep.mubr.bf16.mxu0 0
      %1336 = vmatmul.mubr.bf16.gmra.mrb[0].mxu0 %v1254
      %v1337 = vpop.f32.mrb[0].mxu0
      %v1338 = vadd.f32 0.0, %v1337
      %v1339 = vpop.f32.mrb[0].mxu0
      %v1340 = vpop.f32.mrb[0].mxu0
      %v1341 = vadd.f32 0.0, %v1340
      %v1342 = vpop.f32.mrb[0].mxu0
      %1343 = vmatprep.mubr.bf16.mxu0 0
      %1344 = vmatmul.mubr.bf16.gmra.mrb[0].mxu0 %v1257
      %v1345 = vpop.f32.mrb[0].mxu0
      %v1346 = vadd.f32 0.0, %v1345
      %v1347 = vpop.f32.mrb[0].mxu0
      %v1348 = vpop.f32.mrb[0].mxu0
      %v1349 = vadd.f32 0.0, %v1348
      %v1350 = vpop.f32.mrb[0].mxu0
      %1351 = vmatprep.mubr.bf16.mxu0 0
      %1352 = vmatmul.mubr.bf16.gmra.mrb[0].mxu0 %v1260
      %v1353 = vpop.f32.mrb[0].mxu0
      %v1354 = vadd.f32 0.0, %v1353
      %v1355 = vpop.f32.mrb[0].mxu0
      %v1356 = vpop.f32.mrb[0].mxu0
      %v1357 = vadd.f32 0.0, %v1356
      %v1358 = vpop.f32.mrb[0].mxu0
      %1359 = vmatprep.mubr.bf16.mxu0 0
      %1360 = vmatmul.mubr.bf16.gmra.mrb[0].mxu0 %v1263
      %v1361 = vpop.f32.mrb[0].mxu0
      %v1362 = vadd.f32 0.0, %v1361
      %v1363 = vpop.f32.mrb[0].mxu0
      %v1364 = vpop.f32.mrb[0].mxu0
      %v1365 = vadd.f32 0.0, %v1364
      %v1366 = vpop.f32.mrb[0].mxu0
      %1367 = vmatprep.mubr.bf16.mxu0 0
      %1368 = vmatmul.mubr.bf16.gmra.mrb[0].mxu0 %v1266
      %v1369 = vpop.f32.mrb[0].mxu0
      %v1370 = vadd.f32 0.0, %v1369
      %v1371 = vpop.f32.mrb[0].mxu0
      %v1372 = vpop.f32.mrb[0].mxu0
      %v1373 = vadd.f32 0.0, %v1372
      %v1374 = vpop.f32.mrb[0].mxu0
      %1375 = vdwg.mxu0
      %v1376 = vadd.f32 %v1145, %v1306
      %v1377 = vadd.f32 %v1148, %v1309
      %v1378 = vadd.f32 %v1153, %v1314
      %v1379 = vadd.f32 %v1156, %v1317
      %v1380 = vadd.f32 %v1161, %v1322
      %v1381 = vadd.f32 %v1164, %v1325
      %v1382 = vadd.f32 %v1169, %v1330
      %v1383 = vadd.f32 %v1172, %v1333
      %v1384 = vadd.f32 %v1177, %v1338
      %v1385 = vadd.f32 %v1180, %v1341
      %v1386 = vadd.f32 %v1185, %v1346
      %v1387 = vadd.f32 %v1188, %v1349
      %v1388 = vadd.f32 %v1193, %v1354
      %v1389 = vadd.f32 %v1196, %v1357
      %v1390 = vadd.f32 %v1201, %v1362
      %v1391 = vadd.f32 %v1204, %v1365
      %v1392 = vadd.f32 %v1209, %v1370
      %v1393 = vadd.f32 %v1212, %v1373
      %v1394 = vld [vmem:[#allocation2 + $0x8] sm:$0xe]
      %v1395 = vld [vmem:[#allocation2 + $0xc] sm:$0xf]
      %v1396 = vld [vmem:[#allocation2 + $0x10] sm:$0xf]
      %v1397 = vld [vmem:[#allocation2 + $0x14] sm:$0xf]
      %v1398 = vld [vmem:[#allocation2 + $0x18] sm:$0xf]
      %v1399 = vld [vmem:[#allocation2 + $0x1c] sm:$0xf]
      %v1400 = vld [vmem:[#allocation2 + $0x20] sm:$0xf]
      %v1401 = vld [vmem:[#allocation2 + $0x24] sm:$0xf]
      %v1402 = vld [vmem:[#allocation2 + $0x28] sm:$0xf]
      %v1403 = vld [vmem:[#allocation2 + $0x2c] sm:$0xf]
      %v1404 = vld [vmem:[#allocation2 + $0x30] sm:$0xf]
      %v1405 = vld [vmem:[#allocation2 + $0x34] sm:$0xf]
      %v1406 = vld [vmem:[#allocation2 + $0x38] sm:$0xf]
      %v1407 = vld [vmem:[#allocation2 + $0x3c] sm:$0xf]
      %v1408 = vld [vmem:[#allocation2 + $0x40] sm:$0xf]
      %v1409 = vld [vmem:[#allocation2 + $0x44] sm:$0xf]
      %v1410 = vld [vmem:[#allocation2 + $0x48] sm:$0xf]
      %v1411 = vld [vmem:[#allocation2 + $0x4c] sm:$0xf]
      %v1412 = vld [vmem:[#allocation2 + $0x50] sm:$0x1]
      %s1413 = scalar_lea.vmem %s3, 12
      %v1414 = vld [vmem:[%s1413] sm:$0xf]
      %v1434 = vunpack.c.l.b16 %v1394
      %v1435 = vunpack.c.l.b16 %v1395
      %v1436 = vunpack.c.l.b16 %v1396
      %v1437 = vunpack.c.l.b16 %v1397
      %v1438 = vunpack.c.l.b16 %v1398
      %v1439 = vunpack.c.l.b16 %v1399
      %v1440 = vunpack.c.l.b16 %v1400
      %v1441 = vunpack.c.l.b16 %v1401
      %v1442 = vunpack.c.l.b16 %v1402
      %v1443 = vunpack.c.l.b16 %v1403
      %v1444 = vunpack.c.l.b16 %v1404
      %v1445 = vunpack.c.l.b16 %v1405
      %v1446 = vunpack.c.l.b16 %v1406
      %v1447 = vunpack.c.l.b16 %v1407
      %v1448 = vunpack.c.l.b16 %v1408
      %v1449 = vunpack.c.l.b16 %v1409
      %v1450 = vunpack.c.l.b16 %v1410
      %v1451 = vunpack.c.l.b16 %v1411
      %v1452 = vunpack.c.l.b16 %v1412
      %v1453 = vpack.c.b16 %v1435, %v1434
      %v1454 = vpack.c.b16 %v1437, %v1436
      %v1455 = vpack.c.b16 %v1439, %v1438
      %v1456 = vpack.c.b16 %v1441, %v1440
      %v1457 = vpack.c.b16 %v1443, %v1442
      %v1458 = vpack.c.b16 %v1445, %v1444
      %v1459 = vpack.c.b16 %v1447, %v1446
      %v1460 = vpack.c.b16 %v1449, %v1448
      %v1461 = vpack.c.b16 %v1451, %v1450
      %v1462 = vpack.c.b16 %v1452, %v1452
      %v1463 = vrot.slane %v1453, 1
      %v1464 = vrot.slane %v1454, 1
      %v1465 = vsel %vm1221, %v1463, %v1464
      %v1466 = vrot.slane %v1455, 1
      %v1467 = vsel %vm1221, %v1464, %v1466
      %v1468 = vrot.slane %v1456, 1
      %v1469 = vsel %vm1221, %v1466, %v1468
      %v1470 = vrot.slane %v1457, 1
      %v1471 = vsel %vm1221, %v1468, %v1470
      %v1472 = vrot.slane %v1458, 1
      %v1473 = vsel %vm1221, %v1470, %v1472
      %v1474 = vrot.slane %v1459, 1
      %v1475 = vsel %vm1221, %v1472, %v1474
      %v1476 = vrot.slane %v1460, 1
      %v1477 = vsel %vm1221, %v1474, %v1476
      %v1478 = vrot.slane %v1461, 1
      %v1479 = vsel %vm1221, %v1476, %v1478
      %v1480 = vrot.slane %v1462, 1
      %v1481 = vsel %vm1221, %v1478, %v1480
      %v1483 = vsel %vm952, %v1465, 0
      %v1486 = vsel %vm952, %v1467, 0
      %v1489 = vsel %vm952, %v1469, 0
      %v1492 = vsel %vm952, %v1471, 0
      %v1495 = vsel %vm952, %v1473, 0
      %v1498 = vsel %vm952, %v1475, 0
      %v1501 = vsel %vm952, %v1477, 0
      %v1504 = vsel %vm952, %v1479, 0
      %v1507 = vsel %vm952, %v1481, 0
      %v1510 = vsel %vm980, %v1414, 0
      %1512 = vmatprep.subr.bf16.mxu0 0
      %1513 = vmatpush1.bf16.msra.mxu0 %v1510
      %1514 = vmatprep.subr.bf16.mxu0 0
      %1515 = vmatpush1.bf16.msra.mxu0 0
      %1516 = vmatprep.subr.bf16.mxu0 0
      %1517 = vmatpush1.bf16.msra.mxu0 0
      %1518 = vmatprep.subr.bf16.mxu0 0
      %1519 = vmatpush1.bf16.msra.mxu0 0
      %1520 = vmatprep.subr.bf16.mxu0 0
      %1521 = vmatpush1.bf16.msra.mxu0 0
      %1522 = vmatprep.subr.bf16.mxu0 0
      %1523 = vmatpush1.bf16.msra.mxu0 0
      %1524 = vmatprep.subr.bf16.mxu0 0
      %1525 = vmatpush1.bf16.msra.mxu0 0
      %1526 = vmatprep.subr.bf16.mxu0 0
      %1527 = vmatpush1.bf16.msra.mxu0 0
      %1528 = vmatprep.subr.bf16.mxu0 0
      %1529 = vmatpush1.bf16.msra.mxu0 0
      %1530 = vmatprep.subr.bf16.mxu0 0
      %1531 = vmatpush1.bf16.msra.mxu0 0
      %1532 = vmatprep.subr.bf16.mxu0 0
      %1533 = vmatpush1.bf16.msra.mxu0 0
      %1534 = vmatprep.subr.bf16.mxu0 0
      %1535 = vmatpush1.bf16.msra.mxu0 0
      %1536 = vmatprep.subr.bf16.mxu0 0
      %1537 = vmatpush1.bf16.msra.mxu0 0
      %1538 = vmatprep.subr.bf16.mxu0 0
      %1539 = vmatpush1.bf16.msra.mxu0 0
      %1540 = vmatprep.subr.bf16.mxu0 0
      %1541 = vmatpush1.bf16.msra.mxu0 0
      %1542 = vmatprep.subr.bf16.mxu0 0
      %1543 = vmatpush1.bf16.msra.mxu0 0
      %1544 = vmatprep.mubr.bf16.mxu0 0
      %1545 = vmatmul.mubr.bf16.gmra.mrb[0].mxu0 %v1483
      %v1546 = vpop.f32.mrb[0].mxu0
      %v1547 = vadd.f32 0.0, %v1546
      %v1548 = vpop.f32.mrb[0].mxu0
      %v1549 = vpop.f32.mrb[0].mxu0
      %v1550 = vadd.f32 0.0, %v1549
      %v1551 = vpop.f32.mrb[0].mxu0
      %1552 = vmatprep.mubr.bf16.mxu0 0
      %1553 = vmatmul.mubr.bf16.gmra.mrb[0].mxu0 %v1486
      %v1554 = vpop.f32.mrb[0].mxu0
      %v1555 = vadd.f32 0.0, %v1554
      %v1556 = vpop.f32.mrb[0].mxu0
      %v1557 = vpop.f32.mrb[0].mxu0
      %v1558 = vadd.f32 0.0, %v1557
      %v1559 = vpop.f32.mrb[0].mxu0
      %1560 = vmatprep.mubr.bf16.mxu0 0
      %1561 = vmatmul.mubr.bf16.gmra.mrb[0].mxu0 %v1489
      %v1562 = vpop.f32.mrb[0].mxu0
      %v1563 = vadd.f32 0.0, %v1562
      %v1564 = vpop.f32.mrb[0].mxu0
      %v1565 = vpop.f32.mrb[0].mxu0
      %v1566 = vadd.f32 0.0, %v1565
      %v1567 = vpop.f32.mrb[0].mxu0
      %1568 = vmatprep.mubr.bf16.mxu0 0
      %1569 = vmatmul.mubr.bf16.gmra.mrb[0].mxu0 %v1492
      %v1570 = vpop.f32.mrb[0].mxu0
      %v1571 = vadd.f32 0.0, %v1570
      %v1572 = vpop.f32.mrb[0].mxu0
      %v1573 = vpop.f32.mrb[0].mxu0
      %v1574 = vadd.f32 0.0, %v1573
      %v1575 = vpop.f32.mrb[0].mxu0
      %1576 = vmatprep.mubr.bf16.mxu0 0
      %1577 = vmatmul.mubr.bf16.gmra.mrb[0].mxu0 %v1495
      %v1578 = vpop.f32.mrb[0].mxu0
      %v1579 = vadd.f32 0.0, %v1578
      %v1580 = vpop.f32.mrb[0].mxu0
      %v1581 = vpop.f32.mrb[0].mxu0
      %v1582 = vadd.f32 0.0, %v1581
      %v1583 = vpop.f32.mrb[0].mxu0
      %1584 = vmatprep.mubr.bf16.mxu0 0
      %1585 = vmatmul.mubr.bf16.gmra.mrb[0].mxu0 %v1498
      %v1586 = vpop.f32.mrb[0].mxu0
      %v1587 = vadd.f32 0.0, %v1586
      %v1588 = vpop.f32.mrb[0].mxu0
      %v1589 = vpop.f32.mrb[0].mxu0
      %v1590 = vadd.f32 0.0, %v1589
      %v1591 = vpop.f32.mrb[0].mxu0
      %1592 = vmatprep.mubr.bf16.mxu0 0
      %1593 = vmatmul.mubr.bf16.gmra.mrb[0].mxu0 %v1501
      %v1594 = vpop.f32.mrb[0].mxu0
      %v1595 = vadd.f32 0.0, %v1594
      %v1596 = vpop.f32.mrb[0].mxu0
      %v1597 = vpop.f32.mrb[0].mxu0
      %v1598 = vadd.f32 0.0, %v1597
      %v1599 = vpop.f32.mrb[0].mxu0
      %1600 = vmatprep.mubr.bf16.mxu0 0
      %1601 = vmatmul.mubr.bf16.gmra.mrb[0].mxu0 %v1504
      %v1602 = vpop.f32.mrb[0].mxu0
      %v1603 = vadd.f32 0.0, %v1602
      %v1604 = vpop.f32.mrb[0].mxu0
      %v1605 = vpop.f32.mrb[0].mxu0
      %v1606 = vadd.f32 0.0, %v1605
      %v1607 = vpop.f32.mrb[0].mxu0
      %1608 = vmatprep.mubr.bf16.mxu0 0
      %1609 = vmatmul.mubr.bf16.gmra.mrb[0].mxu0 %v1507
      %v1610 = vpop.f32.mrb[0].mxu0
      %v1611 = vadd.f32 0.0, %v1610
      %v1612 = vpop.f32.mrb[0].mxu0
      %v1613 = vpop.f32.mrb[0].mxu0
      %v1614 = vadd.f32 0.0, %v1613
      %v1615 = vpop.f32.mrb[0].mxu0
      %1616 = vdwg.mxu0
      %v1617 = vadd.f32 %v1376, %v1547
      %v1618 = vadd.f32 %v1377, %v1550
      %v1619 = vadd.f32 %v1378, %v1555
      %v1620 = vadd.f32 %v1379, %v1558
      %v1621 = vadd.f32 %v1380, %v1563
      %v1622 = vadd.f32 %v1381, %v1566
      %v1623 = vadd.f32 %v1382, %v1571
      %v1624 = vadd.f32 %v1383, %v1574
      %v1625 = vadd.f32 %v1384, %v1579
      %v1626 = vadd.f32 %v1385, %v1582
      %v1627 = vadd.f32 %v1386, %v1587
      %v1628 = vadd.f32 %v1387, %v1590
      %v1629 = vadd.f32 %v1388, %v1595
      %v1630 = vadd.f32 %v1389, %v1598
      %v1631 = vadd.f32 %v1390, %v1603
      %v1632 = vadd.f32 %v1391, %v1606
      %v1633 = vadd.f32 %v1392, %v1611
      %v1634 = vadd.f32 %v1393, %v1614
      %v1635 = vld [vmem:[#allocation2 + $0x50] sm:$0x3]
      %s1636 = scalar_lea.vmem %s3, 16
      %v1637 = vld [vmem:[%s1636] sm:$0xf]
      %v1639 = vunpack.c.l.b16 %v1635
      %v1640 = vpack.c.b16 %v1639, %v1639
      %vm1641 = vsmask.f32 6400
      %v1643 = vshrl.u32 %v1453, 16
      %v1645 = vrot.slane %v1643, 1
      %v1646 = vshll.u32 %v1453, 16
      %v1648 = vrot.slane %v1646, 2
      %v1649 = vor.u32 %v1645, %v1648
      %v1651 = vshrl.u32 %v1454, 16
      %v1653 = vrot.slane %v1651, 1
      %v1654 = vshll.u32 %v1454, 16
      %v1656 = vrot.slane %v1654, 2
      %v1657 = vor.u32 %v1653, %v1656
      %v1658 = vsel %vm1641, %v1649, %v1657
      %v1660 = vshrl.u32 %v1455, 16
      %v1662 = vrot.slane %v1660, 1
      %v1663 = vshll.u32 %v1455, 16
      %v1665 = vrot.slane %v1663, 2
      %v1666 = vor.u32 %v1662, %v1665
      %v1667 = vsel %vm1641, %v1657, %v1666
      %v1669 = vshrl.u32 %v1456, 16
      %v1671 = vrot.slane %v1669, 1
      %v1672 = vshll.u32 %v1456, 16
      %v1674 = vrot.slane %v1672, 2
      %v1675 = vor.u32 %v1671, %v1674
      %v1676 = vsel %vm1641, %v1666, %v1675
      %v1678 = vshrl.u32 %v1457, 16
      %v1680 = vrot.slane %v1678, 1
      %v1681 = vshll.u32 %v1457, 16
      %v1683 = vrot.slane %v1681, 2
      %v1684 = vor.u32 %v1680, %v1683
      %v1685 = vsel %vm1641, %v1675, %v1684
      %v1687 = vshrl.u32 %v1458, 16
      %v1689 = vrot.slane %v1687, 1
      %v1690 = vshll.u32 %v1458, 16
      %v1692 = vrot.slane %v1690, 2
      %v1693 = vor.u32 %v1689, %v1692
      %v1694 = vsel %vm1641, %v1684, %v1693
      %v1696 = vshrl.u32 %v1459, 16
      %v1698 = vrot.slane %v1696, 1
      %v1699 = vshll.u32 %v1459, 16
      %v1701 = vrot.slane %v1699, 2
      %v1702 = vor.u32 %v1698, %v1701
      %v1703 = vsel %vm1641, %v1693, %v1702
      %v1705 = vshrl.u32 %v1460, 16
      %v1707 = vrot.slane %v1705, 1
      %v1708 = vshll.u32 %v1460, 16
      %v1710 = vrot.slane %v1708, 2
      %v1711 = vor.u32 %v1707, %v1710
      %v1712 = vsel %vm1641, %v1702, %v1711
      %v1714 = vshrl.u32 %v1461, 16
      %v1716 = vrot.slane %v1714, 1
      %v1717 = vshll.u32 %v1461, 16
      %v1719 = vrot.slane %v1717, 2
      %v1720 = vor.u32 %v1716, %v1719
      %v1721 = vsel %vm1641, %v1711, %v1720
      %v1723 = vshrl.u32 %v1640, 16
      %v1725 = vrot.slane %v1723, 1
      %v1726 = vshll.u32 %v1640, 16
      %v1728 = vrot.slane %v1726, 2
      %v1729 = vor.u32 %v1725, %v1728
      %v1730 = vsel %vm1641, %v1720, %v1729
      %v1732 = vsel %vm952, %v1658, 0
      %v1735 = vsel %vm952, %v1667, 0
      %v1738 = vsel %vm952, %v1676, 0
      %v1741 = vsel %vm952, %v1685, 0
      %v1744 = vsel %vm952, %v1694, 0
      %v1747 = vsel %vm952, %v1703, 0
      %v1750 = vsel %vm952, %v1712, 0
      %v1753 = vsel %vm952, %v1721, 0
      %v1756 = vsel %vm952, %v1730, 0
      %v1759 = vsel %vm980, %v1637, 0
      %1761 = vmatprep.subr.bf16.mxu0 0
      %1762 = vmatpush1.bf16.msra.mxu0 %v1759
      %1763 = vmatprep.subr.bf16.mxu0 0
      %1764 = vmatpush1.bf16.msra.mxu0 0
      %1765 = vmatprep.subr.bf16.mxu0 0
      %1766 = vmatpush1.bf16.msra.mxu0 0
      %1767 = vmatprep.subr.bf16.mxu0 0
      %1768 = vmatpush1.bf16.msra.mxu0 0
      %1769 = vmatprep.subr.bf16.mxu0 0
      %1770 = vmatpush1.bf16.msra.mxu0 0
      %1771 = vmatprep.subr.bf16.mxu0 0
      %1772 = vmatpush1.bf16.msra.mxu0 0
      %1773 = vmatprep.subr.bf16.mxu0 0
      %1774 = vmatpush1.bf16.msra.mxu0 0
      %1775 = vmatprep.subr.bf16.mxu0 0
      %1776 = vmatpush1.bf16.msra.mxu0 0
      %1777 = vmatprep.subr.bf16.mxu0 0
      %1778 = vmatpush1.bf16.msra.mxu0 0
      %1779 = vmatprep.subr.bf16.mxu0 0
      %1780 = vmatpush1.bf16.msra.mxu0 0
      %1781 = vmatprep.subr.bf16.mxu0 0
      %1782 = vmatpush1.bf16.msra.mxu0 0
      %1783 = vmatprep.subr.bf16.mxu0 0
      %1784 = vmatpush1.bf16.msra.mxu0 0
      %1785 = vmatprep.subr.bf16.mxu0 0
      %1786 = vmatpush1.bf16.msra.mxu0 0
      %1787 = vmatprep.subr.bf16.mxu0 0
      %1788 = vmatpush1.bf16.msra.mxu0 0
      %1789 = vmatprep.subr.bf16.mxu0 0
      %1790 = vmatpush1.bf16.msra.mxu0 0
      %1791 = vmatprep.subr.bf16.mxu0 0
      %1792 = vmatpush1.bf16.msra.mxu0 0
      %1793 = vmatprep.mubr.bf16.mxu0 0
      %1794 = vmatmul.mubr.bf16.gmra.mrb[0].mxu0 %v1732
      %v1795 = vpop.f32.mrb[0].mxu0
      %v1796 = vadd.f32 0.0, %v1795
      %v1797 = vpop.f32.mrb[0].mxu0
      %v1798 = vpop.f32.mrb[0].mxu0
      %v1799 = vadd.f32 0.0, %v1798
      %v1800 = vpop.f32.mrb[0].mxu0
      %1801 = vmatprep.mubr.bf16.mxu0 0
      %1802 = vmatmul.mubr.bf16.gmra.mrb[0].mxu0 %v1735
      %v1803 = vpop.f32.mrb[0].mxu0
      %v1804 = vadd.f32 0.0, %v1803
      %v1805 = vpop.f32.mrb[0].mxu0
      %v1806 = vpop.f32.mrb[0].mxu0
      %v1807 = vadd.f32 0.0, %v1806
      %v1808 = vpop.f32.mrb[0].mxu0
      %1809 = vmatprep.mubr.bf16.mxu0 0
      %1810 = vmatmul.mubr.bf16.gmra.mrb[0].mxu0 %v1738
      %v1811 = vpop.f32.mrb[0].mxu0
      %v1812 = vadd.f32 0.0, %v1811
      %v1813 = vpop.f32.mrb[0].mxu0
      %v1814 = vpop.f32.mrb[0].mxu0
      %v1815 = vadd.f32 0.0, %v1814
      %v1816 = vpop.f32.mrb[0].mxu0
      %1817 = vmatprep.mubr.bf16.mxu0 0
      %1818 = vmatmul.mubr.bf16.gmra.mrb[0].mxu0 %v1741
      %v1819 = vpop.f32.mrb[0].mxu0
      %v1820 = vadd.f32 0.0, %v1819
      %v1821 = vpop.f32.mrb[0].mxu0
      %v1822 = vpop.f32.mrb[0].mxu0
      %v1823 = vadd.f32 0.0, %v1822
      %v1824 = vpop.f32.mrb[0].mxu0
      %1825 = vmatprep.mubr.bf16.mxu0 0
      %1826 = vmatmul.mubr.bf16.gmra.mrb[0].mxu0 %v1744
      %v1827 = vpop.f32.mrb[0].mxu0
      %v1828 = vadd.f32 0.0, %v1827
      %v1829 = vpop.f32.mrb[0].mxu0
      %v1830 = vpop.f32.mrb[0].mxu0
      %v1831 = vadd.f32 0.0, %v1830
      %v1832 = vpop.f32.mrb[0].mxu0
      %1833 = vmatprep.mubr.bf16.mxu0 0
      %1834 = vmatmul.mubr.bf16.gmra.mrb[0].mxu0 %v1747
      %v1835 = vpop.f32.mrb[0].mxu0
      %v1836 = vadd.f32 0.0, %v1835
      %v1837 = vpop.f32.mrb[0].mxu0
      %v1838 = vpop.f32.mrb[0].mxu0
      %v1839 = vadd.f32 0.0, %v1838
      %v1840 = vpop.f32.mrb[0].mxu0
      %1841 = vmatprep.mubr.bf16.mxu0 0
      %1842 = vmatmul.mubr.bf16.gmra.mrb[0].mxu0 %v1750
      %v1843 = vpop.f32.mrb[0].mxu0
      %v1844 = vadd.f32 0.0, %v1843
      %v1845 = vpop.f32.mrb[0].mxu0
      %v1846 = vpop.f32.mrb[0].mxu0
      %v1847 = vadd.f32 0.0, %v1846
      %v1848 = vpop.f32.mrb[0].mxu0
      %1849 = vmatprep.mubr.bf16.mxu0 0
      %1850 = vmatmul.mubr.bf16.gmra.mrb[0].mxu0 %v1753
      %v1851 = vpop.f32.mrb[0].mxu0
      %v1852 = vadd.f32 0.0, %v1851
      %v1853 = vpop.f32.mrb[0].mxu0
      %v1854 = vpop.f32.mrb[0].mxu0
      %v1855 = vadd.f32 0.0, %v1854
      %v1856 = vpop.f32.mrb[0].mxu0
      %1857 = vmatprep.mubr.bf16.mxu0 0
      %1858 = vmatmul.mubr.bf16.gmra.mrb[0].mxu0 %v1756
      %v1859 = vpop.f32.mrb[0].mxu0
      %v1860 = vadd.f32 0.0, %v1859
      %v1861 = vpop.f32.mrb[0].mxu0
      %v1862 = vpop.f32.mrb[0].mxu0
      %v1863 = vadd.f32 0.0, %v1862
      %v1864 = vpop.f32.mrb[0].mxu0
      %1865 = vdwg.mxu0
      %v1866 = vadd.f32 %v1617, %v1796
      %v1867 = vadd.f32 %v1618, %v1799
      %v1868 = vadd.f32 %v1619, %v1804
      %v1869 = vadd.f32 %v1620, %v1807
      %v1870 = vadd.f32 %v1621, %v1812
      %v1871 = vadd.f32 %v1622, %v1815
      %v1872 = vadd.f32 %v1623, %v1820
      %v1873 = vadd.f32 %v1624, %v1823
      %v1874 = vadd.f32 %v1625, %v1828
      %v1875 = vadd.f32 %v1626, %v1831
      %v1876 = vadd.f32 %v1627, %v1836
      %v1877 = vadd.f32 %v1628, %v1839
      %v1878 = vadd.f32 %v1629, %v1844
      %v1879 = vadd.f32 %v1630, %v1847
      %v1880 = vadd.f32 %v1631, %v1852
      %v1881 = vadd.f32 %v1632, %v1855
      %v1882 = vadd.f32 %v1633, %v1860
      %v1883 = vadd.f32 %v1634, %v1863
      %v1884 = vld [vmem:[#allocation2 + $0x8] sm:$0xc]
      %s1885 = scalar_lea.vmem %s3, 20
      %v1886 = vld [vmem:[%s1885] sm:$0xf]
      %v1888 = vunpack.c.l.b16 %v1884
      %v1889 = vpack.c.b16 %v1435, %v1888
      %vm1890 = vcmask 1045504
      %v1891 = vrot.slane %v1889, 2
      %v1892 = vrot.slane %v1454, 2
      %v1893 = vsel %vm1890, %v1891, %v1892
      %v1894 = vrot.slane %v1455, 2
      %v1895 = vsel %vm1890, %v1892, %v1894
      %v1896 = vrot.slane %v1456, 2
      %v1897 = vsel %vm1890, %v1894, %v1896
      %v1898 = vrot.slane %v1457, 2
      %v1899 = vsel %vm1890, %v1896, %v1898
      %v1900 = vrot.slane %v1458, 2
      %v1901 = vsel %vm1890, %v1898, %v1900
      %v1902 = vrot.slane %v1459, 2
      %v1903 = vsel %vm1890, %v1900, %v1902
      %v1904 = vrot.slane %v1460, 2
      %v1905 = vsel %vm1890, %v1902, %v1904
      %v1906 = vrot.slane %v1461, 2
      %v1907 = vsel %vm1890, %v1904, %v1906
      %v1908 = vrot.slane %v1640, 2
      %v1909 = vsel %vm1890, %v1906, %v1908
      %v1911 = vsel %vm952, %v1893, 0
      %v1914 = vsel %vm952, %v1895, 0
      %v1917 = vsel %vm952, %v1897, 0
      %v1920 = vsel %vm952, %v1899, 0
      %v1923 = vsel %vm952, %v1901, 0
      %v1926 = vsel %vm952, %v1903, 0
      %v1929 = vsel %vm952, %v1905, 0
      %v1932 = vsel %vm952, %v1907, 0
      %v1935 = vsel %vm952, %v1909, 0
      %v1938 = vsel %vm980, %v1886, 0
      %1940 = vmatprep.subr.bf16.mxu0 0
      %1941 = vmatpush1.bf16.msra.mxu0 %v1938
      %1942 = vmatprep.subr.bf16.mxu0 0
      %1943 = vmatpush1.bf16.msra.mxu0 0
      %1944 = vmatprep.subr.bf16.mxu0 0
      %1945 = vmatpush1.bf16.msra.mxu0 0
      %1946 = vmatprep.subr.bf16.mxu0 0
      %1947 = vmatpush1.bf16.msra.mxu0 0
      %1948 = vmatprep.subr.bf16.mxu0 0
      %1949 = vmatpush1.bf16.msra.mxu0 0
      %1950 = vmatprep.subr.bf16.mxu0 0
      %1951 = vmatpush1.bf16.msra.mxu0 0
      %1952 = vmatprep.subr.bf16.mxu0 0
      %1953 = vmatpush1.bf16.msra.mxu0 0
      %1954 = vmatprep.subr.bf16.mxu0 0
      %1955 = vmatpush1.bf16.msra.mxu0 0
      %1956 = vmatprep.subr.bf16.mxu0 0
      %1957 = vmatpush1.bf16.msra.mxu0 0
      %1958 = vmatprep.subr.bf16.mxu0 0
      %1959 = vmatpush1.bf16.msra.mxu0 0
      %1960 = vmatprep.subr.bf16.mxu0 0
      %1961 = vmatpush1.bf16.msra.mxu0 0
      %1962 = vmatprep.subr.bf16.mxu0 0
      %1963 = vmatpush1.bf16.msra.mxu0 0
      %1964 = vmatprep.subr.bf16.mxu0 0
      %1965 = vmatpush1.bf16.msra.mxu0 0
      %1966 = vmatprep.subr.bf16.mxu0 0
      %1967 = vmatpush1.bf16.msra.mxu0 0
      %1968 = vmatprep.subr.bf16.mxu0 0
      %1969 = vmatpush1.bf16.msra.mxu0 0
      %1970 = vmatprep.subr.bf16.mxu0 0
      %1971 = vmatpush1.bf16.msra.mxu0 0
      %1972 = vmatprep.mubr.bf16.mxu0 0
      %1973 = vmatmul.mubr.bf16.gmra.mrb[0].mxu0 %v1911
      %v1974 = vpop.f32.mrb[0].mxu0
      %v1975 = vadd.f32 0.0, %v1974
      %v1976 = vpop.f32.mrb[0].mxu0
      %v1977 = vpop.f32.mrb[0].mxu0
      %v1978 = vadd.f32 0.0, %v1977
      %v1979 = vpop.f32.mrb[0].mxu0
      %1980 = vmatprep.mubr.bf16.mxu0 0
      %1981 = vmatmul.mubr.bf16.gmra.mrb[0].mxu0 %v1914
      %v1982 = vpop.f32.mrb[0].mxu0
      %v1983 = vadd.f32 0.0, %v1982
      %v1984 = vpop.f32.mrb[0].mxu0
      %v1985 = vpop.f32.mrb[0].mxu0
      %v1986 = vadd.f32 0.0, %v1985
      %v1987 = vpop.f32.mrb[0].mxu0
      %1988 = vmatprep.mubr.bf16.mxu0 0
      %1989 = vmatmul.mubr.bf16.gmra.mrb[0].mxu0 %v1917
      %v1990 = vpop.f32.mrb[0].mxu0
      %v1991 = vadd.f32 0.0, %v1990
      %v1992 = vpop.f32.mrb[0].mxu0
      %v1993 = vpop.f32.mrb[0].mxu0
      %v1994 = vadd.f32 0.0, %v1993
      %v1995 = vpop.f32.mrb[0].mxu0
      %1996 = vmatprep.mubr.bf16.mxu0 0
      %1997 = vmatmul.mubr.bf16.gmra.mrb[0].mxu0 %v1920
      %v1998 = vpop.f32.mrb[0].mxu0
      %v1999 = vadd.f32 0.0, %v1998
      %v2000 = vpop.f32.mrb[0].mxu0
      %v2001 = vpop.f32.mrb[0].mxu0
      %v2002 = vadd.f32 0.0, %v2001
      %v2003 = vpop.f32.mrb[0].mxu0
      %2004 = vmatprep.mubr.bf16.mxu0 0
      %2005 = vmatmul.mubr.bf16.gmra.mrb[0].mxu0 %v1923
      %v2006 = vpop.f32.mrb[0].mxu0
      %v2007 = vadd.f32 0.0, %v2006
      %v2008 = vpop.f32.mrb[0].mxu0
      %v2009 = vpop.f32.mrb[0].mxu0
      %v2010 = vadd.f32 0.0, %v2009
      %v2011 = vpop.f32.mrb[0].mxu0
      %2012 = vmatprep.mubr.bf16.mxu0 0
      %2013 = vmatmul.mubr.bf16.gmra.mrb[0].mxu0 %v1926
      %v2014 = vpop.f32.mrb[0].mxu0
      %v2015 = vadd.f32 0.0, %v2014
      %v2016 = vpop.f32.mrb[0].mxu0
      %v2017 = vpop.f32.mrb[0].mxu0
      %v2018 = vadd.f32 0.0, %v2017
      %v2019 = vpop.f32.mrb[0].mxu0
      %2020 = vmatprep.mubr.bf16.mxu0 0
      %2021 = vmatmul.mubr.bf16.gmra.mrb[0].mxu0 %v1929
      %v2022 = vpop.f32.mrb[0].mxu0
      %v2023 = vadd.f32 0.0, %v2022
      %v2024 = vpop.f32.mrb[0].mxu0
      %v2025 = vpop.f32.mrb[0].mxu0
      %v2026 = vadd.f32 0.0, %v2025
      %v2027 = vpop.f32.mrb[0].mxu0
      %2028 = vmatprep.mubr.bf16.mxu0 0
      %2029 = vmatmul.mubr.bf16.gmra.mrb[0].mxu0 %v1932
      %v2030 = vpop.f32.mrb[0].mxu0
      %v2031 = vadd.f32 0.0, %v2030
      %v2032 = vpop.f32.mrb[0].mxu0
      %v2033 = vpop.f32.mrb[0].mxu0
      %v2034 = vadd.f32 0.0, %v2033
      %v2035 = vpop.f32.mrb[0].mxu0
      %2036 = vmatprep.mubr.bf16.mxu0 0
      %2037 = vmatmul.mubr.bf16.gmra.mrb[0].mxu0 %v1935
      %v2038 = vpop.f32.mrb[0].mxu0
      %v2039 = vadd.f32 0.0, %v2038
      %v2040 = vpop.f32.mrb[0].mxu0
      %v2041 = vpop.f32.mrb[0].mxu0
      %v2042 = vadd.f32 0.0, %v2041
      %v2043 = vpop.f32.mrb[0].mxu0
      %2044 = vdwg.mxu0
      %v2045 = vadd.f32 %v1866, %v1975
      %v2046 = vadd.f32 %v1867, %v1978
      %v2047 = vadd.f32 %v1868, %v1983
      %v2048 = vadd.f32 %v1869, %v1986
      %v2049 = vadd.f32 %v1870, %v1991
      %v2050 = vadd.f32 %v1871, %v1994
      %v2051 = vadd.f32 %v1872, %v1999
      %v2052 = vadd.f32 %v1873, %v2002
      %v2053 = vadd.f32 %v1874, %v2007
      %v2054 = vadd.f32 %v1875, %v2010
      %v2055 = vadd.f32 %v1876, %v2015
      %v2056 = vadd.f32 %v1877, %v2018
      %v2057 = vadd.f32 %v1878, %v2023
      %v2058 = vadd.f32 %v1879, %v2026
      %v2059 = vadd.f32 %v1880, %v2031
      %v2060 = vadd.f32 %v1881, %v2034
      %v2061 = vadd.f32 %v1882, %v2039
      %v2062 = vadd.f32 %v1883, %v2042
      %v2063 = vld [vmem:[#allocation2 + $0x10] sm:$0xc]
      %v2064 = vld [vmem:[#allocation2 + $0x14] sm:$0xf]
      %v2065 = vld [vmem:[#allocation2 + $0x18] sm:$0xf]
      %v2066 = vld [vmem:[#allocation2 + $0x1c] sm:$0xf]
      %v2067 = vld [vmem:[#allocation2 + $0x20] sm:$0xf]
      %v2068 = vld [vmem:[#allocation2 + $0x24] sm:$0xf]
      %v2069 = vld [vmem:[#allocation2 + $0x28] sm:$0xf]
      %v2070 = vld [vmem:[#allocation2 + $0x2c] sm:$0xf]
      %v2071 = vld [vmem:[#allocation2 + $0x30] sm:$0xf]
      %v2072 = vld [vmem:[#allocation2 + $0x34] sm:$0xf]
      %v2073 = vld [vmem:[#allocation2 + $0x38] sm:$0xf]
      %v2074 = vld [vmem:[#allocation2 + $0x3c] sm:$0xf]
      %v2075 = vld [vmem:[#allocation2 + $0x40] sm:$0xf]
      %v2076 = vld [vmem:[#allocation2 + $0x44] sm:$0xf]
      %v2077 = vld [vmem:[#allocation2 + $0x48] sm:$0xf]
      %v2078 = vld [vmem:[#allocation2 + $0x4c] sm:$0xf]
      %v2079 = vld [vmem:[#allocation2 + $0x50] sm:$0xf]
      %v2080 = vld [vmem:[#allocation2 + $0x54] sm:$0xf]
      %v2081 = vld [vmem:[#allocation2 + $0x58] sm:$0x3]
      %s2082 = scalar_lea.vmem %s3, 24
      %v2083 = vld [vmem:[%s2082] sm:$0xf]
      %v2103 = vunpack.c.l.b16 %v2063
      %v2104 = vunpack.c.l.b16 %v2064
      %v2105 = vunpack.c.l.b16 %v2065
      %v2106 = vunpack.c.l.b16 %v2066
      %v2107 = vunpack.c.l.b16 %v2067
      %v2108 = vunpack.c.l.b16 %v2068
      %v2109 = vunpack.c.l.b16 %v2069
      %v2110 = vunpack.c.l.b16 %v2070
      %v2111 = vunpack.c.l.b16 %v2071
      %v2112 = vunpack.c.l.b16 %v2072
      %v2113 = vunpack.c.l.b16 %v2073
      %v2114 = vunpack.c.l.b16 %v2074
      %v2115 = vunpack.c.l.b16 %v2075
      %v2116 = vunpack.c.l.b16 %v2076
      %v2117 = vunpack.c.l.b16 %v2077
      %v2118 = vunpack.c.l.b16 %v2078
      %v2119 = vunpack.c.l.b16 %v2079
      %v2120 = vunpack.c.l.b16 %v2080
      %v2121 = vunpack.c.l.b16 %v2081
      %v2122 = vpack.c.b16 %v2104, %v2103
      %v2123 = vpack.c.b16 %v2106, %v2105
      %v2124 = vpack.c.b16 %v2108, %v2107
      %v2125 = vpack.c.b16 %v2110, %v2109
      %v2126 = vpack.c.b16 %v2112, %v2111
      %v2127 = vpack.c.b16 %v2114, %v2113
      %v2128 = vpack.c.b16 %v2116, %v2115
      %v2129 = vpack.c.b16 %v2118, %v2117
      %v2130 = vpack.c.b16 %v2120, %v2119
      %v2131 = vpack.c.b16 %v2121, %v2121
      %v2132 = vrot.slane %v2122, 2
      %v2133 = vrot.slane %v2123, 2
      %v2134 = vsel %vm1890, %v2132, %v2133
      %v2135 = vrot.slane %v2124, 2
      %v2136 = vsel %vm1890, %v2133, %v2135
      %v2137 = vrot.slane %v2125, 2
      %v2138 = vsel %vm1890, %v2135, %v2137
      %v2139 = vrot.slane %v2126, 2
      %v2140 = vsel %vm1890, %v2137, %v2139
      %v2141 = vrot.slane %v2127, 2
      %v2142 = vsel %vm1890, %v2139, %v2141
      %v2143 = vrot.slane %v2128, 2
      %v2144 = vsel %vm1890, %v2141, %v2143
      %v2145 = vrot.slane %v2129, 2
      %v2146 = vsel %vm1890, %v2143, %v2145
      %v2147 = vrot.slane %v2130, 2
      %v2148 = vsel %vm1890, %v2145, %v2147
      %v2149 = vrot.slane %v2131, 2
      %v2150 = vsel %vm1890, %v2147, %v2149
      %v2152 = vsel %vm952, %v2134, 0
      %v2155 = vsel %vm952, %v2136, 0
      %v2158 = vsel %vm952, %v2138, 0
      %v2161 = vsel %vm952, %v2140, 0
      %v2164 = vsel %vm952, %v2142, 0
      %v2167 = vsel %vm952, %v2144, 0
      %v2170 = vsel %vm952, %v2146, 0
      %v2173 = vsel %vm952, %v2148, 0
      %v2176 = vsel %vm952, %v2150, 0
      %v2179 = vsel %vm980, %v2083, 0
      %2181 = vmatprep.subr.bf16.mxu0 0
      %2182 = vmatpush1.bf16.msra.mxu0 %v2179
      %2183 = vmatprep.subr.bf16.mxu0 0
      %2184 = vmatpush1.bf16.msra.mxu0 0
      %2185 = vmatprep.subr.bf16.mxu0 0
      %2186 = vmatpush1.bf16.msra.mxu0 0
      %2187 = vmatprep.subr.bf16.mxu0 0
      %2188 = vmatpush1.bf16.msra.mxu0 0
      %2189 = vmatprep.subr.bf16.mxu0 0
      %2190 = vmatpush1.bf16.msra.mxu0 0
      %2191 = vmatprep.subr.bf16.mxu0 0
      %2192 = vmatpush1.bf16.msra.mxu0 0
      %2193 = vmatprep.subr.bf16.mxu0 0
      %2194 = vmatpush1.bf16.msra.mxu0 0
      %2195 = vmatprep.subr.bf16.mxu0 0
      %2196 = vmatpush1.bf16.msra.mxu0 0
      %2197 = vmatprep.subr.bf16.mxu0 0
      %2198 = vmatpush1.bf16.msra.mxu0 0
      %2199 = vmatprep.subr.bf16.mxu0 0
      %2200 = vmatpush1.bf16.msra.mxu0 0
      %2201 = vmatprep.subr.bf16.mxu0 0
      %2202 = vmatpush1.bf16.msra.mxu0 0
      %2203 = vmatprep.subr.bf16.mxu0 0
      %2204 = vmatpush1.bf16.msra.mxu0 0
      %2205 = vmatprep.subr.bf16.mxu0 0
      %2206 = vmatpush1.bf16.msra.mxu0 0
      %2207 = vmatprep.subr.bf16.mxu0 0
      %2208 = vmatpush1.bf16.msra.mxu0 0
      %2209 = vmatprep.subr.bf16.mxu0 0
      %2210 = vmatpush1.bf16.msra.mxu0 0
      %2211 = vmatprep.subr.bf16.mxu0 0
      %2212 = vmatpush1.bf16.msra.mxu0 0
      %2213 = vmatprep.mubr.bf16.mxu0 0
      %2214 = vmatmul.mubr.bf16.gmra.mrb[0].mxu0 %v2152
      %v2215 = vpop.f32.mrb[0].mxu0
      %v2216 = vadd.f32 0.0, %v2215
      %v2217 = vpop.f32.mrb[0].mxu0
      %v2218 = vpop.f32.mrb[0].mxu0
      %v2219 = vadd.f32 0.0, %v2218
      %v2220 = vpop.f32.mrb[0].mxu0
      %2221 = vmatprep.mubr.bf16.mxu0 0
      %2222 = vmatmul.mubr.bf16.gmra.mrb[0].mxu0 %v2155
      %v2223 = vpop.f32.mrb[0].mxu0
      %v2224 = vadd.f32 0.0, %v2223
      %v2225 = vpop.f32.mrb[0].mxu0
      %v2226 = vpop.f32.mrb[0].mxu0
      %v2227 = vadd.f32 0.0, %v2226
      %v2228 = vpop.f32.mrb[0].mxu0
      %2229 = vmatprep.mubr.bf16.mxu0 0
      %2230 = vmatmul.mubr.bf16.gmra.mrb[0].mxu0 %v2158
      %v2231 = vpop.f32.mrb[0].mxu0
      %v2232 = vadd.f32 0.0, %v2231
      %v2233 = vpop.f32.mrb[0].mxu0
      %v2234 = vpop.f32.mrb[0].mxu0
      %v2235 = vadd.f32 0.0, %v2234
      %v2236 = vpop.f32.mrb[0].mxu0
      %2237 = vmatprep.mubr.bf16.mxu0 0
      %2238 = vmatmul.mubr.bf16.gmra.mrb[0].mxu0 %v2161
      %v2239 = vpop.f32.mrb[0].mxu0
      %v2240 = vadd.f32 0.0, %v2239
      %v2241 = vpop.f32.mrb[0].mxu0
      %v2242 = vpop.f32.mrb[0].mxu0
      %v2243 = vadd.f32 0.0, %v2242
      %v2244 = vpop.f32.mrb[0].mxu0
      %2245 = vmatprep.mubr.bf16.mxu0 0
      %2246 = vmatmul.mubr.bf16.gmra.mrb[0].mxu0 %v2164
      %v2247 = vpop.f32.mrb[0].mxu0
      %v2248 = vadd.f32 0.0, %v2247
      %v2249 = vpop.f32.mrb[0].mxu0
      %v2250 = vpop.f32.mrb[0].mxu0
      %v2251 = vadd.f32 0.0, %v2250
      %v2252 = vpop.f32.mrb[0].mxu0
      %2253 = vmatprep.mubr.bf16.mxu0 0
      %2254 = vmatmul.mubr.bf16.gmra.mrb[0].mxu0 %v2167
      %v2255 = vpop.f32.mrb[0].mxu0
      %v2256 = vadd.f32 0.0, %v2255
      %v2257 = vpop.f32.mrb[0].mxu0
      %v2258 = vpop.f32.mrb[0].mxu0
      %v2259 = vadd.f32 0.0, %v2258
      %v2260 = vpop.f32.mrb[0].mxu0
      %2261 = vmatprep.mubr.bf16.mxu0 0
      %2262 = vmatmul.mubr.bf16.gmra.mrb[0].mxu0 %v2170
      %v2263 = vpop.f32.mrb[0].mxu0
      %v2264 = vadd.f32 0.0, %v2263
      %v2265 = vpop.f32.mrb[0].mxu0
      %v2266 = vpop.f32.mrb[0].mxu0
      %v2267 = vadd.f32 0.0, %v2266
      %v2268 = vpop.f32.mrb[0].mxu0
      %2269 = vmatprep.mubr.bf16.mxu0 0
      %2270 = vmatmul.mubr.bf16.gmra.mrb[0].mxu0 %v2173
      %v2271 = vpop.f32.mrb[0].mxu0
      %v2272 = vadd.f32 0.0, %v2271
      %v2273 = vpop.f32.mrb[0].mxu0
      %v2274 = vpop.f32.mrb[0].mxu0
      %v2275 = vadd.f32 0.0, %v2274
      %v2276 = vpop.f32.mrb[0].mxu0
      %2277 = vmatprep.mubr.bf16.mxu0 0
      %2278 = vmatmul.mubr.bf16.gmra.mrb[0].mxu0 %v2176
      %v2279 = vpop.f32.mrb[0].mxu0
      %v2280 = vadd.f32 0.0, %v2279
      %v2281 = vpop.f32.mrb[0].mxu0
      %v2282 = vpop.f32.mrb[0].mxu0
      %v2283 = vadd.f32 0.0, %v2282
      %v2284 = vpop.f32.mrb[0].mxu0
      %2285 = vdwg.mxu0
      %v2286 = vadd.f32 %v2045, %v2216
      %v2287 = vadd.f32 %v2046, %v2219
      %v2288 = vadd.f32 %v2047, %v2224
      %v2289 = vadd.f32 %v2048, %v2227
      %v2290 = vadd.f32 %v2049, %v2232
      %v2291 = vadd.f32 %v2050, %v2235
      %v2292 = vadd.f32 %v2051, %v2240
      %v2293 = vadd.f32 %v2052, %v2243
      %v2294 = vadd.f32 %v2053, %v2248
      %v2295 = vadd.f32 %v2054, %v2251
      %v2296 = vadd.f32 %v2055, %v2256
      %v2297 = vadd.f32 %v2056, %v2259
      %v2298 = vadd.f32 %v2057, %v2264
      %v2299 = vadd.f32 %v2058, %v2267
      %v2300 = vadd.f32 %v2059, %v2272
      %v2301 = vadd.f32 %v2060, %v2275
      %v2302 = vadd.f32 %v2061, %v2280
      %v2303 = vadd.f32 %v2062, %v2283
      %v2304 = vld [vmem:[#allocation2 + $0x58] sm:$0x7]
      %s2305 = scalar_lea.vmem %s3, 28
      %v2306 = vld [vmem:[%s2305] sm:$0xf]
      %v2308 = vunpack.c.l.b16 %v2304
      %v2309 = vpack.c.b16 %v2308, %v2308
      %vm2310 = vsmask.f32 5376
      %v2312 = vshrl.u32 %v2122, 16
      %v2314 = vrot.slane %v2312, 2
      %v2315 = vshll.u32 %v2122, 16
      %v2317 = vrot.slane %v2315, 3
      %v2318 = vor.u32 %v2314, %v2317
      %v2320 = vshrl.u32 %v2123, 16
      %v2322 = vrot.slane %v2320, 2
      %v2323 = vshll.u32 %v2123, 16
      %v2325 = vrot.slane %v2323, 3
      %v2326 = vor.u32 %v2322, %v2325
      %v2327 = vsel %vm2310, %v2318, %v2326
      %v2329 = vshrl.u32 %v2124, 16
      %v2331 = vrot.slane %v2329, 2
      %v2332 = vshll.u32 %v2124, 16
      %v2334 = vrot.slane %v2332, 3
      %v2335 = vor.u32 %v2331, %v2334
      %v2336 = vsel %vm2310, %v2326, %v2335
      %v2338 = vshrl.u32 %v2125, 16
      %v2340 = vrot.slane %v2338, 2
      %v2341 = vshll.u32 %v2125, 16
      %v2343 = vrot.slane %v2341, 3
      %v2344 = vor.u32 %v2340, %v2343
      %v2345 = vsel %vm2310, %v2335, %v2344
      %v2347 = vshrl.u32 %v2126, 16
      %v2349 = vrot.slane %v2347, 2
      %v2350 = vshll.u32 %v2126, 16
      %v2352 = vrot.slane %v2350, 3
      %v2353 = vor.u32 %v2349, %v2352
      %v2354 = vsel %vm2310, %v2344, %v2353
      %v2356 = vshrl.u32 %v2127, 16
      %v2358 = vrot.slane %v2356, 2
      %v2359 = vshll.u32 %v2127, 16
      %v2361 = vrot.slane %v2359, 3
      %v2362 = vor.u32 %v2358, %v2361
      %v2363 = vsel %vm2310, %v2353, %v2362
      %v2365 = vshrl.u32 %v2128, 16
      %v2367 = vrot.slane %v2365, 2
      %v2368 = vshll.u32 %v2128, 16
      %v2370 = vrot.slane %v2368, 3
      %v2371 = vor.u32 %v2367, %v2370
      %v2372 = vsel %vm2310, %v2362, %v2371
      %v2374 = vshrl.u32 %v2129, 16
      %v2376 = vrot.slane %v2374, 2
      %v2377 = vshll.u32 %v2129, 16
      %v2379 = vrot.slane %v2377, 3
      %v2380 = vor.u32 %v2376, %v2379
      %v2381 = vsel %vm2310, %v2371, %v2380
      %v2383 = vshrl.u32 %v2130, 16
      %v2385 = vrot.slane %v2383, 2
      %v2386 = vshll.u32 %v2130, 16
      %v2388 = vrot.slane %v2386, 3
      %v2389 = vor.u32 %v2385, %v2388
      %v2390 = vsel %vm2310, %v2380, %v2389
      %v2392 = vshrl.u32 %v2309, 16
      %v2394 = vrot.slane %v2392, 2
      %v2395 = vshll.u32 %v2309, 16
      %v2397 = vrot.slane %v2395, 3
      %v2398 = vor.u32 %v2394, %v2397
      %v2399 = vsel %vm2310, %v2389, %v2398
      %v2401 = vsel %vm952, %v2327, 0
      %v2404 = vsel %vm952, %v2336, 0
      %v2407 = vsel %vm952, %v2345, 0
      %v2410 = vsel %vm952, %v2354, 0
      %v2413 = vsel %vm952, %v2363, 0
      %v2416 = vsel %vm952, %v2372, 0
      %v2419 = vsel %vm952, %v2381, 0
      %v2422 = vsel %vm952, %v2390, 0
      %v2425 = vsel %vm952, %v2399, 0
      %v2428 = vsel %vm980, %v2306, 0
      %2430 = vmatprep.subr.bf16.mxu0 0
      %2431 = vmatpush1.bf16.msra.mxu0 %v2428
      %2432 = vmatprep.subr.bf16.mxu0 0
      %2433 = vmatpush1.bf16.msra.mxu0 0
      %2434 = vmatprep.subr.bf16.mxu0 0
      %2435 = vmatpush1.bf16.msra.mxu0 0
      %2436 = vmatprep.subr.bf16.mxu0 0
      %2437 = vmatpush1.bf16.msra.mxu0 0
      %2438 = vmatprep.subr.bf16.mxu0 0
      %2439 = vmatpush1.bf16.msra.mxu0 0
      %2440 = vmatprep.subr.bf16.mxu0 0
      %2441 = vmatpush1.bf16.msra.mxu0 0
      %2442 = vmatprep.subr.bf16.mxu0 0
      %2443 = vmatpush1.bf16.msra.mxu0 0
      %2444 = vmatprep.subr.bf16.mxu0 0
      %2445 = vmatpush1.bf16.msra.mxu0 0
      %2446 = vmatprep.subr.bf16.mxu0 0
      %2447 = vmatpush1.bf16.msra.mxu0 0
      %2448 = vmatprep.subr.bf16.mxu0 0
      %2449 = vmatpush1.bf16.msra.mxu0 0
      %2450 = vmatprep.subr.bf16.mxu0 0
      %2451 = vmatpush1.bf16.msra.mxu0 0
      %2452 = vmatprep.subr.bf16.mxu0 0
      %2453 = vmatpush1.bf16.msra.mxu0 0
      %2454 = vmatprep.subr.bf16.mxu0 0
      %2455 = vmatpush1.bf16.msra.mxu0 0
      %2456 = vmatprep.subr.bf16.mxu0 0
      %2457 = vmatpush1.bf16.msra.mxu0 0
      %2458 = vmatprep.subr.bf16.mxu0 0
      %2459 = vmatpush1.bf16.msra.mxu0 0
      %2460 = vmatprep.subr.bf16.mxu0 0
      %2461 = vmatpush1.bf16.msra.mxu0 0
      %2462 = vmatprep.mubr.bf16.mxu0 0
      %2463 = vmatmul.mubr.bf16.gmra.mrb[0].mxu0 %v2401
      %v2464 = vpop.f32.mrb[0].mxu0
      %v2465 = vadd.f32 0.0, %v2464
      %v2466 = vpop.f32.mrb[0].mxu0
      %v2467 = vpop.f32.mrb[0].mxu0
      %v2468 = vadd.f32 0.0, %v2467
      %v2469 = vpop.f32.mrb[0].mxu0
      %2470 = vmatprep.mubr.bf16.mxu0 0
      %2471 = vmatmul.mubr.bf16.gmra.mrb[0].mxu0 %v2404
      %v2472 = vpop.f32.mrb[0].mxu0
      %v2473 = vadd.f32 0.0, %v2472
      %v2474 = vpop.f32.mrb[0].mxu0
      %v2475 = vpop.f32.mrb[0].mxu0
      %v2476 = vadd.f32 0.0, %v2475
      %v2477 = vpop.f32.mrb[0].mxu0
      %2478 = vmatprep.mubr.bf16.mxu0 0
      %2479 = vmatmul.mubr.bf16.gmra.mrb[0].mxu0 %v2407
      %v2480 = vpop.f32.mrb[0].mxu0
      %v2481 = vadd.f32 0.0, %v2480
      %v2482 = vpop.f32.mrb[0].mxu0
      %v2483 = vpop.f32.mrb[0].mxu0
      %v2484 = vadd.f32 0.0, %v2483
      %v2485 = vpop.f32.mrb[0].mxu0
      %2486 = vmatprep.mubr.bf16.mxu0 0
      %2487 = vmatmul.mubr.bf16.gmra.mrb[0].mxu0 %v2410
      %v2488 = vpop.f32.mrb[0].mxu0
      %v2489 = vadd.f32 0.0, %v2488
      %v2490 = vpop.f32.mrb[0].mxu0
      %v2491 = vpop.f32.mrb[0].mxu0
      %v2492 = vadd.f32 0.0, %v2491
      %v2493 = vpop.f32.mrb[0].mxu0
      %2494 = vmatprep.mubr.bf16.mxu0 0
      %2495 = vmatmul.mubr.bf16.gmra.mrb[0].mxu0 %v2413
      %v2496 = vpop.f32.mrb[0].mxu0
      %v2497 = vadd.f32 0.0, %v2496
      %v2498 = vpop.f32.mrb[0].mxu0
      %v2499 = vpop.f32.mrb[0].mxu0
      %v2500 = vadd.f32 0.0, %v2499
      %v2501 = vpop.f32.mrb[0].mxu0
      %2502 = vmatprep.mubr.bf16.mxu0 0
      %2503 = vmatmul.mubr.bf16.gmra.mrb[0].mxu0 %v2416
      %v2504 = vpop.f32.mrb[0].mxu0
      %v2505 = vadd.f32 0.0, %v2504
      %v2506 = vpop.f32.mrb[0].mxu0
      %v2507 = vpop.f32.mrb[0].mxu0
      %v2508 = vadd.f32 0.0, %v2507
      %v2509 = vpop.f32.mrb[0].mxu0
      %2510 = vmatprep.mubr.bf16.mxu0 0
      %2511 = vmatmul.mubr.bf16.gmra.mrb[0].mxu0 %v2419
      %v2512 = vpop.f32.mrb[0].mxu0
      %v2513 = vadd.f32 0.0, %v2512
      %v2514 = vpop.f32.mrb[0].mxu0
      %v2515 = vpop.f32.mrb[0].mxu0
      %v2516 = vadd.f32 0.0, %v2515
      %v2517 = vpop.f32.mrb[0].mxu0
      %2518 = vmatprep.mubr.bf16.mxu0 0
      %2519 = vmatmul.mubr.bf16.gmra.mrb[0].mxu0 %v2422
      %v2520 = vpop.f32.mrb[0].mxu0
      %v2521 = vadd.f32 0.0, %v2520
      %v2522 = vpop.f32.mrb[0].mxu0
      %v2523 = vpop.f32.mrb[0].mxu0
      %v2524 = vadd.f32 0.0, %v2523
      %v2525 = vpop.f32.mrb[0].mxu0
      %2526 = vmatprep.mubr.bf16.mxu0 0
      %2527 = vmatmul.mubr.bf16.gmra.mrb[0].mxu0 %v2425
      %v2528 = vpop.f32.mrb[0].mxu0
      %v2529 = vadd.f32 0.0, %v2528
      %v2530 = vpop.f32.mrb[0].mxu0
      %v2531 = vpop.f32.mrb[0].mxu0
      %v2532 = vadd.f32 0.0, %v2531
      %v2533 = vpop.f32.mrb[0].mxu0
      %2534 = vdwg.mxu0
      %v2535 = vadd.f32 %v2286, %v2465
      %v2536 = vadd.f32 %v2287, %v2468
      %v2537 = vadd.f32 %v2288, %v2473
      %v2538 = vadd.f32 %v2289, %v2476
      %v2539 = vadd.f32 %v2290, %v2481
      %v2540 = vadd.f32 %v2291, %v2484
      %v2541 = vadd.f32 %v2292, %v2489
      %v2542 = vadd.f32 %v2293, %v2492
      %v2543 = vadd.f32 %v2294, %v2497
      %v2544 = vadd.f32 %v2295, %v2500
      %v2545 = vadd.f32 %v2296, %v2505
      %v2546 = vadd.f32 %v2297, %v2508
      %v2547 = vadd.f32 %v2298, %v2513
      %v2548 = vadd.f32 %v2299, %v2516
      %v2549 = vadd.f32 %v2300, %v2521
      %v2550 = vadd.f32 %v2301, %v2524
      %v2551 = vadd.f32 %v2302, %v2529
      %v2552 = vadd.f32 %v2303, %v2532
      %v2553 = vld [vmem:[#allocation2 + $0x10] sm:$0x8]
      %s2554 = scalar_lea.vmem %s3, 32
      %v2555 = vld [vmem:[%s2554] sm:$0xf]
      %v2557 = vunpack.c.l.b16 %v2553
      %v2558 = vpack.c.b16 %v2104, %v2557
      %vm2559 = vcmask 1044480
      %v2560 = vrot.slane %v2558, 3
      %v2561 = vrot.slane %v2123, 3
      %v2562 = vsel %vm2559, %v2560, %v2561
      %v2563 = vrot.slane %v2124, 3
      %v2564 = vsel %vm2559, %v2561, %v2563
      %v2565 = vrot.slane %v2125, 3
      %v2566 = vsel %vm2559, %v2563, %v2565
      %v2567 = vrot.slane %v2126, 3
      %v2568 = vsel %vm2559, %v2565, %v2567
      %v2569 = vrot.slane %v2127, 3
      %v2570 = vsel %vm2559, %v2567, %v2569
      %v2571 = vrot.slane %v2128, 3
      %v2572 = vsel %vm2559, %v2569, %v2571
      %v2573 = vrot.slane %v2129, 3
      %v2574 = vsel %vm2559, %v2571, %v2573
      %v2575 = vrot.slane %v2130, 3
      %v2576 = vsel %vm2559, %v2573, %v2575
      %v2577 = vrot.slane %v2309, 3
      %v2578 = vsel %vm2559, %v2575, %v2577
      %v2580 = vsel %vm952, %v2562, 0
      %v2583 = vsel %vm952, %v2564, 0
      %v2586 = vsel %vm952, %v2566, 0
      %v2589 = vsel %vm952, %v2568, 0
      %v2592 = vsel %vm952, %v2570, 0
      %v2595 = vsel %vm952, %v2572, 0
      %v2598 = vsel %vm952, %v2574, 0
      %v2601 = vsel %vm952, %v2576, 0
      %v2604 = vsel %vm952, %v2578, 0
      %v2607 = vsel %vm980, %v2555, 0
      %2609 = vmatprep.subr.bf16.mxu0 0
      %2610 = vmatpush1.bf16.msra.mxu0 %v2607
      %2611 = vmatprep.subr.bf16.mxu0 0
      %2612 = vmatpush1.bf16.msra.mxu0 0
      %2613 = vmatprep.subr.bf16.mxu0 0
      %2614 = vmatpush1.bf16.msra.mxu0 0
      %2615 = vmatprep.subr.bf16.mxu0 0
      %2616 = vmatpush1.bf16.msra.mxu0 0
      %2617 = vmatprep.subr.bf16.mxu0 0
      %2618 = vmatpush1.bf16.msra.mxu0 0
      %2619 = vmatprep.subr.bf16.mxu0 0
      %2620 = vmatpush1.bf16.msra.mxu0 0
      %2621 = vmatprep.subr.bf16.mxu0 0
      %2622 = vmatpush1.bf16.msra.mxu0 0
      %2623 = vmatprep.subr.bf16.mxu0 0
      %2624 = vmatpush1.bf16.msra.mxu0 0
      %2625 = vmatprep.subr.bf16.mxu0 0
      %2626 = vmatpush1.bf16.msra.mxu0 0
      %2627 = vmatprep.subr.bf16.mxu0 0
      %2628 = vmatpush1.bf16.msra.mxu0 0
      %2629 = vmatprep.subr.bf16.mxu0 0
      %2630 = vmatpush1.bf16.msra.mxu0 0
      %2631 = vmatprep.subr.bf16.mxu0 0
      %2632 = vmatpush1.bf16.msra.mxu0 0
      %2633 = vmatprep.subr.bf16.mxu0 0
      %2634 = vmatpush1.bf16.msra.mxu0 0
      %2635 = vmatprep.subr.bf16.mxu0 0
      %2636 = vmatpush1.bf16.msra.mxu0 0
      %2637 = vmatprep.subr.bf16.mxu0 0
      %2638 = vmatpush1.bf16.msra.mxu0 0
      %2639 = vmatprep.subr.bf16.mxu0 0
      %2640 = vmatpush1.bf16.msra.mxu0 0
      %2641 = vmatprep.mubr.bf16.mxu0 0
      %2642 = vmatmul.mubr.bf16.gmra.mrb[0].mxu0 %v2580
      %v2643 = vpop.f32.mrb[0].mxu0
      %v2644 = vadd.f32 0.0, %v2643
      %v2645 = vpop.f32.mrb[0].mxu0
      %v2646 = vpop.f32.mrb[0].mxu0
      %v2647 = vadd.f32 0.0, %v2646
      %v2648 = vpop.f32.mrb[0].mxu0
      %2649 = vmatprep.mubr.bf16.mxu0 0
      %2650 = vmatmul.mubr.bf16.gmra.mrb[0].mxu0 %v2583
      %v2651 = vpop.f32.mrb[0].mxu0
      %v2652 = vadd.f32 0.0, %v2651
      %v2653 = vpop.f32.mrb[0].mxu0
      %v2654 = vpop.f32.mrb[0].mxu0
      %v2655 = vadd.f32 0.0, %v2654
      %v2656 = vpop.f32.mrb[0].mxu0
      %2657 = vmatprep.mubr.bf16.mxu0 0
      %2658 = vmatmul.mubr.bf16.gmra.mrb[0].mxu0 %v2586
      %v2659 = vpop.f32.mrb[0].mxu0
      %v2660 = vadd.f32 0.0, %v2659
      %v2661 = vpop.f32.mrb[0].mxu0
      %v2662 = vpop.f32.mrb[0].mxu0
      %v2663 = vadd.f32 0.0, %v2662
      %v2664 = vpop.f32.mrb[0].mxu0
      %2665 = vmatprep.mubr.bf16.mxu0 0
      %2666 = vmatmul.mubr.bf16.gmra.mrb[0].mxu0 %v2589
      %v2667 = vpop.f32.mrb[0].mxu0
      %v2668 = vadd.f32 0.0, %v2667
      %v2669 = vpop.f32.mrb[0].mxu0
      %v2670 = vpop.f32.mrb[0].mxu0
      %v2671 = vadd.f32 0.0, %v2670
      %v2672 = vpop.f32.mrb[0].mxu0
      %2673 = vmatprep.mubr.bf16.mxu0 0
      %2674 = vmatmul.mubr.bf16.gmra.mrb[0].mxu0 %v2592
      %v2675 = vpop.f32.mrb[0].mxu0
      %v2676 = vadd.f32 0.0, %v2675
      %v2677 = vpop.f32.mrb[0].mxu0
      %v2678 = vpop.f32.mrb[0].mxu0
      %v2679 = vadd.f32 0.0, %v2678
      %v2680 = vpop.f32.mrb[0].mxu0
      %2681 = vmatprep.mubr.bf16.mxu0 0
      %2682 = vmatmul.mubr.bf16.gmra.mrb[0].mxu0 %v2595
      %v2683 = vpop.f32.mrb[0].mxu0
      %v2684 = vadd.f32 0.0, %v2683
      %v2685 = vpop.f32.mrb[0].mxu0
      %v2686 = vpop.f32.mrb[0].mxu0
      %v2687 = vadd.f32 0.0, %v2686
      %v2688 = vpop.f32.mrb[0].mxu0
      %2689 = vmatprep.mubr.bf16.mxu0 0
      %2690 = vmatmul.mubr.bf16.gmra.mrb[0].mxu0 %v2598
      %v2691 = vpop.f32.mrb[0].mxu0
      %v2692 = vadd.f32 0.0, %v2691
      %v2693 = vpop.f32.mrb[0].mxu0
      %v2694 = vpop.f32.mrb[0].mxu0
      %v2695 = vadd.f32 0.0, %v2694
      %v2696 = vpop.f32.mrb[0].mxu0
      %2697 = vmatprep.mubr.bf16.mxu0 0
      %2698 = vmatmul.mubr.bf16.gmra.mrb[0].mxu0 %v2601
      %v2699 = vpop.f32.mrb[0].mxu0
      %v2700 = vadd.f32 0.0, %v2699
      %v2701 = vpop.f32.mrb[0].mxu0
      %v2702 = vpop.f32.mrb[0].mxu0
      %v2703 = vadd.f32 0.0, %v2702
      %v2704 = vpop.f32.mrb[0].mxu0
      %2705 = vmatprep.mubr.bf16.mxu0 0
      %2706 = vmatmul.mubr.bf16.gmra.mrb[0].mxu0 %v2604
      %v2707 = vpop.f32.mrb[0].mxu0
      %v2708 = vadd.f32 0.0, %v2707
      %v2709 = vpop.f32.mrb[0].mxu0
      %v2710 = vpop.f32.mrb[0].mxu0
      %v2711 = vadd.f32 0.0, %v2710
      %v2712 = vpop.f32.mrb[0].mxu0
      %2713 = vdwg.mxu0
      %v2714 = vadd.f32 %v2535, %v2644
      %v2715 = vadd.f32 %v2536, %v2647
      %v2716 = vadd.f32 %v2537, %v2652
      %v2717 = vadd.f32 %v2538, %v2655
      %v2718 = vadd.f32 %v2539, %v2660
      %v2719 = vadd.f32 %v2540, %v2663
      %v2720 = vadd.f32 %v2541, %v2668
      %v2721 = vadd.f32 %v2542, %v2671
      %v2722 = vadd.f32 %v2543, %v2676
      %v2723 = vadd.f32 %v2544, %v2679
      %v2724 = vadd.f32 %v2545, %v2684
      %v2725 = vadd.f32 %v2546, %v2687
      %v2726 = vadd.f32 %v2547, %v2692
      %v2727 = vadd.f32 %v2548, %v2695
      %v2728 = vadd.f32 %v2549, %v2700
      %v2729 = vadd.f32 %v2550, %v2703
      %v2730 = vadd.f32 %v2551, %v2708
      %v2731 = vadd.f32 %v2552, %v2711
      %v2732 = vld [vmem:[%s4] sm:$0x1]
      %v2734 = vlaneseq
      %v2735 = vshrl.u32 %v2734, 7
      %v2736 = vsub.s32 0, %v2735
      %v2737 = vrot.slane %v2732, %v2736
      %v2739 = vmul.f32 %v2714, %v2737
      %v2740 = vmul.f32 %v2715, %v2737
      %v2741 = vmul.f32 %v2716, %v2737
      %v2742 = vmul.f32 %v2717, %v2737
      %v2743 = vmul.f32 %v2718, %v2737
      %v2744 = vmul.f32 %v2719, %v2737
      %v2745 = vmul.f32 %v2720, %v2737
      %v2746 = vmul.f32 %v2721, %v2737
      %v2747 = vmul.f32 %v2722, %v2737
      %v2748 = vmul.f32 %v2723, %v2737
      %v2749 = vmul.f32 %v2724, %v2737
      %v2750 = vmul.f32 %v2725, %v2737
      %v2751 = vmul.f32 %v2726, %v2737
      %v2752 = vmul.f32 %v2727, %v2737
      %v2753 = vmul.f32 %v2728, %v2737
      %v2754 = vmul.f32 %v2729, %v2737
      %v2755 = vmul.f32 %v2730, %v2737
      %v2756 = vmul.f32 %v2731, %v2737
      %v2757 = vld [vmem:[%s5] sm:$0x1]
      %v2759 = vlaneseq
      %v2760 = vshrl.u32 %v2759, 7
      %v2761 = vsub.s32 0, %v2760
      %v2762 = vrot.slane %v2757, %v2761
      %v2764 = vadd.f32 %v2739, %v2762
      %v2765 = vadd.f32 %v2740, %v2762
      %v2766 = vadd.f32 %v2741, %v2762
      %v2767 = vadd.f32 %v2742, %v2762
      %v2768 = vadd.f32 %v2743, %v2762
      %v2769 = vadd.f32 %v2744, %v2762
      %v2770 = vadd.f32 %v2745, %v2762
      %v2771 = vadd.f32 %v2746, %v2762
      %v2772 = vadd.f32 %v2747, %v2762
      %v2773 = vadd.f32 %v2748, %v2762
      %v2774 = vadd.f32 %v2749, %v2762
      %v2775 = vadd.f32 %v2750, %v2762
      %v2776 = vadd.f32 %v2751, %v2762
      %v2777 = vadd.f32 %v2752, %v2762
      %v2778 = vadd.f32 %v2753, %v2762
      %v2779 = vadd.f32 %v2754, %v2762
      %v2780 = vadd.f32 %v2755, %v2762
      %v2781 = vadd.f32 %v2756, %v2762
      %v2782 = vxor.u32 %v2764, 2147483648
      %v2783 = vxor.u32 %v2765, 2147483648
      %v2784 = vxor.u32 %v2766, 2147483648
      %v2785 = vxor.u32 %v2767, 2147483648
      %v2786 = vxor.u32 %v2768, 2147483648
      %v2787 = vxor.u32 %v2769, 2147483648
      %v2788 = vxor.u32 %v2770, 2147483648
      %v2789 = vxor.u32 %v2771, 2147483648
      %v2790 = vxor.u32 %v2772, 2147483648
      %v2791 = vxor.u32 %v2773, 2147483648
      %v2792 = vxor.u32 %v2774, 2147483648
      %v2793 = vxor.u32 %v2775, 2147483648
      %v2794 = vxor.u32 %v2776, 2147483648
      %v2795 = vxor.u32 %v2777, 2147483648
      %v2796 = vxor.u32 %v2778, 2147483648
      %v2797 = vxor.u32 %v2779, 2147483648
      %v2798 = vxor.u32 %v2780, 2147483648
      %v2799 = vxor.u32 %v2781, 2147483648
      %v2800 = vmul.f32 %v2782, 1.442695
      %v2801 = vpow.pop %v2800
      %v2802 = vmul.f32 %v2783, 1.442695
      %v2803 = vpow.pop %v2802
      %v2804 = vmul.f32 %v2784, 1.442695
      %v2805 = vpow.pop %v2804
      %v2806 = vmul.f32 %v2785, 1.442695
      %v2807 = vpow.pop %v2806
      %v2808 = vmul.f32 %v2786, 1.442695
      %v2809 = vpow.pop %v2808
      %v2810 = vmul.f32 %v2787, 1.442695
      %v2811 = vpow.pop %v2810
      %v2812 = vmul.f32 %v2788, 1.442695
      %v2813 = vpow.pop %v2812
      %v2814 = vmul.f32 %v2789, 1.442695
      %v2815 = vpow.pop %v2814
      %v2816 = vmul.f32 %v2790, 1.442695
      %v2817 = vpow.pop %v2816
      %v2818 = vmul.f32 %v2791, 1.442695
      %v2819 = vpow.pop %v2818
      %v2820 = vmul.f32 %v2792, 1.442695
      %v2821 = vpow.pop %v2820
      %v2822 = vmul.f32 %v2793, 1.442695
      %v2823 = vpow.pop %v2822
      %v2824 = vmul.f32 %v2794, 1.442695
      %v2825 = vpow.pop %v2824
      %v2826 = vmul.f32 %v2795, 1.442695
      %v2827 = vpow.pop %v2826
      %v2828 = vmul.f32 %v2796, 1.442695
      %v2829 = vpow.pop %v2828
      %v2830 = vmul.f32 %v2797, 1.442695
      %v2831 = vpow.pop %v2830
      %v2832 = vmul.f32 %v2798, 1.442695
      %v2833 = vpow.pop %v2832
      %v2834 = vmul.f32 %v2799, 1.442695
      %v2835 = vpow.pop %v2834
      %v2836 = vadd.f32 %v2801, 1.0
      %v2837 = vadd.f32 %v2803, 1.0
      %v2838 = vadd.f32 %v2805, 1.0
      %v2839 = vadd.f32 %v2807, 1.0
      %v2840 = vadd.f32 %v2809, 1.0
      %v2841 = vadd.f32 %v2811, 1.0
      %v2842 = vadd.f32 %v2813, 1.0
      %v2843 = vadd.f32 %v2815, 1.0
      %v2844 = vadd.f32 %v2817, 1.0
      %v2845 = vadd.f32 %v2819, 1.0
      %v2846 = vadd.f32 %v2821, 1.0
      %v2847 = vadd.f32 %v2823, 1.0
      %v2848 = vadd.f32 %v2825, 1.0
      %v2849 = vadd.f32 %v2827, 1.0
      %v2850 = vadd.f32 %v2829, 1.0
      %v2851 = vadd.f32 %v2831, 1.0
      %v2852 = vadd.f32 %v2833, 1.0
      %v2853 = vadd.f32 %v2835, 1.0
      %v2854 = vrcp.pop %v2836
      %v2855 = vmul.f32 1.0, %v2854
      %v2856 = vrcp.pop %v2837
      %v2857 = vmul.f32 1.0, %v2856
      %v2858 = vrcp.pop %v2838
      %v2859 = vmul.f32 1.0, %v2858
      %v2860 = vrcp.pop %v2839
      %v2861 = vmul.f32 1.0, %v2860
      %v2862 = vrcp.pop %v2840
      %v2863 = vmul.f32 1.0, %v2862
      %v2864 = vrcp.pop %v2841
      %v2865 = vmul.f32 1.0, %v2864
      %v2866 = vrcp.pop %v2842
      %v2867 = vmul.f32 1.0, %v2866
      %v2868 = vrcp.pop %v2843
      %v2869 = vmul.f32 1.0, %v2868
      %v2870 = vrcp.pop %v2844
      %v2871 = vmul.f32 1.0, %v2870
      %v2872 = vrcp.pop %v2845
      %v2873 = vmul.f32 1.0, %v2872
      %v2874 = vrcp.pop %v2846
      %v2875 = vmul.f32 1.0, %v2874
      %v2876 = vrcp.pop %v2847
      %v2877 = vmul.f32 1.0, %v2876
      %v2878 = vrcp.pop %v2848
      %v2879 = vmul.f32 1.0, %v2878
      %v2880 = vrcp.pop %v2849
      %v2881 = vmul.f32 1.0, %v2880
      %v2882 = vrcp.pop %v2850
      %v2883 = vmul.f32 1.0, %v2882
      %v2884 = vrcp.pop %v2851
      %v2885 = vmul.f32 1.0, %v2884
      %v2886 = vrcp.pop %v2852
      %v2887 = vmul.f32 1.0, %v2886
      %v2888 = vrcp.pop %v2853
      %v2889 = vmul.f32 1.0, %v2888
      %v2890 = vmul.f32 %v2764, %v2855
      %v2891 = vmul.f32 %v2765, %v2857
      %v2892 = vmul.f32 %v2766, %v2859
      %v2893 = vmul.f32 %v2767, %v2861
      %v2894 = vmul.f32 %v2768, %v2863
      %v2895 = vmul.f32 %v2769, %v2865
      %v2896 = vmul.f32 %v2770, %v2867
      %v2897 = vmul.f32 %v2771, %v2869
      %v2898 = vmul.f32 %v2772, %v2871
      %v2899 = vmul.f32 %v2773, %v2873
      %v2900 = vmul.f32 %v2774, %v2875
      %v2901 = vmul.f32 %v2775, %v2877
      %v2902 = vmul.f32 %v2776, %v2879
      %v2903 = vmul.f32 %v2777, %v2881
      %v2904 = vmul.f32 %v2778, %v2883
      %v2905 = vmul.f32 %v2779, %v2885
      %v2906 = vmul.f32 %v2780, %v2887
      %v2907 = vmul.f32 %v2781, %v2889
      %v2908 = vpack.c.bf16 %v2891, %v2890
      %v2909 = vpack.c.bf16 %v2893, %v2892
      %v2910 = vpack.c.bf16 %v2895, %v2894
      %v2911 = vpack.c.bf16 %v2897, %v2896
      %v2912 = vpack.c.bf16 %v2899, %v2898
      %v2913 = vpack.c.bf16 %v2901, %v2900
      %v2914 = vpack.c.bf16 %v2903, %v2902
      %v2915 = vpack.c.bf16 %v2905, %v2904
      %v2916 = vpack.c.bf16 %v2907, %v2906
      %v2918 = vunpack.c.l.b16 %v2908
      %v2919 = vunpack.c.h.b16 %v2908
      %v2920 = vpack.c.b16 %v2918, %v2918
      %v2921 = vpack.c.b16 %v2919, %v2919
      %2924 = vst.msk [vmem:[%s418] sm:$0xf] %vm421, %v2920
      %2925 = vst.msk [vmem:[%s418 + $0x4] sm:$0xf] %vm421, %v2921
      %v2928 = vunpack.c.l.b16 %v2909
      %v2929 = vunpack.c.h.b16 %v2909
      %v2930 = vunpack.c.l.b16 %v2910
      %v2931 = vpack.c.b16 %v2928, %v2928
      %v2932 = vpack.c.b16 %v2929, %v2929
      %v2933 = vpack.c.b16 %v2930, %v2930
      %vm2934 = vcmask 1042432
      %vm2935 = vcmask 1046532
      %vm2936 = vmor %vm2934, %vm2935
      %v2937 = vrot.slane %v2931, 5
      %v2938 = vrot.slane %v2937, 4
      %v2939 = vrot.slane %v2932, 5
      %v2940 = vsel %vm2936, %v2938, %v2939
      %v2941 = vrot.slane %v2939, 4
      %v2942 = vrot.slane %v2933, 5
      %v2943 = vsel %vm2936, %v2941, %v2942
      %s2946 = scalar_lea.vmem %s418, 8
      %2947 = vst.msk [vmem:[%s2946] sm:$0xf] %vm421, %v2940
      %2948 = vst.msk [vmem:[%s2946 + $0x4] sm:$0xf] %vm421, %v2943
      %v2950 = vunpack.c.h.b16 %v2910
      %v2951 = vunpack.c.l.b16 %v2911
      %v2952 = vpack.c.b16 %v2950, %v2950
      %v2953 = vpack.c.b16 %v2951, %v2951
      %vm2954 = vcmask 1041408
      %vm2955 = vcmask 1045508
      %vm2956 = vmor %vm2954, %vm2955
      %v2957 = vrot.slane %v2933, 6
      %v2958 = vrot.slane %v2957, 4
      %v2959 = vrot.slane %v2952, 6
      %v2960 = vsel %vm2956, %v2958, %v2959
      %v2961 = vrot.slane %v2959, 4
      %v2962 = vrot.slane %v2953, 6
      %v2963 = vsel %vm2956, %v2961, %v2962
      %s2966 = scalar_lea.vmem %s418, 16
      %2967 = vst.msk [vmem:[%s2966] sm:$0xf] %vm421, %v2960
      %2968 = vst.msk [vmem:[%s2966 + $0x4] sm:$0xf] %vm421, %v2963
      %v2970 = vunpack.c.h.b16 %v2911
      %v2971 = vunpack.c.l.b16 %v2912
      %v2972 = vpack.c.b16 %v2970, %v2970
      %v2973 = vpack.c.b16 %v2971, %v2971
      %vm2974 = vcmask 1040384
      %vm2975 = vcmask 1044484
      %vm2976 = vmor %vm2974, %vm2975
      %v2977 = vrot.slane %v2953, 7
      %v2978 = vrot.slane %v2977, 4
      %v2979 = vrot.slane %v2972, 7
      %v2980 = vsel %vm2976, %v2978, %v2979
      %v2981 = vrot.slane %v2979, 4
      %v2982 = vrot.slane %v2973, 7
      %v2983 = vsel %vm2976, %v2981, %v2982
      %s2986 = scalar_lea.vmem %s418, 24
      %2987 = vst.msk [vmem:[%s2986] sm:$0xf] %vm421, %v2980
      %2988 = vst.msk [vmem:[%s2986 + $0x4] sm:$0xf] %vm421, %v2983
      %v2990 = vunpack.c.h.b16 %v2912
      %v2991 = vunpack.c.l.b16 %v2913
      %v2992 = vpack.c.b16 %v2990, %v2990
      %v2993 = vpack.c.b16 %v2991, %v2991
      %s2996 = scalar_lea.vmem %s418, 32
      %2997 = vst.msk [vmem:[%s2996] sm:$0xf] %vm421, %v2992
      %2998 = vst.msk [vmem:[%s2996 + $0x4] sm:$0xf] %vm421, %v2993
      %v3000 = vunpack.c.h.b16 %v2913
      %v3001 = vunpack.c.l.b16 %v2914
      %v3002 = vunpack.c.h.b16 %v2914
      %v3003 = vpack.c.b16 %v3000, %v3000
      %v3004 = vpack.c.b16 %v3001, %v3001
      %v3005 = vpack.c.b16 %v3002, %v3002
      %v3006 = vrot.slane %v3003, 5
      %v3007 = vrot.slane %v3006, 4
      %v3008 = vrot.slane %v3004, 5
      %v3009 = vsel %vm2936, %v3007, %v3008
      %v3010 = vrot.slane %v3008, 4
      %v3011 = vrot.slane %v3005, 5
      %v3012 = vsel %vm2936, %v3010, %v3011
      %s3015 = scalar_lea.vmem %s418, 40
      %3016 = vst.msk [vmem:[%s3015] sm:$0xf] %vm421, %v3009
      %3017 = vst.msk [vmem:[%s3015 + $0x4] sm:$0xf] %vm421, %v3012
      %v3019 = vunpack.c.l.b16 %v2915
      %v3020 = vunpack.c.h.b16 %v2915
      %v3021 = vpack.c.b16 %v3019, %v3019
      %v3022 = vpack.c.b16 %v3020, %v3020
      %v3023 = vrot.slane %v3005, 6
      %v3024 = vrot.slane %v3023, 4
      %v3025 = vrot.slane %v3021, 6
      %v3026 = vsel %vm2956, %v3024, %v3025
      %v3027 = vrot.slane %v3025, 4
      %v3028 = vrot.slane %v3022, 6
      %v3029 = vsel %vm2956, %v3027, %v3028
      %s3032 = scalar_lea.vmem %s418, 48
      %3033 = vst.msk [vmem:[%s3032] sm:$0xf] %vm421, %v3026
      %3034 = vst.msk [vmem:[%s3032 + $0x4] sm:$0xf] %vm421, %v3029
      %v3036 = vunpack.c.l.b16 %v2916
      %v3037 = vunpack.c.h.b16 %v2916
      %v3038 = vpack.c.b16 %v3036, %v3036
      %v3039 = vpack.c.b16 %v3037, %v3037
      %v3040 = vrot.slane %v3022, 7
      %v3041 = vrot.slane %v3040, 4
      %v3042 = vrot.slane %v3038, 7
      %v3043 = vsel %vm2976, %v3041, %v3042
      %v3044 = vrot.slane %v3042, 4
      %v3045 = vrot.slane %v3039, 7
      %v3046 = vsel %vm2976, %v3044, %v3045
      %s3049 = scalar_lea.vmem %s418, 56
      %3050 = vst.msk [vmem:[%s3049] sm:$0xf] %vm421, %v3043
      %3051 = vst.msk [vmem:[%s3049 + $0x4] sm:$0xf] %vm421, %v3046
      %s3052 = smul.u32 8, %s22
      %p3053 = scmp.lt.s32.totalorder %s21, 1
      %s3054 = scalar_select %p3053, %s21, 1
      %p3055 = scmp.lt.s32.totalorder %s3052, 15
      %s3056 = scalar_select %p3055, %s3052, 15
      %s3057 = smul.addr %s3056, 2
      %s3058 = smul.addr %s3054, 32
      %s3059 = sadd.s32 %s3057, %s3058
      %s3060 = smul.addr %s3059, 4
      %s3061 = scalar_lea.vmem %s6, %s3060
      // Predicated region
      $region53: #{_lambda_.6} parent=43 // pred_check
        %p3062 = pneg %p212
      $region54: #{_lambda_.6} parent=43 // pred_check_branch
        %3064 = sbr.rel (%p3062) target = $region56
      $region55: #{_lambda_.6} parent=43 // pred_region
        %s3065 = smul.u32 8, %s22
      $region56: #{_lambda_.6} parent=43 // pred_fallthru
        _
    $region44: #{_lambda_.6} parent=5 // pred_fallthru
      _
    %p3066 = scmp.le.s32.totalorder 2, %s12
    // Predicated region
    $region57: #{_lambda_.6} parent=5 // pred_check
      %p3067 = pneg %p3066
    $region58: #{_lambda_.6} parent=5 // pred_check_branch
      %3069 = sbr.rel (%p3067) target = $region60
    $region59: #{_lambda_.6} parent=5 // pred_region
      %s3070 = ssub.s32 %s12, 2
      // Predicated region
      $region61: #{_lambda_.6} parent=59 // pred_check
        %p3071 = pneg %p218
      $region62: #{_lambda_.6} parent=59 // pred_check_branch
        %3073 = sbr.rel (%p3071) target = $region64
      $region63: #{_lambda_.6} parent=59 // pred_region
        %s3074 = smul.u32 8, %s24
        %p3075 = scmp.lt.s32.totalorder %s23, 1
        %s3076 = scalar_select %p3075, %s23, 1
        %p3077 = scmp.lt.s32.totalorder %s3074, 15
        %s3078 = scalar_select %p3077, %s3074, 15
        %s3079 = smul.addr %s3078, 2
        %s3080 = smul.addr %s3076, 32
        %s3081 = sadd.s32 %s3079, %s3080
        %s3082 = smul.addr %s3081, 4
        %s3083 = scalar_lea.vmem %s6, %s3082
      $region64: #{_lambda_.6} parent=59 // pred_fallthru
        _
    $region60: #{_lambda_.6} parent=5 // pred_fallthru
      _
  $region6: #{_lambda_.6} parent=0 // loop_footer
    %s16 = sadd.s32 1, %s12
  $region7: #{_lambda_.6} parent=0 // loop_footer_branch
    %11 = sbr.rel target = $region3
  $region8: #{_lambda_.6} parent=0 // loop_exit
    _

// kernel: _lambda_.9
$region0: #{_lambda_.9}
  #allocation0 [shape = 'u32[]', space=smem, size = 0x4, offset = 0x4, fixed_abs, tag = 'smem constant byte address 0x4 - core index']
  #allocation1 [shape = 'u32[144,128]{1,0:T(1,128)}', space=vmem, size = 0x12000, scoped, tag = 'internal scratch']
  %s0 = inlined_call_operand.vmem [shape: bf16[512,16], index: 0, kind: input, shape index: {}]
  %s1 = inlined_call_operand.vmem [shape: bf16[512,8], index: 1, kind: input, shape index: {}]
  %s2 = inlined_call_operand.vmem [shape: bf16[16,16], index: 2, kind: input, shape index: {}]
  %s3 = inlined_call_operand.vmem [shape: bf16[8,16], index: 3, kind: input, shape index: {}]
  %s4 = inlined_call_operand.vmem [shape: f32[1,16], index: 4, kind: input, shape index: {}]
  %s5 = inlined_call_operand.vmem [shape: f32[1,16], index: 5, kind: input, shape index: {}]
  %s6 = inlined_call_operand.hbm [shape: f32[512,16], index: 6, kind: output, shape index: {}]
  %s7 = sld [smem:[#allocation0]]
  $region34: #{_lambda_.9} parent=0
    _
  %s9 = ssub.s32 1, %s7
  %s10 = scalar_select 0, %s9, %s7
  $region1: #{_lambda_.9} parent=0
    #allocation2 [shape = 'u8[262144]{0}', space=vmem, size = 0x40000, scoped, tag = 'output window, operand 0, single buffered']
    #allocation3 [shape = 's32[1]{0}', space=sflag, size = 0x4, scoped, tag = 'scoped memory for _lambda_.9']
    %11 = vsyncpa [#allocation3], 0
    // Predicated region
    $region2: #{_lambda_.9} parent=1 // pred_check
      _
    $region3: #{_lambda_.9} parent=1 // pred_check_branch
      %13 = sbr.rel (0) target = $region5
    $region4: #{_lambda_.9} parent=1 // pred_region
      _
    $region5: #{_lambda_.9} parent=1 // pred_fallthru
      _
    // Predicated region
    $region6: #{_lambda_.9} parent=1 // pred_check
      _
    $region7: #{_lambda_.9} parent=1 // pred_check_branch
      %15 = sbr.rel (0) target = $region9
    $region8: #{_lambda_.9} parent=1 // pred_region
      _
    $region9: #{_lambda_.9} parent=1 // pred_fallthru
      _
    // Predicated region
    $region10: #{_lambda_.9} parent=1 // pred_check
      _
    $region11: #{_lambda_.9} parent=1 // pred_check_branch
      %17 = sbr.rel (0) target = $region13
    $region12: #{_lambda_.9} parent=1 // pred_region
      _
    $region13: #{_lambda_.9} parent=1 // pred_fallthru
      _
    // Predicated region
    $region14: #{_lambda_.9} parent=1 // pred_check
      _
    $region15: #{_lambda_.9} parent=1 // pred_check_branch
      %19 = sbr.rel (0) target = $region17
    $region16: #{_lambda_.9} parent=1 // pred_region
      _
    $region17: #{_lambda_.9} parent=1 // pred_fallthru
      _
    // Predicated region
    $region18: #{_lambda_.9} parent=1 // pred_check
      _
    $region19: #{_lambda_.9} parent=1 // pred_check_branch
      %21 = sbr.rel (0) target = $region21
    $region20: #{_lambda_.9} parent=1 // pred_region
      _
    $region21: #{_lambda_.9} parent=1 // pred_fallthru
      _
    // Predicated region
    $region22: #{_lambda_.9} parent=1 // pred_check
      _
    $region23: #{_lambda_.9} parent=1 // pred_check_branch
      %23 = sbr.rel (0) target = $region25
    $region24: #{_lambda_.9} parent=1 // pred_region
      _
    $region25: #{_lambda_.9} parent=1 // pred_fallthru
      _
    %v25 = vld [vmem:[%s0] sm:$0xf]
    %v26 = vld [vmem:[%s0 + $0x4] sm:$0xf]
    %v27 = vld [vmem:[%s0 + $0x8] sm:$0xf]
    %v28 = vld [vmem:[%s0 + $0xc] sm:$0xf]
    %v29 = vld [vmem:[%s0 + $0x10] sm:$0xf]
    %v30 = vld [vmem:[%s0 + $0x14] sm:$0xf]
    %v31 = vld [vmem:[%s0 + $0x18] sm:$0xf]
    %v32 = vld [vmem:[%s0 + $0x1c] sm:$0xf]
    %v33 = vld [vmem:[%s0 + $0x20] sm:$0xf]
    %v34 = vld [vmem:[%s0 + $0x24] sm:$0xf]
    %v35 = vld [vmem:[%s0 + $0x28] sm:$0xf]
    %v36 = vld [vmem:[%s0 + $0x2c] sm:$0xf]
    %v37 = vld [vmem:[%s0 + $0x30] sm:$0xf]
    %v38 = vld [vmem:[%s0 + $0x34] sm:$0xf]
    %v39 = vld [vmem:[%s0 + $0x38] sm:$0xf]
    %v40 = vld [vmem:[%s0 + $0x3c] sm:$0xf]
    %v41 = vld [vmem:[%s0 + $0x40] sm:$0xf]
    %v42 = vld [vmem:[%s0 + $0x44] sm:$0xf]
    %v43 = vld [vmem:[%s0 + $0x48] sm:$0xf]
    %v44 = vld [vmem:[%s0 + $0x4c] sm:$0xf]
    %v45 = vld [vmem:[%s0 + $0x50] sm:$0xf]
    %v46 = vld [vmem:[%s0 + $0x54] sm:$0xf]
    %v47 = vld [vmem:[%s0 + $0x58] sm:$0xf]
    %v48 = vld [vmem:[%s0 + $0x5c] sm:$0xf]
    %v49 = vld [vmem:[%s0 + $0x60] sm:$0xf]
    %v50 = vld [vmem:[%s0 + $0x64] sm:$0xf]
    %v51 = vld [vmem:[%s0 + $0x68] sm:$0xf]
    %v52 = vld [vmem:[%s0 + $0x6c] sm:$0xf]
    %v53 = vld [vmem:[%s0 + $0x70] sm:$0xf]
    %v54 = vld [vmem:[%s0 + $0x74] sm:$0xf]
    %v55 = vld [vmem:[%s0 + $0x78] sm:$0xf]
    %v56 = vld [vmem:[%s0 + $0x7c] sm:$0xf]
    %v57 = vld [vmem:[%s0 + $0x80] sm:$0xf]
    %v58 = vld [vmem:[%s0 + $0x84] sm:$0xf]
    %v59 = vld [vmem:[%s0 + $0x88] sm:$0xf]
    %v60 = vld [vmem:[%s0 + $0x8c] sm:$0xf]
    %v61 = vld [vmem:[%s0 + $0x90] sm:$0xf]
    %v62 = vld [vmem:[%s0 + $0x94] sm:$0xf]
    %v63 = vld [vmem:[%s0 + $0x98] sm:$0xf]
    %v64 = vld [vmem:[%s0 + $0x9c] sm:$0xf]
    %v65 = vld [vmem:[%s0 + $0xa0] sm:$0xf]
    %v66 = vld [vmem:[%s0 + $0xa4] sm:$0xf]
    %v67 = vld [vmem:[%s0 + $0xa8] sm:$0xf]
    %v68 = vld [vmem:[%s0 + $0xac] sm:$0xf]
    %v69 = vld [vmem:[%s0 + $0xb0] sm:$0xf]
    %v70 = vld [vmem:[%s0 + $0xb4] sm:$0xf]
    %v71 = vld [vmem:[%s0 + $0xb8] sm:$0xf]
    %v72 = vld [vmem:[%s0 + $0xbc] sm:$0xf]
    %v73 = vld [vmem:[%s0 + $0xc0] sm:$0xf]
    %v74 = vld [vmem:[%s0 + $0xc4] sm:$0xf]
    %v75 = vld [vmem:[%s0 + $0xc8] sm:$0xf]
    %v76 = vld [vmem:[%s0 + $0xcc] sm:$0xf]
    %v77 = vld [vmem:[%s0 + $0xd0] sm:$0xf]
    %v78 = vld [vmem:[%s0 + $0xd4] sm:$0xf]
    %v79 = vld [vmem:[%s0 + $0xd8] sm:$0xf]
    %v80 = vld [vmem:[%s0 + $0xdc] sm:$0xf]
    %v81 = vld [vmem:[%s0 + $0xe0] sm:$0xf]
    %v82 = vld [vmem:[%s0 + $0xe4] sm:$0xf]
    %v83 = vld [vmem:[%s0 + $0xe8] sm:$0xf]
    %v84 = vld [vmem:[%s0 + $0xec] sm:$0xf]
    %v85 = vld [vmem:[%s0 + $0xf0] sm:$0xf]
    %v86 = vld [vmem:[%s0 + $0xf4] sm:$0xf]
    %v87 = vld [vmem:[%s0 + $0xf8] sm:$0xf]
    %v88 = vld [vmem:[%s0 + $0xfc] sm:$0xf]
    %v89 = vld [vmem:[%s2] sm:$0xf]
    %v90 = vld [vmem:[%s2 + $0x4] sm:$0xf]
    %v91 = vld [vmem:[%s1] sm:$0xf]
    %v92 = vld [vmem:[%s1 + $0x4] sm:$0xf]
    %v93 = vld [vmem:[%s1 + $0x8] sm:$0xf]
    %v94 = vld [vmem:[%s1 + $0xc] sm:$0xf]
    %v95 = vld [vmem:[%s1 + $0x10] sm:$0xf]
    %v96 = vld [vmem:[%s1 + $0x14] sm:$0xf]
    %v97 = vld [vmem:[%s1 + $0x18] sm:$0xf]
    %v98 = vld [vmem:[%s1 + $0x1c] sm:$0xf]
    %v99 = vld [vmem:[%s1 + $0x20] sm:$0xf]
    %v100 = vld [vmem:[%s1 + $0x24] sm:$0xf]
    %v101 = vld [vmem:[%s1 + $0x28] sm:$0xf]
    %v102 = vld [vmem:[%s1 + $0x2c] sm:$0xf]
    %v103 = vld [vmem:[%s1 + $0x30] sm:$0xf]
    %v104 = vld [vmem:[%s1 + $0x34] sm:$0xf]
    %v105 = vld [vmem:[%s1 + $0x38] sm:$0xf]
    %v106 = vld [vmem:[%s1 + $0x3c] sm:$0xf]
    %v107 = vld [vmem:[%s1 + $0x40] sm:$0xf]
    %v108 = vld [vmem:[%s1 + $0x44] sm:$0xf]
    %v109 = vld [vmem:[%s1 + $0x48] sm:$0xf]
    %v110 = vld [vmem:[%s1 + $0x4c] sm:$0xf]
    %v111 = vld [vmem:[%s1 + $0x50] sm:$0xf]
    %v112 = vld [vmem:[%s1 + $0x54] sm:$0xf]
    %v113 = vld [vmem:[%s1 + $0x58] sm:$0xf]
    %v114 = vld [vmem:[%s1 + $0x5c] sm:$0xf]
    %v115 = vld [vmem:[%s1 + $0x60] sm:$0xf]
    %v116 = vld [vmem:[%s1 + $0x64] sm:$0xf]
    %v117 = vld [vmem:[%s1 + $0x68] sm:$0xf]
    %v118 = vld [vmem:[%s1 + $0x6c] sm:$0xf]
    %v119 = vld [vmem:[%s1 + $0x70] sm:$0xf]
    %v120 = vld [vmem:[%s1 + $0x74] sm:$0xf]
    %v121 = vld [vmem:[%s1 + $0x78] sm:$0xf]
    %v122 = vld [vmem:[%s1 + $0x7c] sm:$0xf]
    %v123 = vld [vmem:[%s1 + $0x80] sm:$0xf]
    %v124 = vld [vmem:[%s1 + $0x84] sm:$0xf]
    %v125 = vld [vmem:[%s1 + $0x88] sm:$0xf]
    %v126 = vld [vmem:[%s1 + $0x8c] sm:$0xf]
    %v127 = vld [vmem:[%s1 + $0x90] sm:$0xf]
    %v128 = vld [vmem:[%s1 + $0x94] sm:$0xf]
    %v129 = vld [vmem:[%s1 + $0x98] sm:$0xf]
    %v130 = vld [vmem:[%s1 + $0x9c] sm:$0xf]
    %v131 = vld [vmem:[%s1 + $0xa0] sm:$0xf]
    %v132 = vld [vmem:[%s1 + $0xa4] sm:$0xf]
    %v133 = vld [vmem:[%s1 + $0xa8] sm:$0xf]
    %v134 = vld [vmem:[%s1 + $0xac] sm:$0xf]
    %v135 = vld [vmem:[%s1 + $0xb0] sm:$0xf]
    %v136 = vld [vmem:[%s1 + $0xb4] sm:$0xf]
    %v137 = vld [vmem:[%s1 + $0xb8] sm:$0xf]
    %v138 = vld [vmem:[%s1 + $0xbc] sm:$0xf]
    %v139 = vld [vmem:[%s1 + $0xc0] sm:$0xf]
    %v140 = vld [vmem:[%s1 + $0xc4] sm:$0xf]
    %v141 = vld [vmem:[%s1 + $0xc8] sm:$0xf]
    %v142 = vld [vmem:[%s1 + $0xcc] sm:$0xf]
    %v143 = vld [vmem:[%s1 + $0xd0] sm:$0xf]
    %v144 = vld [vmem:[%s1 + $0xd4] sm:$0xf]
    %v145 = vld [vmem:[%s1 + $0xd8] sm:$0xf]
    %v146 = vld [vmem:[%s1 + $0xdc] sm:$0xf]
    %v147 = vld [vmem:[%s1 + $0xe0] sm:$0xf]
    %v148 = vld [vmem:[%s1 + $0xe4] sm:$0xf]
    %v149 = vld [vmem:[%s1 + $0xe8] sm:$0xf]
    %v150 = vld [vmem:[%s1 + $0xec] sm:$0xf]
    %v151 = vld [vmem:[%s1 + $0xf0] sm:$0xf]
    %v152 = vld [vmem:[%s1 + $0xf4] sm:$0xf]
    %v153 = vld [vmem:[%s1 + $0xf8] sm:$0xf]
    %v154 = vld [vmem:[%s1 + $0xfc] sm:$0xf]
    %v155 = vld [vmem:[%s3] sm:$0xf]
    %v220 = vunpack.c.l.b16 %v91
    %v221 = vunpack.c.l.b16 %v92
    %v222 = vunpack.c.l.b16 %v93
    %v223 = vunpack.c.l.b16 %v94
    %v224 = vunpack.c.l.b16 %v95
    %v225 = vunpack.c.l.b16 %v96
    %v226 = vunpack.c.l.b16 %v97
    %v227 = vunpack.c.l.b16 %v98
    %v228 = vunpack.c.l.b16 %v99
    %v229 = vunpack.c.l.b16 %v100
    %v230 = vunpack.c.l.b16 %v101
    %v231 = vunpack.c.l.b16 %v102
    %v232 = vunpack.c.l.b16 %v103
    %v233 = vunpack.c.l.b16 %v104
    %v234 = vunpack.c.l.b16 %v105
    %v235 = vunpack.c.l.b16 %v106
    %v236 = vunpack.c.l.b16 %v107
    %v237 = vunpack.c.l.b16 %v108
    %v238 = vunpack.c.l.b16 %v109
    %v239 = vunpack.c.l.b16 %v110
    %v240 = vunpack.c.l.b16 %v111
    %v241 = vunpack.c.l.b16 %v112
    %v242 = vunpack.c.l.b16 %v113
    %v243 = vunpack.c.l.b16 %v114
    %v244 = vunpack.c.l.b16 %v115
    %v245 = vunpack.c.l.b16 %v116
    %v246 = vunpack.c.l.b16 %v117
    %v247 = vunpack.c.l.b16 %v118
    %v248 = vunpack.c.l.b16 %v119
    %v249 = vunpack.c.l.b16 %v120
    %v250 = vunpack.c.l.b16 %v121
    %v251 = vunpack.c.l.b16 %v122
    %v252 = vunpack.c.l.b16 %v123
    %v253 = vunpack.c.l.b16 %v124
    %v254 = vunpack.c.l.b16 %v125
    %v255 = vunpack.c.l.b16 %v126
    %v256 = vunpack.c.l.b16 %v127
    %v257 = vunpack.c.l.b16 %v128
    %v258 = vunpack.c.l.b16 %v129
    %v259 = vunpack.c.l.b16 %v130
    %v260 = vunpack.c.l.b16 %v131
    %v261 = vunpack.c.l.b16 %v132
    %v262 = vunpack.c.l.b16 %v133
    %v263 = vunpack.c.l.b16 %v134
    %v264 = vunpack.c.l.b16 %v135
    %v265 = vunpack.c.l.b16 %v136
    %v266 = vunpack.c.l.b16 %v137
    %v267 = vunpack.c.l.b16 %v138
    %v268 = vunpack.c.l.b16 %v139
    %v269 = vunpack.c.l.b16 %v140
    %v270 = vunpack.c.l.b16 %v141
    %v271 = vunpack.c.l.b16 %v142
    %v272 = vunpack.c.l.b16 %v143
    %v273 = vunpack.c.l.b16 %v144
    %v274 = vunpack.c.l.b16 %v145
    %v275 = vunpack.c.l.b16 %v146
    %v276 = vunpack.c.l.b16 %v147
    %v277 = vunpack.c.l.b16 %v148
    %v278 = vunpack.c.l.b16 %v149
    %v279 = vunpack.c.l.b16 %v150
    %v280 = vunpack.c.l.b16 %v151
    %v281 = vunpack.c.l.b16 %v152
    %v282 = vunpack.c.l.b16 %v153
    %v283 = vunpack.c.l.b16 %v154
    %v284 = vpack.c.b16 %v221, %v220
    %v285 = vpack.c.b16 %v223, %v222
    %v286 = vpack.c.b16 %v225, %v224
    %v287 = vpack.c.b16 %v227, %v226
    %v288 = vpack.c.b16 %v229, %v228
    %v289 = vpack.c.b16 %v231, %v230
    %v290 = vpack.c.b16 %v233, %v232
    %v291 = vpack.c.b16 %v235, %v234
    %v292 = vpack.c.b16 %v237, %v236
    %v293 = vpack.c.b16 %v239, %v238
    %v294 = vpack.c.b16 %v241, %v240
    %v295 = vpack.c.b16 %v243, %v242
    %v296 = vpack.c.b16 %v245, %v244
    %v297 = vpack.c.b16 %v247, %v246
    %v298 = vpack.c.b16 %v249, %v248
    %v299 = vpack.c.b16 %v251, %v250
    %v300 = vpack.c.b16 %v253, %v252
    %v301 = vpack.c.b16 %v255, %v254
    %v302 = vpack.c.b16 %v257, %v256
    %v303 = vpack.c.b16 %v259, %v258
    %v304 = vpack.c.b16 %v261, %v260
    %v305 = vpack.c.b16 %v263, %v262
    %v306 = vpack.c.b16 %v265, %v264
    %v307 = vpack.c.b16 %v267, %v266
    %v308 = vpack.c.b16 %v269, %v268
    %v309 = vpack.c.b16 %v271, %v270
    %v310 = vpack.c.b16 %v273, %v272
    %v311 = vpack.c.b16 %v275, %v274
    %v312 = vpack.c.b16 %v277, %v276
    %v313 = vpack.c.b16 %v279, %v278
    %v314 = vpack.c.b16 %v281, %v280
    %v315 = vpack.c.b16 %v283, %v282
    %vm316 = vcmask 64512
    %v318 = vsel %vm316, %v284, 0
    %v321 = vsel %vm316, %v285, 0
    %v324 = vsel %vm316, %v286, 0
    %v327 = vsel %vm316, %v287, 0
    %v330 = vsel %vm316, %v288, 0
    %v333 = vsel %vm316, %v289, 0
    %v336 = vsel %vm316, %v290, 0
    %v339 = vsel %vm316, %v291, 0
    %v342 = vsel %vm316, %v292, 0
    %v345 = vsel %vm316, %v293, 0
    %v348 = vsel %vm316, %v294, 0
    %v351 = vsel %vm316, %v295, 0
    %v354 = vsel %vm316, %v296, 0
    %v357 = vsel %vm316, %v297, 0
    %v360 = vsel %vm316, %v298, 0
    %v363 = vsel %vm316, %v299, 0
    %v366 = vsel %vm316, %v300, 0
    %v369 = vsel %vm316, %v301, 0
    %v372 = vsel %vm316, %v302, 0
    %v375 = vsel %vm316, %v303, 0
    %v378 = vsel %vm316, %v304, 0
    %v381 = vsel %vm316, %v305, 0
    %v384 = vsel %vm316, %v306, 0
    %v387 = vsel %vm316, %v307, 0
    %v390 = vsel %vm316, %v308, 0
    %v393 = vsel %vm316, %v309, 0
    %v396 = vsel %vm316, %v310, 0
    %v399 = vsel %vm316, %v311, 0
    %v402 = vsel %vm316, %v312, 0
    %v405 = vsel %vm316, %v313, 0
    %v408 = vsel %vm316, %v314, 0
    %v411 = vsel %vm316, %v315, 0
    %vm413 = vcmask 1043456
    %v415 = vsel %vm413, %v155, 0
    %417 = vmatprep.subr.bf16.mxu0 0
    %418 = vmatpush1.bf16.msra.mxu0 %v415
    %419 = vmatprep.subr.bf16.mxu0 0
    %420 = vmatpush1.bf16.msra.mxu0 0
    %421 = vmatprep.subr.bf16.mxu0 0
    %422 = vmatpush1.bf16.msra.mxu0 0
    %423 = vmatprep.subr.bf16.mxu0 0
    %424 = vmatpush1.bf16.msra.mxu0 0
    %425 = vmatprep.subr.bf16.mxu0 0
    %426 = vmatpush1.bf16.msra.mxu0 0
    %427 = vmatprep.subr.bf16.mxu0 0
    %428 = vmatpush1.bf16.msra.mxu0 0
    %429 = vmatprep.subr.bf16.mxu0 0
    %430 = vmatpush1.bf16.msra.mxu0 0
    %431 = vmatprep.subr.bf16.mxu0 0
    %432 = vmatpush1.bf16.msra.mxu0 0
    %433 = vmatprep.subr.bf16.mxu0 0
    %434 = vmatpush1.bf16.msra.mxu0 0
    %435 = vmatprep.subr.bf16.mxu0 0
    %436 = vmatpush1.bf16.msra.mxu0 0
    %437 = vmatprep.subr.bf16.mxu0 0
    %438 = vmatpush1.bf16.msra.mxu0 0
    %439 = vmatprep.subr.bf16.mxu0 0
    %440 = vmatpush1.bf16.msra.mxu0 0
    %441 = vmatprep.subr.bf16.mxu0 0
    %442 = vmatpush1.bf16.msra.mxu0 0
    %443 = vmatprep.subr.bf16.mxu0 0
    %444 = vmatpush1.bf16.msra.mxu0 0
    %445 = vmatprep.subr.bf16.mxu0 0
    %446 = vmatpush1.bf16.msra.mxu0 0
    %447 = vmatprep.subr.bf16.mxu0 0
    %448 = vmatpush1.bf16.msra.mxu0 0
    %449 = vmatprep.mubr.bf16.mxu0 0
    %450 = vmatmul.mubr.bf16.gmra.mrb[0].mxu0 %v318
    %v451 = vpop.f32.mrb[0].mxu0
    %v452 = vadd.f32 0.0, %v451
    %v453 = vpop.f32.mrb[0].mxu0
    %v454 = vpop.f32.mrb[0].mxu0
    %v455 = vadd.f32 0.0, %v454
    %v456 = vpop.f32.mrb[0].mxu0
    %457 = vmatprep.mubr.bf16.mxu0 0
    %458 = vmatmul.mubr.bf16.gmra.mrb[0].mxu0 %v321
    %v459 = vpop.f32.mrb[0].mxu0
    %v460 = vadd.f32 0.0, %v459
    %v461 = vpop.f32.mrb[0].mxu0
    %v462 = vpop.f32.mrb[0].mxu0
    %v463 = vadd.f32 0.0, %v462
    %v464 = vpop.f32.mrb[0].mxu0
    %465 = vmatprep.mubr.bf16.mxu0 0
    %466 = vmatmul.mubr.bf16.gmra.mrb[0].mxu0 %v324
    %v467 = vpop.f32.mrb[0].mxu0
    %v468 = vadd.f32 0.0, %v467
    %v469 = vpop.f32.mrb[0].mxu0
    %v470 = vpop.f32.mrb[0].mxu0
    %v471 = vadd.f32 0.0, %v470
    %v472 = vpop.f32.mrb[0].mxu0
    %473 = vmatprep.mubr.bf16.mxu0 0
    %474 = vmatmul.mubr.bf16.gmra.mrb[0].mxu0 %v327
    %v475 = vpop.f32.mrb[0].mxu0
    %v476 = vadd.f32 0.0, %v475
    %v477 = vpop.f32.mrb[0].mxu0
    %v478 = vpop.f32.mrb[0].mxu0
    %v479 = vadd.f32 0.0, %v478
    %v480 = vpop.f32.mrb[0].mxu0
    %481 = vmatprep.mubr.bf16.mxu0 0
    %482 = vmatmul.mubr.bf16.gmra.mrb[0].mxu0 %v330
    %v483 = vpop.f32.mrb[0].mxu0
    %v484 = vadd.f32 0.0, %v483
    %v485 = vpop.f32.mrb[0].mxu0
    %v486 = vpop.f32.mrb[0].mxu0
    %v487 = vadd.f32 0.0, %v486
    %v488 = vpop.f32.mrb[0].mxu0
    %489 = vmatprep.mubr.bf16.mxu0 0
    %490 = vmatmul.mubr.bf16.gmra.mrb[0].mxu0 %v333
    %v491 = vpop.f32.mrb[0].mxu0
    %v492 = vadd.f32 0.0, %v491
    %v493 = vpop.f32.mrb[0].mxu0
    %v494 = vpop.f32.mrb[0].mxu0
    %v495 = vadd.f32 0.0, %v494
    %v496 = vpop.f32.mrb[0].mxu0
    %497 = vmatprep.mubr.bf16.mxu0 0
    %498 = vmatmul.mubr.bf16.gmra.mrb[0].mxu0 %v336
    %v499 = vpop.f32.mrb[0].mxu0
    %v500 = vadd.f32 0.0, %v499
    %v501 = vpop.f32.mrb[0].mxu0
    %v502 = vpop.f32.mrb[0].mxu0
    %v503 = vadd.f32 0.0, %v502
    %v504 = vpop.f32.mrb[0].mxu0
    %505 = vmatprep.mubr.bf16.mxu0 0
    %506 = vmatmul.mubr.bf16.gmra.mrb[0].mxu0 %v339
    %v507 = vpop.f32.mrb[0].mxu0
    %v508 = vadd.f32 0.0, %v507
    %v509 = vpop.f32.mrb[0].mxu0
    %v510 = vpop.f32.mrb[0].mxu0
    %v511 = vadd.f32 0.0, %v510
    %v512 = vpop.f32.mrb[0].mxu0
    %513 = vmatprep.mubr.bf16.mxu0 0
    %514 = vmatmul.mubr.bf16.gmra.mrb[0].mxu0 %v342
    %v515 = vpop.f32.mrb[0].mxu0
    %v516 = vadd.f32 0.0, %v515
    %v517 = vpop.f32.mrb[0].mxu0
    %v518 = vpop.f32.mrb[0].mxu0
    %v519 = vadd.f32 0.0, %v518
    %v520 = vpop.f32.mrb[0].mxu0
    %521 = vmatprep.mubr.bf16.mxu0 0
    %522 = vmatmul.mubr.bf16.gmra.mrb[0].mxu0 %v345
    %v523 = vpop.f32.mrb[0].mxu0
    %v524 = vadd.f32 0.0, %v523
    %v525 = vpop.f32.mrb[0].mxu0
    %v526 = vpop.f32.mrb[0].mxu0
    %v527 = vadd.f32 0.0, %v526
    %v528 = vpop.f32.mrb[0].mxu0
    %529 = vmatprep.mubr.bf16.mxu0 0
    %530 = vmatmul.mubr.bf16.gmra.mrb[0].mxu0 %v348
    %v531 = vpop.f32.mrb[0].mxu0
    %v532 = vadd.f32 0.0, %v531
    %v533 = vpop.f32.mrb[0].mxu0
    %v534 = vpop.f32.mrb[0].mxu0
    %v535 = vadd.f32 0.0, %v534
    %v536 = vpop.f32.mrb[0].mxu0
    %537 = vmatprep.mubr.bf16.mxu0 0
    %538 = vmatmul.mubr.bf16.gmra.mrb[0].mxu0 %v351
    %v539 = vpop.f32.mrb[0].mxu0
    %v540 = vadd.f32 0.0, %v539
    %v541 = vpop.f32.mrb[0].mxu0
    %v542 = vpop.f32.mrb[0].mxu0
    %v543 = vadd.f32 0.0, %v542
    %v544 = vpop.f32.mrb[0].mxu0
    %545 = vmatprep.mubr.bf16.mxu0 0
    %546 = vmatmul.mubr.bf16.gmra.mrb[0].mxu0 %v354
    %v547 = vpop.f32.mrb[0].mxu0
    %v548 = vadd.f32 0.0, %v547
    %v549 = vpop.f32.mrb[0].mxu0
    %v550 = vpop.f32.mrb[0].mxu0
    %v551 = vadd.f32 0.0, %v550
    %v552 = vpop.f32.mrb[0].mxu0
    %553 = vmatprep.mubr.bf16.mxu0 0
    %554 = vmatmul.mubr.bf16.gmra.mrb[0].mxu0 %v357
    %v555 = vpop.f32.mrb[0].mxu0
    %v556 = vadd.f32 0.0, %v555
    %v557 = vpop.f32.mrb[0].mxu0
    %v558 = vpop.f32.mrb[0].mxu0
    %v559 = vadd.f32 0.0, %v558
    %v560 = vpop.f32.mrb[0].mxu0
    %561 = vmatprep.mubr.bf16.mxu0 0
    %562 = vmatmul.mubr.bf16.gmra.mrb[0].mxu0 %v360
    %v563 = vpop.f32.mrb[0].mxu0
    %v564 = vadd.f32 0.0, %v563
    %v565 = vpop.f32.mrb[0].mxu0
    %v566 = vpop.f32.mrb[0].mxu0
    %v567 = vadd.f32 0.0, %v566
    %v568 = vpop.f32.mrb[0].mxu0
    %569 = vmatprep.mubr.bf16.mxu0 0
    %570 = vmatmul.mubr.bf16.gmra.mrb[0].mxu0 %v363
    %v571 = vpop.f32.mrb[0].mxu0
    %v572 = vadd.f32 0.0, %v571
    %v573 = vpop.f32.mrb[0].mxu0
    %v574 = vpop.f32.mrb[0].mxu0
    %v575 = vadd.f32 0.0, %v574
    %v576 = vpop.f32.mrb[0].mxu0
    %577 = vmatprep.mubr.bf16.mxu0 0
    %578 = vmatmul.mubr.bf16.gmra.mrb[0].mxu0 %v366
    %v579 = vpop.f32.mrb[0].mxu0
    %v580 = vadd.f32 0.0, %v579
    %v581 = vpop.f32.mrb[0].mxu0
    %v582 = vpop.f32.mrb[0].mxu0
    %v583 = vadd.f32 0.0, %v582
    %v584 = vpop.f32.mrb[0].mxu0
    %585 = vmatprep.mubr.bf16.mxu0 0
    %586 = vmatmul.mubr.bf16.gmra.mrb[0].mxu0 %v369
    %v587 = vpop.f32.mrb[0].mxu0
    %v588 = vadd.f32 0.0, %v587
    %v589 = vpop.f32.mrb[0].mxu0
    %v590 = vpop.f32.mrb[0].mxu0
    %v591 = vadd.f32 0.0, %v590
    %v592 = vpop.f32.mrb[0].mxu0
    %593 = vmatprep.mubr.bf16.mxu0 0
    %594 = vmatmul.mubr.bf16.gmra.mrb[0].mxu0 %v372
    %v595 = vpop.f32.mrb[0].mxu0
    %v596 = vadd.f32 0.0, %v595
    %v597 = vpop.f32.mrb[0].mxu0
    %v598 = vpop.f32.mrb[0].mxu0
    %v599 = vadd.f32 0.0, %v598
    %v600 = vpop.f32.mrb[0].mxu0
    %601 = vmatprep.mubr.bf16.mxu0 0
    %602 = vmatmul.mubr.bf16.gmra.mrb[0].mxu0 %v375
    %v603 = vpop.f32.mrb[0].mxu0
    %v604 = vadd.f32 0.0, %v603
    %v605 = vpop.f32.mrb[0].mxu0
    %v606 = vpop.f32.mrb[0].mxu0
    %v607 = vadd.f32 0.0, %v606
    %v608 = vpop.f32.mrb[0].mxu0
    %609 = vmatprep.mubr.bf16.mxu0 0
    %610 = vmatmul.mubr.bf16.gmra.mrb[0].mxu0 %v378
    %v611 = vpop.f32.mrb[0].mxu0
    %v612 = vadd.f32 0.0, %v611
    %v613 = vpop.f32.mrb[0].mxu0
    %v614 = vpop.f32.mrb[0].mxu0
    %v615 = vadd.f32 0.0, %v614
    %v616 = vpop.f32.mrb[0].mxu0
    %617 = vmatprep.mubr.bf16.mxu0 0
    %618 = vmatmul.mubr.bf16.gmra.mrb[0].mxu0 %v381
    %v619 = vpop.f32.mrb[0].mxu0
    %v620 = vadd.f32 0.0, %v619
    %v621 = vpop.f32.mrb[0].mxu0
    %v622 = vpop.f32.mrb[0].mxu0
    %v623 = vadd.f32 0.0, %v622
    %v624 = vpop.f32.mrb[0].mxu0
    %625 = vmatprep.mubr.bf16.mxu0 0
    %626 = vmatmul.mubr.bf16.gmra.mrb[0].mxu0 %v384
    %v627 = vpop.f32.mrb[0].mxu0
    %v628 = vadd.f32 0.0, %v627
    %v629 = vpop.f32.mrb[0].mxu0
    %v630 = vpop.f32.mrb[0].mxu0
    %v631 = vadd.f32 0.0, %v630
    %v632 = vpop.f32.mrb[0].mxu0
    %633 = vmatprep.mubr.bf16.mxu0 0
    %634 = vmatmul.mubr.bf16.gmra.mrb[0].mxu0 %v387
    %v635 = vpop.f32.mrb[0].mxu0
    %v636 = vadd.f32 0.0, %v635
    %v637 = vpop.f32.mrb[0].mxu0
    %v638 = vpop.f32.mrb[0].mxu0
    %v639 = vadd.f32 0.0, %v638
    %v640 = vpop.f32.mrb[0].mxu0
    %641 = vmatprep.mubr.bf16.mxu0 0
    %642 = vmatmul.mubr.bf16.gmra.mrb[0].mxu0 %v390
    %v643 = vpop.f32.mrb[0].mxu0
    %v644 = vadd.f32 0.0, %v643
    %v645 = vpop.f32.mrb[0].mxu0
    %v646 = vpop.f32.mrb[0].mxu0
    %v647 = vadd.f32 0.0, %v646
    %v648 = vpop.f32.mrb[0].mxu0
    %649 = vmatprep.mubr.bf16.mxu0 0
    %650 = vmatmul.mubr.bf16.gmra.mrb[0].mxu0 %v393
    %v651 = vpop.f32.mrb[0].mxu0
    %v652 = vadd.f32 0.0, %v651
    %v653 = vpop.f32.mrb[0].mxu0
    %v654 = vpop.f32.mrb[0].mxu0
    %v655 = vadd.f32 0.0, %v654
    %v656 = vpop.f32.mrb[0].mxu0
    %657 = vmatprep.mubr.bf16.mxu0 0
    %658 = vmatmul.mubr.bf16.gmra.mrb[0].mxu0 %v396
    %v659 = vpop.f32.mrb[0].mxu0
    %v660 = vadd.f32 0.0, %v659
    %v661 = vpop.f32.mrb[0].mxu0
    %v662 = vpop.f32.mrb[0].mxu0
    %v663 = vadd.f32 0.0, %v662
    %v664 = vpop.f32.mrb[0].mxu0
    %665 = vmatprep.mubr.bf16.mxu0 0
    %666 = vmatmul.mubr.bf16.gmra.mrb[0].mxu0 %v399
    %v667 = vpop.f32.mrb[0].mxu0
    %v668 = vadd.f32 0.0, %v667
    %v669 = vpop.f32.mrb[0].mxu0
    %v670 = vpop.f32.mrb[0].mxu0
    %v671 = vadd.f32 0.0, %v670
    %v672 = vpop.f32.mrb[0].mxu0
    %673 = vmatprep.mubr.bf16.mxu0 0
    %674 = vmatmul.mubr.bf16.gmra.mrb[0].mxu0 %v402
    %v675 = vpop.f32.mrb[0].mxu0
    %v676 = vadd.f32 0.0, %v675
    %v677 = vpop.f32.mrb[0].mxu0
    %v678 = vpop.f32.mrb[0].mxu0
    %v679 = vadd.f32 0.0, %v678
    %v680 = vpop.f32.mrb[0].mxu0
    %681 = vmatprep.mubr.bf16.mxu0 0
    %682 = vmatmul.mubr.bf16.gmra.mrb[0].mxu0 %v405
    %v683 = vpop.f32.mrb[0].mxu0
    %v684 = vadd.f32 0.0, %v683
    %v685 = vpop.f32.mrb[0].mxu0
    %v686 = vpop.f32.mrb[0].mxu0
    %v687 = vadd.f32 0.0, %v686
    %v688 = vpop.f32.mrb[0].mxu0
    %689 = vmatprep.mubr.bf16.mxu0 0
    %690 = vmatmul.mubr.bf16.gmra.mrb[0].mxu0 %v408
    %v691 = vpop.f32.mrb[0].mxu0
    %v692 = vadd.f32 0.0, %v691
    %v693 = vpop.f32.mrb[0].mxu0
    %v694 = vpop.f32.mrb[0].mxu0
    %v695 = vadd.f32 0.0, %v694
    %v696 = vpop.f32.mrb[0].mxu0
    %697 = vmatprep.mubr.bf16.mxu0 0
    %698 = vmatmul.mubr.bf16.gmra.mrb[0].mxu0 %v411
    %v699 = vpop.f32.mrb[0].mxu0
    %v700 = vadd.f32 0.0, %v699
    %v701 = vpop.f32.mrb[0].mxu0
    %v702 = vpop.f32.mrb[0].mxu0
    %v703 = vadd.f32 0.0, %v702
    %v704 = vpop.f32.mrb[0].mxu0
    %705 = vdwg.mxu0
    %v770 = vunpack.c.l.b16 %v25
    %v771 = vunpack.c.l.b16 %v26
    %v772 = vunpack.c.l.b16 %v27
    %v773 = vunpack.c.l.b16 %v28
    %v774 = vunpack.c.l.b16 %v29
    %v775 = vunpack.c.l.b16 %v30
    %v776 = vunpack.c.l.b16 %v31
    %v777 = vunpack.c.l.b16 %v32
    %v778 = vunpack.c.l.b16 %v33
    %v779 = vunpack.c.l.b16 %v34
    %v780 = vunpack.c.l.b16 %v35
    %v781 = vunpack.c.l.b16 %v36
    %v782 = vunpack.c.l.b16 %v37
    %v783 = vunpack.c.l.b16 %v38
    %v784 = vunpack.c.l.b16 %v39
    %v785 = vunpack.c.l.b16 %v40
    %v786 = vunpack.c.l.b16 %v41
    %v787 = vunpack.c.l.b16 %v42
    %v788 = vunpack.c.l.b16 %v43
    %v789 = vunpack.c.l.b16 %v44
    %v790 = vunpack.c.l.b16 %v45
    %v791 = vunpack.c.l.b16 %v46
    %v792 = vunpack.c.l.b16 %v47
    %v793 = vunpack.c.l.b16 %v48
    %v794 = vunpack.c.l.b16 %v49
    %v795 = vunpack.c.l.b16 %v50
    %v796 = vunpack.c.l.b16 %v51
    %v797 = vunpack.c.l.b16 %v52
    %v798 = vunpack.c.l.b16 %v53
    %v799 = vunpack.c.l.b16 %v54
    %v800 = vunpack.c.l.b16 %v55
    %v801 = vunpack.c.l.b16 %v56
    %v802 = vunpack.c.l.b16 %v57
    %v803 = vunpack.c.l.b16 %v58
    %v804 = vunpack.c.l.b16 %v59
    %v805 = vunpack.c.l.b16 %v60
    %v806 = vunpack.c.l.b16 %v61
    %v807 = vunpack.c.l.b16 %v62
    %v808 = vunpack.c.l.b16 %v63
    %v809 = vunpack.c.l.b16 %v64
    %v810 = vunpack.c.l.b16 %v65
    %v811 = vunpack.c.l.b16 %v66
    %v812 = vunpack.c.l.b16 %v67
    %v813 = vunpack.c.l.b16 %v68
    %v814 = vunpack.c.l.b16 %v69
    %v815 = vunpack.c.l.b16 %v70
    %v816 = vunpack.c.l.b16 %v71
    %v817 = vunpack.c.l.b16 %v72
    %v818 = vunpack.c.l.b16 %v73
    %v819 = vunpack.c.l.b16 %v74
    %v820 = vunpack.c.l.b16 %v75
    %v821 = vunpack.c.l.b16 %v76
    %v822 = vunpack.c.l.b16 %v77
    %v823 = vunpack.c.l.b16 %v78
    %v824 = vunpack.c.l.b16 %v79
    %v825 = vunpack.c.l.b16 %v80
    %v826 = vunpack.c.l.b16 %v81
    %v827 = vunpack.c.l.b16 %v82
    %v828 = vunpack.c.l.b16 %v83
    %v829 = vunpack.c.l.b16 %v84
    %v830 = vunpack.c.l.b16 %v85
    %v831 = vunpack.c.l.b16 %v86
    %v832 = vunpack.c.l.b16 %v87
    %v833 = vunpack.c.l.b16 %v88
    %v834 = vpack.c.b16 %v771, %v770
    %v835 = vpack.c.b16 %v773, %v772
    %v836 = vpack.c.b16 %v775, %v774
    %v837 = vpack.c.b16 %v777, %v776
    %v838 = vpack.c.b16 %v779, %v778
    %v839 = vpack.c.b16 %v781, %v780
    %v840 = vpack.c.b16 %v783, %v782
    %v841 = vpack.c.b16 %v785, %v784
    %v842 = vpack.c.b16 %v787, %v786
    %v843 = vpack.c.b16 %v789, %v788
    %v844 = vpack.c.b16 %v791, %v790
    %v845 = vpack.c.b16 %v793, %v792
    %v846 = vpack.c.b16 %v795, %v794
    %v847 = vpack.c.b16 %v797, %v796
    %v848 = vpack.c.b16 %v799, %v798
    %v849 = vpack.c.b16 %v801, %v800
    %v850 = vpack.c.b16 %v803, %v802
    %v851 = vpack.c.b16 %v805, %v804
    %v852 = vpack.c.b16 %v807, %v806
    %v853 = vpack.c.b16 %v809, %v808
    %v854 = vpack.c.b16 %v811, %v810
    %v855 = vpack.c.b16 %v813, %v812
    %v856 = vpack.c.b16 %v815, %v814
    %v857 = vpack.c.b16 %v817, %v816
    %v858 = vpack.c.b16 %v819, %v818
    %v859 = vpack.c.b16 %v821, %v820
    %v860 = vpack.c.b16 %v823, %v822
    %v861 = vpack.c.b16 %v825, %v824
    %v862 = vpack.c.b16 %v827, %v826
    %v863 = vpack.c.b16 %v829, %v828
    %v864 = vpack.c.b16 %v831, %v830
    %v865 = vpack.c.b16 %v833, %v832
    %v868 = vunpack.c.l.b16 %v89
    %v869 = vunpack.c.l.b16 %v90
    %v870 = vpack.c.b16 %v869, %v868
    %vm872 = vcmask 130048
    %v874 = vsel %vm872, %v834, 0
    %v877 = vsel %vm872, %v835, 0
    %v880 = vsel %vm872, %v836, 0
    %v883 = vsel %vm872, %v837, 0
    %v886 = vsel %vm872, %v838, 0
    %v889 = vsel %vm872, %v839, 0
    %v892 = vsel %vm872, %v840, 0
    %v895 = vsel %vm872, %v841, 0
    %v898 = vsel %vm872, %v842, 0
    %v901 = vsel %vm872, %v843, 0
    %v904 = vsel %vm872, %v844, 0
    %v907 = vsel %vm872, %v845, 0
    %v910 = vsel %vm872, %v846, 0
    %v913 = vsel %vm872, %v847, 0
    %v916 = vsel %vm872, %v848, 0
    %v919 = vsel %vm872, %v849, 0
    %v922 = vsel %vm872, %v850, 0
    %v925 = vsel %vm872, %v851, 0
    %v928 = vsel %vm872, %v852, 0
    %v931 = vsel %vm872, %v853, 0
    %v934 = vsel %vm872, %v854, 0
    %v937 = vsel %vm872, %v855, 0
    %v940 = vsel %vm872, %v856, 0
    %v943 = vsel %vm872, %v857, 0
    %v946 = vsel %vm872, %v858, 0
    %v949 = vsel %vm872, %v859, 0
    %v952 = vsel %vm872, %v860, 0
    %v955 = vsel %vm872, %v861, 0
    %v958 = vsel %vm872, %v862, 0
    %v961 = vsel %vm872, %v863, 0
    %v964 = vsel %vm872, %v864, 0
    %v967 = vsel %vm872, %v865, 0
    %969 = vmatprep.subr.bf16.mxu0 0
    %970 = vmatpush1.bf16.msra.mxu0 %v870
    %971 = vmatprep.subr.bf16.mxu0 0
    %972 = vmatpush1.bf16.msra.mxu0 0
    %973 = vmatprep.subr.bf16.mxu0 0
    %974 = vmatpush1.bf16.msra.mxu0 0
    %975 = vmatprep.subr.bf16.mxu0 0
    %976 = vmatpush1.bf16.msra.mxu0 0
    %977 = vmatprep.subr.bf16.mxu0 0
    %978 = vmatpush1.bf16.msra.mxu0 0
    %979 = vmatprep.subr.bf16.mxu0 0
    %980 = vmatpush1.bf16.msra.mxu0 0
    %981 = vmatprep.subr.bf16.mxu0 0
    %982 = vmatpush1.bf16.msra.mxu0 0
    %983 = vmatprep.subr.bf16.mxu0 0
    %984 = vmatpush1.bf16.msra.mxu0 0
    %985 = vmatprep.subr.bf16.mxu0 0
    %986 = vmatpush1.bf16.msra.mxu0 0
    %987 = vmatprep.subr.bf16.mxu0 0
    %988 = vmatpush1.bf16.msra.mxu0 0
    %989 = vmatprep.subr.bf16.mxu0 0
    %990 = vmatpush1.bf16.msra.mxu0 0
    %991 = vmatprep.subr.bf16.mxu0 0
    %992 = vmatpush1.bf16.msra.mxu0 0
    %993 = vmatprep.subr.bf16.mxu0 0
    %994 = vmatpush1.bf16.msra.mxu0 0
    %995 = vmatprep.subr.bf16.mxu0 0
    %996 = vmatpush1.bf16.msra.mxu0 0
    %997 = vmatprep.subr.bf16.mxu0 0
    %998 = vmatpush1.bf16.msra.mxu0 0
    %999 = vmatprep.subr.bf16.mxu0 0
    %1000 = vmatpush1.bf16.msra.mxu0 0
    %1001 = vmatprep.mubr.bf16.mxu0 0
    %1002 = vmatmul.mubr.bf16.gmra.mrb[0].mxu0 %v874
    %v1003 = vpop.f32.mrb[0].mxu0
    %v1004 = vadd.f32 %v452, %v1003
    %v1005 = vpop.f32.mrb[0].mxu0
    %v1006 = vpop.f32.mrb[0].mxu0
    %v1007 = vadd.f32 %v455, %v1006
    %v1008 = vpop.f32.mrb[0].mxu0
    %1009 = vmatprep.mubr.bf16.mxu0 0
    %1010 = vmatmul.mubr.bf16.gmra.mrb[0].mxu0 %v877
    %v1011 = vpop.f32.mrb[0].mxu0
    %v1012 = vadd.f32 %v460, %v1011
    %v1013 = vpop.f32.mrb[0].mxu0
    %v1014 = vpop.f32.mrb[0].mxu0
    %v1015 = vadd.f32 %v463, %v1014
    %v1016 = vpop.f32.mrb[0].mxu0
    %1017 = vmatprep.mubr.bf16.mxu0 0
    %1018 = vmatmul.mubr.bf16.gmra.mrb[0].mxu0 %v880
    %v1019 = vpop.f32.mrb[0].mxu0
    %v1020 = vadd.f32 %v468, %v1019
    %v1021 = vpop.f32.mrb[0].mxu0
    %v1022 = vpop.f32.mrb[0].mxu0
    %v1023 = vadd.f32 %v471, %v1022
    %v1024 = vpop.f32.mrb[0].mxu0
    %1025 = vmatprep.mubr.bf16.mxu0 0
    %1026 = vmatmul.mubr.bf16.gmra.mrb[0].mxu0 %v883
    %v1027 = vpop.f32.mrb[0].mxu0
    %v1028 = vadd.f32 %v476, %v1027
    %v1029 = vpop.f32.mrb[0].mxu0
    %v1030 = vpop.f32.mrb[0].mxu0
    %v1031 = vadd.f32 %v479, %v1030
    %v1032 = vpop.f32.mrb[0].mxu0
    %1033 = vmatprep.mubr.bf16.mxu0 0
    %1034 = vmatmul.mubr.bf16.gmra.mrb[0].mxu0 %v886
    %v1035 = vpop.f32.mrb[0].mxu0
    %v1036 = vadd.f32 %v484, %v1035
    %v1037 = vpop.f32.mrb[0].mxu0
    %v1038 = vpop.f32.mrb[0].mxu0
    %v1039 = vadd.f32 %v487, %v1038
    %v1040 = vpop.f32.mrb[0].mxu0
    %1041 = vmatprep.mubr.bf16.mxu0 0
    %1042 = vmatmul.mubr.bf16.gmra.mrb[0].mxu0 %v889
    %v1043 = vpop.f32.mrb[0].mxu0
    %v1044 = vadd.f32 %v492, %v1043
    %v1045 = vpop.f32.mrb[0].mxu0
    %v1046 = vpop.f32.mrb[0].mxu0
    %v1047 = vadd.f32 %v495, %v1046
    %v1048 = vpop.f32.mrb[0].mxu0
    %1049 = vmatprep.mubr.bf16.mxu0 0
    %1050 = vmatmul.mubr.bf16.gmra.mrb[0].mxu0 %v892
    %v1051 = vpop.f32.mrb[0].mxu0
    %v1052 = vadd.f32 %v500, %v1051
    %v1053 = vpop.f32.mrb[0].mxu0
    %v1054 = vpop.f32.mrb[0].mxu0
    %v1055 = vadd.f32 %v503, %v1054
    %v1056 = vpop.f32.mrb[0].mxu0
    %1057 = vmatprep.mubr.bf16.mxu0 0
    %1058 = vmatmul.mubr.bf16.gmra.mrb[0].mxu0 %v895
    %v1059 = vpop.f32.mrb[0].mxu0
    %v1060 = vadd.f32 %v508, %v1059
    %v1061 = vpop.f32.mrb[0].mxu0
    %v1062 = vpop.f32.mrb[0].mxu0
    %v1063 = vadd.f32 %v511, %v1062
    %v1064 = vpop.f32.mrb[0].mxu0
    %1065 = vmatprep.mubr.bf16.mxu0 0
    %1066 = vmatmul.mubr.bf16.gmra.mrb[0].mxu0 %v898
    %v1067 = vpop.f32.mrb[0].mxu0
    %v1068 = vadd.f32 %v516, %v1067
    %v1069 = vpop.f32.mrb[0].mxu0
    %v1070 = vpop.f32.mrb[0].mxu0
    %v1071 = vadd.f32 %v519, %v1070
    %v1072 = vpop.f32.mrb[0].mxu0
    %1073 = vmatprep.mubr.bf16.mxu0 0
    %1074 = vmatmul.mubr.bf16.gmra.mrb[0].mxu0 %v901
    %v1075 = vpop.f32.mrb[0].mxu0
    %v1076 = vadd.f32 %v524, %v1075
    %v1077 = vpop.f32.mrb[0].mxu0
    %v1078 = vpop.f32.mrb[0].mxu0
    %v1079 = vadd.f32 %v527, %v1078
    %v1080 = vpop.f32.mrb[0].mxu0
    %1081 = vmatprep.mubr.bf16.mxu0 0
    %1082 = vmatmul.mubr.bf16.gmra.mrb[0].mxu0 %v904
    %v1083 = vpop.f32.mrb[0].mxu0
    %v1084 = vadd.f32 %v532, %v1083
    %v1085 = vpop.f32.mrb[0].mxu0
    %v1086 = vpop.f32.mrb[0].mxu0
    %v1087 = vadd.f32 %v535, %v1086
    %v1088 = vpop.f32.mrb[0].mxu0
    %1089 = vmatprep.mubr.bf16.mxu0 0
    %1090 = vmatmul.mubr.bf16.gmra.mrb[0].mxu0 %v907
    %v1091 = vpop.f32.mrb[0].mxu0
    %v1092 = vadd.f32 %v540, %v1091
    %v1093 = vpop.f32.mrb[0].mxu0
    %v1094 = vpop.f32.mrb[0].mxu0
    %v1095 = vadd.f32 %v543, %v1094
    %v1096 = vpop.f32.mrb[0].mxu0
    %1097 = vmatprep.mubr.bf16.mxu0 0
    %1098 = vmatmul.mubr.bf16.gmra.mrb[0].mxu0 %v910
    %v1099 = vpop.f32.mrb[0].mxu0
    %v1100 = vadd.f32 %v548, %v1099
    %v1101 = vpop.f32.mrb[0].mxu0
    %v1102 = vpop.f32.mrb[0].mxu0
    %v1103 = vadd.f32 %v551, %v1102
    %v1104 = vpop.f32.mrb[0].mxu0
    %1105 = vmatprep.mubr.bf16.mxu0 0
    %1106 = vmatmul.mubr.bf16.gmra.mrb[0].mxu0 %v913
    %v1107 = vpop.f32.mrb[0].mxu0
    %v1108 = vadd.f32 %v556, %v1107
    %v1109 = vpop.f32.mrb[0].mxu0
    %v1110 = vpop.f32.mrb[0].mxu0
    %v1111 = vadd.f32 %v559, %v1110
    %v1112 = vpop.f32.mrb[0].mxu0
    %1113 = vmatprep.mubr.bf16.mxu0 0
    %1114 = vmatmul.mubr.bf16.gmra.mrb[0].mxu0 %v916
    %v1115 = vpop.f32.mrb[0].mxu0
    %v1116 = vadd.f32 %v564, %v1115
    %v1117 = vpop.f32.mrb[0].mxu0
    %v1118 = vpop.f32.mrb[0].mxu0
    %v1119 = vadd.f32 %v567, %v1118
    %v1120 = vpop.f32.mrb[0].mxu0
    %1121 = vmatprep.mubr.bf16.mxu0 0
    %1122 = vmatmul.mubr.bf16.gmra.mrb[0].mxu0 %v919
    %v1123 = vpop.f32.mrb[0].mxu0
    %v1124 = vadd.f32 %v572, %v1123
    %v1125 = vpop.f32.mrb[0].mxu0
    %v1126 = vpop.f32.mrb[0].mxu0
    %v1127 = vadd.f32 %v575, %v1126
    %v1128 = vpop.f32.mrb[0].mxu0
    %1129 = vmatprep.mubr.bf16.mxu0 0
    %1130 = vmatmul.mubr.bf16.gmra.mrb[0].mxu0 %v922
    %v1131 = vpop.f32.mrb[0].mxu0
    %v1132 = vadd.f32 %v580, %v1131
    %v1133 = vpop.f32.mrb[0].mxu0
    %v1134 = vpop.f32.mrb[0].mxu0
    %v1135 = vadd.f32 %v583, %v1134
    %v1136 = vpop.f32.mrb[0].mxu0
    %1137 = vmatprep.mubr.bf16.mxu0 0
    %1138 = vmatmul.mubr.bf16.gmra.mrb[0].mxu0 %v925
    %v1139 = vpop.f32.mrb[0].mxu0
    %v1140 = vadd.f32 %v588, %v1139
    %v1141 = vpop.f32.mrb[0].mxu0
    %v1142 = vpop.f32.mrb[0].mxu0
    %v1143 = vadd.f32 %v591, %v1142
    %v1144 = vpop.f32.mrb[0].mxu0
    %1145 = vmatprep.mubr.bf16.mxu0 0
    %1146 = vmatmul.mubr.bf16.gmra.mrb[0].mxu0 %v928
    %v1147 = vpop.f32.mrb[0].mxu0
    %v1148 = vadd.f32 %v596, %v1147
    %v1149 = vpop.f32.mrb[0].mxu0
    %v1150 = vpop.f32.mrb[0].mxu0
    %v1151 = vadd.f32 %v599, %v1150
    %v1152 = vpop.f32.mrb[0].mxu0
    %1153 = vmatprep.mubr.bf16.mxu0 0
    %1154 = vmatmul.mubr.bf16.gmra.mrb[0].mxu0 %v931
    %v1155 = vpop.f32.mrb[0].mxu0
    %v1156 = vadd.f32 %v604, %v1155
    %v1157 = vpop.f32.mrb[0].mxu0
    %v1158 = vpop.f32.mrb[0].mxu0
    %v1159 = vadd.f32 %v607, %v1158
    %v1160 = vpop.f32.mrb[0].mxu0
    %1161 = vmatprep.mubr.bf16.mxu0 0
    %1162 = vmatmul.mubr.bf16.gmra.mrb[0].mxu0 %v934
    %v1163 = vpop.f32.mrb[0].mxu0
    %v1164 = vadd.f32 %v612, %v1163
    %v1165 = vpop.f32.mrb[0].mxu0
    %v1166 = vpop.f32.mrb[0].mxu0
    %v1167 = vadd.f32 %v615, %v1166
    %v1168 = vpop.f32.mrb[0].mxu0
    %1169 = vmatprep.mubr.bf16.mxu0 0
    %1170 = vmatmul.mubr.bf16.gmra.mrb[0].mxu0 %v937
    %v1171 = vpop.f32.mrb[0].mxu0
    %v1172 = vadd.f32 %v620, %v1171
    %v1173 = vpop.f32.mrb[0].mxu0
    %v1174 = vpop.f32.mrb[0].mxu0
    %v1175 = vadd.f32 %v623, %v1174
    %v1176 = vpop.f32.mrb[0].mxu0
    %1177 = vmatprep.mubr.bf16.mxu0 0
    %1178 = vmatmul.mubr.bf16.gmra.mrb[0].mxu0 %v940
    %v1179 = vpop.f32.mrb[0].mxu0
    %v1180 = vadd.f32 %v628, %v1179
    %v1181 = vpop.f32.mrb[0].mxu0
    %v1182 = vpop.f32.mrb[0].mxu0
    %v1183 = vadd.f32 %v631, %v1182
    %v1184 = vpop.f32.mrb[0].mxu0
    %1185 = vmatprep.mubr.bf16.mxu0 0
    %1186 = vmatmul.mubr.bf16.gmra.mrb[0].mxu0 %v943
    %v1187 = vpop.f32.mrb[0].mxu0
    %v1188 = vadd.f32 %v636, %v1187
    %v1189 = vpop.f32.mrb[0].mxu0
    %v1190 = vpop.f32.mrb[0].mxu0
    %v1191 = vadd.f32 %v639, %v1190
    %v1192 = vpop.f32.mrb[0].mxu0
    %1193 = vmatprep.mubr.bf16.mxu0 0
    %1194 = vmatmul.mubr.bf16.gmra.mrb[0].mxu0 %v946
    %v1195 = vpop.f32.mrb[0].mxu0
    %v1196 = vadd.f32 %v644, %v1195
    %v1197 = vpop.f32.mrb[0].mxu0
    %v1198 = vpop.f32.mrb[0].mxu0
    %v1199 = vadd.f32 %v647, %v1198
    %v1200 = vpop.f32.mrb[0].mxu0
    %1201 = vmatprep.mubr.bf16.mxu0 0
    %1202 = vmatmul.mubr.bf16.gmra.mrb[0].mxu0 %v949
    %v1203 = vpop.f32.mrb[0].mxu0
    %v1204 = vadd.f32 %v652, %v1203
    %v1205 = vpop.f32.mrb[0].mxu0
    %v1206 = vpop.f32.mrb[0].mxu0
    %v1207 = vadd.f32 %v655, %v1206
    %v1208 = vpop.f32.mrb[0].mxu0
    %1209 = vmatprep.mubr.bf16.mxu0 0
    %1210 = vmatmul.mubr.bf16.gmra.mrb[0].mxu0 %v952
    %v1211 = vpop.f32.mrb[0].mxu0
    %v1212 = vadd.f32 %v660, %v1211
    %v1213 = vpop.f32.mrb[0].mxu0
    %v1214 = vpop.f32.mrb[0].mxu0
    %v1215 = vadd.f32 %v663, %v1214
    %v1216 = vpop.f32.mrb[0].mxu0
    %1217 = vmatprep.mubr.bf16.mxu0 0
    %1218 = vmatmul.mubr.bf16.gmra.mrb[0].mxu0 %v955
    %v1219 = vpop.f32.mrb[0].mxu0
    %v1220 = vadd.f32 %v668, %v1219
    %v1221 = vpop.f32.mrb[0].mxu0
    %v1222 = vpop.f32.mrb[0].mxu0
    %v1223 = vadd.f32 %v671, %v1222
    %v1224 = vpop.f32.mrb[0].mxu0
    %1225 = vmatprep.mubr.bf16.mxu0 0
    %1226 = vmatmul.mubr.bf16.gmra.mrb[0].mxu0 %v958
    %v1227 = vpop.f32.mrb[0].mxu0
    %v1228 = vadd.f32 %v676, %v1227
    %v1229 = vpop.f32.mrb[0].mxu0
    %v1230 = vpop.f32.mrb[0].mxu0
    %v1231 = vadd.f32 %v679, %v1230
    %v1232 = vpop.f32.mrb[0].mxu0
    %1233 = vmatprep.mubr.bf16.mxu0 0
    %1234 = vmatmul.mubr.bf16.gmra.mrb[0].mxu0 %v961
    %v1235 = vpop.f32.mrb[0].mxu0
    %v1236 = vadd.f32 %v684, %v1235
    %v1237 = vpop.f32.mrb[0].mxu0
    %v1238 = vpop.f32.mrb[0].mxu0
    %v1239 = vadd.f32 %v687, %v1238
    %v1240 = vpop.f32.mrb[0].mxu0
    %1241 = vmatprep.mubr.bf16.mxu0 0
    %1242 = vmatmul.mubr.bf16.gmra.mrb[0].mxu0 %v964
    %v1243 = vpop.f32.mrb[0].mxu0
    %v1244 = vadd.f32 %v692, %v1243
    %v1245 = vpop.f32.mrb[0].mxu0
    %v1246 = vpop.f32.mrb[0].mxu0
    %v1247 = vadd.f32 %v695, %v1246
    %v1248 = vpop.f32.mrb[0].mxu0
    %1249 = vmatprep.mubr.bf16.mxu0 0
    %1250 = vmatmul.mubr.bf16.gmra.mrb[0].mxu0 %v967
    %v1251 = vpop.f32.mrb[0].mxu0
    %v1252 = vadd.f32 %v700, %v1251
    %v1253 = vpop.f32.mrb[0].mxu0
    %v1254 = vpop.f32.mrb[0].mxu0
    %v1255 = vadd.f32 %v703, %v1254
    %v1256 = vpop.f32.mrb[0].mxu0
    %1257 = vdwg.mxu0
    %v1258 = vld [vmem:[%s4] sm:$0x1]
    %v1260 = vlaneseq
    %v1261 = vshrl.u32 %v1260, 7
    %v1262 = vsub.s32 0, %v1261
    %v1263 = vrot.slane %v1258, %v1262
    %v1265 = vmul.f32 %v1004, %v1263
    %v1266 = vmul.f32 %v1007, %v1263
    %v1267 = vmul.f32 %v1012, %v1263
    %v1268 = vmul.f32 %v1015, %v1263
    %v1269 = vmul.f32 %v1020, %v1263
    %v1270 = vmul.f32 %v1023, %v1263
    %v1271 = vmul.f32 %v1028, %v1263
    %v1272 = vmul.f32 %v1031, %v1263
    %v1273 = vmul.f32 %v1036, %v1263
    %v1274 = vmul.f32 %v1039, %v1263
    %v1275 = vmul.f32 %v1044, %v1263
    %v1276 = vmul.f32 %v1047, %v1263
    %v1277 = vmul.f32 %v1052, %v1263
    %v1278 = vmul.f32 %v1055, %v1263
    %v1279 = vmul.f32 %v1060, %v1263
    %v1280 = vmul.f32 %v1063, %v1263
    %v1281 = vmul.f32 %v1068, %v1263
    %v1282 = vmul.f32 %v1071, %v1263
    %v1283 = vmul.f32 %v1076, %v1263
    %v1284 = vmul.f32 %v1079, %v1263
    %v1285 = vmul.f32 %v1084, %v1263
    %v1286 = vmul.f32 %v1087, %v1263
    %v1287 = vmul.f32 %v1092, %v1263
    %v1288 = vmul.f32 %v1095, %v1263
    %v1289 = vmul.f32 %v1100, %v1263
    %v1290 = vmul.f32 %v1103, %v1263
    %v1291 = vmul.f32 %v1108, %v1263
    %v1292 = vmul.f32 %v1111, %v1263
    %v1293 = vmul.f32 %v1116, %v1263
    %v1294 = vmul.f32 %v1119, %v1263
    %v1295 = vmul.f32 %v1124, %v1263
    %v1296 = vmul.f32 %v1127, %v1263
    %v1297 = vmul.f32 %v1132, %v1263
    %v1298 = vmul.f32 %v1135, %v1263
    %v1299 = vmul.f32 %v1140, %v1263
    %v1300 = vmul.f32 %v1143, %v1263
    %v1301 = vmul.f32 %v1148, %v1263
    %v1302 = vmul.f32 %v1151, %v1263
    %v1303 = vmul.f32 %v1156, %v1263
    %v1304 = vmul.f32 %v1159, %v1263
    %v1305 = vmul.f32 %v1164, %v1263
    %v1306 = vmul.f32 %v1167, %v1263
    %v1307 = vmul.f32 %v1172, %v1263
    %v1308 = vmul.f32 %v1175, %v1263
    %v1309 = vmul.f32 %v1180, %v1263
    %v1310 = vmul.f32 %v1183, %v1263
    %v1311 = vmul.f32 %v1188, %v1263
    %v1312 = vmul.f32 %v1191, %v1263
    %v1313 = vmul.f32 %v1196, %v1263
    %v1314 = vmul.f32 %v1199, %v1263
    %v1315 = vmul.f32 %v1204, %v1263
    %v1316 = vmul.f32 %v1207, %v1263
    %v1317 = vmul.f32 %v1212, %v1263
    %v1318 = vmul.f32 %v1215, %v1263
    %v1319 = vmul.f32 %v1220, %v1263
    %v1320 = vmul.f32 %v1223, %v1263
    %v1321 = vmul.f32 %v1228, %v1263
    %v1322 = vmul.f32 %v1231, %v1263
    %v1323 = vmul.f32 %v1236, %v1263
    %v1324 = vmul.f32 %v1239, %v1263
    %v1325 = vmul.f32 %v1244, %v1263
    %v1326 = vmul.f32 %v1247, %v1263
    %v1327 = vmul.f32 %v1252, %v1263
    %v1328 = vmul.f32 %v1255, %v1263
    %v1329 = vld [vmem:[%s5] sm:$0x1]
    %v1331 = vlaneseq
    %v1332 = vshrl.u32 %v1331, 7
    %v1333 = vsub.s32 0, %v1332
    %v1334 = vrot.slane %v1329, %v1333
    %v1336 = vadd.f32 %v1265, %v1334
    %v1337 = vadd.f32 %v1266, %v1334
    %v1338 = vadd.f32 %v1267, %v1334
    %v1339 = vadd.f32 %v1268, %v1334
    %v1340 = vadd.f32 %v1269, %v1334
    %v1341 = vadd.f32 %v1270, %v1334
    %v1342 = vadd.f32 %v1271, %v1334
    %v1343 = vadd.f32 %v1272, %v1334
    %v1344 = vadd.f32 %v1273, %v1334
    %v1345 = vadd.f32 %v1274, %v1334
    %v1346 = vadd.f32 %v1275, %v1334
    %v1347 = vadd.f32 %v1276, %v1334
    %v1348 = vadd.f32 %v1277, %v1334
    %v1349 = vadd.f32 %v1278, %v1334
    %v1350 = vadd.f32 %v1279, %v1334
    %v1351 = vadd.f32 %v1280, %v1334
    %v1352 = vadd.f32 %v1281, %v1334
    %v1353 = vadd.f32 %v1282, %v1334
    %v1354 = vadd.f32 %v1283, %v1334
    %v1355 = vadd.f32 %v1284, %v1334
    %v1356 = vadd.f32 %v1285, %v1334
    %v1357 = vadd.f32 %v1286, %v1334
    %v1358 = vadd.f32 %v1287, %v1334
    %v1359 = vadd.f32 %v1288, %v1334
    %v1360 = vadd.f32 %v1289, %v1334
    %v1361 = vadd.f32 %v1290, %v1334
    %v1362 = vadd.f32 %v1291, %v1334
    %v1363 = vadd.f32 %v1292, %v1334
    %v1364 = vadd.f32 %v1293, %v1334
    %v1365 = vadd.f32 %v1294, %v1334
    %v1366 = vadd.f32 %v1295, %v1334
    %v1367 = vadd.f32 %v1296, %v1334
    %v1368 = vadd.f32 %v1297, %v1334
    %v1369 = vadd.f32 %v1298, %v1334
    %v1370 = vadd.f32 %v1299, %v1334
    %v1371 = vadd.f32 %v1300, %v1334
    %v1372 = vadd.f32 %v1301, %v1334
    %v1373 = vadd.f32 %v1302, %v1334
    %v1374 = vadd.f32 %v1303, %v1334
    %v1375 = vadd.f32 %v1304, %v1334
    %v1376 = vadd.f32 %v1305, %v1334
    %v1377 = vadd.f32 %v1306, %v1334
    %v1378 = vadd.f32 %v1307, %v1334
    %v1379 = vadd.f32 %v1308, %v1334
    %v1380 = vadd.f32 %v1309, %v1334
    %v1381 = vadd.f32 %v1310, %v1334
    %v1382 = vadd.f32 %v1311, %v1334
    %v1383 = vadd.f32 %v1312, %v1334
    %v1384 = vadd.f32 %v1313, %v1334
    %v1385 = vadd.f32 %v1314, %v1334
    %v1386 = vadd.f32 %v1315, %v1334
    %v1387 = vadd.f32 %v1316, %v1334
    %v1388 = vadd.f32 %v1317, %v1334
    %v1389 = vadd.f32 %v1318, %v1334
    %v1390 = vadd.f32 %v1319, %v1334
    %v1391 = vadd.f32 %v1320, %v1334
    %v1392 = vadd.f32 %v1321, %v1334
    %v1393 = vadd.f32 %v1322, %v1334
    %v1394 = vadd.f32 %v1323, %v1334
    %v1395 = vadd.f32 %v1324, %v1334
    %v1396 = vadd.f32 %v1325, %v1334
    %v1397 = vadd.f32 %v1326, %v1334
    %v1398 = vadd.f32 %v1327, %v1334
    %v1399 = vadd.f32 %v1328, %v1334
    %v1400 = vxor.u32 %v1336, 2147483648
    %v1401 = vxor.u32 %v1337, 2147483648
    %v1402 = vxor.u32 %v1338, 2147483648
    %v1403 = vxor.u32 %v1339, 2147483648
    %v1404 = vxor.u32 %v1340, 2147483648
    %v1405 = vxor.u32 %v1341, 2147483648
    %v1406 = vxor.u32 %v1342, 2147483648
    %v1407 = vxor.u32 %v1343, 2147483648
    %v1408 = vxor.u32 %v1344, 2147483648
    %v1409 = vxor.u32 %v1345, 2147483648
    %v1410 = vxor.u32 %v1346, 2147483648
    %v1411 = vxor.u32 %v1347, 2147483648
    %v1412 = vxor.u32 %v1348, 2147483648
    %v1413 = vxor.u32 %v1349, 2147483648
    %v1414 = vxor.u32 %v1350, 2147483648
    %v1415 = vxor.u32 %v1351, 2147483648
    %v1416 = vxor.u32 %v1352, 2147483648
    %v1417 = vxor.u32 %v1353, 2147483648
    %v1418 = vxor.u32 %v1354, 2147483648
    %v1419 = vxor.u32 %v1355, 2147483648
    %v1420 = vxor.u32 %v1356, 2147483648
    %v1421 = vxor.u32 %v1357, 2147483648
    %v1422 = vxor.u32 %v1358, 2147483648
    %v1423 = vxor.u32 %v1359, 2147483648
    %v1424 = vxor.u32 %v1360, 2147483648
    %v1425 = vxor.u32 %v1361, 2147483648
    %v1426 = vxor.u32 %v1362, 2147483648
    %v1427 = vxor.u32 %v1363, 2147483648
    %v1428 = vxor.u32 %v1364, 2147483648
    %v1429 = vxor.u32 %v1365, 2147483648
    %v1430 = vxor.u32 %v1366, 2147483648
    %v1431 = vxor.u32 %v1367, 2147483648
    %v1432 = vxor.u32 %v1368, 2147483648
    %v1433 = vxor.u32 %v1369, 2147483648
    %v1434 = vxor.u32 %v1370, 2147483648
    %v1435 = vxor.u32 %v1371, 2147483648
    %v1436 = vxor.u32 %v1372, 2147483648
    %v1437 = vxor.u32 %v1373, 2147483648
    %v1438 = vxor.u32 %v1374, 2147483648
    %v1439 = vxor.u32 %v1375, 2147483648
    %v1440 = vxor.u32 %v1376, 2147483648
    %v1441 = vxor.u32 %v1377, 2147483648
    %v1442 = vxor.u32 %v1378, 2147483648
    %v1443 = vxor.u32 %v1379, 2147483648
    %v1444 = vxor.u32 %v1380, 2147483648
    %v1445 = vxor.u32 %v1381, 2147483648
    %v1446 = vxor.u32 %v1382, 2147483648
    %v1447 = vxor.u32 %v1383, 2147483648
    %v1448 = vxor.u32 %v1384, 2147483648
    %v1449 = vxor.u32 %v1385, 2147483648
    %v1450 = vxor.u32 %v1386, 2147483648
    %v1451 = vxor.u32 %v1387, 2147483648
    %v1452 = vxor.u32 %v1388, 2147483648
    %v1453 = vxor.u32 %v1389, 2147483648
    %v1454 = vxor.u32 %v1390, 2147483648
    %v1455 = vxor.u32 %v1391, 2147483648
    %v1456 = vxor.u32 %v1392, 2147483648
    %v1457 = vxor.u32 %v1393, 2147483648
    %v1458 = vxor.u32 %v1394, 2147483648
    %v1459 = vxor.u32 %v1395, 2147483648
    %v1460 = vxor.u32 %v1396, 2147483648
    %v1461 = vxor.u32 %v1397, 2147483648
    %v1462 = vxor.u32 %v1398, 2147483648
    %v1463 = vxor.u32 %v1399, 2147483648
    %v1464 = vmul.f32 %v1400, 1.442695
    %v1465 = vpow.pop %v1464
    %v1466 = vmul.f32 %v1401, 1.442695
    %v1467 = vpow.pop %v1466
    %v1468 = vmul.f32 %v1402, 1.442695
    %v1469 = vpow.pop %v1468
    %v1470 = vmul.f32 %v1403, 1.442695
    %v1471 = vpow.pop %v1470
    %v1472 = vmul.f32 %v1404, 1.442695
    %v1473 = vpow.pop %v1472
    %v1474 = vmul.f32 %v1405, 1.442695
    %v1475 = vpow.pop %v1474
    %v1476 = vmul.f32 %v1406, 1.442695
    %v1477 = vpow.pop %v1476
    %v1478 = vmul.f32 %v1407, 1.442695
    %v1479 = vpow.pop %v1478
    %v1480 = vmul.f32 %v1408, 1.442695
    %v1481 = vpow.pop %v1480
    %v1482 = vmul.f32 %v1409, 1.442695
    %v1483 = vpow.pop %v1482
    %v1484 = vmul.f32 %v1410, 1.442695
    %v1485 = vpow.pop %v1484
    %v1486 = vmul.f32 %v1411, 1.442695
    %v1487 = vpow.pop %v1486
    %v1488 = vmul.f32 %v1412, 1.442695
    %v1489 = vpow.pop %v1488
    %v1490 = vmul.f32 %v1413, 1.442695
    %v1491 = vpow.pop %v1490
    %v1492 = vmul.f32 %v1414, 1.442695
    %v1493 = vpow.pop %v1492
    %v1494 = vmul.f32 %v1415, 1.442695
    %v1495 = vpow.pop %v1494
    %v1496 = vmul.f32 %v1416, 1.442695
    %v1497 = vpow.pop %v1496
    %v1498 = vmul.f32 %v1417, 1.442695
    %v1499 = vpow.pop %v1498
    %v1500 = vmul.f32 %v1418, 1.442695
    %v1501 = vpow.pop %v1500
    %v1502 = vmul.f32 %v1419, 1.442695
    %v1503 = vpow.pop %v1502
    %v1504 = vmul.f32 %v1420, 1.442695
    %v1505 = vpow.pop %v1504
    %v1506 = vmul.f32 %v1421, 1.442695
    %v1507 = vpow.pop %v1506
    %v1508 = vmul.f32 %v1422, 1.442695
    %v1509 = vpow.pop %v1508
    %v1510 = vmul.f32 %v1423, 1.442695
    %v1511 = vpow.pop %v1510
    %v1512 = vmul.f32 %v1424, 1.442695
    %v1513 = vpow.pop %v1512
    %v1514 = vmul.f32 %v1425, 1.442695
    %v1515 = vpow.pop %v1514
    %v1516 = vmul.f32 %v1426, 1.442695
    %v1517 = vpow.pop %v1516
    %v1518 = vmul.f32 %v1427, 1.442695
    %v1519 = vpow.pop %v1518
    %v1520 = vmul.f32 %v1428, 1.442695
    %v1521 = vpow.pop %v1520
    %v1522 = vmul.f32 %v1429, 1.442695
    %v1523 = vpow.pop %v1522
    %v1524 = vmul.f32 %v1430, 1.442695
    %v1525 = vpow.pop %v1524
    %v1526 = vmul.f32 %v1431, 1.442695
    %v1527 = vpow.pop %v1526
    %v1528 = vmul.f32 %v1432, 1.442695
    %v1529 = vpow.pop %v1528
    %v1530 = vmul.f32 %v1433, 1.442695
    %v1531 = vpow.pop %v1530
    %v1532 = vmul.f32 %v1434, 1.442695
    %v1533 = vpow.pop %v1532
    %v1534 = vmul.f32 %v1435, 1.442695
    %v1535 = vpow.pop %v1534
    %v1536 = vmul.f32 %v1436, 1.442695
    %v1537 = vpow.pop %v1536
    %v1538 = vmul.f32 %v1437, 1.442695
    %v1539 = vpow.pop %v1538
    %v1540 = vmul.f32 %v1438, 1.442695
    %v1541 = vpow.pop %v1540
    %v1542 = vmul.f32 %v1439, 1.442695
    %v1543 = vpow.pop %v1542
    %v1544 = vmul.f32 %v1440, 1.442695
    %v1545 = vpow.pop %v1544
    %v1546 = vmul.f32 %v1441, 1.442695
    %v1547 = vpow.pop %v1546
    %v1548 = vmul.f32 %v1442, 1.442695
    %v1549 = vpow.pop %v1548
    %v1550 = vmul.f32 %v1443, 1.442695
    %v1551 = vpow.pop %v1550
    %v1552 = vmul.f32 %v1444, 1.442695
    %v1553 = vpow.pop %v1552
    %v1554 = vmul.f32 %v1445, 1.442695
    %v1555 = vpow.pop %v1554
    %v1556 = vmul.f32 %v1446, 1.442695
    %v1557 = vpow.pop %v1556
    %v1558 = vmul.f32 %v1447, 1.442695
    %v1559 = vpow.pop %v1558
    %v1560 = vmul.f32 %v1448, 1.442695
    %v1561 = vpow.pop %v1560
    %v1562 = vmul.f32 %v1449, 1.442695
    %v1563 = vpow.pop %v1562
    %v1564 = vmul.f32 %v1450, 1.442695
    %v1565 = vpow.pop %v1564
    %v1566 = vmul.f32 %v1451, 1.442695
    %v1567 = vpow.pop %v1566
    %v1568 = vmul.f32 %v1452, 1.442695
    %v1569 = vpow.pop %v1568
    %v1570 = vmul.f32 %v1453, 1.442695
    %v1571 = vpow.pop %v1570
    %v1572 = vmul.f32 %v1454, 1.442695
    %v1573 = vpow.pop %v1572
    %v1574 = vmul.f32 %v1455, 1.442695
    %v1575 = vpow.pop %v1574
    %v1576 = vmul.f32 %v1456, 1.442695
    %v1577 = vpow.pop %v1576
    %v1578 = vmul.f32 %v1457, 1.442695
    %v1579 = vpow.pop %v1578
    %v1580 = vmul.f32 %v1458, 1.442695
    %v1581 = vpow.pop %v1580
    %v1582 = vmul.f32 %v1459, 1.442695
    %v1583 = vpow.pop %v1582
    %v1584 = vmul.f32 %v1460, 1.442695
    %v1585 = vpow.pop %v1584
    %v1586 = vmul.f32 %v1461, 1.442695
    %v1587 = vpow.pop %v1586
    %v1588 = vmul.f32 %v1462, 1.442695
    %v1589 = vpow.pop %v1588
    %v1590 = vmul.f32 %v1463, 1.442695
    %v1591 = vpow.pop %v1590
    %v1592 = vadd.f32 %v1465, 1.0
    %v1593 = vadd.f32 %v1467, 1.0
    %v1594 = vadd.f32 %v1469, 1.0
    %v1595 = vadd.f32 %v1471, 1.0
    %v1596 = vadd.f32 %v1473, 1.0
    %v1597 = vadd.f32 %v1475, 1.0
    %v1598 = vadd.f32 %v1477, 1.0
    %v1599 = vadd.f32 %v1479, 1.0
    %v1600 = vadd.f32 %v1481, 1.0
    %v1601 = vadd.f32 %v1483, 1.0
    %v1602 = vadd.f32 %v1485, 1.0
    %v1603 = vadd.f32 %v1487, 1.0
    %v1604 = vadd.f32 %v1489, 1.0
    %v1605 = vadd.f32 %v1491, 1.0
    %v1606 = vadd.f32 %v1493, 1.0
    %v1607 = vadd.f32 %v1495, 1.0
    %v1608 = vadd.f32 %v1497, 1.0
    %v1609 = vadd.f32 %v1499, 1.0
    %v1610 = vadd.f32 %v1501, 1.0
    %v1611 = vadd.f32 %v1503, 1.0
    %v1612 = vadd.f32 %v1505, 1.0
    %v1613 = vadd.f32 %v1507, 1.0
    %v1614 = vadd.f32 %v1509, 1.0
    %v1615 = vadd.f32 %v1511, 1.0
    %v1616 = vadd.f32 %v1513, 1.0
    %v1617 = vadd.f32 %v1515, 1.0
    %v1618 = vadd.f32 %v1517, 1.0
    %v1619 = vadd.f32 %v1519, 1.0
    %v1620 = vadd.f32 %v1521, 1.0
    %v1621 = vadd.f32 %v1523, 1.0
    %v1622 = vadd.f32 %v1525, 1.0
    %v1623 = vadd.f32 %v1527, 1.0
    %v1624 = vadd.f32 %v1529, 1.0
    %v1625 = vadd.f32 %v1531, 1.0
    %v1626 = vadd.f32 %v1533, 1.0
    %v1627 = vadd.f32 %v1535, 1.0
    %v1628 = vadd.f32 %v1537, 1.0
    %v1629 = vadd.f32 %v1539, 1.0
    %v1630 = vadd.f32 %v1541, 1.0
    %v1631 = vadd.f32 %v1543, 1.0
    %v1632 = vadd.f32 %v1545, 1.0
    %v1633 = vadd.f32 %v1547, 1.0
    %v1634 = vadd.f32 %v1549, 1.0
    %v1635 = vadd.f32 %v1551, 1.0
    %v1636 = vadd.f32 %v1553, 1.0
    %v1637 = vadd.f32 %v1555, 1.0
    %v1638 = vadd.f32 %v1557, 1.0
    %v1639 = vadd.f32 %v1559, 1.0
    %v1640 = vadd.f32 %v1561, 1.0
    %v1641 = vadd.f32 %v1563, 1.0
    %v1642 = vadd.f32 %v1565, 1.0
    %v1643 = vadd.f32 %v1567, 1.0
    %v1644 = vadd.f32 %v1569, 1.0
    %v1645 = vadd.f32 %v1571, 1.0
    %v1646 = vadd.f32 %v1573, 1.0
    %v1647 = vadd.f32 %v1575, 1.0
    %v1648 = vadd.f32 %v1577, 1.0
    %v1649 = vadd.f32 %v1579, 1.0
    %v1650 = vadd.f32 %v1581, 1.0
    %v1651 = vadd.f32 %v1583, 1.0
    %v1652 = vadd.f32 %v1585, 1.0
    %v1653 = vadd.f32 %v1587, 1.0
    %v1654 = vadd.f32 %v1589, 1.0
    %v1655 = vadd.f32 %v1591, 1.0
    %v1656 = vrcp.pop %v1592
    %v1657 = vmul.f32 1.0, %v1656
    %v1658 = vrcp.pop %v1593
    %v1659 = vmul.f32 1.0, %v1658
    %v1660 = vrcp.pop %v1594
    %v1661 = vmul.f32 1.0, %v1660
    %v1662 = vrcp.pop %v1595
    %v1663 = vmul.f32 1.0, %v1662
    %v1664 = vrcp.pop %v1596
    %v1665 = vmul.f32 1.0, %v1664
    %v1666 = vrcp.pop %v1597
    %v1667 = vmul.f32 1.0, %v1666
    %v1668 = vrcp.pop %v1598
    %v1669 = vmul.f32 1.0, %v1668
    %v1670 = vrcp.pop %v1599
    %v1671 = vmul.f32 1.0, %v1670
    %v1672 = vrcp.pop %v1600
    %v1673 = vmul.f32 1.0, %v1672
    %v1674 = vrcp.pop %v1601
    %v1675 = vmul.f32 1.0, %v1674
    %v1676 = vrcp.pop %v1602
    %v1677 = vmul.f32 1.0, %v1676
    %v1678 = vrcp.pop %v1603
    %v1679 = vmul.f32 1.0, %v1678
    %v1680 = vrcp.pop %v1604
    %v1681 = vmul.f32 1.0, %v1680
    %v1682 = vrcp.pop %v1605
    %v1683 = vmul.f32 1.0, %v1682
    %v1684 = vrcp.pop %v1606
    %v1685 = vmul.f32 1.0, %v1684
    %v1686 = vrcp.pop %v1607
    %v1687 = vmul.f32 1.0, %v1686
    %v1688 = vrcp.pop %v1608
    %v1689 = vmul.f32 1.0, %v1688
    %v1690 = vrcp.pop %v1609
    %v1691 = vmul.f32 1.0, %v1690
    %v1692 = vrcp.pop %v1610
    %v1693 = vmul.f32 1.0, %v1692
    %v1694 = vrcp.pop %v1611
    %v1695 = vmul.f32 1.0, %v1694
    %v1696 = vrcp.pop %v1612
    %v1697 = vmul.f32 1.0, %v1696
    %v1698 = vrcp.pop %v1613
    %v1699 = vmul.f32 1.0, %v1698
    %v1700 = vrcp.pop %v1614
    %v1701 = vmul.f32 1.0, %v1700
    %v1702 = vrcp.pop %v1615
    %v1703 = vmul.f32 1.0, %v1702
    %v1704 = vrcp.pop %v1616
    %v1705 = vmul.f32 1.0, %v1704
    %v1706 = vrcp.pop %v1617
    %v1707 = vmul.f32 1.0, %v1706
    %v1708 = vrcp.pop %v1618
    %v1709 = vmul.f32 1.0, %v1708
    %v1710 = vrcp.pop %v1619
    %v1711 = vmul.f32 1.0, %v1710
    %v1712 = vrcp.pop %v1620
    %v1713 = vmul.f32 1.0, %v1712
    %v1714 = vrcp.pop %v1621
    %v1715 = vmul.f32 1.0, %v1714
    %v1716 = vrcp.pop %v1622
    %v1717 = vmul.f32 1.0, %v1716
    %v1718 = vrcp.pop %v1623
    %v1719 = vmul.f32 1.0, %v1718
    %v1720 = vrcp.pop %v1624
    %v1721 = vmul.f32 1.0, %v1720
    %v1722 = vrcp.pop %v1625
    %v1723 = vmul.f32 1.0, %v1722
    %v1724 = vrcp.pop %v1626
    %v1725 = vmul.f32 1.0, %v1724
    %v1726 = vrcp.pop %v1627
    %v1727 = vmul.f32 1.0, %v1726
    %v1728 = vrcp.pop %v1628
    %v1729 = vmul.f32 1.0, %v1728
    %v1730 = vrcp.pop %v1629
    %v1731 = vmul.f32 1.0, %v1730
    %v1732 = vrcp.pop %v1630
    %v1733 = vmul.f32 1.0, %v1732
    %v1734 = vrcp.pop %v1631
    %v1735 = vmul.f32 1.0, %v1734
    %v1736 = vrcp.pop %v1632
    %v1737 = vmul.f32 1.0, %v1736
    %v1738 = vrcp.pop %v1633
    %v1739 = vmul.f32 1.0, %v1738
    %v1740 = vrcp.pop %v1634
    %v1741 = vmul.f32 1.0, %v1740
    %v1742 = vrcp.pop %v1635
    %v1743 = vmul.f32 1.0, %v1742
    %v1744 = vrcp.pop %v1636
    %v1745 = vmul.f32 1.0, %v1744
    %v1746 = vrcp.pop %v1637
    %v1747 = vmul.f32 1.0, %v1746
    %v1748 = vrcp.pop %v1638
    %v1749 = vmul.f32 1.0, %v1748
    %v1750 = vrcp.pop %v1639
    %v1751 = vmul.f32 1.0, %v1750
    %v1752 = vrcp.pop %v1640
    %v1753 = vmul.f32 1.0, %v1752
    %v1754 = vrcp.pop %v1641
    %v1755 = vmul.f32 1.0, %v1754
    %v1756 = vrcp.pop %v1642
    %v1757 = vmul.f32 1.0, %v1756
    %v1758 = vrcp.pop %v1643
    %v1759 = vmul.f32 1.0, %v1758
    %v1760 = vrcp.pop %v1644
    %v1761 = vmul.f32 1.0, %v1760
    %v1762 = vrcp.pop %v1645
    %v1763 = vmul.f32 1.0, %v1762
    %v1764 = vrcp.pop %v1646
    %v1765 = vmul.f32 1.0, %v1764
    %v1766 = vrcp.pop %v1647
    %v1767 = vmul.f32 1.0, %v1766
    %v1768 = vrcp.pop %v1648
    %v1769 = vmul.f32 1.0, %v1768
    %v1770 = vrcp.pop %v1649
    %v1771 = vmul.f32 1.0, %v1770
    %v1772 = vrcp.pop %v1650
    %v1773 = vmul.f32 1.0, %v1772
    %v1774 = vrcp.pop %v1651
    %v1775 = vmul.f32 1.0, %v1774
    %v1776 = vrcp.pop %v1652
    %v1777 = vmul.f32 1.0, %v1776
    %v1778 = vrcp.pop %v1653
    %v1779 = vmul.f32 1.0, %v1778
    %v1780 = vrcp.pop %v1654
    %v1781 = vmul.f32 1.0, %v1780
    %v1782 = vrcp.pop %v1655
    %v1783 = vmul.f32 1.0, %v1782
    %v1784 = vmul.f32 %v1336, %v1657
    %v1785 = vmul.f32 %v1337, %v1659
    %v1786 = vmul.f32 %v1338, %v1661
    %v1787 = vmul.f32 %v1339, %v1663
    %v1788 = vmul.f32 %v1340, %v1665
    %v1789 = vmul.f32 %v1341, %v1667
    %v1790 = vmul.f32 %v1342, %v1669
    %v1791 = vmul.f32 %v1343, %v1671
    %v1792 = vmul.f32 %v1344, %v1673
    %v1793 = vmul.f32 %v1345, %v1675
    %v1794 = vmul.f32 %v1346, %v1677
    %v1795 = vmul.f32 %v1347, %v1679
    %v1796 = vmul.f32 %v1348, %v1681
    %v1797 = vmul.f32 %v1349, %v1683
    %v1798 = vmul.f32 %v1350, %v1685
    %v1799 = vmul.f32 %v1351, %v1687
    %v1800 = vmul.f32 %v1352, %v1689
    %v1801 = vmul.f32 %v1353, %v1691
    %v1802 = vmul.f32 %v1354, %v1693
    %v1803 = vmul.f32 %v1355, %v1695
    %v1804 = vmul.f32 %v1356, %v1697
    %v1805 = vmul.f32 %v1357, %v1699
    %v1806 = vmul.f32 %v1358, %v1701
    %v1807 = vmul.f32 %v1359, %v1703
    %v1808 = vmul.f32 %v1360, %v1705
    %v1809 = vmul.f32 %v1361, %v1707
    %v1810 = vmul.f32 %v1362, %v1709
    %v1811 = vmul.f32 %v1363, %v1711
    %v1812 = vmul.f32 %v1364, %v1713
    %v1813 = vmul.f32 %v1365, %v1715
    %v1814 = vmul.f32 %v1366, %v1717
    %v1815 = vmul.f32 %v1367, %v1719
    %v1816 = vmul.f32 %v1368, %v1721
    %v1817 = vmul.f32 %v1369, %v1723
    %v1818 = vmul.f32 %v1370, %v1725
    %v1819 = vmul.f32 %v1371, %v1727
    %v1820 = vmul.f32 %v1372, %v1729
    %v1821 = vmul.f32 %v1373, %v1731
    %v1822 = vmul.f32 %v1374, %v1733
    %v1823 = vmul.f32 %v1375, %v1735
    %v1824 = vmul.f32 %v1376, %v1737
    %v1825 = vmul.f32 %v1377, %v1739
    %v1826 = vmul.f32 %v1378, %v1741
    %v1827 = vmul.f32 %v1379, %v1743
    %v1828 = vmul.f32 %v1380, %v1745
    %v1829 = vmul.f32 %v1381, %v1747
    %v1830 = vmul.f32 %v1382, %v1749
    %v1831 = vmul.f32 %v1383, %v1751
    %v1832 = vmul.f32 %v1384, %v1753
    %v1833 = vmul.f32 %v1385, %v1755
    %v1834 = vmul.f32 %v1386, %v1757
    %v1835 = vmul.f32 %v1387, %v1759
    %v1836 = vmul.f32 %v1388, %v1761
    %v1837 = vmul.f32 %v1389, %v1763
    %v1838 = vmul.f32 %v1390, %v1765
    %v1839 = vmul.f32 %v1391, %v1767
    %v1840 = vmul.f32 %v1392, %v1769
    %v1841 = vmul.f32 %v1393, %v1771
    %v1842 = vmul.f32 %v1394, %v1773
    %v1843 = vmul.f32 %v1395, %v1775
    %v1844 = vmul.f32 %v1396, %v1777
    %v1845 = vmul.f32 %v1397, %v1779
    %v1846 = vmul.f32 %v1398, %v1781
    %v1847 = vmul.f32 %v1399, %v1783
    %1848 = vst.msk [vmem:[#allocation2] sm:$0xff] %vm872, %v1784
    %1849 = vst.msk [vmem:[#allocation2 + $0x8] sm:$0xff] %vm872, %v1785
    %1850 = vst.msk [vmem:[#allocation2 + $0x10] sm:$0xff] %vm872, %v1786
    %1851 = vst.msk [vmem:[#allocation2 + $0x18] sm:$0xff] %vm872, %v1787
    %1852 = vst.msk [vmem:[#allocation2 + $0x20] sm:$0xff] %vm872, %v1788
    %1853 = vst.msk [vmem:[#allocation2 + $0x28] sm:$0xff] %vm872, %v1789
    %1854 = vst.msk [vmem:[#allocation2 + $0x30] sm:$0xff] %vm872, %v1790
    %1855 = vst.msk [vmem:[#allocation2 + $0x38] sm:$0xff] %vm872, %v1791
    %1856 = vst.msk [vmem:[#allocation2 + $0x40] sm:$0xff] %vm872, %v1792
    %1857 = vst.msk [vmem:[#allocation2 + $0x48] sm:$0xff] %vm872, %v1793
    %1858 = vst.msk [vmem:[#allocation2 + $0x50] sm:$0xff] %vm872, %v1794
    %1859 = vst.msk [vmem:[#allocation2 + $0x58] sm:$0xff] %vm872, %v1795
    %1860 = vst.msk [vmem:[#allocation2 + $0x60] sm:$0xff] %vm872, %v1796
    %1861 = vst.msk [vmem:[#allocation2 + $0x68] sm:$0xff] %vm872, %v1797
    %1862 = vst.msk [vmem:[#allocation2 + $0x70] sm:$0xff] %vm872, %v1798
    %1863 = vst.msk [vmem:[#allocation2 + $0x78] sm:$0xff] %vm872, %v1799
    %1864 = vst.msk [vmem:[#allocation2 + $0x80] sm:$0xff] %vm872, %v1800
    %1865 = vst.msk [vmem:[#allocation2 + $0x88] sm:$0xff] %vm872, %v1801
    %1866 = vst.msk [vmem:[#allocation2 + $0x90] sm:$0xff] %vm872, %v1802
    %1867 = vst.msk [vmem:[#allocation2 + $0x98] sm:$0xff] %vm872, %v1803
    %1868 = vst.msk [vmem:[#allocation2 + $0xa0] sm:$0xff] %vm872, %v1804
    %1869 = vst.msk [vmem:[#allocation2 + $0xa8] sm:$0xff] %vm872, %v1805
    %1870 = vst.msk [vmem:[#allocation2 + $0xb0] sm:$0xff] %vm872, %v1806
    %1871 = vst.msk [vmem:[#allocation2 + $0xb8] sm:$0xff] %vm872, %v1807
    %1872 = vst.msk [vmem:[#allocation2 + $0xc0] sm:$0xff] %vm872, %v1808
    %1873 = vst.msk [vmem:[#allocation2 + $0xc8] sm:$0xff] %vm872, %v1809
    %1874 = vst.msk [vmem:[#allocation2 + $0xd0] sm:$0xff] %vm872, %v1810
    %1875 = vst.msk [vmem:[#allocation2 + $0xd8] sm:$0xff] %vm872, %v1811
    %1876 = vst.msk [vmem:[#allocation2 + $0xe0] sm:$0xff] %vm872, %v1812
    %1877 = vst.msk [vmem:[#allocation2 + $0xe8] sm:$0xff] %vm872, %v1813
    %1878 = vst.msk [vmem:[#allocation2 + $0xf0] sm:$0xff] %vm872, %v1814
    %1879 = vst.msk [vmem:[#allocation2 + $0xf8] sm:$0xff] %vm872, %v1815
    %1880 = vst.msk [vmem:[#allocation2 + $0x100] sm:$0xff] %vm872, %v1816
    %1881 = vst.msk [vmem:[#allocation2 + $0x108] sm:$0xff] %vm872, %v1817
    %1882 = vst.msk [vmem:[#allocation2 + $0x110] sm:$0xff] %vm872, %v1818
    %1883 = vst.msk [vmem:[#allocation2 + $0x118] sm:$0xff] %vm872, %v1819
    %1884 = vst.msk [vmem:[#allocation2 + $0x120] sm:$0xff] %vm872, %v1820
    %1885 = vst.msk [vmem:[#allocation2 + $0x128] sm:$0xff] %vm872, %v1821
    %1886 = vst.msk [vmem:[#allocation2 + $0x130] sm:$0xff] %vm872, %v1822
    %1887 = vst.msk [vmem:[#allocation2 + $0x138] sm:$0xff] %vm872, %v1823
    %1888 = vst.msk [vmem:[#allocation2 + $0x140] sm:$0xff] %vm872, %v1824
    %1889 = vst.msk [vmem:[#allocation2 + $0x148] sm:$0xff] %vm872, %v1825
    %1890 = vst.msk [vmem:[#allocation2 + $0x150] sm:$0xff] %vm872, %v1826
    %1891 = vst.msk [vmem:[#allocation2 + $0x158] sm:$0xff] %vm872, %v1827
    %1892 = vst.msk [vmem:[#allocation2 + $0x160] sm:$0xff] %vm872, %v1828
    %1893 = vst.msk [vmem:[#allocation2 + $0x168] sm:$0xff] %vm872, %v1829
    %1894 = vst.msk [vmem:[#allocation2 + $0x170] sm:$0xff] %vm872, %v1830
    %1895 = vst.msk [vmem:[#allocation2 + $0x178] sm:$0xff] %vm872, %v1831
    %1896 = vst.msk [vmem:[#allocation2 + $0x180] sm:$0xff] %vm872, %v1832
    %1897 = vst.msk [vmem:[#allocation2 + $0x188] sm:$0xff] %vm872, %v1833
    %1898 = vst.msk [vmem:[#allocation2 + $0x190] sm:$0xff] %vm872, %v1834
    %1899 = vst.msk [vmem:[#allocation2 + $0x198] sm:$0xff] %vm872, %v1835
    %1900 = vst.msk [vmem:[#allocation2 + $0x1a0] sm:$0xff] %vm872, %v1836
    %1901 = vst.msk [vmem:[#allocation2 + $0x1a8] sm:$0xff] %vm872, %v1837
    %1902 = vst.msk [vmem:[#allocation2 + $0x1b0] sm:$0xff] %vm872, %v1838
    %1903 = vst.msk [vmem:[#allocation2 + $0x1b8] sm:$0xff] %vm872, %v1839
    %1904 = vst.msk [vmem:[#allocation2 + $0x1c0] sm:$0xff] %vm872, %v1840
    %1905 = vst.msk [vmem:[#allocation2 + $0x1c8] sm:$0xff] %vm872, %v1841
    %1906 = vst.msk [vmem:[#allocation2 + $0x1d0] sm:$0xff] %vm872, %v1842
    %1907 = vst.msk [vmem:[#allocation2 + $0x1d8] sm:$0xff] %vm872, %v1843
    %1908 = vst.msk [vmem:[#allocation2 + $0x1e0] sm:$0xff] %vm872, %v1844
    %1909 = vst.msk [vmem:[#allocation2 + $0x1e8] sm:$0xff] %vm872, %v1845
    %1910 = vst.msk [vmem:[#allocation2 + $0x1f0] sm:$0xff] %vm872, %v1846
    %1911 = vst.msk [vmem:[#allocation2 + $0x1f8] sm:$0xff] %vm872, %v1847
    // Predicated region
    $region26: #{_lambda_.9} parent=1 // pred_check
      _
    $region27: #{_lambda_.9} parent=1 // pred_check_branch
      %1913 = sbr.rel (0) target = $region29
    $region28: #{_lambda_.9} parent=1 // pred_region
      %s1915 = ssub.s32 8192, 8192
      %1916 = vsyncadd [#allocation3], %s1915
      %s1917 = sshll.u32 [#allocation2], 4
      %s1918 = int_to_ptr.vmem [resolvable:$true] %s1917
      %1923 = dma.vmem_to_hbm [thread:$0]  %s1918, 8192, %s6, [#allocation3], 128, 128, 8
    $region29: #{_lambda_.9} parent=1 // pred_fallthru
      _
    // Predicated region
    $region30: #{_lambda_.9} parent=1 // pred_check
      _
    $region31: #{_lambda_.9} parent=1 // pred_check_branch
      %1925 = sbr.rel (0) target = $region33
    $region32: #{_lambda_.9} parent=1 // pred_region
      %1926 = dma.done [#allocation3], 8192
    $region33: #{_lambda_.9} parent=1 // pred_fallthru
      _
    %1927 = vsyncpa [#allocation3], 1

</llo_original>
